<compile_context>
chip_gen: v6e
topology: v6e:2x2x1
jax: 0.10.0
libtpu: 0.0.40
codegen_flags: <defaults>
</compile_context>

<pallas_src>
import functools
import math

import jax
import jax.numpy as jnp
from jax.experimental import pallas as pl
from jax.experimental.pallas import tpu as pltpu

# ----------------------------- configuration --------------------------------
B = 2                      # batch
NUM_POINTS = 64            # input point count (small analog of 16384)
NUM_POINTS_LIST = [32, 16] # per-level point counts (input_module config)
NUM_PC = len(NUM_POINTS_LIST)
CHANNELS = [8, 16]         # channels[0] * 2**i = mlp_i input channels
SCALE_PTS = 1024           # small analog of the 16384 in `3 * 16384 // n`
OUT_CHANNELS = [3 * SCALE_PTS // n for n in NUM_POINTS_LIST]   # [96, 192] logical
GLOBAL_DIM = 512


def _pad128(n):
    return ((n + 127) // 128) * 128


OUT_PAD = [_pad128(c) for c in OUT_CHANNELS]                   # [128, 256] lane-dense

WEIGHT_DTYPE = jnp.bfloat16   # MXU operands
ACT_DTYPE = jnp.bfloat16      # inter-kernel feature tensors (halves HBM traffic)
OUT_DTYPE = jnp.float32       # point / prediction outputs


# ----------------------------- small helpers --------------------------------
def _gelu(x):
    # tanh-approximate GELU (EUP-friendly inside the kernel).
    # TODO(synk): exact erf-GELU if the reference checkpoint requires it.
    c = math.sqrt(2.0 / math.pi)
    return 0.5 * x * (1.0 + jnp.tanh(c * (x + 0.044715 * x * x * x)))


def _pick_row_tile(m, cap=1024, min_steps=4):
    """Largest multiple-of-8 row tile <= cap dividing m with >= min_steps grid
    steps (v7x megacore needs >=2 per core for double-buffering)."""
    for t in (1024, 512, 256, 128, 64, 32, 16, 8):
        if t <= cap and m % t == 0 and m // t >= min_steps:
            return t
    for t in (1024, 512, 256, 128, 64, 32, 16, 8):
        if t <= cap and m % t == 0 and m // t >= 2:
            return t
    return m


def _pick_col_tile(n, cap=1024, min_steps=4):
    """Largest multiple-of-128 column tile <= cap dividing n with >= min_steps
    grid steps."""
    for t in (2048, 1024, 512, 256, 128):
        if t <= cap and n % t == 0 and n // t >= min_steps:
            return t
    for t in (2048, 1024, 512, 256, 128):
        if t <= cap and n % t == 0 and n // t >= 2:
            return t
    return n


def _fold_bn(w, b, eps=1e-5):
    # BatchNorm at deterministic init (gamma=1, beta=0, mean=0, var=1), eval
    # semantics -> a single scale folded into the conv weights/bias at init.
    # TODO(synk): fold real running stats when loading a trained checkpoint.
    scale = 1.0 / math.sqrt(1.0 + eps)
    return w * scale, b * scale


# ----------------------------- Pallas kernels --------------------------------
def _level_kernel(x_ref, w_ref, b_ref, o_ref):
    """Folded lift+mlp_i: 3 VPU FMAs + bias (no MXU — K=3 would underfill it)."""
    x = x_ref[...]                                       # (tm, 3) f32
    w = w_ref[...]                                       # (3, c_pad) f32
    y = b_ref[...] + x[:, 0:1] * w[0:1, :]
    y = y + x[:, 1:2] * w[1:2, :]
    y = y + x[:, 2:3] * w[2:3, :]
    o_ref[...] = y.astype(o_ref.dtype)


def _encoder_kernel(f1_ref, f2_ref, w_ref, b_ref, o_ref):
    """Group-max (dense load + in-register max) + 1x1 conv + residual + GELU."""
    pooled = jnp.max(f1_ref[...], axis=1)                # (tr, c1_pad) bf16
    y = jnp.dot(pooled, w_ref[...], preferred_element_type=jnp.float32)
    y = y + b_ref[...] + f2_ref[...].astype(jnp.float32)
    o_ref[...] = _gelu(y).astype(o_ref.dtype)


def _global_pool_kernel(x_ref, gw_ref, gb_ref, q1w_ref, q1b_ref, o_ref):
    """Per-batch: global conv(+folded BN)+GELU -> max over points -> q1+GELU."""
    y = jnp.dot(x_ref[...], gw_ref[...], preferred_element_type=jnp.float32)
    y = _gelu(y + gb_ref[...])
    g = jnp.max(y, axis=0, keepdims=True)                # (1, 512)
    q = jnp.dot(g.astype(jnp.bfloat16), q1w_ref[...],
                preferred_element_type=jnp.float32)
    o_ref[...] = _gelu(q + q1b_ref[...]).astype(o_ref.dtype)


def _q2_kernel(g_ref, w_ref, b_ref, o_ref):
    """q2 MLP with the (512, n_last*oc_pad) weight tiled along N."""
    g = g_ref[...][:, 0, :]                              # (B, 512) bf16
    y = jnp.dot(g, w_ref[...], preferred_element_type=jnp.float32)
    o_ref[...] = _gelu(y + b_ref[...]).astype(o_ref.dtype)


def _decoder_kernel(q_ref, skip_ref, w_ref, b_ref, slot_ref, sh_ref, hw_ref,
                    up_ref, heads_ref, *, s, gelu_cols):
    """Fused decoder: conv + skip + GELU -> interleaved factor-s upsample
    (single dense store) -> combined [fusion | pc] head (single dense store)."""
    x = q_ref[...]                                       # (tr, c_in_pad) bf16
    fused = jnp.dot(x, w_ref[...], preferred_element_type=jnp.float32)
    fused = fused + b_ref[...] + skip_ref[...].astype(jnp.float32)
    fused = _gelu(fused)                                 # (tr, c_out_pad) f32
    tr, c_out = fused.shape
    # interleaved upsample: row i*s + j = fused[i] + slot[j]  (repeat/tile form)
    slot = slot_ref[...]                                 # (s, c_out_pad) f32
    up = (fused[:, None, :] + slot[None, :, :]).reshape(tr * s, c_out)
    up_ref[...] = up.astype(up_ref.dtype)
    # combined head is linear in `up`, so apply it to `fused` only and add the
    # precomputed slot contribution (s-fold fewer MXU flops, one weight push).
    fh = jnp.dot(fused.astype(jnp.bfloat16), hw_ref[...],
                 preferred_element_type=jnp.float32)     # (tr, W)
    sh = sh_ref[...]                                     # (s, W) f32 (incl. bias)
    heads = (fh[:, None, :] + sh[None, :, :]).reshape(tr * s, hw_ref.shape[1])
    if gelu_cols > 0:                                    # GELU only on the fusion cols
        col = jax.lax.broadcasted_iota(jnp.int32, heads.shape, 1)
        heads = jnp.where(col < gelu_cols, _gelu(heads), heads)
    heads_ref[...] = heads.astype(heads_ref.dtype)


# ----------------------------- kernel wrappers --------------------------------
def level_features(pts, w, b):
    """(B, n, 3) -> (B, n, c_pad): folded lift+mlp, row-tiled parallel grid."""
    bb, nn, _ = pts.shape
    c_pad = w.shape[1]
    m = bb * nn
    x = pts.reshape(m, 3)
    tm = _pick_row_tile(m)
    out = pl.pallas_call(
        _level_kernel,
        out_shape=jax.ShapeDtypeStruct((m, c_pad), ACT_DTYPE),
        grid=(m // tm,),
        in_specs=[
            pl.BlockSpec((tm, 3), lambda i: (i, 0)),
            pl.BlockSpec(w.shape, lambda i: (0, 0)),
            pl.BlockSpec(b.shape, lambda i: (0, 0)),
        ],
        out_specs=pl.BlockSpec((tm, c_pad), lambda i: (i, 0)),
        compiler_params=pltpu.CompilerParams(dimension_semantics=("parallel",)),
    )(x, w, b)
    return out.reshape(bb, nn, c_pad)


def query_encoder(f1, f2, w, b):
    """Group-max f1 onto f2's resolution, project, add residual f2, GELU."""
    bb, n1, c1 = f1.shape
    _, n2, c2p = f2.shape
    group = n1 // n2
    f1g = f1.reshape(bb, n2, group, c1)    # contiguous row-major -> free reshape
    tr = _pick_row_tile(n2, cap=512, min_steps=2)
    return pl.pallas_call(
        _encoder_kernel,
        out_shape=jax.ShapeDtypeStruct((bb, n2, c2p), ACT_DTYPE),
        grid=(bb, n2 // tr),
        in_specs=[
            pl.BlockSpec((None, tr, group, c1), lambda bi, r: (bi, r, 0, 0)),
            pl.BlockSpec((None, tr, c2p), lambda bi, r: (bi, r, 0)),
            pl.BlockSpec(w.shape, lambda bi, r: (0, 0)),
            pl.BlockSpec(b.shape, lambda bi, r: (0, 0)),
        ],
        out_specs=pl.BlockSpec((None, tr, c2p), lambda bi, r: (bi, r, 0)),
        compiler_params=pltpu.CompilerParams(
            dimension_semantics=("parallel", "parallel")),
    )(f1g, f2, w, b)


def global_pool(x, gw, gb, q1w, q1b):
    """(B, n, c) -> (B, 1, 512): global conv+GELU+max then q1+GELU, per batch."""
    bb, n, c = x.shape
    return pl.pallas_call(
        _global_pool_kernel,
        out_shape=jax.ShapeDtypeStruct((bb, 1, GLOBAL_DIM), ACT_DTYPE),
        grid=(bb,),
        in_specs=[
            pl.BlockSpec((None, n, c), lambda i: (i, 0, 0)),
            pl.BlockSpec(gw.shape, lambda i: (0, 0)),
            pl.BlockSpec(gb.shape, lambda i: (0, 0)),
            pl.BlockSpec(q1w.shape, lambda i: (0, 0)),
            pl.BlockSpec(q1b.shape, lambda i: (0, 0)),
        ],
        out_specs=pl.BlockSpec((None, 1, GLOBAL_DIM), lambda i: (i, 0, 0)),
        compiler_params=pltpu.CompilerParams(dimension_semantics=("parallel",)),
    )(x, gw, gb, q1w, q1b)


def query_mlp(g1, q2w, q2b):
    """q2: (B, 512) @ (512, n_last*oc_pad), weight N-tiled so it pipelines and
    fits VMEM at production scale (explicit vmem limit, lane-dense tiles)."""
    bb = g1.shape[0]
    qdim = q2w.shape[1]
    tn = _pick_col_tile(qdim, cap=1024, min_steps=4)
    return pl.pallas_call(
        _q2_kernel,
        out_shape=jax.ShapeDtypeStruct((bb, qdim), ACT_DTYPE),
        grid=(qdim // tn,),
        in_specs=[
            pl.BlockSpec(g1.shape, lambda j: (0, 0, 0)),
            pl.BlockSpec((GLOBAL_DIM, tn), lambda j: (0, j)),
            pl.BlockSpec((1, tn), lambda j: (0, j)),
        ],
        out_specs=pl.BlockSpec((bb, tn), lambda j: (0, j)),
        compiler_params=pltpu.CompilerParams(
            dimension_semantics=("parallel",),
            vmem_limit_bytes=32 * 1024 * 1024),
    )(g1, q2w, q2b)


def query_decoder(q, skip, w, b, slot, slot_head, head_w, *, s, c2, gelu_cols):
    """Returns (up (B,n*s,c_out_pad), pc (B,n*s,3), h2 (B,n*s,c2))."""
    bb, n_in, c_in_pad = q.shape
    c_out_pad = w.shape[1]
    wdim = head_w.shape[1]
    tr = _pick_row_tile(n_in, cap=512, min_steps=2)
    kernel = functools.partial(_decoder_kernel, s=s, gelu_cols=gelu_cols)
    up, heads = pl.pallas_call(
        kernel,
        out_shape=(
            jax.ShapeDtypeStruct((bb, n_in * s, c_out_pad), ACT_DTYPE),
            jax.ShapeDtypeStruct((bb, n_in * s, wdim), OUT_DTYPE),
        ),
        grid=(bb, n_in // tr),
        in_specs=[
            pl.BlockSpec((None, tr, c_in_pad), lambda bi, r: (bi, r, 0)),
            pl.BlockSpec((None, tr, c_out_pad), lambda bi, r: (bi, r, 0)),
            pl.BlockSpec(w.shape, lambda bi, r: (0, 0)),
            pl.BlockSpec(b.shape, lambda bi, r: (0, 0)),
            pl.BlockSpec(slot.shape, lambda bi, r: (0, 0)),
            pl.BlockSpec(slot_head.shape, lambda bi, r: (0, 0)),
            pl.BlockSpec(head_w.shape, lambda bi, r: (0, 0)),
        ],
        out_specs=(
            pl.BlockSpec((None, tr * s, c_out_pad), lambda bi, r: (bi, r, 0)),
            pl.BlockSpec((None, tr * s, wdim), lambda bi, r: (bi, r, 0)),
        ),
        compiler_params=pltpu.CompilerParams(
            dimension_semantics=("parallel", "parallel")),
    )(q, skip, w, b, slot, slot_head, head_w)
    pc = heads[..., c2:c2 + 3]      # 3-lane point head, sliced from dense store
    h2 = heads[..., :c2]            # fusion head (coarse_fused / preds)
    return up, pc, h2


# ----------------------------- parameters ------------------------------------
def init_params(key):
    params = {}
    keys = iter(jax.random.split(key, 64))

    def lin(cin, cout):
        kw, kb = next(keys), next(keys)
        w = jax.random.normal(kw, (cin, cout), jnp.float32) / math.sqrt(cin)
        b = jax.random.normal(kb, (cout,), jnp.float32).reshape(1, cout) * 0.01
        return w, b

    def pad_cols(a, total):
        return jnp.pad(a, ((0, 0), (0, total - a.shape[1])))

    def pad_rows(a, total):
        return jnp.pad(a, ((0, total - a.shape[0]), (0, 0)))

    # levels: lift (3->c_i) and mlp_i (c_i->oc_i) fold into one (3->oc_pad) map
    # (no nonlinearity between them in the stand-in) -> pure VPU kernel.
    for i in range(NUM_PC):
        c_i = CHANNELS[0] * 2 ** i
        wl, bl = lin(3, c_i)
        wm, bm = lin(c_i, OUT_CHANNELS[i])
        params[f"level_{i}_w"] = pad_cols(wl @ wm, OUT_PAD[i])          # f32 (VPU)
        params[f"level_{i}_b"] = pad_cols(bl @ wm + bm, OUT_PAD[i])     # f32

    for i in range(NUM_PC - 1):
        w, b = lin(OUT_CHANNELS[i], OUT_CHANNELS[i + 1])
        w = pad_rows(pad_cols(w, OUT_PAD[i + 1]), OUT_PAD[i])
        params[f"enc_{i}_w"] = w.astype(WEIGHT_DTYPE)
        params[f"enc_{i}_b"] = pad_cols(b, OUT_PAD[i + 1])

    gw, gb = _fold_bn(*lin(OUT_CHANNELS[-1], GLOBAL_DIM))
    params["global_w"] = pad_rows(gw, OUT_PAD[-1]).astype(WEIGHT_DTYPE)
    params["global_b"] = gb
    w, b = lin(GLOBAL_DIM, GLOBAL_DIM)
    params["q1_w"], params["q1_b"] = w.astype(WEIGHT_DTYPE), b

    # q2 weight laid out per-point with zero-padded channels so the (B, n, oc_pad)
    # reshape of its output keeps pad channels exactly zero.
    n_last, oc_last, oc_pad = NUM_POINTS_LIST[-1], OUT_CHANNELS[-1], OUT_PAD[-1]
    w, b = lin(GLOBAL_DIM, n_last * oc_last)
    w = jnp.pad(w.reshape(GLOBAL_DIM, n_last, oc_last),
                ((0, 0), (0, 0), (0, oc_pad - oc_last)))
    b = jnp.pad(b.reshape(1, n_last, oc_last),
                ((0, 0), (0, 0), (0, oc_pad - oc_last)))
    params["q2_w"] = w.reshape(GLOBAL_DIM, n_last * oc_pad).astype(WEIGHT_DTYPE)
    params["q2_b"] = b.reshape(1, n_last * oc_pad)

    full_np = [NUM_POINTS, *NUM_POINTS_LIST]           # [64, 32, 16]
    out_ext = [*OUT_CHANNELS, OUT_CHANNELS[-1]]        # [96, 192, 192]
    out_ext_pad = [*OUT_PAD, OUT_PAD[-1]]              # [128, 256, 256]
    for i in range(NUM_PC, 0, -1):                     # i = 2 (coarse), 1 (fine)
        c_in, c_out = out_ext[i], out_ext[i - 1]
        c_in_p, c_out_p = out_ext_pad[i], out_ext_pad[i - 1]
        s = full_np[i - 1] // full_np[i]
        w, b = lin(c_in, c_out)
        params[f"dec_{i}_w"] = pad_rows(pad_cols(w, c_out_p), c_in_p).astype(WEIGHT_DTYPE)
        params[f"dec_{i}_b"] = pad_cols(b, c_out_p)
        slot = jax.random.normal(next(keys), (s, c_out), jnp.float32) * 0.01
        slot = pad_cols(slot, c_out_p)
        params[f"dec_{i}_slot"] = slot                 # f32 (VPU add)

        # combined head RHS: cols [0:c2) = fusion head, [c2:c2+3) = pc head.
        pcw, pcb = lin(c_out, 3)
        if i == NUM_PC:
            h2w, h2b = _fold_bn(*lin(c_out, out_ext[i]))    # fusion_2 (GELU)
            c2 = out_ext[i]
        else:
            h2w, h2b = lin(c_out, 3)                        # fusion_final (preds)
            c2 = 3
        wdim = _pad128(c2 + 3)
        hw = jnp.zeros((c_out, wdim), jnp.float32)
        hw = hw.at[:, :c2].set(h2w).at[:, c2:c2 + 3].set(pcw)
        hb = jnp.zeros((1, wdim), jnp.float32)
        hb = hb.at[:, :c2].set(h2b).at[:, c2:c2 + 3].set(pcb)
        hw = pad_rows(hw, c_out_p)
        params[f"dec_{i}_head_w"] = hw.astype(WEIGHT_DTYPE)
        # head is linear -> precompute the slot contribution (+bias) at init.
        params[f"dec_{i}_slot_head"] = slot @ hw + hb       # (s, wdim) f32
    return params


# ----------------------------- forward ---------------------------------------
def complete_dt_forward(params, points):
    """points: (B, NUM_POINTS, 3) -> dict of coarse-to-fine point predictions."""
    bb = points.shape[0]

    # ---- input_module + per-level folded lift+mlp kernels --------------------
    # TODO(synk): the reference input_module (FPS sampling + ball grouping) is
    # an external builder; stand-in = stride subsampling + linear lift.
    feats_list = []
    prev_pts = points
    for i, n_i in enumerate(NUM_POINTS_LIST):
        stride = prev_pts.shape[1] // n_i
        pts_i = prev_pts[:, ::stride, :][:, :n_i, :]
        feats_list.append(level_features(
            pts_i, params[f"level_{i}_w"], params[f"level_{i}_b"]))
        prev_pts = pts_i

    # ---- query encoders (group-max + conv + residual + GELU) -----------------
    # TODO(synk): reference query_encoder is an external builder; stand-in =
    # group-max-pool fine feats onto the coarse level, project, residual add.
    for i in range(NUM_PC - 1):
        feats_list[i + 1] = query_encoder(
            feats_list[i], feats_list[i + 1],
            params[f"enc_{i}_w"], params[f"enc_{i}_b"])

    # ---- global feature + query generation ------------------------------------
    g1 = global_pool(feats_list[-1], params["global_w"], params["global_b"],
                     params["q1_w"], params["q1_b"])           # (B, 1, 512)
    q = query_mlp(g1, params["q2_w"], params["q2_b"])          # (B, n_last*oc_pad)
    query_feats = q.reshape(bb, NUM_POINTS_LIST[-1], OUT_PAD[-1])

    # ---- query decoders + fused heads (one kernel per level) ------------------
    # TODO(synk): reference query_decoder is an external builder and forward()
    # indexes decoders inconsistently with __init__; stand-in = channel
    # projection + skip fusion + factor-s slot upsampling + point head, with the
    # per-level fusion conv fused in as the second head of one combined matmul.
    preds_dict = {}
    full_np = [NUM_POINTS, *NUM_POINTS_LIST]
    head_cfg = {
        NUM_PC: (OUT_CHANNELS[-1], "gelu", "coarse_fused"),
        1: (3, "none", "preds"),
    }
    for i in range(NUM_PC, 0, -1):                     # i = 2 (coarse), 1 (fine)
        skip = feats_list[i - 1]
        s = full_np[i - 1] // full_np[i]
        c2, act, name = head_cfg[i]
        up, pc, h2 = query_decoder(
            query_feats, skip,
            params[f"dec_{i}_w"], params[f"dec_{i}_b"],
            params[f"dec_{i}_slot"], params[f"dec_{i}_slot_head"],
            params[f"dec_{i}_head_w"],
            s=s, c2=c2, gelu_cols=c2 if act == "gelu" else 0)
        preds_dict[f"level_{i}"] = pc                  # (B, n_in*s, 3)
        preds_dict[name] = h2
        query_feats = up
    return preds_dict


# ----------------------------- main ------------------------------------------
if __name__ == "__main__":
    key = jax.random.PRNGKey(0)
    pkey, xkey = jax.random.split(key)
    params = init_params(pkey)
    points = jax.random.normal(xkey, (B, NUM_POINTS, 3), jnp.float32)
    preds = jax.jit(complete_dt_forward)(params, points)
    jax.block_until_ready(preds)
    assert preds["preds"].shape == (B, NUM_POINTS, 3)
    assert preds["level_2"].shape == (B, 2 * NUM_POINTS_LIST[-1], 3)
    assert preds["level_1"].shape == (B, NUM_POINTS, 3)
    assert preds["coarse_fused"].shape == (B, 2 * NUM_POINTS_LIST[-1], OUT_CHANNELS[-1])
    print("KERNEL_OK")
</pallas_src>

<mosaic_0001>
module attributes {stable_mosaic.version = 11 : i64} {
  func.func @_level_kernel(%arg0: i32, %arg1: memref<16x3xf32, #tpu.memory_space<vmem>>, %arg2: memref<3x128xf32, #tpu.memory_space<vmem>>, %arg3: memref<1x128xf32, #tpu.memory_space<vmem>>, %arg4: memref<16x128xbf16, #tpu.memory_space<vmem>>) attributes {dimension_semantics = [#tpu.dimension_semantics<parallel>], iteration_bounds = array<i64: 4>, scalar_prefetch = 0 : i64, scratch_operands = 0 : i64, tpu.core_type = #tpu.core_type<tc>, window_params = [{transform_indices = @transform_0, window_bounds = array<i64: 16, 3>}, {pipeline_mode = #tpu.pipeline_mode<synchronous>, transform_indices = @transform_1, window_bounds = array<i64: 3, 128>}, {pipeline_mode = #tpu.pipeline_mode<synchronous>, transform_indices = @transform_2, window_bounds = array<i64: 1, 128>}, {transform_indices = @transform_3, window_bounds = array<i64: 16, 128>}]} {
    %c0 = arith.constant 0 : index
    %c0_0 = arith.constant 0 : index
    %0 = vector.load %arg1[%c0, %c0_0] : memref<16x3xf32, #tpu.memory_space<vmem>>, vector<16x3xf32>
    %c0_1 = arith.constant 0 : index
    %c0_2 = arith.constant 0 : index
    %1 = vector.load %arg2[%c0_1, %c0_2] : memref<3x128xf32, #tpu.memory_space<vmem>>, vector<3x128xf32>
    %c0_3 = arith.constant 0 : index
    %c0_4 = arith.constant 0 : index
    %2 = vector.load %arg3[%c0_3, %c0_4] : memref<1x128xf32, #tpu.memory_space<vmem>>, vector<1x128xf32>
    %3 = vector.extract_strided_slice %0 {offsets = [0, 0], sizes = [16, 1], strides = [1, 1]} : vector<16x3xf32> to vector<16x1xf32>
    %4 = vector.extract_strided_slice %1 {offsets = [0, 0], sizes = [1, 128], strides = [1, 1]} : vector<3x128xf32> to vector<1x128xf32>
    %5 = vector.broadcast %3 : vector<16x1xf32> to vector<16x128xf32>
    %6 = vector.broadcast %4 : vector<1x128xf32> to vector<16x128xf32>
    %7 = arith.mulf %5, %6 : vector<16x128xf32>
    %8 = vector.broadcast %2 : vector<1x128xf32> to vector<16x128xf32>
    %9 = arith.addf %8, %7 : vector<16x128xf32>
    %10 = vector.extract_strided_slice %0 {offsets = [0, 1], sizes = [16, 1], strides = [1, 1]} : vector<16x3xf32> to vector<16x1xf32>
    %11 = vector.extract_strided_slice %1 {offsets = [1, 0], sizes = [1, 128], strides = [1, 1]} : vector<3x128xf32> to vector<1x128xf32>
    %12 = vector.broadcast %10 : vector<16x1xf32> to vector<16x128xf32>
    %13 = vector.broadcast %11 : vector<1x128xf32> to vector<16x128xf32>
    %14 = arith.mulf %12, %13 : vector<16x128xf32>
    %15 = arith.addf %9, %14 : vector<16x128xf32>
    %16 = vector.extract_strided_slice %0 {offsets = [0, 2], sizes = [16, 1], strides = [1, 1]} : vector<16x3xf32> to vector<16x1xf32>
    %17 = vector.extract_strided_slice %1 {offsets = [2, 0], sizes = [1, 128], strides = [1, 1]} : vector<3x128xf32> to vector<1x128xf32>
    %18 = vector.broadcast %16 : vector<16x1xf32> to vector<16x128xf32>
    %19 = vector.broadcast %17 : vector<1x128xf32> to vector<16x128xf32>
    %20 = arith.mulf %18, %19 : vector<16x128xf32>
    %21 = arith.addf %15, %20 : vector<16x128xf32>
    %22 = arith.truncf %21 : vector<16x128xf32> to vector<16x128xbf16>
    %c0_5 = arith.constant 0 : index
    %c0_6 = arith.constant 0 : index
    %23 = vector.load %arg4[%c0_5, %c0_6] : memref<16x128xbf16, #tpu.memory_space<vmem>>, vector<16x128xbf16>
    tpu.vector_store %arg4[%c0_5, %c0_6], %22 {strides = array<i32>} : memref<16x128xbf16, #tpu.memory_space<vmem>>, vector<16x128xbf16>,
    return
  }
  func.func @transform_0(%arg0: i32) -> (i32, i32) {
    %c0_i32 = arith.constant 0 : i32
    %c0_i32_0 = arith.constant 0 : i32
    return %arg0, %c0_i32 : i32, i32
  }
  func.func @transform_1(%arg0: i32) -> (i32, i32) {
    %c0_i32 = arith.constant 0 : i32
    %c0_i32_0 = arith.constant 0 : i32
    %c0_i32_1 = arith.constant 0 : i32
    return %c0_i32, %c0_i32_0 : i32, i32
  }
  func.func @transform_2(%arg0: i32) -> (i32, i32) {
    %c0_i32 = arith.constant 0 : i32
    %c0_i32_0 = arith.constant 0 : i32
    %c0_i32_1 = arith.constant 0 : i32
    return %c0_i32, %c0_i32_0 : i32, i32
  }
  func.func @transform_3(%arg0: i32) -> (i32, i32) {
    %c0_i32 = arith.constant 0 : i32
    %c0_i32_0 = arith.constant 0 : i32
    return %arg0, %c0_i32 : i32, i32
  }
}

module attributes {stable_mosaic.version = 11 : i64} {
  func.func @_encoder_kernel(%arg0: i32, %arg1: i32, %arg2: memref<1x8x2x128xbf16, #tpu.memory_space<vmem>>, %arg3: memref<1x8x256xbf16, #tpu.memory_space<vmem>>, %arg4: memref<128x256xbf16, #tpu.memory_space<vmem>>, %arg5: memref<1x256xf32, #tpu.memory_space<vmem>>, %arg6: memref<1x8x256xbf16, #tpu.memory_space<vmem>>) attributes {dimension_semantics = [#tpu.dimension_semantics<parallel>, #tpu.dimension_semantics<parallel>], iteration_bounds = array<i64: 2, 2>, scalar_prefetch = 0 : i64, scratch_operands = 0 : i64, tpu.core_type = #tpu.core_type<tc>, window_params = [{transform_indices = @transform_0, window_bounds = array<i64: 1, 8, 2, 128>}, {transform_indices = @transform_1, window_bounds = array<i64: 1, 8, 256>}, {pipeline_mode = #tpu.pipeline_mode<synchronous>, transform_indices = @transform_2, window_bounds = array<i64: 128, 256>}, {pipeline_mode = #tpu.pipeline_mode<synchronous>, transform_indices = @transform_3, window_bounds = array<i64: 1, 256>}, {transform_indices = @transform_4, window_bounds = array<i64: 1, 8, 256>}]} {
    %c0 = arith.constant 0 : index
    %c0_0 = arith.constant 0 : index
    %c0_1 = arith.constant 0 : index
    %c0_2 = arith.constant 0 : index
    %0 = vector.load %arg2[%c0, %c0_0, %c0_1, %c0_2] : memref<1x8x2x128xbf16, #tpu.memory_space<vmem>>, vector<1x8x2x128xbf16>
    %1 = vector.shape_cast %0 : vector<1x8x2x128xbf16> to vector<8x2x128xbf16>
    %cst = arith.constant dense<0xFF80> : vector<8x128xbf16>
    %2 = vector.multi_reduction <maximumf>, %1, %cst [1] : vector<8x2x128xbf16> to vector<8x128xbf16>
    %c0_3 = arith.constant 0 : index
    %c0_4 = arith.constant 0 : index
    %3 = vector.load %arg4[%c0_3, %c0_4] : memref<128x256xbf16, #tpu.memory_space<vmem>>, vector<128x256xbf16>
    %cst_5 = arith.constant dense<0.000000e+00> : vector<8x256xf32>
    %4 = tpu.matmul %2, %3, %cst_5 {dimension_numbers = #tpu.dot_dimension_numbers<[1], [0], [0], [1], [0, 0, 1, 1], [], []>} : vector<8x128xbf16>, vector<128x256xbf16>, vector<8x256xf32> -> vector<8x256xf32>
    %c0_6 = arith.constant 0 : index
    %c0_7 = arith.constant 0 : index
    %5 = vector.load %arg5[%c0_6, %c0_7] : memref<1x256xf32, #tpu.memory_space<vmem>>, vector<1x256xf32>
    %6 = vector.broadcast %5 : vector<1x256xf32> to vector<8x256xf32>
    %7 = arith.addf %4, %6 : vector<8x256xf32>
    %c0_8 = arith.constant 0 : index
    %c0_9 = arith.constant 0 : index
    %c0_10 = arith.constant 0 : index
    %8 = vector.load %arg3[%c0_8, %c0_9, %c0_10] : memref<1x8x256xbf16, #tpu.memory_space<vmem>>, vector<1x8x256xbf16>
    %9 = vector.shape_cast %8 : vector<1x8x256xbf16> to vector<8x256xbf16>
    %10 = arith.extf %9 : vector<8x256xbf16> to vector<8x256xf32>
    %11 = arith.addf %7, %10 : vector<8x256xf32>
    %cst_11 = arith.constant 5.000000e-01 : f32
    %12 = vector.broadcast %cst_11 : f32 to vector<8x256xf32>
    %13 = arith.mulf %12, %11 : vector<8x256xf32>
    %cst_12 = arith.constant 4.471500e-02 : f32
    %14 = vector.broadcast %cst_12 : f32 to vector<8x256xf32>
    %15 = arith.mulf %14, %11 : vector<8x256xf32>
    %16 = arith.mulf %15, %11 : vector<8x256xf32>
    %17 = arith.mulf %16, %11 : vector<8x256xf32>
    %18 = arith.addf %11, %17 : vector<8x256xf32>
    %cst_13 = arith.constant 0.797884583 : f32
    %19 = vector.broadcast %cst_13 : f32 to vector<8x256xf32>
    %20 = arith.mulf %19, %18 : vector<8x256xf32>
    %21 = math.tanh %20 : vector<8x256xf32>
    %cst_14 = arith.constant 1.000000e+00 : f32
    %22 = vector.broadcast %cst_14 : f32 to vector<8x256xf32>
    %23 = arith.addf %22, %21 : vector<8x256xf32>
    %24 = arith.mulf %13, %23 : vector<8x256xf32>
    %25 = arith.truncf %24 : vector<8x256xf32> to vector<8x256xbf16>
    %c0_15 = arith.constant 0 : index
    %c0_16 = arith.constant 0 : index
    %c0_17 = arith.constant 0 : index
    %26 = vector.load %arg6[%c0_15, %c0_16, %c0_17] : memref<1x8x256xbf16, #tpu.memory_space<vmem>>, vector<1x8x256xbf16>
    %27 = vector.shape_cast %26 : vector<1x8x256xbf16> to vector<8x256xbf16>
    %28 = vector.shape_cast %25 : vector<8x256xbf16> to vector<1x8x256xbf16>
    tpu.vector_store %arg6[%c0_15, %c0_16, %c0_17], %28 {strides = array<i32>} : memref<1x8x256xbf16, #tpu.memory_space<vmem>>, vector<1x8x256xbf16>,
    return
  }
  func.func @transform_0(%arg0: i32, %arg1: i32) -> (i32, i32, i32, i32) {
    %c0_i32 = arith.constant 0 : i32
    %c0_i32_0 = arith.constant 0 : i32
    %c0_i32_1 = arith.constant 0 : i32
    return %arg0, %arg1, %c0_i32, %c0_i32_0 : i32, i32, i32, i32
  }
  func.func @transform_1(%arg0: i32, %arg1: i32) -> (i32, i32, i32) {
    %c0_i32 = arith.constant 0 : i32
    %c0_i32_0 = arith.constant 0 : i32
    return %arg0, %arg1, %c0_i32 : i32, i32, i32
  }
  func.func @transform_2(%arg0: i32, %arg1: i32) -> (i32, i32) {
    %c0_i32 = arith.constant 0 : i32
    %c0_i32_0 = arith.constant 0 : i32
    %c0_i32_1 = arith.constant 0 : i32
    return %c0_i32, %c0_i32_0 : i32, i32
  }
  func.func @transform_3(%arg0: i32, %arg1: i32) -> (i32, i32) {
    %c0_i32 = arith.constant 0 : i32
    %c0_i32_0 = arith.constant 0 : i32
    %c0_i32_1 = arith.constant 0 : i32
    return %c0_i32, %c0_i32_0 : i32, i32
  }
  func.func @transform_4(%arg0: i32, %arg1: i32) -> (i32, i32, i32) {
    %c0_i32 = arith.constant 0 : i32
    %c0_i32_0 = arith.constant 0 : i32
    return %arg0, %arg1, %c0_i32 : i32, i32, i32
  }
}

module attributes {stable_mosaic.version = 11 : i64} {
  func.func @_level_kernel(%arg0: i32, %arg1: memref<8x3xf32, #tpu.memory_space<vmem>>, %arg2: memref<3x256xf32, #tpu.memory_space<vmem>>, %arg3: memref<1x256xf32, #tpu.memory_space<vmem>>, %arg4: memref<8x256xbf16, #tpu.memory_space<vmem>>) attributes {dimension_semantics = [#tpu.dimension_semantics<parallel>], iteration_bounds = array<i64: 4>, scalar_prefetch = 0 : i64, scratch_operands = 0 : i64, tpu.core_type = #tpu.core_type<tc>, window_params = [{transform_indices = @transform_0, window_bounds = array<i64: 8, 3>}, {pipeline_mode = #tpu.pipeline_mode<synchronous>, transform_indices = @transform_1, window_bounds = array<i64: 3, 256>}, {pipeline_mode = #tpu.pipeline_mode<synchronous>, transform_indices = @transform_2, window_bounds = array<i64: 1, 256>}, {transform_indices = @transform_3, window_bounds = array<i64: 8, 256>}]} {
    %c0 = arith.constant 0 : index
    %c0_0 = arith.constant 0 : index
    %0 = vector.load %arg1[%c0, %c0_0] : memref<8x3xf32, #tpu.memory_space<vmem>>, vector<8x3xf32>
    %c0_1 = arith.constant 0 : index
    %c0_2 = arith.constant 0 : index
    %1 = vector.load %arg2[%c0_1, %c0_2] : memref<3x256xf32, #tpu.memory_space<vmem>>, vector<3x256xf32>
    %c0_3 = arith.constant 0 : index
    %c0_4 = arith.constant 0 : index
    %2 = vector.load %arg3[%c0_3, %c0_4] : memref<1x256xf32, #tpu.memory_space<vmem>>, vector<1x256xf32>
    %3 = vector.extract_strided_slice %0 {offsets = [0, 0], sizes = [8, 1], strides = [1, 1]} : vector<8x3xf32> to vector<8x1xf32>
    %4 = vector.extract_strided_slice %1 {offsets = [0, 0], sizes = [1, 256], strides = [1, 1]} : vector<3x256xf32> to vector<1x256xf32>
    %5 = vector.broadcast %3 : vector<8x1xf32> to vector<8x256xf32>
    %6 = vector.broadcast %4 : vector<1x256xf32> to vector<8x256xf32>
    %7 = arith.mulf %5, %6 : vector<8x256xf32>
    %8 = vector.broadcast %2 : vector<1x256xf32> to vector<8x256xf32>
    %9 = arith.addf %8, %7 : vector<8x256xf32>
    %10 = vector.extract_strided_slice %0 {offsets = [0, 1], sizes = [8, 1], strides = [1, 1]} : vector<8x3xf32> to vector<8x1xf32>
    %11 = vector.extract_strided_slice %1 {offsets = [1, 0], sizes = [1, 256], strides = [1, 1]} : vector<3x256xf32> to vector<1x256xf32>
    %12 = vector.broadcast %10 : vector<8x1xf32> to vector<8x256xf32>
    %13 = vector.broadcast %11 : vector<1x256xf32> to vector<8x256xf32>
    %14 = arith.mulf %12, %13 : vector<8x256xf32>
    %15 = arith.addf %9, %14 : vector<8x256xf32>
    %16 = vector.extract_strided_slice %0 {offsets = [0, 2], sizes = [8, 1], strides = [1, 1]} : vector<8x3xf32> to vector<8x1xf32>
    %17 = vector.extract_strided_slice %1 {offsets = [2, 0], sizes = [1, 256], strides = [1, 1]} : vector<3x256xf32> to vector<1x256xf32>
    %18 = vector.broadcast %16 : vector<8x1xf32> to vector<8x256xf32>
    %19 = vector.broadcast %17 : vector<1x256xf32> to vector<8x256xf32>
    %20 = arith.mulf %18, %19 : vector<8x256xf32>
    %21 = arith.addf %15, %20 : vector<8x256xf32>
    %22 = arith.truncf %21 : vector<8x256xf32> to vector<8x256xbf16>
    %c0_5 = arith.constant 0 : index
    %c0_6 = arith.constant 0 : index
    %23 = vector.load %arg4[%c0_5, %c0_6] : memref<8x256xbf16, #tpu.memory_space<vmem>>, vector<8x256xbf16>
    tpu.vector_store %arg4[%c0_5, %c0_6], %22 {strides = array<i32>} : memref<8x256xbf16, #tpu.memory_space<vmem>>, vector<8x256xbf16>,
    return
  }
  func.func @transform_0(%arg0: i32) -> (i32, i32) {
    %c0_i32 = arith.constant 0 : i32
    %c0_i32_0 = arith.constant 0 : i32
    return %arg0, %c0_i32 : i32, i32
  }
  func.func @transform_1(%arg0: i32) -> (i32, i32) {
    %c0_i32 = arith.constant 0 : i32
    %c0_i32_0 = arith.constant 0 : i32
    %c0_i32_1 = arith.constant 0 : i32
    return %c0_i32, %c0_i32_0 : i32, i32
  }
  func.func @transform_2(%arg0: i32) -> (i32, i32) {
    %c0_i32 = arith.constant 0 : i32
    %c0_i32_0 = arith.constant 0 : i32
    %c0_i32_1 = arith.constant 0 : i32
    return %c0_i32, %c0_i32_0 : i32, i32
  }
  func.func @transform_3(%arg0: i32) -> (i32, i32) {
    %c0_i32 = arith.constant 0 : i32
    %c0_i32_0 = arith.constant 0 : i32
    return %arg0, %c0_i32 : i32, i32
  }
}

module attributes {stable_mosaic.version = 11 : i64} {
  func.func @_global_pool_kernel(%arg0: i32, %arg1: memref<1x16x256xbf16, #tpu.memory_space<vmem>>, %arg2: memref<256x512xbf16, #tpu.memory_space<vmem>>, %arg3: memref<1x512xf32, #tpu.memory_space<vmem>>, %arg4: memref<512x512xbf16, #tpu.memory_space<vmem>>, %arg5: memref<1x512xf32, #tpu.memory_space<vmem>>, %arg6: memref<1x1x512xbf16, #tpu.memory_space<vmem>>) attributes {dimension_semantics = [#tpu.dimension_semantics<parallel>], iteration_bounds = array<i64: 2>, scalar_prefetch = 0 : i64, scratch_operands = 0 : i64, tpu.core_type = #tpu.core_type<tc>, window_params = [{transform_indices = @transform_0, window_bounds = array<i64: 1, 16, 256>}, {pipeline_mode = #tpu.pipeline_mode<synchronous>, transform_indices = @transform_1, window_bounds = array<i64: 256, 512>}, {pipeline_mode = #tpu.pipeline_mode<synchronous>, transform_indices = @transform_2, window_bounds = array<i64: 1, 512>}, {pipeline_mode = #tpu.pipeline_mode<synchronous>, transform_indices = @transform_3, window_bounds = array<i64: 512, 512>}, {pipeline_mode = #tpu.pipeline_mode<synchronous>, transform_indices = @transform_4, window_bounds = array<i64: 1, 512>}, {transform_indices = @transform_5, window_bounds = array<i64: 1, 1, 512>}]} {
    %c0 = arith.constant 0 : index
    %c0_0 = arith.constant 0 : index
    %c0_1 = arith.constant 0 : index
    %0 = vector.load %arg1[%c0, %c0_0, %c0_1] : memref<1x16x256xbf16, #tpu.memory_space<vmem>>, vector<1x16x256xbf16>
    %1 = vector.shape_cast %0 : vector<1x16x256xbf16> to vector<16x256xbf16>
    %c0_2 = arith.constant 0 : index
    %c0_3 = arith.constant 0 : index
    %2 = vector.load %arg2[%c0_2, %c0_3] : memref<256x512xbf16, #tpu.memory_space<vmem>>, vector<256x512xbf16>
    %cst = arith.constant dense<0.000000e+00> : vector<16x512xf32>
    %3 = tpu.matmul %1, %2, %cst {dimension_numbers = #tpu.dot_dimension_numbers<[1], [0], [0], [1], [0, 0, 1, 1], [], []>} : vector<16x256xbf16>, vector<256x512xbf16>, vector<16x512xf32> -> vector<16x512xf32>
    %c0_4 = arith.constant 0 : index
    %c0_5 = arith.constant 0 : index
    %4 = vector.load %arg3[%c0_4, %c0_5] : memref<1x512xf32, #tpu.memory_space<vmem>>, vector<1x512xf32>
    %5 = vector.broadcast %4 : vector<1x512xf32> to vector<16x512xf32>
    %6 = arith.addf %3, %5 : vector<16x512xf32>
    %cst_6 = arith.constant 5.000000e-01 : f32
    %7 = vector.broadcast %cst_6 : f32 to vector<16x512xf32>
    %8 = arith.mulf %7, %6 : vector<16x512xf32>
    %cst_7 = arith.constant 4.471500e-02 : f32
    %9 = vector.broadcast %cst_7 : f32 to vector<16x512xf32>
    %10 = arith.mulf %9, %6 : vector<16x512xf32>
    %11 = arith.mulf %10, %6 : vector<16x512xf32>
    %12 = arith.mulf %11, %6 : vector<16x512xf32>
    %13 = arith.addf %6, %12 : vector<16x512xf32>
    %cst_8 = arith.constant 0.797884583 : f32
    %14 = vector.broadcast %cst_8 : f32 to vector<16x512xf32>
    %15 = arith.mulf %14, %13 : vector<16x512xf32>
    %16 = math.tanh %15 : vector<16x512xf32>
    %cst_9 = arith.constant 1.000000e+00 : f32
    %17 = vector.broadcast %cst_9 : f32 to vector<16x512xf32>
    %18 = arith.addf %17, %16 : vector<16x512xf32>
    %19 = arith.mulf %8, %18 : vector<16x512xf32>
    %cst_10 = arith.constant dense<0xFF800000> : vector<512xf32>
    %20 = vector.multi_reduction <maximumf>, %19, %cst_10 [0] : vector<16x512xf32> to vector<512xf32>
    %21 = vector.shape_cast %20 : vector<512xf32> to vector<1x512xf32>
    %22 = arith.truncf %21 : vector<1x512xf32> to vector<1x512xbf16>
    %c0_11 = arith.constant 0 : index
    %c0_12 = arith.constant 0 : index
    %23 = vector.load %arg4[%c0_11, %c0_12] : memref<512x512xbf16, #tpu.memory_space<vmem>>, vector<512x512xbf16>
    %cst_13 = arith.constant dense<0.000000e+00> : vector<1x512xf32>
    %24 = tpu.matmul %22, %23, %cst_13 {dimension_numbers = #tpu.dot_dimension_numbers<[1], [0], [0], [1], [0, 0, 1, 1], [], []>} : vector<1x512xbf16>, vector<512x512xbf16>, vector<1x512xf32> -> vector<1x512xf32>
    %c0_14 = arith.constant 0 : index
    %c0_15 = arith.constant 0 : index
    %25 = vector.load %arg5[%c0_14, %c0_15] : memref<1x512xf32, #tpu.memory_space<vmem>>, vector<1x512xf32>
    %26 = arith.addf %24, %25 : vector<1x512xf32>
    %cst_16 = arith.constant 5.000000e-01 : f32
    %27 = vector.broadcast %cst_16 : f32 to vector<1x512xf32>
    %28 = arith.mulf %27, %26 : vector<1x512xf32>
    %cst_17 = arith.constant 4.471500e-02 : f32
    %29 = vector.broadcast %cst_17 : f32 to vector<1x512xf32>
    %30 = arith.mulf %29, %26 : vector<1x512xf32>
    %31 = arith.mulf %30, %26 : vector<1x512xf32>
    %32 = arith.mulf %31, %26 : vector<1x512xf32>
    %33 = arith.addf %26, %32 : vector<1x512xf32>
    %cst_18 = arith.constant 0.797884583 : f32
    %34 = vector.broadcast %cst_18 : f32 to vector<1x512xf32>
    %35 = arith.mulf %34, %33 : vector<1x512xf32>
    %36 = math.tanh %35 : vector<1x512xf32>
    %cst_19 = arith.constant 1.000000e+00 : f32
    %37 = vector.broadcast %cst_19 : f32 to vector<1x512xf32>
    %38 = arith.addf %37, %36 : vector<1x512xf32>
    %39 = arith.mulf %28, %38 : vector<1x512xf32>
    %40 = arith.truncf %39 : vector<1x512xf32> to vector<1x512xbf16>
    %c0_20 = arith.constant 0 : index
    %c0_21 = arith.constant 0 : index
    %c0_22 = arith.constant 0 : index
    %41 = vector.load %arg6[%c0_20, %c0_21, %c0_22] : memref<1x1x512xbf16, #tpu.memory_space<vmem>>, vector<1x1x512xbf16>
    %42 = vector.shape_cast %41 : vector<1x1x512xbf16> to vector<1x512xbf16>
    %43 = vector.shape_cast %40 : vector<1x512xbf16> to vector<1x1x512xbf16>
    tpu.vector_store %arg6[%c0_20, %c0_21, %c0_22], %43 {strides = array<i32>} : memref<1x1x512xbf16, #tpu.memory_space<vmem>>, vector<1x1x512xbf16>,
    return
  }
  func.func @transform_0(%arg0: i32) -> (i32, i32, i32) {
    %c0_i32 = arith.constant 0 : i32
    %c0_i32_0 = arith.constant 0 : i32
    %c0_i32_1 = arith.constant 0 : i32
    return %arg0, %c0_i32, %c0_i32_0 : i32, i32, i32
  }
  func.func @transform_1(%arg0: i32) -> (i32, i32) {
    %c0_i32 = arith.constant 0 : i32
    %c0_i32_0 = arith.constant 0 : i32
    %c0_i32_1 = arith.constant 0 : i32
    return %c0_i32, %c0_i32_0 : i32, i32
  }
  func.func @transform_2(%arg0: i32) -> (i32, i32) {
    %c0_i32 = arith.constant 0 : i32
    %c0_i32_0 = arith.constant 0 : i32
    %c0_i32_1 = arith.constant 0 : i32
    return %c0_i32, %c0_i32_0 : i32, i32
  }
  func.func @transform_3(%arg0: i32) -> (i32, i32) {
    %c0_i32 = arith.constant 0 : i32
    %c0_i32_0 = arith.constant 0 : i32
    %c0_i32_1 = arith.constant 0 : i32
    return %c0_i32, %c0_i32_0 : i32, i32
  }
  func.func @transform_4(%arg0: i32) -> (i32, i32) {
    %c0_i32 = arith.constant 0 : i32
    %c0_i32_0 = arith.constant 0 : i32
    %c0_i32_1 = arith.constant 0 : i32
    return %c0_i32, %c0_i32_0 : i32, i32
  }
  func.func @transform_5(%arg0: i32) -> (i32, i32, i32) {
    %c0_i32 = arith.constant 0 : i32
    %c0_i32_0 = arith.constant 0 : i32
    %c0_i32_1 = arith.constant 0 : i32
    return %arg0, %c0_i32, %c0_i32_0 : i32, i32, i32
  }
}

module attributes {stable_mosaic.version = 11 : i64} {
  func.func @_decoder_kernel(%arg0: i32, %arg1: i32, %arg2: memref<1x8x256xbf16, #tpu.memory_space<vmem>>, %arg3: memref<1x8x256xbf16, #tpu.memory_space<vmem>>, %arg4: memref<256x256xbf16, #tpu.memory_space<vmem>>, %arg5: memref<1x256xf32, #tpu.memory_space<vmem>>, %arg6: memref<2x256xf32, #tpu.memory_space<vmem>>, %arg7: memref<2x256xf32, #tpu.memory_space<vmem>>, %arg8: memref<256x256xbf16, #tpu.memory_space<vmem>>, %arg9: memref<1x16x256xbf16, #tpu.memory_space<vmem>>, %arg10: memref<1x16x256xf32, #tpu.memory_space<vmem>>) attributes {dimension_semantics = [#tpu.dimension_semantics<parallel>, #tpu.dimension_semantics<parallel>], iteration_bounds = array<i64: 2, 2>, scalar_prefetch = 0 : i64, scratch_operands = 0 : i64, tpu.core_type = #tpu.core_type<tc>, window_params = [{transform_indices = @transform_0, window_bounds = array<i64: 1, 8, 256>}, {transform_indices = @transform_1, window_bounds = array<i64: 1, 8, 256>}, {pipeline_mode = #tpu.pipeline_mode<synchronous>, transform_indices = @transform_2, window_bounds = array<i64: 256, 256>}, {pipeline_mode = #tpu.pipeline_mode<synchronous>, transform_indices = @transform_3, window_bounds = array<i64: 1, 256>}, {pipeline_mode = #tpu.pipeline_mode<synchronous>, transform_indices = @transform_4, window_bounds = array<i64: 2, 256>}, {pipeline_mode = #tpu.pipeline_mode<synchronous>, transform_indices = @transform_5, window_bounds = array<i64: 2, 256>}, {pipeline_mode = #tpu.pipeline_mode<synchronous>, transform_indices = @transform_6, window_bounds = array<i64: 256, 256>}, {transform_indices = @transform_7, window_bounds = array<i64: 1, 16, 256>}, {transform_indices = @transform_8, window_bounds = array<i64: 1, 16, 256>}]} {
    %c0 = arith.constant 0 : index
    %c0_0 = arith.constant 0 : index
    %c0_1 = arith.constant 0 : index
    %0 = vector.load %arg2[%c0, %c0_0, %c0_1] : memref<1x8x256xbf16, #tpu.memory_space<vmem>>, vector<1x8x256xbf16>
    %1 = vector.shape_cast %0 : vector<1x8x256xbf16> to vector<8x256xbf16>
    %c0_2 = arith.constant 0 : index
    %c0_3 = arith.constant 0 : index
    %2 = vector.load %arg4[%c0_2, %c0_3] : memref<256x256xbf16, #tpu.memory_space<vmem>>, vector<256x256xbf16>
    %cst = arith.constant dense<0.000000e+00> : vector<8x256xf32>
    %3 = tpu.matmul %1, %2, %cst {dimension_numbers = #tpu.dot_dimension_numbers<[1], [0], [0], [1], [0, 0, 1, 1], [], []>} : vector<8x256xbf16>, vector<256x256xbf16>, vector<8x256xf32> -> vector<8x256xf32>
    %c0_4 = arith.constant 0 : index
    %c0_5 = arith.constant 0 : index
    %4 = vector.load %arg5[%c0_4, %c0_5] : memref<1x256xf32, #tpu.memory_space<vmem>>, vector<1x256xf32>
    %5 = vector.broadcast %4 : vector<1x256xf32> to vector<8x256xf32>
    %6 = arith.addf %3, %5 : vector<8x256xf32>
    %c0_6 = arith.constant 0 : index
    %c0_7 = arith.constant 0 : index
    %c0_8 = arith.constant 0 : index
    %7 = vector.load %arg3[%c0_6, %c0_7, %c0_8] : memref<1x8x256xbf16, #tpu.memory_space<vmem>>, vector<1x8x256xbf16>
    %8 = vector.shape_cast %7 : vector<1x8x256xbf16> to vector<8x256xbf16>
    %9 = arith.extf %8 : vector<8x256xbf16> to vector<8x256xf32>
    %10 = arith.addf %6, %9 : vector<8x256xf32>
    %cst_9 = arith.constant 5.000000e-01 : f32
    %11 = vector.broadcast %cst_9 : f32 to vector<8x256xf32>
    %12 = arith.mulf %11, %10 : vector<8x256xf32>
    %cst_10 = arith.constant 4.471500e-02 : f32
    %13 = vector.broadcast %cst_10 : f32 to vector<8x256xf32>
    %14 = arith.mulf %13, %10 : vector<8x256xf32>
    %15 = arith.mulf %14, %10 : vector<8x256xf32>
    %16 = arith.mulf %15, %10 : vector<8x256xf32>
    %17 = arith.addf %10, %16 : vector<8x256xf32>
    %cst_11 = arith.constant 0.797884583 : f32
    %18 = vector.broadcast %cst_11 : f32 to vector<8x256xf32>
    %19 = arith.mulf %18, %17 : vector<8x256xf32>
    %20 = math.tanh %19 : vector<8x256xf32>
    %cst_12 = arith.constant 1.000000e+00 : f32
    %21 = vector.broadcast %cst_12 : f32 to vector<8x256xf32>
    %22 = arith.addf %21, %20 : vector<8x256xf32>
    %23 = arith.mulf %12, %22 : vector<8x256xf32>
    %c0_13 = arith.constant 0 : index
    %c0_14 = arith.constant 0 : index
    %24 = vector.load %arg6[%c0_13, %c0_14] : memref<2x256xf32, #tpu.memory_space<vmem>>, vector<2x256xf32>
    %25 = vector.shape_cast %23 : vector<8x256xf32> to vector<8x1x256xf32>
    %26 = vector.shape_cast %24 : vector<2x256xf32> to vector<1x2x256xf32>
    %27 = vector.broadcast %25 : vector<8x1x256xf32> to vector<8x2x256xf32>
    %28 = vector.broadcast %26 : vector<1x2x256xf32> to vector<8x2x256xf32>
    %29 = arith.addf %27, %28 : vector<8x2x256xf32>
    %30 = vector.shape_cast %29 : vector<8x2x256xf32> to vector<16x256xf32>
    %31 = arith.truncf %30 : vector<16x256xf32> to vector<16x256xbf16>
    %c0_15 = arith.constant 0 : index
    %c0_16 = arith.constant 0 : index
    %c0_17 = arith.constant 0 : index
    %32 = vector.load %arg9[%c0_15, %c0_16, %c0_17] : memref<1x16x256xbf16, #tpu.memory_space<vmem>>, vector<1x16x256xbf16>
    %33 = vector.shape_cast %32 : vector<1x16x256xbf16> to vector<16x256xbf16>
    %34 = vector.shape_cast %31 : vector<16x256xbf16> to vector<1x16x256xbf16>
    tpu.vector_store %arg9[%c0_15, %c0_16, %c0_17], %34 {strides = array<i32>} : memref<1x16x256xbf16, #tpu.memory_space<vmem>>, vector<1x16x256xbf16>,
    %35 = arith.truncf %23 : vector<8x256xf32> to vector<8x256xbf16>
    %c0_18 = arith.constant 0 : index
    %c0_19 = arith.constant 0 : index
    %36 = vector.load %arg8[%c0_18, %c0_19] : memref<256x256xbf16, #tpu.memory_space<vmem>>, vector<256x256xbf16>
    %cst_20 = arith.constant dense<0.000000e+00> : vector<8x256xf32>
    %37 = tpu.matmul %35, %36, %cst_20 {dimension_numbers = #tpu.dot_dimension_numbers<[1], [0], [0], [1], [0, 0, 1, 1], [], []>} : vector<8x256xbf16>, vector<256x256xbf16>, vector<8x256xf32> -> vector<8x256xf32>
    %c0_21 = arith.constant 0 : index
    %c0_22 = arith.constant 0 : index
    %38 = vector.load %arg7[%c0_21, %c0_22] : memref<2x256xf32, #tpu.memory_space<vmem>>, vector<2x256xf32>
    %39 = vector.shape_cast %37 : vector<8x256xf32> to vector<8x1x256xf32>
    %40 = vector.shape_cast %38 : vector<2x256xf32> to vector<1x2x256xf32>
    %41 = vector.broadcast %39 : vector<8x1x256xf32> to vector<8x2x256xf32>
    %42 = vector.broadcast %40 : vector<1x2x256xf32> to vector<8x2x256xf32>
    %43 = arith.addf %41, %42 : vector<8x2x256xf32>
    %44 = vector.shape_cast %43 : vector<8x2x256xf32> to vector<16x256xf32>
    %45 = tpu.iota {dimensions = array<i32: 1>} : vector<16x256xi32>
    %c192_i32 = arith.constant 192 : i32
    %46 = vector.broadcast %c192_i32 : i32 to vector<16x256xi32>
    %47 = arith.cmpi slt, %45, %46 : vector<16x256xi32>
    %cst_23 = arith.constant 5.000000e-01 : f32
    %48 = vector.broadcast %cst_23 : f32 to vector<16x256xf32>
    %49 = arith.mulf %48, %44 : vector<16x256xf32>
    %cst_24 = arith.constant 4.471500e-02 : f32
    %50 = vector.broadcast %cst_24 : f32 to vector<16x256xf32>
    %51 = arith.mulf %50, %44 : vector<16x256xf32>
    %52 = arith.mulf %51, %44 : vector<16x256xf32>
    %53 = arith.mulf %52, %44 : vector<16x256xf32>
    %54 = arith.addf %44, %53 : vector<16x256xf32>
    %cst_25 = arith.constant 0.797884583 : f32
    %55 = vector.broadcast %cst_25 : f32 to vector<16x256xf32>
    %56 = arith.mulf %55, %54 : vector<16x256xf32>
    %57 = math.tanh %56 : vector<16x256xf32>
    %cst_26 = arith.constant 1.000000e+00 : f32
    %58 = vector.broadcast %cst_26 : f32 to vector<16x256xf32>
    %59 = arith.addf %58, %57 : vector<16x256xf32>
    %60 = arith.mulf %49, %59 : vector<16x256xf32>
    %61 = arith.select %47, %60, %44 : vector<16x256xi1>, vector<16x256xf32>
    %c0_27 = arith.constant 0 : index
    %c0_28 = arith.constant 0 : index
    %c0_29 = arith.constant 0 : index
    %62 = vector.load %arg10[%c0_27, %c0_28, %c0_29] : memref<1x16x256xf32, #tpu.memory_space<vmem>>, vector<1x16x256xf32>
    %63 = vector.shape_cast %62 : vector<1x16x256xf32> to vector<16x256xf32>
    %64 = vector.shape_cast %61 : vector<16x256xf32> to vector<1x16x256xf32>
    tpu.vector_store %arg10[%c0_27, %c0_28, %c0_29], %64 {strides = array<i32>} : memref<1x16x256xf32, #tpu.memory_space<vmem>>, vector<1x16x256xf32>,
    return
  }
  func.func @transform_0(%arg0: i32, %arg1: i32) -> (i32, i32, i32) {
    %c0_i32 = arith.constant 0 : i32
    %c0_i32_0 = arith.constant 0 : i32
    return %arg0, %arg1, %c0_i32 : i32, i32, i32
  }
  func.func @transform_1(%arg0: i32, %arg1: i32) -> (i32, i32, i32) {
    %c0_i32 = arith.constant 0 : i32
    %c0_i32_0 = arith.constant 0 : i32
    return %arg0, %arg1, %c0_i32 : i32, i32, i32
  }
  func.func @transform_2(%arg0: i32, %arg1: i32) -> (i32, i32) {
    %c0_i32 = arith.constant 0 : i32
    %c0_i32_0 = arith.constant 0 : i32
    %c0_i32_1 = arith.constant 0 : i32
    return %c0_i32, %c0_i32_0 : i32, i32
  }
  func.func @transform_3(%arg0: i32, %arg1: i32) -> (i32, i32) {
    %c0_i32 = arith.constant 0 : i32
    %c0_i32_0 = arith.constant 0 : i32
    %c0_i32_1 = arith.constant 0 : i32
    return %c0_i32, %c0_i32_0 : i32, i32
  }
  func.func @transform_4(%arg0: i32, %arg1: i32) -> (i32, i32) {
    %c0_i32 = arith.constant 0 : i32
    %c0_i32_0 = arith.constant 0 : i32
    %c0_i32_1 = arith.constant 0 : i32
    return %c0_i32, %c0_i32_0 : i32, i32
  }
  func.func @transform_5(%arg0: i32, %arg1: i32) -> (i32, i32) {
    %c0_i32 = arith.constant 0 : i32
    %c0_i32_0 = arith.constant 0 : i32
    %c0_i32_1 = arith.constant 0 : i32
    return %c0_i32, %c0_i32_0 : i32, i32
  }
  func.func @transform_6(%arg0: i32, %arg1: i32) -> (i32, i32) {
    %c0_i32 = arith.constant 0 : i32
    %c0_i32_0 = arith.constant 0 : i32
    %c0_i32_1 = arith.constant 0 : i32
    return %c0_i32, %c0_i32_0 : i32, i32
  }
  func.func @transform_7(%arg0: i32, %arg1: i32) -> (i32, i32, i32) {
    %c0_i32 = arith.constant 0 : i32
    %c0_i32_0 = arith.constant 0 : i32
    return %arg0, %arg1, %c0_i32 : i32, i32, i32
  }
  func.func @transform_8(%arg0: i32, %arg1: i32) -> (i32, i32, i32) {
    %c0_i32 = arith.constant 0 : i32
    %c0_i32_0 = arith.constant 0 : i32
    return %arg0, %arg1, %c0_i32 : i32, i32, i32
  }
}

module attributes {stable_mosaic.version = 11 : i64} {
  func.func @_q2_kernel(%arg0: i32, %arg1: memref<2x1x512xbf16, #tpu.memory_space<vmem>>, %arg2: memref<512x1024xbf16, #tpu.memory_space<vmem>>, %arg3: memref<1x1024xf32, #tpu.memory_space<vmem>>, %arg4: memref<2x1024xbf16, #tpu.memory_space<vmem>>) attributes {dimension_semantics = [#tpu.dimension_semantics<parallel>], iteration_bounds = array<i64: 4>, scalar_prefetch = 0 : i64, scratch_operands = 0 : i64, tpu.core_type = #tpu.core_type<tc>, window_params = [{pipeline_mode = #tpu.pipeline_mode<synchronous>, transform_indices = @transform_0, window_bounds = array<i64: 2, 1, 512>}, {transform_indices = @transform_1, window_bounds = array<i64: 512, 1024>}, {transform_indices = @transform_2, window_bounds = array<i64: 1, 1024>}, {transform_indices = @transform_3, window_bounds = array<i64: 2, 1024>}]} {
    %c0 = arith.constant 0 : index
    %c0_0 = arith.constant 0 : index
    %c0_1 = arith.constant 0 : index
    %0 = vector.load %arg1[%c0, %c0_0, %c0_1] : memref<2x1x512xbf16, #tpu.memory_space<vmem>>, vector<2x1x512xbf16>
    %1 = vector.shape_cast %0 : vector<2x1x512xbf16> to vector<2x512xbf16>
    %c0_2 = arith.constant 0 : index
    %c0_3 = arith.constant 0 : index
    %2 = vector.load %arg2[%c0_2, %c0_3] : memref<512x1024xbf16, #tpu.memory_space<vmem>>, vector<512x1024xbf16>
    %cst = arith.constant dense<0.000000e+00> : vector<2x1024xf32>
    %3 = tpu.matmul %1, %2, %cst {dimension_numbers = #tpu.dot_dimension_numbers<[1], [0], [0], [1], [0, 0, 1, 1], [], []>} : vector<2x512xbf16>, vector<512x1024xbf16>, vector<2x1024xf32> -> vector<2x1024xf32>
    %c0_4 = arith.constant 0 : index
    %c0_5 = arith.constant 0 : index
    %4 = vector.load %arg3[%c0_4, %c0_5] : memref<1x1024xf32, #tpu.memory_space<vmem>>, vector<1x1024xf32>
    %5 = vector.broadcast %4 : vector<1x1024xf32> to vector<2x1024xf32>
    %6 = arith.addf %3, %5 : vector<2x1024xf32>
    %cst_6 = arith.constant 5.000000e-01 : f32
    %7 = vector.broadcast %cst_6 : f32 to vector<2x1024xf32>
    %8 = arith.mulf %7, %6 : vector<2x1024xf32>
    %cst_7 = arith.constant 4.471500e-02 : f32
    %9 = vector.broadcast %cst_7 : f32 to vector<2x1024xf32>
    %10 = arith.mulf %9, %6 : vector<2x1024xf32>
    %11 = arith.mulf %10, %6 : vector<2x1024xf32>
    %12 = arith.mulf %11, %6 : vector<2x1024xf32>
    %13 = arith.addf %6, %12 : vector<2x1024xf32>
    %cst_8 = arith.constant 0.797884583 : f32
    %14 = vector.broadcast %cst_8 : f32 to vector<2x1024xf32>
    %15 = arith.mulf %14, %13 : vector<2x1024xf32>
    %16 = math.tanh %15 : vector<2x1024xf32>
    %cst_9 = arith.constant 1.000000e+00 : f32
    %17 = vector.broadcast %cst_9 : f32 to vector<2x1024xf32>
    %18 = arith.addf %17, %16 : vector<2x1024xf32>
    %19 = arith.mulf %8, %18 : vector<2x1024xf32>
    %20 = arith.truncf %19 : vector<2x1024xf32> to vector<2x1024xbf16>
    %c0_10 = arith.constant 0 : index
    %c0_11 = arith.constant 0 : index
    %21 = vector.load %arg4[%c0_10, %c0_11] : memref<2x1024xbf16, #tpu.memory_space<vmem>>, vector<2x1024xbf16>
    tpu.vector_store %arg4[%c0_10, %c0_11], %20 {strides = array<i32>} : memref<2x1024xbf16, #tpu.memory_space<vmem>>, vector<2x1024xbf16>,
    return
  }
  func.func @transform_0(%arg0: i32) -> (i32, i32, i32) {
    %c0_i32 = arith.constant 0 : i32
    %c0_i32_0 = arith.constant 0 : i32
    %c0_i32_1 = arith.constant 0 : i32
    %c0_i32_2 = arith.constant 0 : i32
    return %c0_i32, %c0_i32_0, %c0_i32_1 : i32, i32, i32
  }
  func.func @transform_1(%arg0: i32) -> (i32, i32) {
    %c0_i32 = arith.constant 0 : i32
    %c0_i32_0 = arith.constant 0 : i32
    return %c0_i32, %arg0 : i32, i32
  }
  func.func @transform_2(%arg0: i32) -> (i32, i32) {
    %c0_i32 = arith.constant 0 : i32
    %c0_i32_0 = arith.constant 0 : i32
    return %c0_i32, %arg0 : i32, i32
  }
  func.func @transform_3(%arg0: i32) -> (i32, i32) {
    %c0_i32 = arith.constant 0 : i32
    %c0_i32_0 = arith.constant 0 : i32
    return %c0_i32, %arg0 : i32, i32
  }
}

module attributes {stable_mosaic.version = 11 : i64} {
  func.func @_decoder_kernel(%arg0: i32, %arg1: i32, %arg2: memref<1x16x256xbf16, #tpu.memory_space<vmem>>, %arg3: memref<1x16x128xbf16, #tpu.memory_space<vmem>>, %arg4: memref<256x128xbf16, #tpu.memory_space<vmem>>, %arg5: memref<1x128xf32, #tpu.memory_space<vmem>>, %arg6: memref<2x128xf32, #tpu.memory_space<vmem>>, %arg7: memref<2x128xf32, #tpu.memory_space<vmem>>, %arg8: memref<128x128xbf16, #tpu.memory_space<vmem>>, %arg9: memref<1x32x128xbf16, #tpu.memory_space<vmem>>, %arg10: memref<1x32x128xf32, #tpu.memory_space<vmem>>) attributes {dimension_semantics = [#tpu.dimension_semantics<parallel>, #tpu.dimension_semantics<parallel>], iteration_bounds = array<i64: 2, 2>, scalar_prefetch = 0 : i64, scratch_operands = 0 : i64, tpu.core_type = #tpu.core_type<tc>, window_params = [{transform_indices = @transform_0, window_bounds = array<i64: 1, 16, 256>}, {transform_indices = @transform_1, window_bounds = array<i64: 1, 16, 128>}, {pipeline_mode = #tpu.pipeline_mode<synchronous>, transform_indices = @transform_2, window_bounds = array<i64: 256, 128>}, {pipeline_mode = #tpu.pipeline_mode<synchronous>, transform_indices = @transform_3, window_bounds = array<i64: 1, 128>}, {pipeline_mode = #tpu.pipeline_mode<synchronous>, transform_indices = @transform_4, window_bounds = array<i64: 2, 128>}, {pipeline_mode = #tpu.pipeline_mode<synchronous>, transform_indices = @transform_5, window_bounds = array<i64: 2, 128>}, {pipeline_mode = #tpu.pipeline_mode<synchronous>, transform_indices = @transform_6, window_bounds = array<i64: 128, 128>}, {transform_indices = @transform_7, window_bounds = array<i64: 1, 32, 128>}, {transform_indices = @transform_8, window_bounds = array<i64: 1, 32, 128>}]} {
    %c0 = arith.constant 0 : index
    %c0_0 = arith.constant 0 : index
    %c0_1 = arith.constant 0 : index
    %0 = vector.load %arg2[%c0, %c0_0, %c0_1] : memref<1x16x256xbf16, #tpu.memory_space<vmem>>, vector<1x16x256xbf16>
    %1 = vector.shape_cast %0 : vector<1x16x256xbf16> to vector<16x256xbf16>
    %c0_2 = arith.constant 0 : index
    %c0_3 = arith.constant 0 : index
    %2 = vector.load %arg4[%c0_2, %c0_3] : memref<256x128xbf16, #tpu.memory_space<vmem>>, vector<256x128xbf16>
    %cst = arith.constant dense<0.000000e+00> : vector<16x128xf32>
    %3 = tpu.matmul %1, %2, %cst {dimension_numbers = #tpu.dot_dimension_numbers<[1], [0], [0], [1], [0, 0, 1, 1], [], []>} : vector<16x256xbf16>, vector<256x128xbf16>, vector<16x128xf32> -> vector<16x128xf32>
    %c0_4 = arith.constant 0 : index
    %c0_5 = arith.constant 0 : index
    %4 = vector.load %arg5[%c0_4, %c0_5] : memref<1x128xf32, #tpu.memory_space<vmem>>, vector<1x128xf32>
    %5 = vector.broadcast %4 : vector<1x128xf32> to vector<16x128xf32>
    %6 = arith.addf %3, %5 : vector<16x128xf32>
    %c0_6 = arith.constant 0 : index
    %c0_7 = arith.constant 0 : index
    %c0_8 = arith.constant 0 : index
    %7 = vector.load %arg3[%c0_6, %c0_7, %c0_8] : memref<1x16x128xbf16, #tpu.memory_space<vmem>>, vector<1x16x128xbf16>
    %8 = vector.shape_cast %7 : vector<1x16x128xbf16> to vector<16x128xbf16>
    %9 = arith.extf %8 : vector<16x128xbf16> to vector<16x128xf32>
    %10 = arith.addf %6, %9 : vector<16x128xf32>
    %cst_9 = arith.constant 5.000000e-01 : f32
    %11 = vector.broadcast %cst_9 : f32 to vector<16x128xf32>
    %12 = arith.mulf %11, %10 : vector<16x128xf32>
    %cst_10 = arith.constant 4.471500e-02 : f32
    %13 = vector.broadcast %cst_10 : f32 to vector<16x128xf32>
    %14 = arith.mulf %13, %10 : vector<16x128xf32>
    %15 = arith.mulf %14, %10 : vector<16x128xf32>
    %16 = arith.mulf %15, %10 : vector<16x128xf32>
    %17 = arith.addf %10, %16 : vector<16x128xf32>
    %cst_11 = arith.constant 0.797884583 : f32
    %18 = vector.broadcast %cst_11 : f32 to vector<16x128xf32>
    %19 = arith.mulf %18, %17 : vector<16x128xf32>
    %20 = math.tanh %19 : vector<16x128xf32>
    %cst_12 = arith.constant 1.000000e+00 : f32
    %21 = vector.broadcast %cst_12 : f32 to vector<16x128xf32>
    %22 = arith.addf %21, %20 : vector<16x128xf32>
    %23 = arith.mulf %12, %22 : vector<16x128xf32>
    %c0_13 = arith.constant 0 : index
    %c0_14 = arith.constant 0 : index
    %24 = vector.load %arg6[%c0_13, %c0_14] : memref<2x128xf32, #tpu.memory_space<vmem>>, vector<2x128xf32>
    %25 = vector.shape_cast %23 : vector<16x128xf32> to vector<16x1x128xf32>
    %26 = vector.shape_cast %24 : vector<2x128xf32> to vector<1x2x128xf32>
    %27 = vector.broadcast %25 : vector<16x1x128xf32> to vector<16x2x128xf32>
    %28 = vector.broadcast %26 : vector<1x2x128xf32> to vector<16x2x128xf32>
    %29 = arith.addf %27, %28 : vector<16x2x128xf32>
    %30 = vector.shape_cast %29 : vector<16x2x128xf32> to vector<32x128xf32>
    %31 = arith.truncf %30 : vector<32x128xf32> to vector<32x128xbf16>
    %c0_15 = arith.constant 0 : index
    %c0_16 = arith.constant 0 : index
    %c0_17 = arith.constant 0 : index
    %32 = vector.load %arg9[%c0_15, %c0_16, %c0_17] : memref<1x32x128xbf16, #tpu.memory_space<vmem>>, vector<1x32x128xbf16>
    %33 = vector.shape_cast %32 : vector<1x32x128xbf16> to vector<32x128xbf16>
    %34 = vector.shape_cast %31 : vector<32x128xbf16> to vector<1x32x128xbf16>
    tpu.vector_store %arg9[%c0_15, %c0_16, %c0_17], %34 {strides = array<i32>} : memref<1x32x128xbf16, #tpu.memory_space<vmem>>, vector<1x32x128xbf16>,
    %35 = arith.truncf %23 : vector<16x128xf32> to vector<16x128xbf16>
    %c0_18 = arith.constant 0 : index
    %c0_19 = arith.constant 0 : index
    %36 = vector.load %arg8[%c0_18, %c0_19] : memref<128x128xbf16, #tpu.memory_space<vmem>>, vector<128x128xbf16>
    %cst_20 = arith.constant dense<0.000000e+00> : vector<16x128xf32>
    %37 = tpu.matmul %35, %36, %cst_20 {dimension_numbers = #tpu.dot_dimension_numbers<[1], [0], [0], [1], [0, 0, 1, 1], [], []>} : vector<16x128xbf16>, vector<128x128xbf16>, vector<16x128xf32> -> vector<16x128xf32>
    %c0_21 = arith.constant 0 : index
    %c0_22 = arith.constant 0 : index
    %38 = vector.load %arg7[%c0_21, %c0_22] : memref<2x128xf32, #tpu.memory_space<vmem>>, vector<2x128xf32>
    %39 = vector.shape_cast %37 : vector<16x128xf32> to vector<16x1x128xf32>
    %40 = vector.shape_cast %38 : vector<2x128xf32> to vector<1x2x128xf32>
    %41 = vector.broadcast %39 : vector<16x1x128xf32> to vector<16x2x128xf32>
    %42 = vector.broadcast %40 : vector<1x2x128xf32> to vector<16x2x128xf32>
    %43 = arith.addf %41, %42 : vector<16x2x128xf32>
    %44 = vector.shape_cast %43 : vector<16x2x128xf32> to vector<32x128xf32>
    %c0_23 = arith.constant 0 : index
    %c0_24 = arith.constant 0 : index
    %c0_25 = arith.constant 0 : index
    %45 = vector.load %arg10[%c0_23, %c0_24, %c0_25] : memref<1x32x128xf32, #tpu.memory_space<vmem>>, vector<1x32x128xf32>
    %46 = vector.shape_cast %45 : vector<1x32x128xf32> to vector<32x128xf32>
    %47 = vector.shape_cast %44 : vector<32x128xf32> to vector<1x32x128xf32>
    tpu.vector_store %arg10[%c0_23, %c0_24, %c0_25], %47 {strides = array<i32>} : memref<1x32x128xf32, #tpu.memory_space<vmem>>, vector<1x32x128xf32>,
    return
  }
  func.func @transform_0(%arg0: i32, %arg1: i32) -> (i32, i32, i32) {
    %c0_i32 = arith.constant 0 : i32
    %c0_i32_0 = arith.constant 0 : i32
    return %arg0, %arg1, %c0_i32 : i32, i32, i32
  }
  func.func @transform_1(%arg0: i32, %arg1: i32) -> (i32, i32, i32) {
    %c0_i32 = arith.constant 0 : i32
    %c0_i32_0 = arith.constant 0 : i32
    return %arg0, %arg1, %c0_i32 : i32, i32, i32
  }
  func.func @transform_2(%arg0: i32, %arg1: i32) -> (i32, i32) {
    %c0_i32 = arith.constant 0 : i32
    %c0_i32_0 = arith.constant 0 : i32
    %c0_i32_1 = arith.constant 0 : i32
    return %c0_i32, %c0_i32_0 : i32, i32
  }
  func.func @transform_3(%arg0: i32, %arg1: i32) -> (i32, i32) {
    %c0_i32 = arith.constant 0 : i32
    %c0_i32_0 = arith.constant 0 : i32
    %c0_i32_1 = arith.constant 0 : i32
    return %c0_i32, %c0_i32_0 : i32, i32
  }
  func.func @transform_4(%arg0: i32, %arg1: i32) -> (i32, i32) {
    %c0_i32 = arith.constant 0 : i32
    %c0_i32_0 = arith.constant 0 : i32
    %c0_i32_1 = arith.constant 0 : i32
    return %c0_i32, %c0_i32_0 : i32, i32
  }
  func.func @transform_5(%arg0: i32, %arg1: i32) -> (i32, i32) {
    %c0_i32 = arith.constant 0 : i32
    %c0_i32_0 = arith.constant 0 : i32
    %c0_i32_1 = arith.constant 0 : i32
    return %c0_i32, %c0_i32_0 : i32, i32
  }
  func.func @transform_6(%arg0: i32, %arg1: i32) -> (i32, i32) {
    %c0_i32 = arith.constant 0 : i32
    %c0_i32_0 = arith.constant 0 : i32
    %c0_i32_1 = arith.constant 0 : i32
    return %c0_i32, %c0_i32_0 : i32, i32
  }
  func.func @transform_7(%arg0: i32, %arg1: i32) -> (i32, i32, i32) {
    %c0_i32 = arith.constant 0 : i32
    %c0_i32_0 = arith.constant 0 : i32
    return %arg0, %arg1, %c0_i32 : i32, i32, i32
  }
  func.func @transform_8(%arg0: i32, %arg1: i32) -> (i32, i32, i32) {
    %c0_i32 = arith.constant 0 : i32
    %c0_i32_0 = arith.constant 0 : i32
    return %arg0, %arg1, %c0_i32 : i32, i32, i32
  }
}

</mosaic_0001>

<llo_original>
// kernel: complete_dt_forward.8
$region0: #{complete_dt_forward.8}
  #allocation0 [shape = 'u32[]', space=smem, size = 0x4, offset = 0x4, fixed_abs, tag = 'smem constant byte address 0x4 - core index']
  #allocation1 [shape = 'u32[144,128]{1,0:T(1,128)}', space=vmem, size = 0x12000, scoped, tag = 'internal scratch']
  %s0 = inlined_call_operand.vmem [shape: f32[32,3], index: 0, kind: input, shape index: {}]
  %s1 = inlined_call_operand.hbm [shape: f32[3,256], index: 1, kind: input, shape index: {}]
  %s2 = inlined_call_operand.hbm [shape: f32[1,256], index: 2, kind: input, shape index: {}]
  %s3 = inlined_call_operand.vmem [shape: bf16[32,256], index: 3, kind: output, shape index: {}]
  %s4 = sld [smem:[#allocation0]]
  $region53: #{complete_dt_forward.8} parent=0
    _
  %s6 = ssub.s32 1, %s4
  %s7 = scalar_select 0, %s6, %s4
  $region1: #{complete_dt_forward.8} parent=0
    #allocation2 [shape = 'u8[4096]{0}', space=vmem, size = 0x1000, scoped, tag = 'input window, operand 1, single buffered']
    #allocation3 [shape = 's32[2]{0}', space=sflag, size = 0x8, scoped, tag = 'scoped memory for complete_dt_forward.8']
    #allocation4 [shape = 'u8[1024]{0}', space=vmem, size = 0x400, scoped, tag = 'input window, operand 2, single buffered']
    #allocation5 [shape = 's32[1]{0}', space=sflag, size = 0x4, scoped, tag = 'scoped memory for complete_dt_forward.8']
    %8 = vsyncpa [#allocation3], 0
    %9 = vsyncpa [#allocation5], 0
    loop: start=0, step=1, limit=6
    $region2: #{complete_dt_forward.8} parent=1 // loop_pre_header
      _
    $region3: #{complete_dt_forward.8} parent=1 // loop_header
      %s11 = sphi 0, %s15
      %p12 = scmp.ge.s32.totalorder %s11, 6
      %s21 = sphi 0, %s23
      %s24 = sphi 0, %s21
      %s25 = sphi 0, %s24
      %s41 = sphi 0, %s25
      %s45 = sphi 0, %s45
      %s47 = sphi 0, %s45
      %s48 = sphi 0, %s47
      %s62 = sphi 0, %s48
      %s66 = sphi 0, %s66
      %s68 = sphi 0, %s66
      %s69 = sphi 0, %s68
      %s83 = sphi 0, %s69
      %s89 = sphi 0, %s91
      %s92 = sphi 0, %s89
      %s93 = sphi 0, %s92
      %s109 = sphi 0, %s93
    $region4: #{complete_dt_forward.8} parent=1 // loop_header_branch
      %14 = sbr.rel (%p12) target = $region8
    $region5: #{complete_dt_forward.8} parent=1 // loop_body
      %s16 = ssub.s32 %s11, 1
      %s17 = ssub.s32 %s11, 2
      %s18 = sadd.s32 %s11, 1
      %s19 = ssub.s32 %s11, %s18
      %p20 = scmp.eq.s32.totalorder %s19, 0
      %s22 = sadd.s32 %s21, 1
      %s23 = scalar_select %p20, %s21, %s22
      %p26 = pneg %p20
      %p27 = scmp.eq.s32.totalorder %s11, 3
      %p28 = por %p26, %p27
      %p29 = scmp.ne.s32.totalorder %s21, %s24
      %p30 = scmp.eq.s32.totalorder %s11, 0
      %p31 = por %p29, %p30
      %p32 = scmp.ne.s32.totalorder %s21, %s24
      %p33 = scmp.eq.s32.totalorder %s16, 3
      %p34 = por %p32, %p33
      %p35 = scmp.ne.s32.totalorder %s24, %s25
      %p36 = scmp.eq.s32.totalorder %s16, 0
      %p37 = por %p35, %p36
      %p38 = scmp.ne.s32.totalorder %s24, %s25
      %p39 = scmp.eq.s32.totalorder %s17, 3
      %p40 = por %p38, %p39
      %p42 = scmp.ne.s32.totalorder %s25, %s41
      %p43 = scmp.eq.s32.totalorder %s17, 0
      %p44 = por %p42, %p43
      %s46 = sadd.s32 %s45, 1
      %p49 = scmp.eq.s32.totalorder %s11, 3
      %p50 = scmp.ne.s32.totalorder %s45, %s47
      %p51 = scmp.eq.s32.totalorder %s11, 0
      %p52 = por %p50, %p51
      %p53 = scmp.ne.s32.totalorder %s45, %s47
      %p54 = scmp.eq.s32.totalorder %s16, 3
      %p55 = por %p53, %p54
      %p56 = scmp.ne.s32.totalorder %s47, %s48
      %p57 = scmp.eq.s32.totalorder %s16, 0
      %p58 = por %p56, %p57
      %p59 = scmp.ne.s32.totalorder %s47, %s48
      %p60 = scmp.eq.s32.totalorder %s17, 3
      %p61 = por %p59, %p60
      %p63 = scmp.ne.s32.totalorder %s48, %s62
      %p64 = scmp.eq.s32.totalorder %s17, 0
      %p65 = por %p63, %p64
      %s67 = sadd.s32 %s66, 1
      %p70 = scmp.eq.s32.totalorder %s11, 3
      %p71 = scmp.ne.s32.totalorder %s66, %s68
      %p72 = scmp.eq.s32.totalorder %s11, 0
      %p73 = por %p71, %p72
      %p74 = scmp.ne.s32.totalorder %s66, %s68
      %p75 = scmp.eq.s32.totalorder %s16, 3
      %p76 = por %p74, %p75
      %p77 = scmp.ne.s32.totalorder %s68, %s69
      %p78 = scmp.eq.s32.totalorder %s16, 0
      %p79 = por %p77, %p78
      %p80 = scmp.ne.s32.totalorder %s68, %s69
      %p81 = scmp.eq.s32.totalorder %s17, 3
      %p82 = por %p80, %p81
      %p84 = scmp.ne.s32.totalorder %s69, %s83
      %p85 = scmp.eq.s32.totalorder %s17, 0
      %p86 = por %p84, %p85
      %s87 = ssub.s32 %s11, %s18
      %p88 = scmp.eq.s32.totalorder %s87, 0
      %s90 = sadd.s32 %s89, 1
      %s91 = scalar_select %p88, %s89, %s90
      %p94 = pneg %p88
      %p95 = scmp.eq.s32.totalorder %s11, 3
      %p96 = por %p94, %p95
      %p97 = scmp.ne.s32.totalorder %s89, %s92
      %p98 = scmp.eq.s32.totalorder %s11, 0
      %p99 = por %p97, %p98
      %p100 = scmp.ne.s32.totalorder %s89, %s92
      %p101 = scmp.eq.s32.totalorder %s16, 3
      %p102 = por %p100, %p101
      %p103 = scmp.ne.s32.totalorder %s92, %s93
      %p104 = scmp.eq.s32.totalorder %s16, 0
      %p105 = por %p103, %p104
      %p106 = scmp.ne.s32.totalorder %s92, %s93
      %p107 = scmp.eq.s32.totalorder %s17, 3
      %p108 = por %p106, %p107
      %p110 = scmp.ne.s32.totalorder %s93, %s109
      %p111 = scmp.eq.s32.totalorder %s17, 0
      %p112 = por %p110, %p111
      %p113 = scmp.le.s32.totalorder 1, %s11
      %p114 = scmp.lt.s32.totalorder %s11, 5
      %p115 = pnand %p113, %p114
      %p116 = pneg %p115
      // Predicated region
      $region9: #{complete_dt_forward.8} parent=5 // pred_check
        _
      $region10: #{complete_dt_forward.8} parent=5 // pred_check_branch
        %118 = sbr.rel (%p115) target = $region12
      $region11: #{complete_dt_forward.8} parent=5 // pred_region
        %s119 = ssub.s32 %s11, 1
        // Predicated region
        $region13: #{complete_dt_forward.8} parent=11 // pred_check
          %p120 = pneg %p58
        $region14: #{complete_dt_forward.8} parent=11 // pred_check_branch
          %122 = sbr.rel (%p120) target = $region16
        $region15: #{complete_dt_forward.8} parent=11 // pred_region
          %s124 = ssub.s32 128, 128
          %125 = vsyncadd [#allocation3], %s124
          %s127 = sshll.u32 [#allocation2], 4
          %s128 = int_to_ptr.vmem [resolvable:$true] %s127
          %130 = dma.hbm_to_vmem [thread:$0]  %s1, 128, %s128, [#allocation3]
        $region16: #{complete_dt_forward.8} parent=11 // pred_fallthru
          _
        // Predicated region
        $region17: #{complete_dt_forward.8} parent=11 // pred_check
          %p131 = pneg %p79
        $region18: #{complete_dt_forward.8} parent=11 // pred_check_branch
          %133 = sbr.rel (%p131) target = $region20
        $region19: #{complete_dt_forward.8} parent=11 // pred_region
          %s135 = ssub.s32 32, 32
          %136 = vsyncadd [#allocation5], %s135
          %s138 = sshll.u32 [#allocation4], 4
          %s139 = int_to_ptr.vmem [resolvable:$true] %s138
          %141 = dma.hbm_to_vmem [thread:$0]  %s2, 32, %s139, [#allocation5]
        $region20: #{complete_dt_forward.8} parent=11 // pred_fallthru
          _
      $region12: #{complete_dt_forward.8} parent=5 // pred_fallthru
        _
      %p142 = scmp.lt.s32.totalorder %s11, 4
      // Predicated region
      $region21: #{complete_dt_forward.8} parent=5 // pred_check
        %p143 = pneg %p142
      $region22: #{complete_dt_forward.8} parent=5 // pred_check_branch
        %145 = sbr.rel (%p143) target = $region24
      $region23: #{complete_dt_forward.8} parent=5 // pred_region
        // Predicated region
        $region25: #{complete_dt_forward.8} parent=23 // pred_check
          %p146 = pneg %p31
        $region26: #{complete_dt_forward.8} parent=23 // pred_check_branch
          %148 = sbr.rel (%p146) target = $region28
        $region27: #{complete_dt_forward.8} parent=23 // pred_region
          %p149 = scmp.lt.s32.totalorder %s11, 3
          %s150 = scalar_select %p149, %s11, 3
          %s151 = smul.addr %s150, 8
          %s152 = scalar_lea.vmem %s0, %s151
        $region28: #{complete_dt_forward.8} parent=23 // pred_fallthru
          _
      $region24: #{complete_dt_forward.8} parent=5 // pred_fallthru
        _
      %p153 = scmp.le.s32.totalorder 1, %s11
      %p154 = scmp.lt.s32.totalorder %s11, 5
      %p155 = pnand %p153, %p154
      %p156 = pneg %p155
      // Predicated region
      $region29: #{complete_dt_forward.8} parent=5 // pred_check
        _
      $region30: #{complete_dt_forward.8} parent=5 // pred_check_branch
        %158 = sbr.rel (%p155) target = $region32
      $region31: #{complete_dt_forward.8} parent=5 // pred_region
        %s159 = ssub.s32 %s11, 1
        // Predicated region
        $region33: #{complete_dt_forward.8} parent=31 // pred_check
          %p160 = pneg %p58
        $region34: #{complete_dt_forward.8} parent=31 // pred_check_branch
          %162 = sbr.rel (%p160) target = $region36
        $region35: #{complete_dt_forward.8} parent=31 // pred_region
          %163 = dma.done [#allocation3], 128
        $region36: #{complete_dt_forward.8} parent=31 // pred_fallthru
          _
        // Predicated region
        $region37: #{complete_dt_forward.8} parent=31 // pred_check
          %p164 = pneg %p79
        $region38: #{complete_dt_forward.8} parent=31 // pred_check_branch
          %166 = sbr.rel (%p164) target = $region40
        $region39: #{complete_dt_forward.8} parent=31 // pred_region
          %167 = dma.done [#allocation5], 32
        $region40: #{complete_dt_forward.8} parent=31 // pred_fallthru
          _
        %p168 = scmp.lt.s32.totalorder %s16, 3
        %s169 = scalar_select %p168, %s16, 3
        %s170 = smul.addr %s169, 8
        %s171 = scalar_lea.vmem %s0, %s170
        %p172 = pneg %p37
        %p173 = pneg %p34
        %p174 = pneg %p58
        %p175 = pneg %p55
        %p176 = pneg %p79
        %p177 = pneg %p76
        %p178 = pneg %p105
        %p179 = pneg %p102
        %p180 = scmp.lt.s32.totalorder %s16, 3
        %s181 = scalar_select %p180, %s16, 3
        %s182 = smul.addr %s181, 2
        %s183 = smul.addr %s182, 4
        %s184 = scalar_lea.vmem %s3, %s183
        %p185 = scmp.lt.s32.totalorder %s16, 3
        %s186 = scalar_select %p185, %s16, 3
        %s187 = smul.addr %s186, 8
        %s188 = scalar_lea.vmem %s0, %s187
        %p189 = scmp.lt.s32.totalorder %s16, 3
        %s190 = scalar_select %p189, %s16, 3
        %s191 = smul.addr %s190, 2
        %s192 = smul.addr %s191, 4
        %s193 = scalar_lea.vmem %s3, %s192
        %v194 = vld [vmem:[%s188] sm:$0xff]
        %v195 = vld [vmem:[#allocation2] sm:$0x77]
        %v196 = vld [vmem:[#allocation4] sm:$0x3]
        %198 = vset.pattern.permute.xlu0 0
        %199 = vperm.xlu0 %198, %v194
        %v200 = vpop.permute.xlu0 %199
        %v203 = vlaneseq
        %v204 = vshrl.u32 %v203, 7
        %v205 = vsub.s32 0, %v204
        %v206 = vrot.slane %v195, %v205
        %v207 = vlaneseq
        %v208 = vshrl.u32 %v207, 7
        %v209 = vsub.s32 4, %v208
        %v210 = vrot.slane %v195, %v209
        %v213 = vlaneseq
        %v214 = vshrl.u32 %v213, 7
        %v215 = vsub.s32 0, %v214
        %v216 = vrot.slane %v206, %v215
        %v217 = vlaneseq
        %v218 = vshrl.u32 %v217, 7
        %v219 = vsub.s32 0, %v218
        %v220 = vrot.slane %v210, %v219
        %v221 = vmul.f32 %v200, %v216
        %v222 = vmul.f32 %v200, %v220
        %v224 = vlaneseq
        %v225 = vshrl.u32 %v224, 7
        %v226 = vsub.s32 0, %v225
        %v227 = vrot.slane %v196, %v226
        %v228 = vlaneseq
        %v229 = vshrl.u32 %v228, 7
        %v230 = vsub.s32 1, %v229
        %v231 = vrot.slane %v196, %v230
        %v234 = vadd.f32 %v227, %v221
        %v235 = vadd.f32 %v231, %v222
        %236 = vset.pattern.permute.xlu0 1
        %237 = vperm.xlu0 %236, %v194
        %v238 = vpop.permute.xlu0 %237
        %v240 = vlaneseq
        %v241 = vshrl.u32 %v240, 7
        %v242 = vsub.s32 1, %v241
        %v243 = vrot.slane %v195, %v242
        %v244 = vlaneseq
        %v245 = vshrl.u32 %v244, 7
        %v246 = vsub.s32 5, %v245
        %v247 = vrot.slane %v195, %v246
        %v250 = vlaneseq
        %v251 = vshrl.u32 %v250, 7
        %v252 = vsub.s32 1, %v251
        %v253 = vrot.slane %v243, %v252
        %v254 = vlaneseq
        %v255 = vshrl.u32 %v254, 7
        %v256 = vsub.s32 1, %v255
        %v257 = vrot.slane %v247, %v256
        %v258 = vmul.f32 %v238, %v253
        %v259 = vmul.f32 %v238, %v257
        %v260 = vadd.f32 %v234, %v258
        %v261 = vadd.f32 %v235, %v259
        %262 = vset.pattern.permute.xlu0 2
        %263 = vperm.xlu0 %262, %v194
        %v264 = vpop.permute.xlu0 %263
        %v266 = vlaneseq
        %v267 = vshrl.u32 %v266, 7
        %v268 = vsub.s32 2, %v267
        %v269 = vrot.slane %v195, %v268
        %v270 = vlaneseq
        %v271 = vshrl.u32 %v270, 7
        %v272 = vsub.s32 6, %v271
        %v273 = vrot.slane %v195, %v272
        %v276 = vlaneseq
        %v277 = vshrl.u32 %v276, 7
        %v278 = vsub.s32 2, %v277
        %v279 = vrot.slane %v269, %v278
        %v280 = vlaneseq
        %v281 = vshrl.u32 %v280, 7
        %v282 = vsub.s32 2, %v281
        %v283 = vrot.slane %v273, %v282
        %v284 = vmul.f32 %v264, %v279
        %v285 = vmul.f32 %v264, %v283
        %v286 = vadd.f32 %v260, %v284
        %v287 = vadd.f32 %v261, %v285
        %v288 = vpack.c.bf16 %v286, %v286
        %v289 = vpack.c.bf16 %v287, %v287
        %v292 = vunpack.c.l.b16 %v288
        %v293 = vunpack.c.l.b16 %v289
        %v294 = vpack.c.b16 %v293, %v292
        %296 = vst [vmem:[%s193] sm:$0xff] %v294
        %p297 = scmp.lt.s32.totalorder %s16, 3
        %s298 = scalar_select %p297, %s16, 3
        %s299 = smul.addr %s298, 2
        %s300 = smul.addr %s299, 4
        %s301 = scalar_lea.vmem %s3, %s300
        // Predicated region
        $region41: #{complete_dt_forward.8} parent=31 // pred_check
          %p302 = pneg %p102
        $region42: #{complete_dt_forward.8} parent=31 // pred_check_branch
          %304 = sbr.rel (%p302) target = $region44
        $region43: #{complete_dt_forward.8} parent=31 // pred_region
          _
        $region44: #{complete_dt_forward.8} parent=31 // pred_fallthru
          _
      $region32: #{complete_dt_forward.8} parent=5 // pred_fallthru
        _
      %p305 = scmp.le.s32.totalorder 2, %s11
      // Predicated region
      $region45: #{complete_dt_forward.8} parent=5 // pred_check
        %p306 = pneg %p305
      $region46: #{complete_dt_forward.8} parent=5 // pred_check_branch
        %308 = sbr.rel (%p306) target = $region48
      $region47: #{complete_dt_forward.8} parent=5 // pred_region
        %s309 = ssub.s32 %s11, 2
        // Predicated region
        $region49: #{complete_dt_forward.8} parent=47 // pred_check
          %p310 = pneg %p108
        $region50: #{complete_dt_forward.8} parent=47 // pred_check_branch
          %312 = sbr.rel (%p310) target = $region52
        $region51: #{complete_dt_forward.8} parent=47 // pred_region
          %p313 = scmp.lt.s32.totalorder %s17, 3
          %s314 = scalar_select %p313, %s17, 3
          %s315 = smul.addr %s314, 2
          %s316 = smul.addr %s315, 4
          %s317 = scalar_lea.vmem %s3, %s316
        $region52: #{complete_dt_forward.8} parent=47 // pred_fallthru
          _
      $region48: #{complete_dt_forward.8} parent=5 // pred_fallthru
        _
    $region6: #{complete_dt_forward.8} parent=1 // loop_footer
      %s15 = sadd.s32 1, %s11
    $region7: #{complete_dt_forward.8} parent=1 // loop_footer_branch
      %10 = sbr.rel target = $region3
    $region8: #{complete_dt_forward.8} parent=1 // loop_exit
      _
    %318 = vsyncpa [#allocation3], 1
    %s319 = scalar_lea.sflag [#allocation3], 1
    %320 = vsyncpa %s319, 1
    %321 = vsyncpa [#allocation5], 1

// kernel: complete_dt_forward.7
$region0: #{complete_dt_forward.7}
  #allocation0 [shape = 'u32[]', space=smem, size = 0x4, offset = 0x4, fixed_abs, tag = 'smem constant byte address 0x4 - core index']
  #allocation1 [shape = 'u32[144,128]{1,0:T(1,128)}', space=vmem, size = 0x12000, scoped, tag = 'internal scratch']
  %s0 = inlined_call_operand.vmem [shape: f32[64,3], index: 0, kind: input, shape index: {}]
  %s1 = inlined_call_operand.hbm [shape: f32[3,128], index: 1, kind: input, shape index: {}]
  %s2 = inlined_call_operand.hbm [shape: f32[1,128], index: 2, kind: input, shape index: {}]
  %s3 = inlined_call_operand.vmem [shape: bf16[64,128], index: 3, kind: output, shape index: {}]
  %s4 = sld [smem:[#allocation0]]
  $region53: #{complete_dt_forward.7} parent=0
    _
  %s6 = ssub.s32 1, %s4
  %s7 = scalar_select 0, %s6, %s4
  $region1: #{complete_dt_forward.7} parent=0
    #allocation2 [shape = 'u8[2048]{0}', space=vmem, size = 0x800, scoped, tag = 'input window, operand 1, single buffered']
    #allocation3 [shape = 's32[2]{0}', space=sflag, size = 0x8, scoped, tag = 'scoped memory for complete_dt_forward.7']
    #allocation4 [shape = 'u8[512]{0}', space=vmem, size = 0x400, scoped, tag = 'input window, operand 2, single buffered']
    #allocation5 [shape = 's32[1]{0}', space=sflag, size = 0x4, scoped, tag = 'scoped memory for complete_dt_forward.7']
    %8 = vsyncpa [#allocation3], 0
    %9 = vsyncpa [#allocation5], 0
    loop: start=0, step=1, limit=6
    $region2: #{complete_dt_forward.7} parent=1 // loop_pre_header
      _
    $region3: #{complete_dt_forward.7} parent=1 // loop_header
      %s11 = sphi 0, %s15
      %p12 = scmp.ge.s32.totalorder %s11, 6
      %s21 = sphi 0, %s23
      %s24 = sphi 0, %s21
      %s25 = sphi 0, %s24
      %s41 = sphi 0, %s25
      %s45 = sphi 0, %s45
      %s47 = sphi 0, %s45
      %s48 = sphi 0, %s47
      %s62 = sphi 0, %s48
      %s66 = sphi 0, %s66
      %s68 = sphi 0, %s66
      %s69 = sphi 0, %s68
      %s83 = sphi 0, %s69
      %s89 = sphi 0, %s91
      %s92 = sphi 0, %s89
      %s93 = sphi 0, %s92
      %s109 = sphi 0, %s93
    $region4: #{complete_dt_forward.7} parent=1 // loop_header_branch
      %14 = sbr.rel (%p12) target = $region8
    $region5: #{complete_dt_forward.7} parent=1 // loop_body
      %s16 = ssub.s32 %s11, 1
      %s17 = ssub.s32 %s11, 2
      %s18 = sadd.s32 %s11, 1
      %s19 = ssub.s32 %s11, %s18
      %p20 = scmp.eq.s32.totalorder %s19, 0
      %s22 = sadd.s32 %s21, 1
      %s23 = scalar_select %p20, %s21, %s22
      %p26 = pneg %p20
      %p27 = scmp.eq.s32.totalorder %s11, 3
      %p28 = por %p26, %p27
      %p29 = scmp.ne.s32.totalorder %s21, %s24
      %p30 = scmp.eq.s32.totalorder %s11, 0
      %p31 = por %p29, %p30
      %p32 = scmp.ne.s32.totalorder %s21, %s24
      %p33 = scmp.eq.s32.totalorder %s16, 3
      %p34 = por %p32, %p33
      %p35 = scmp.ne.s32.totalorder %s24, %s25
      %p36 = scmp.eq.s32.totalorder %s16, 0
      %p37 = por %p35, %p36
      %p38 = scmp.ne.s32.totalorder %s24, %s25
      %p39 = scmp.eq.s32.totalorder %s17, 3
      %p40 = por %p38, %p39
      %p42 = scmp.ne.s32.totalorder %s25, %s41
      %p43 = scmp.eq.s32.totalorder %s17, 0
      %p44 = por %p42, %p43
      %s46 = sadd.s32 %s45, 1
      %p49 = scmp.eq.s32.totalorder %s11, 3
      %p50 = scmp.ne.s32.totalorder %s45, %s47
      %p51 = scmp.eq.s32.totalorder %s11, 0
      %p52 = por %p50, %p51
      %p53 = scmp.ne.s32.totalorder %s45, %s47
      %p54 = scmp.eq.s32.totalorder %s16, 3
      %p55 = por %p53, %p54
      %p56 = scmp.ne.s32.totalorder %s47, %s48
      %p57 = scmp.eq.s32.totalorder %s16, 0
      %p58 = por %p56, %p57
      %p59 = scmp.ne.s32.totalorder %s47, %s48
      %p60 = scmp.eq.s32.totalorder %s17, 3
      %p61 = por %p59, %p60
      %p63 = scmp.ne.s32.totalorder %s48, %s62
      %p64 = scmp.eq.s32.totalorder %s17, 0
      %p65 = por %p63, %p64
      %s67 = sadd.s32 %s66, 1
      %p70 = scmp.eq.s32.totalorder %s11, 3
      %p71 = scmp.ne.s32.totalorder %s66, %s68
      %p72 = scmp.eq.s32.totalorder %s11, 0
      %p73 = por %p71, %p72
      %p74 = scmp.ne.s32.totalorder %s66, %s68
      %p75 = scmp.eq.s32.totalorder %s16, 3
      %p76 = por %p74, %p75
      %p77 = scmp.ne.s32.totalorder %s68, %s69
      %p78 = scmp.eq.s32.totalorder %s16, 0
      %p79 = por %p77, %p78
      %p80 = scmp.ne.s32.totalorder %s68, %s69
      %p81 = scmp.eq.s32.totalorder %s17, 3
      %p82 = por %p80, %p81
      %p84 = scmp.ne.s32.totalorder %s69, %s83
      %p85 = scmp.eq.s32.totalorder %s17, 0
      %p86 = por %p84, %p85
      %s87 = ssub.s32 %s11, %s18
      %p88 = scmp.eq.s32.totalorder %s87, 0
      %s90 = sadd.s32 %s89, 1
      %s91 = scalar_select %p88, %s89, %s90
      %p94 = pneg %p88
      %p95 = scmp.eq.s32.totalorder %s11, 3
      %p96 = por %p94, %p95
      %p97 = scmp.ne.s32.totalorder %s89, %s92
      %p98 = scmp.eq.s32.totalorder %s11, 0
      %p99 = por %p97, %p98
      %p100 = scmp.ne.s32.totalorder %s89, %s92
      %p101 = scmp.eq.s32.totalorder %s16, 3
      %p102 = por %p100, %p101
      %p103 = scmp.ne.s32.totalorder %s92, %s93
      %p104 = scmp.eq.s32.totalorder %s16, 0
      %p105 = por %p103, %p104
      %p106 = scmp.ne.s32.totalorder %s92, %s93
      %p107 = scmp.eq.s32.totalorder %s17, 3
      %p108 = por %p106, %p107
      %p110 = scmp.ne.s32.totalorder %s93, %s109
      %p111 = scmp.eq.s32.totalorder %s17, 0
      %p112 = por %p110, %p111
      %p113 = scmp.le.s32.totalorder 1, %s11
      %p114 = scmp.lt.s32.totalorder %s11, 5
      %p115 = pnand %p113, %p114
      %p116 = pneg %p115
      // Predicated region
      $region9: #{complete_dt_forward.7} parent=5 // pred_check
        _
      $region10: #{complete_dt_forward.7} parent=5 // pred_check_branch
        %118 = sbr.rel (%p115) target = $region12
      $region11: #{complete_dt_forward.7} parent=5 // pred_region
        %s119 = ssub.s32 %s11, 1
        // Predicated region
        $region13: #{complete_dt_forward.7} parent=11 // pred_check
          %p120 = pneg %p58
        $region14: #{complete_dt_forward.7} parent=11 // pred_check_branch
          %122 = sbr.rel (%p120) target = $region16
        $region15: #{complete_dt_forward.7} parent=11 // pred_region
          %s124 = ssub.s32 64, 64
          %125 = vsyncadd [#allocation3], %s124
          %s127 = sshll.u32 [#allocation2], 4
          %s128 = int_to_ptr.vmem [resolvable:$true] %s127
          %130 = dma.hbm_to_vmem [thread:$0]  %s1, 64, %s128, [#allocation3]
        $region16: #{complete_dt_forward.7} parent=11 // pred_fallthru
          _
        // Predicated region
        $region17: #{complete_dt_forward.7} parent=11 // pred_check
          %p131 = pneg %p79
        $region18: #{complete_dt_forward.7} parent=11 // pred_check_branch
          %133 = sbr.rel (%p131) target = $region20
        $region19: #{complete_dt_forward.7} parent=11 // pred_region
          %s135 = ssub.s32 16, 16
          %136 = vsyncadd [#allocation5], %s135
          %s138 = sshll.u32 [#allocation4], 4
          %s139 = int_to_ptr.vmem [resolvable:$true] %s138
          %141 = dma.hbm_to_vmem [thread:$0]  %s2, 16, %s139, [#allocation5]
        $region20: #{complete_dt_forward.7} parent=11 // pred_fallthru
          _
      $region12: #{complete_dt_forward.7} parent=5 // pred_fallthru
        _
      %p142 = scmp.lt.s32.totalorder %s11, 4
      // Predicated region
      $region21: #{complete_dt_forward.7} parent=5 // pred_check
        %p143 = pneg %p142
      $region22: #{complete_dt_forward.7} parent=5 // pred_check_branch
        %145 = sbr.rel (%p143) target = $region24
      $region23: #{complete_dt_forward.7} parent=5 // pred_region
        // Predicated region
        $region25: #{complete_dt_forward.7} parent=23 // pred_check
          %p146 = pneg %p31
        $region26: #{complete_dt_forward.7} parent=23 // pred_check_branch
          %148 = sbr.rel (%p146) target = $region28
        $region27: #{complete_dt_forward.7} parent=23 // pred_region
          %s149 = smul.u32 2, %s11
          %p150 = scmp.lt.s32.totalorder %s149, 7
          %s151 = scalar_select %p150, %s149, 7
          %s152 = smul.addr %s151, 8
          %s153 = scalar_lea.vmem %s0, %s152
          %s154 = smul.u32 2, %s11
        $region28: #{complete_dt_forward.7} parent=23 // pred_fallthru
          _
      $region24: #{complete_dt_forward.7} parent=5 // pred_fallthru
        _
      %p155 = scmp.le.s32.totalorder 1, %s11
      %p156 = scmp.lt.s32.totalorder %s11, 5
      %p157 = pnand %p155, %p156
      %p158 = pneg %p157
      // Predicated region
      $region29: #{complete_dt_forward.7} parent=5 // pred_check
        _
      $region30: #{complete_dt_forward.7} parent=5 // pred_check_branch
        %160 = sbr.rel (%p157) target = $region32
      $region31: #{complete_dt_forward.7} parent=5 // pred_region
        %s161 = ssub.s32 %s11, 1
        // Predicated region
        $region33: #{complete_dt_forward.7} parent=31 // pred_check
          %p162 = pneg %p58
        $region34: #{complete_dt_forward.7} parent=31 // pred_check_branch
          %164 = sbr.rel (%p162) target = $region36
        $region35: #{complete_dt_forward.7} parent=31 // pred_region
          %165 = dma.done [#allocation3], 64
        $region36: #{complete_dt_forward.7} parent=31 // pred_fallthru
          _
        // Predicated region
        $region37: #{complete_dt_forward.7} parent=31 // pred_check
          %p166 = pneg %p79
        $region38: #{complete_dt_forward.7} parent=31 // pred_check_branch
          %168 = sbr.rel (%p166) target = $region40
        $region39: #{complete_dt_forward.7} parent=31 // pred_region
          %169 = dma.done [#allocation5], 16
        $region40: #{complete_dt_forward.7} parent=31 // pred_fallthru
          _
        %s170 = smul.u32 2, %s16
        %p171 = scmp.lt.s32.totalorder %s170, 7
        %s172 = scalar_select %p171, %s170, 7
        %s173 = smul.addr %s172, 8
        %s174 = scalar_lea.vmem %s0, %s173
        %p175 = pneg %p37
        %p176 = pneg %p34
        %p177 = pneg %p58
        %p178 = pneg %p55
        %p179 = pneg %p79
        %p180 = pneg %p76
        %p181 = pneg %p105
        %p182 = pneg %p102
        %s183 = smul.u32 2, %s16
        %p184 = scmp.lt.s32.totalorder %s183, 7
        %s185 = scalar_select %p184, %s183, 7
        %s186 = smul.addr %s185, 4
        %s187 = scalar_lea.vmem %s3, %s186
        %s188 = smul.u32 2, %s16
        %p189 = scmp.lt.s32.totalorder %s188, 7
        %s190 = scalar_select %p189, %s188, 7
        %s191 = smul.addr %s190, 8
        %s192 = scalar_lea.vmem %s0, %s191
        %s193 = smul.u32 2, %s16
        %s194 = smul.u32 2, %s16
        %p195 = scmp.lt.s32.totalorder %s194, 7
        %s196 = scalar_select %p195, %s194, 7
        %s197 = smul.addr %s196, 4
        %s198 = scalar_lea.vmem %s3, %s197
        %s199 = smul.u32 2, %s16
        %v200 = vld [vmem:[%s192] sm:$0xff]
        %v201 = vld [vmem:[%s192 + $0x8] sm:$0xff]
        %v202 = vld [vmem:[#allocation2] sm:$0x7]
        %v203 = vld [vmem:[#allocation4] sm:$0x1]
        %205 = vset.pattern.permute.xlu0 0
        %206 = vperm.xlu0 %205, %v200
        %v207 = vpop.permute.xlu0 %206
        %210 = vset.pattern.permute.xlu0 0
        %211 = vperm.xlu0 %210, %v201
        %v212 = vpop.permute.xlu0 %211
        %v214 = vlaneseq
        %v215 = vshrl.u32 %v214, 7
        %v216 = vsub.s32 0, %v215
        %v217 = vrot.slane %v202, %v216
        %v218 = vmul.f32 %v207, %v217
        %v219 = vmul.f32 %v212, %v217
        %v221 = vlaneseq
        %v222 = vshrl.u32 %v221, 7
        %v223 = vsub.s32 0, %v222
        %v224 = vrot.slane %v203, %v223
        %v226 = vadd.f32 %v224, %v218
        %v227 = vadd.f32 %v224, %v219
        %228 = vset.pattern.permute.xlu0 1
        %229 = vperm.xlu0 %228, %v200
        %v230 = vpop.permute.xlu0 %229
        %232 = vset.pattern.permute.xlu0 1
        %233 = vperm.xlu0 %232, %v201
        %v234 = vpop.permute.xlu0 %233
        %v236 = vlaneseq
        %v237 = vshrl.u32 %v236, 7
        %v238 = vsub.s32 1, %v237
        %v239 = vrot.slane %v202, %v238
        %v240 = vmul.f32 %v230, %v239
        %v241 = vmul.f32 %v234, %v239
        %v242 = vadd.f32 %v226, %v240
        %v243 = vadd.f32 %v227, %v241
        %244 = vset.pattern.permute.xlu0 2
        %245 = vperm.xlu0 %244, %v200
        %v246 = vpop.permute.xlu0 %245
        %248 = vset.pattern.permute.xlu0 2
        %249 = vperm.xlu0 %248, %v201
        %v250 = vpop.permute.xlu0 %249
        %v252 = vlaneseq
        %v253 = vshrl.u32 %v252, 7
        %v254 = vsub.s32 2, %v253
        %v255 = vrot.slane %v202, %v254
        %v256 = vmul.f32 %v246, %v255
        %v257 = vmul.f32 %v250, %v255
        %v258 = vadd.f32 %v242, %v256
        %v259 = vadd.f32 %v243, %v257
        %v260 = vpack.c.bf16 %v259, %v258
        %v262 = vunpack.c.l.b16 %v260
        %v263 = vunpack.c.h.b16 %v260
        %v264 = vpack.c.b16 %v262, %v262
        %v265 = vpack.c.b16 %v263, %v263
        %268 = vst [vmem:[%s198] sm:$0xf] %v264
        %269 = vst [vmem:[%s198 + $0x4] sm:$0xf] %v265
        %s270 = smul.u32 2, %s16
        %p271 = scmp.lt.s32.totalorder %s270, 7
        %s272 = scalar_select %p271, %s270, 7
        %s273 = smul.addr %s272, 4
        %s274 = scalar_lea.vmem %s3, %s273
        // Predicated region
        $region41: #{complete_dt_forward.7} parent=31 // pred_check
          %p275 = pneg %p102
        $region42: #{complete_dt_forward.7} parent=31 // pred_check_branch
          %277 = sbr.rel (%p275) target = $region44
        $region43: #{complete_dt_forward.7} parent=31 // pred_region
          %s278 = smul.u32 2, %s16
        $region44: #{complete_dt_forward.7} parent=31 // pred_fallthru
          _
      $region32: #{complete_dt_forward.7} parent=5 // pred_fallthru
        _
      %p279 = scmp.le.s32.totalorder 2, %s11
      // Predicated region
      $region45: #{complete_dt_forward.7} parent=5 // pred_check
        %p280 = pneg %p279
      $region46: #{complete_dt_forward.7} parent=5 // pred_check_branch
        %282 = sbr.rel (%p280) target = $region48
      $region47: #{complete_dt_forward.7} parent=5 // pred_region
        %s283 = ssub.s32 %s11, 2
        // Predicated region
        $region49: #{complete_dt_forward.7} parent=47 // pred_check
          %p284 = pneg %p108
        $region50: #{complete_dt_forward.7} parent=47 // pred_check_branch
          %286 = sbr.rel (%p284) target = $region52
        $region51: #{complete_dt_forward.7} parent=47 // pred_region
          %s287 = smul.u32 2, %s17
          %p288 = scmp.lt.s32.totalorder %s287, 7
          %s289 = scalar_select %p288, %s287, 7
          %s290 = smul.addr %s289, 4
          %s291 = scalar_lea.vmem %s3, %s290
        $region52: #{complete_dt_forward.7} parent=47 // pred_fallthru
          _
      $region48: #{complete_dt_forward.7} parent=5 // pred_fallthru
        _
    $region6: #{complete_dt_forward.7} parent=1 // loop_footer
      %s15 = sadd.s32 1, %s11
    $region7: #{complete_dt_forward.7} parent=1 // loop_footer_branch
      %10 = sbr.rel target = $region3
    $region8: #{complete_dt_forward.7} parent=1 // loop_exit
      _
    %292 = vsyncpa [#allocation3], 1
    %s293 = scalar_lea.sflag [#allocation3], 1
    %294 = vsyncpa %s293, 1
    %295 = vsyncpa [#allocation5], 1

// kernel: complete_dt_forward.9
$region0: #{complete_dt_forward.9}
  #allocation0 [shape = 'u32[]', space=smem, size = 0x4, offset = 0x4, fixed_abs, tag = 'smem constant byte address 0x4 - core index']
  #allocation1 [shape = 'u32[144,128]{1,0:T(1,128)}', space=vmem, size = 0x12000, scoped, tag = 'internal scratch']
  %s0 = inlined_call_operand.vmem [shape: bf16[2,16,2,128], index: 0, kind: input, shape index: {}]
  %s1 = inlined_call_operand.vmem [shape: bf16[2,16,256], index: 1, kind: input, shape index: {}]
  %s2 = inlined_call_operand.hbm [shape: bf16[128,256], index: 2, kind: input, shape index: {}]
  %s3 = inlined_call_operand.hbm [shape: f32[1,256], index: 3, kind: input, shape index: {}]
  %s4 = inlined_call_operand.vmem [shape: bf16[2,16,256], index: 4, kind: output, shape index: {}]
  %s5 = sld [smem:[#allocation0]]
  $region57: #{complete_dt_forward.9} parent=0
    _
  %s7 = ssub.s32 1, %s5
  %s8 = scalar_select 0, %s7, %s5
  $region1: #{complete_dt_forward.9} parent=0
    #allocation2 [shape = 'u8[65536]{0}', space=vmem, size = 0x10000, scoped, tag = 'input window, operand 2, single buffered']
    #allocation3 [shape = 's32[2]{0}', space=sflag, size = 0x8, scoped, tag = 'scoped memory for complete_dt_forward.9']
    #allocation4 [shape = 'u8[1024]{0}', space=vmem, size = 0x400, scoped, tag = 'input window, operand 3, single buffered']
    #allocation5 [shape = 's32[1]{0}', space=sflag, size = 0x4, scoped, tag = 'scoped memory for complete_dt_forward.9']
    %9 = vsyncpa [#allocation3], 0
    %10 = vsyncpa [#allocation5], 0
    loop: start=0, step=1, limit=6
    $region2: #{complete_dt_forward.9} parent=1 // loop_pre_header
      _
    $region3: #{complete_dt_forward.9} parent=1 // loop_header
      %s12 = sphi 0, %s16
      %p13 = scmp.ge.s32.totalorder %s12, 6
      %s19 = sphi 0, %s31
      %s20 = sphi 0, %s27
      %s21 = sphi 0, %s19
      %s22 = sphi 0, %s20
      %s23 = sphi 0, %s21
      %s24 = sphi 0, %s22
      %s36 = sphi 0, %s38
      %s39 = sphi 0, %s36
      %s40 = sphi 0, %s39
      %s56 = sphi 0, %s40
      %s64 = sphi 0, %s66
      %s67 = sphi 0, %s64
      %s68 = sphi 0, %s67
      %s84 = sphi 0, %s68
      %s88 = sphi 0, %s88
      %s90 = sphi 0, %s88
      %s91 = sphi 0, %s90
      %s105 = sphi 0, %s91
      %s109 = sphi 0, %s109
      %s111 = sphi 0, %s109
      %s112 = sphi 0, %s111
      %s126 = sphi 0, %s112
      %s134 = sphi 0, %s136
      %s137 = sphi 0, %s134
      %s138 = sphi 0, %s137
      %s154 = sphi 0, %s138
    $region4: #{complete_dt_forward.9} parent=1 // loop_header_branch
      %15 = sbr.rel (%p13) target = $region8
    $region5: #{complete_dt_forward.9} parent=1 // loop_body
      %s17 = ssub.s32 %s12, 1
      %s18 = ssub.s32 %s12, 2
      %s25 = sadd.s32 1, %s20
      %p26 = scmp.ge.s32.totalorder %s25, 2
      %s27 = scalar_select %p26, 0, %s25
      %s28 = sadd.s32 1, %s19
      %s29 = scalar_select %p26, %s28, %s19
      %p30 = scmp.ge.s32.totalorder %s29, 2
      %s31 = scalar_select %p30, 0, %s29
      %s32 = ssub.s32 %s19, %s31
      %s33 = ssub.s32 %s20, %s27
      %s34 = sor.u32 %s32, %s33
      %p35 = scmp.eq.s32.totalorder %s34, 0
      %s37 = sadd.s32 %s36, 1
      %s38 = scalar_select %p35, %s36, %s37
      %p41 = pneg %p35
      %p42 = scmp.eq.s32.totalorder %s12, 3
      %p43 = por %p41, %p42
      %p44 = scmp.ne.s32.totalorder %s36, %s39
      %p45 = scmp.eq.s32.totalorder %s12, 0
      %p46 = por %p44, %p45
      %p47 = scmp.ne.s32.totalorder %s36, %s39
      %p48 = scmp.eq.s32.totalorder %s17, 3
      %p49 = por %p47, %p48
      %p50 = scmp.ne.s32.totalorder %s39, %s40
      %p51 = scmp.eq.s32.totalorder %s17, 0
      %p52 = por %p50, %p51
      %p53 = scmp.ne.s32.totalorder %s39, %s40
      %p54 = scmp.eq.s32.totalorder %s18, 3
      %p55 = por %p53, %p54
      %p57 = scmp.ne.s32.totalorder %s40, %s56
      %p58 = scmp.eq.s32.totalorder %s18, 0
      %p59 = por %p57, %p58
      %s60 = ssub.s32 %s19, %s31
      %s61 = ssub.s32 %s20, %s27
      %s62 = sor.u32 %s60, %s61
      %p63 = scmp.eq.s32.totalorder %s62, 0
      %s65 = sadd.s32 %s64, 1
      %s66 = scalar_select %p63, %s64, %s65
      %p69 = pneg %p63
      %p70 = scmp.eq.s32.totalorder %s12, 3
      %p71 = por %p69, %p70
      %p72 = scmp.ne.s32.totalorder %s64, %s67
      %p73 = scmp.eq.s32.totalorder %s12, 0
      %p74 = por %p72, %p73
      %p75 = scmp.ne.s32.totalorder %s64, %s67
      %p76 = scmp.eq.s32.totalorder %s17, 3
      %p77 = por %p75, %p76
      %p78 = scmp.ne.s32.totalorder %s67, %s68
      %p79 = scmp.eq.s32.totalorder %s17, 0
      %p80 = por %p78, %p79
      %p81 = scmp.ne.s32.totalorder %s67, %s68
      %p82 = scmp.eq.s32.totalorder %s18, 3
      %p83 = por %p81, %p82
      %p85 = scmp.ne.s32.totalorder %s68, %s84
      %p86 = scmp.eq.s32.totalorder %s18, 0
      %p87 = por %p85, %p86
      %s89 = sadd.s32 %s88, 1
      %p92 = scmp.eq.s32.totalorder %s12, 3
      %p93 = scmp.ne.s32.totalorder %s88, %s90
      %p94 = scmp.eq.s32.totalorder %s12, 0
      %p95 = por %p93, %p94
      %p96 = scmp.ne.s32.totalorder %s88, %s90
      %p97 = scmp.eq.s32.totalorder %s17, 3
      %p98 = por %p96, %p97
      %p99 = scmp.ne.s32.totalorder %s90, %s91
      %p100 = scmp.eq.s32.totalorder %s17, 0
      %p101 = por %p99, %p100
      %p102 = scmp.ne.s32.totalorder %s90, %s91
      %p103 = scmp.eq.s32.totalorder %s18, 3
      %p104 = por %p102, %p103
      %p106 = scmp.ne.s32.totalorder %s91, %s105
      %p107 = scmp.eq.s32.totalorder %s18, 0
      %p108 = por %p106, %p107
      %s110 = sadd.s32 %s109, 1
      %p113 = scmp.eq.s32.totalorder %s12, 3
      %p114 = scmp.ne.s32.totalorder %s109, %s111
      %p115 = scmp.eq.s32.totalorder %s12, 0
      %p116 = por %p114, %p115
      %p117 = scmp.ne.s32.totalorder %s109, %s111
      %p118 = scmp.eq.s32.totalorder %s17, 3
      %p119 = por %p117, %p118
      %p120 = scmp.ne.s32.totalorder %s111, %s112
      %p121 = scmp.eq.s32.totalorder %s17, 0
      %p122 = por %p120, %p121
      %p123 = scmp.ne.s32.totalorder %s111, %s112
      %p124 = scmp.eq.s32.totalorder %s18, 3
      %p125 = por %p123, %p124
      %p127 = scmp.ne.s32.totalorder %s112, %s126
      %p128 = scmp.eq.s32.totalorder %s18, 0
      %p129 = por %p127, %p128
      %s130 = ssub.s32 %s19, %s31
      %s131 = ssub.s32 %s20, %s27
      %s132 = sor.u32 %s130, %s131
      %p133 = scmp.eq.s32.totalorder %s132, 0
      %s135 = sadd.s32 %s134, 1
      %s136 = scalar_select %p133, %s134, %s135
      %p139 = pneg %p133
      %p140 = scmp.eq.s32.totalorder %s12, 3
      %p141 = por %p139, %p140
      %p142 = scmp.ne.s32.totalorder %s134, %s137
      %p143 = scmp.eq.s32.totalorder %s12, 0
      %p144 = por %p142, %p143
      %p145 = scmp.ne.s32.totalorder %s134, %s137
      %p146 = scmp.eq.s32.totalorder %s17, 3
      %p147 = por %p145, %p146
      %p148 = scmp.ne.s32.totalorder %s137, %s138
      %p149 = scmp.eq.s32.totalorder %s17, 0
      %p150 = por %p148, %p149
      %p151 = scmp.ne.s32.totalorder %s137, %s138
      %p152 = scmp.eq.s32.totalorder %s18, 3
      %p153 = por %p151, %p152
      %p155 = scmp.ne.s32.totalorder %s138, %s154
      %p156 = scmp.eq.s32.totalorder %s18, 0
      %p157 = por %p155, %p156
      %p158 = scmp.le.s32.totalorder 1, %s12
      %p159 = scmp.lt.s32.totalorder %s12, 5
      %p160 = pnand %p158, %p159
      %p161 = pneg %p160
      // Predicated region
      $region9: #{complete_dt_forward.9} parent=5 // pred_check
        _
      $region10: #{complete_dt_forward.9} parent=5 // pred_check_branch
        %163 = sbr.rel (%p160) target = $region12
      $region11: #{complete_dt_forward.9} parent=5 // pred_region
        %s164 = ssub.s32 %s12, 1
        // Predicated region
        $region13: #{complete_dt_forward.9} parent=11 // pred_check
          %p165 = pneg %p101
        $region14: #{complete_dt_forward.9} parent=11 // pred_check_branch
          %167 = sbr.rel (%p165) target = $region16
        $region15: #{complete_dt_forward.9} parent=11 // pred_region
          %s169 = ssub.s32 2048, 2048
          %170 = vsyncadd [#allocation3], %s169
          %s171 = sshll.u32 [#allocation2], 4
          %s172 = int_to_ptr.vmem [resolvable:$true] %s171
          %177 = dma.hbm_to_vmem [thread:$0]  %s2, 2048, %s172, [#allocation3], 128, 128, 8
        $region16: #{complete_dt_forward.9} parent=11 // pred_fallthru
          _
        // Predicated region
        $region17: #{complete_dt_forward.9} parent=11 // pred_check
          %p178 = pneg %p122
        $region18: #{complete_dt_forward.9} parent=11 // pred_check_branch
          %180 = sbr.rel (%p178) target = $region20
        $region19: #{complete_dt_forward.9} parent=11 // pred_region
          %s182 = ssub.s32 32, 32
          %183 = vsyncadd [#allocation5], %s182
          %s185 = sshll.u32 [#allocation4], 4
          %s186 = int_to_ptr.vmem [resolvable:$true] %s185
          %188 = dma.hbm_to_vmem [thread:$0]  %s3, 32, %s186, [#allocation5]
        $region20: #{complete_dt_forward.9} parent=11 // pred_fallthru
          _
      $region12: #{complete_dt_forward.9} parent=5 // pred_fallthru
        _
      %p189 = scmp.lt.s32.totalorder %s12, 4
      // Predicated region
      $region21: #{complete_dt_forward.9} parent=5 // pred_check
        %p190 = pneg %p189
      $region22: #{complete_dt_forward.9} parent=5 // pred_check_branch
        %192 = sbr.rel (%p190) target = $region24
      $region23: #{complete_dt_forward.9} parent=5 // pred_region
        // Predicated region
        $region25: #{complete_dt_forward.9} parent=23 // pred_check
          %p193 = pneg %p46
        $region26: #{complete_dt_forward.9} parent=23 // pred_check_branch
          %195 = sbr.rel (%p193) target = $region28
        $region27: #{complete_dt_forward.9} parent=23 // pred_region
          %s196 = smul.u32 8, %s20
          %p197 = scmp.lt.s32.totalorder %s19, 1
          %s198 = scalar_select %p197, %s19, 1
          %p199 = scmp.lt.s32.totalorder %s196, 15
          %s200 = scalar_select %p199, %s196, 15
          %s201 = smul.addr %s198, 16
          %s202 = sadd.s32 %s200, %s201
          %s203 = scalar_lea.vmem %s0, %s202
          %s204 = smul.u32 8, %s20
        $region28: #{complete_dt_forward.9} parent=23 // pred_fallthru
          _
        // Predicated region
        $region29: #{complete_dt_forward.9} parent=23 // pred_check
          %p205 = pneg %p74
        $region30: #{complete_dt_forward.9} parent=23 // pred_check_branch
          %207 = sbr.rel (%p205) target = $region32
        $region31: #{complete_dt_forward.9} parent=23 // pred_region
          %p208 = scmp.lt.s32.totalorder %s19, 1
          %s209 = scalar_select %p208, %s19, 1
          %p210 = scmp.lt.s32.totalorder %s20, 1
          %s211 = scalar_select %p210, %s20, 1
          %s212 = smul.addr %s211, 2
          %s213 = smul.addr %s209, 4
          %s214 = sadd.s32 %s212, %s213
          %s215 = smul.addr %s214, 4
          %s216 = scalar_lea.vmem %s1, %s215
        $region32: #{complete_dt_forward.9} parent=23 // pred_fallthru
          _
      $region24: #{complete_dt_forward.9} parent=5 // pred_fallthru
        _
      %p217 = scmp.le.s32.totalorder 1, %s12
      %p218 = scmp.lt.s32.totalorder %s12, 5
      %p219 = pnand %p217, %p218
      %p220 = pneg %p219
      // Predicated region
      $region33: #{complete_dt_forward.9} parent=5 // pred_check
        _
      $region34: #{complete_dt_forward.9} parent=5 // pred_check_branch
        %222 = sbr.rel (%p219) target = $region36
      $region35: #{complete_dt_forward.9} parent=5 // pred_region
        %s223 = ssub.s32 %s12, 1
        // Predicated region
        $region37: #{complete_dt_forward.9} parent=35 // pred_check
          %p224 = pneg %p101
        $region38: #{complete_dt_forward.9} parent=35 // pred_check_branch
          %226 = sbr.rel (%p224) target = $region40
        $region39: #{complete_dt_forward.9} parent=35 // pred_region
          %227 = dma.done [#allocation3], 2048
        $region40: #{complete_dt_forward.9} parent=35 // pred_fallthru
          _
        // Predicated region
        $region41: #{complete_dt_forward.9} parent=35 // pred_check
          %p228 = pneg %p122
        $region42: #{complete_dt_forward.9} parent=35 // pred_check_branch
          %230 = sbr.rel (%p228) target = $region44
        $region43: #{complete_dt_forward.9} parent=35 // pred_region
          %231 = dma.done [#allocation5], 32
        $region44: #{complete_dt_forward.9} parent=35 // pred_fallthru
          _
        %s232 = smul.u32 8, %s22
        %p233 = scmp.lt.s32.totalorder %s21, 1
        %s234 = scalar_select %p233, %s21, 1
        %p235 = scmp.lt.s32.totalorder %s232, 15
        %s236 = scalar_select %p235, %s232, 15
        %s237 = smul.addr %s234, 16
        %s238 = sadd.s32 %s236, %s237
        %s239 = scalar_lea.vmem %s0, %s238
        %p240 = pneg %p52
        %p241 = pneg %p49
        %p242 = scmp.lt.s32.totalorder %s21, 1
        %s243 = scalar_select %p242, %s21, 1
        %p244 = scmp.lt.s32.totalorder %s22, 1
        %s245 = scalar_select %p244, %s22, 1
        %s246 = smul.addr %s245, 2
        %s247 = smul.addr %s243, 4
        %s248 = sadd.s32 %s246, %s247
        %s249 = smul.addr %s248, 4
        %s250 = scalar_lea.vmem %s1, %s249
        %p251 = pneg %p80
        %p252 = pneg %p77
        %p253 = pneg %p101
        %p254 = pneg %p98
        %p255 = pneg %p122
        %p256 = pneg %p119
        %p257 = pneg %p150
        %p258 = pneg %p147
        %p259 = scmp.lt.s32.totalorder %s21, 1
        %s260 = scalar_select %p259, %s21, 1
        %p261 = scmp.lt.s32.totalorder %s22, 1
        %s262 = scalar_select %p261, %s22, 1
        %s263 = smul.addr %s262, 2
        %s264 = smul.addr %s260, 4
        %s265 = sadd.s32 %s263, %s264
        %s266 = smul.addr %s265, 4
        %s267 = scalar_lea.vmem %s4, %s266
        %s268 = smul.u32 8, %s22
        %p269 = scmp.lt.s32.totalorder %s21, 1
        %s270 = scalar_select %p269, %s21, 1
        %p271 = scmp.lt.s32.totalorder %s268, 15
        %s272 = scalar_select %p271, %s268, 15
        %s273 = smul.addr %s270, 16
        %s274 = sadd.s32 %s272, %s273
        %s275 = scalar_lea.vmem %s0, %s274
        %s276 = smul.u32 8, %s22
        %p277 = scmp.lt.s32.totalorder %s21, 1
        %s278 = scalar_select %p277, %s21, 1
        %p279 = scmp.lt.s32.totalorder %s22, 1
        %s280 = scalar_select %p279, %s22, 1
        %s281 = smul.addr %s280, 2
        %s282 = smul.addr %s278, 4
        %s283 = sadd.s32 %s281, %s282
        %s284 = smul.addr %s283, 4
        %s285 = scalar_lea.vmem %s1, %s284
        %p286 = scmp.lt.s32.totalorder %s21, 1
        %s287 = scalar_select %p286, %s21, 1
        %p288 = scmp.lt.s32.totalorder %s22, 1
        %s289 = scalar_select %p288, %s22, 1
        %s290 = smul.addr %s289, 2
        %s291 = smul.addr %s287, 4
        %s292 = sadd.s32 %s290, %s291
        %s293 = smul.addr %s292, 4
        %s294 = scalar_lea.vmem %s4, %s293
        %v297 = vld [vmem:[%s275] sm:$0x1]
        %v298 = vld [vmem:[%s275 + $0x1] sm:$0x1]
        %v299 = vld [vmem:[%s275 + $0x2] sm:$0x1]
        %v300 = vld [vmem:[%s275 + $0x3] sm:$0x1]
        %v301 = vld [vmem:[%s275 + $0x4] sm:$0x1]
        %v302 = vld [vmem:[%s275 + $0x5] sm:$0x1]
        %v303 = vld [vmem:[%s275 + $0x6] sm:$0x1]
        %v304 = vld [vmem:[%s275 + $0x7] sm:$0x1]
        %vm305 = vcmask 1040384
        %v308 = vsel %vm305, %v297, 4286644096
        %v310 = vunpack.i.l.bf16 %v308
        %v311 = vunpack.i.h.bf16 %v308
        %v312 = vmax.f32 %v310, %v311
        %v313 = vrot.slane %v312, 4
        %v314 = vmax.f32 %v312, %v313
        %v315 = vrot.slane %v314, 2
        %v316 = vmax.f32 %v314, %v315
        %v317 = vrot.slane %v316, 1
        %v318 = vmax.f32 %v316, %v317
        %v319 = vpack.i.bf16 %v318, %v318
        %v321 = vsel %vm305, %v298, 4286644096
        %v323 = vunpack.i.l.bf16 %v321
        %v324 = vunpack.i.h.bf16 %v321
        %v325 = vmax.f32 %v323, %v324
        %v326 = vrot.slane %v325, 4
        %v327 = vmax.f32 %v325, %v326
        %v328 = vrot.slane %v327, 2
        %v329 = vmax.f32 %v327, %v328
        %v330 = vrot.slane %v329, 1
        %v331 = vmax.f32 %v329, %v330
        %v332 = vpack.i.bf16 %v331, %v331
        %v334 = vsel %vm305, %v299, 4286644096
        %v336 = vunpack.i.l.bf16 %v334
        %v337 = vunpack.i.h.bf16 %v334
        %v338 = vmax.f32 %v336, %v337
        %v339 = vrot.slane %v338, 4
        %v340 = vmax.f32 %v338, %v339
        %v341 = vrot.slane %v340, 2
        %v342 = vmax.f32 %v340, %v341
        %v343 = vrot.slane %v342, 1
        %v344 = vmax.f32 %v342, %v343
        %v345 = vpack.i.bf16 %v344, %v344
        %v347 = vsel %vm305, %v300, 4286644096
        %v349 = vunpack.i.l.bf16 %v347
        %v350 = vunpack.i.h.bf16 %v347
        %v351 = vmax.f32 %v349, %v350
        %v352 = vrot.slane %v351, 4
        %v353 = vmax.f32 %v351, %v352
        %v354 = vrot.slane %v353, 2
        %v355 = vmax.f32 %v353, %v354
        %v356 = vrot.slane %v355, 1
        %v357 = vmax.f32 %v355, %v356
        %v358 = vpack.i.bf16 %v357, %v357
        %v360 = vsel %vm305, %v301, 4286644096
        %v362 = vunpack.i.l.bf16 %v360
        %v363 = vunpack.i.h.bf16 %v360
        %v364 = vmax.f32 %v362, %v363
        %v365 = vrot.slane %v364, 4
        %v366 = vmax.f32 %v364, %v365
        %v367 = vrot.slane %v366, 2
        %v368 = vmax.f32 %v366, %v367
        %v369 = vrot.slane %v368, 1
        %v370 = vmax.f32 %v368, %v369
        %v371 = vpack.i.bf16 %v370, %v370
        %v373 = vsel %vm305, %v302, 4286644096
        %v375 = vunpack.i.l.bf16 %v373
        %v376 = vunpack.i.h.bf16 %v373
        %v377 = vmax.f32 %v375, %v376
        %v378 = vrot.slane %v377, 4
        %v379 = vmax.f32 %v377, %v378
        %v380 = vrot.slane %v379, 2
        %v381 = vmax.f32 %v379, %v380
        %v382 = vrot.slane %v381, 1
        %v383 = vmax.f32 %v381, %v382
        %v384 = vpack.i.bf16 %v383, %v383
        %v386 = vsel %vm305, %v303, 4286644096
        %v388 = vunpack.i.l.bf16 %v386
        %v389 = vunpack.i.h.bf16 %v386
        %v390 = vmax.f32 %v388, %v389
        %v391 = vrot.slane %v390, 4
        %v392 = vmax.f32 %v390, %v391
        %v393 = vrot.slane %v392, 2
        %v394 = vmax.f32 %v392, %v393
        %v395 = vrot.slane %v394, 1
        %v396 = vmax.f32 %v394, %v395
        %v397 = vpack.i.bf16 %v396, %v396
        %v399 = vsel %vm305, %v304, 4286644096
        %v401 = vunpack.i.l.bf16 %v399
        %v402 = vunpack.i.h.bf16 %v399
        %v403 = vmax.f32 %v401, %v402
        %v404 = vrot.slane %v403, 4
        %v405 = vmax.f32 %v403, %v404
        %v406 = vrot.slane %v405, 2
        %v407 = vmax.f32 %v405, %v406
        %v408 = vrot.slane %v407, 1
        %v409 = vmax.f32 %v407, %v408
        %v410 = vpack.i.bf16 %v409, %v409
        %v411 = vld [vmem:[#allocation2] sm:$0xff]
        %v412 = vld [vmem:[#allocation2 + $0x8] sm:$0xff]
        %v413 = vld [vmem:[#allocation2 + $0x10] sm:$0xff]
        %v414 = vld [vmem:[#allocation2 + $0x18] sm:$0xff]
        %v415 = vld [vmem:[#allocation2 + $0x20] sm:$0xff]
        %v416 = vld [vmem:[#allocation2 + $0x28] sm:$0xff]
        %v417 = vld [vmem:[#allocation2 + $0x30] sm:$0xff]
        %v418 = vld [vmem:[#allocation2 + $0x38] sm:$0xff]
        %v419 = vld [vmem:[#allocation2 + $0x40] sm:$0xff]
        %v420 = vld [vmem:[#allocation2 + $0x48] sm:$0xff]
        %v421 = vld [vmem:[#allocation2 + $0x50] sm:$0xff]
        %v422 = vld [vmem:[#allocation2 + $0x58] sm:$0xff]
        %v423 = vld [vmem:[#allocation2 + $0x60] sm:$0xff]
        %v424 = vld [vmem:[#allocation2 + $0x68] sm:$0xff]
        %v425 = vld [vmem:[#allocation2 + $0x70] sm:$0xff]
        %v426 = vld [vmem:[#allocation2 + $0x78] sm:$0xff]
        %v427 = vld [vmem:[#allocation4] sm:$0x3]
        %v429 = vlaneseq
        %v430 = vshrl.u32 %v429, 7
        %v431 = vsub.s32 0, %v430
        %v432 = vrot.slane %v427, %v431
        %v433 = vlaneseq
        %v434 = vshrl.u32 %v433, 7
        %v435 = vsub.s32 1, %v434
        %v436 = vrot.slane %v427, %v435
        %v447 = vunpack.c.l.b16 %v319
        %v448 = vunpack.c.l.b16 %v332
        %v449 = vunpack.c.l.b16 %v345
        %v450 = vunpack.c.l.b16 %v358
        %v451 = vunpack.c.l.b16 %v371
        %v452 = vunpack.c.l.b16 %v384
        %v453 = vunpack.c.l.b16 %v397
        %v454 = vunpack.c.l.b16 %v410
        %vm455 = vcmask 1041409
        %v456 = vsel %vm455, %v448, %v447
        %vm457 = vcmask 1042434
        %v458 = vsel %vm457, %v449, %v456
        %vm459 = vcmask 1043459
        %v460 = vsel %vm459, %v450, %v458
        %vm461 = vcmask 1044484
        %v462 = vsel %vm461, %v451, %v460
        %vm463 = vcmask 1045509
        %v464 = vsel %vm463, %v452, %v462
        %vm465 = vcmask 1046534
        %v466 = vsel %vm465, %v453, %v464
        %vm467 = vcmask 1047559
        %v468 = vsel %vm467, %v454, %v466
        %v469 = vpack.c.b16 %v468, %v468
        %v487 = vunpack.c.l.b16 %v411
        %v488 = vunpack.c.h.b16 %v411
        %v489 = vunpack.c.l.b16 %v412
        %v490 = vunpack.c.h.b16 %v412
        %v491 = vunpack.c.l.b16 %v413
        %v492 = vunpack.c.h.b16 %v413
        %v493 = vunpack.c.l.b16 %v414
        %v494 = vunpack.c.h.b16 %v414
        %v495 = vunpack.c.l.b16 %v415
        %v496 = vunpack.c.h.b16 %v415
        %v497 = vunpack.c.l.b16 %v416
        %v498 = vunpack.c.h.b16 %v416
        %v499 = vunpack.c.l.b16 %v417
        %v500 = vunpack.c.h.b16 %v417
        %v501 = vunpack.c.l.b16 %v418
        %v502 = vunpack.c.h.b16 %v418
        %v503 = vunpack.c.l.b16 %v419
        %v504 = vunpack.c.h.b16 %v419
        %v505 = vunpack.c.l.b16 %v420
        %v506 = vunpack.c.h.b16 %v420
        %v507 = vunpack.c.l.b16 %v421
        %v508 = vunpack.c.h.b16 %v421
        %v509 = vunpack.c.l.b16 %v422
        %v510 = vunpack.c.h.b16 %v422
        %v511 = vunpack.c.l.b16 %v423
        %v512 = vunpack.c.h.b16 %v423
        %v513 = vunpack.c.l.b16 %v424
        %v514 = vunpack.c.h.b16 %v424
        %v515 = vunpack.c.l.b16 %v425
        %v516 = vunpack.c.h.b16 %v425
        %v517 = vunpack.c.l.b16 %v426
        %v518 = vunpack.c.h.b16 %v426
        %v519 = vpack.c.b16 %v489, %v487
        %v520 = vpack.c.b16 %v490, %v488
        %v521 = vpack.c.b16 %v493, %v491
        %v522 = vpack.c.b16 %v494, %v492
        %v523 = vpack.c.b16 %v497, %v495
        %v524 = vpack.c.b16 %v498, %v496
        %v525 = vpack.c.b16 %v501, %v499
        %v526 = vpack.c.b16 %v502, %v500
        %v527 = vpack.c.b16 %v505, %v503
        %v528 = vpack.c.b16 %v506, %v504
        %v529 = vpack.c.b16 %v509, %v507
        %v530 = vpack.c.b16 %v510, %v508
        %v531 = vpack.c.b16 %v513, %v511
        %v532 = vpack.c.b16 %v514, %v512
        %v533 = vpack.c.b16 %v517, %v515
        %v534 = vpack.c.b16 %v518, %v516
        %551 = vmatprep.subr.bf16.mxu0 %v534
        %552 = vmatpush1.bf16.msra.mxu0 %v533
        %553 = vmatprep.subr.bf16.mxu0 %v532
        %554 = vmatpush1.bf16.msra.mxu0 %v531
        %555 = vmatprep.subr.bf16.mxu0 %v530
        %556 = vmatpush1.bf16.msra.mxu0 %v529
        %557 = vmatprep.subr.bf16.mxu0 %v528
        %558 = vmatpush1.bf16.msra.mxu0 %v527
        %559 = vmatprep.subr.bf16.mxu0 %v526
        %560 = vmatpush1.bf16.msra.mxu0 %v525
        %561 = vmatprep.subr.bf16.mxu0 %v524
        %562 = vmatpush1.bf16.msra.mxu0 %v523
        %563 = vmatprep.subr.bf16.mxu0 %v522
        %564 = vmatpush1.bf16.msra.mxu0 %v521
        %565 = vmatprep.subr.bf16.mxu0 %v520
        %566 = vmatpush1.bf16.msra.mxu0 %v519
        %567 = vmatprep.subr.bf16.mxu0 0
        %568 = vmatpush2.bf16.msra.mxu0 0
        %569 = vmatprep.subr.bf16.mxu0 0
        %570 = vmatpush2.bf16.msra.mxu0 0
        %571 = vmatprep.subr.bf16.mxu0 0
        %572 = vmatpush2.bf16.msra.mxu0 0
        %573 = vmatprep.subr.bf16.mxu0 0
        %574 = vmatpush2.bf16.msra.mxu0 0
        %575 = vmatprep.subr.bf16.mxu0 0
        %576 = vmatpush2.bf16.msra.mxu0 0
        %577 = vmatprep.subr.bf16.mxu0 0
        %578 = vmatpush2.bf16.msra.mxu0 0
        %579 = vmatprep.subr.bf16.mxu0 0
        %580 = vmatpush2.bf16.msra.mxu0 0
        %581 = vmatprep.subr.bf16.mxu0 0
        %582 = vmatpush2.bf16.msra.mxu0 0
        %583 = vmatprep.mubr.bf16.mxu0 0
        %584 = vmatmul.mubr.bf16.gmra.mxu0 %v469
        %v585 = vpop.f32.mrf.mxu0
        %v586 = vadd.f32 %v432, %v585
        %v587 = vpop.f32.mrf.mxu0
        %v588 = vadd.f32 %v436, %v587
        %v589 = vpop.f32.mrf.mxu0
        %v590 = vpop.f32.mrf.mxu0
        %591 = vdwg.mxu0
        %v592 = vld [vmem:[%s285] sm:$0xff]
        %v593 = vunpack.c.l.bf16 %v592
        %v594 = vunpack.c.h.bf16 %v592
        %v595 = vadd.f32 %v586, %v593
        %v596 = vadd.f32 %v588, %v594
        %v597 = vmul.f32 %v595, 0.5
        %v598 = vmul.f32 %v596, 0.5
        %v599 = vmul.f32 %v595, 0.044715
        %v600 = vmul.f32 %v596, 0.044715
        %v601 = vmul.f32 %v599, %v595
        %v602 = vmul.f32 %v600, %v596
        %v603 = vmul.f32 %v601, %v595
        %v604 = vmul.f32 %v602, %v596
        %v605 = vadd.f32 %v595, %v603
        %v606 = vadd.f32 %v596, %v604
        %v607 = vmul.f32 %v605, 0.7978846
        %v608 = vmul.f32 %v606, 0.7978846
        %v609 = vtanh.pop %v607
        %v610 = vtanh.pop %v608
        %v611 = vadd.f32 %v609, 1.0
        %v612 = vadd.f32 %v610, 1.0
        %v613 = vmul.f32 %v597, %v611
        %v614 = vmul.f32 %v598, %v612
        %v615 = vpack.c.bf16 %v613, %v613
        %v616 = vpack.c.bf16 %v614, %v614
        %v619 = vunpack.c.l.b16 %v615
        %v620 = vunpack.c.l.b16 %v616
        %v621 = vpack.c.b16 %v620, %v619
        %623 = vst [vmem:[%s294] sm:$0xff] %v621
        %p624 = scmp.lt.s32.totalorder %s21, 1
        %s625 = scalar_select %p624, %s21, 1
        %p626 = scmp.lt.s32.totalorder %s22, 1
        %s627 = scalar_select %p626, %s22, 1
        %s628 = smul.addr %s627, 2
        %s629 = smul.addr %s625, 4
        %s630 = sadd.s32 %s628, %s629
        %s631 = smul.addr %s630, 4
        %s632 = scalar_lea.vmem %s4, %s631
        // Predicated region
        $region45: #{complete_dt_forward.9} parent=35 // pred_check
          %p633 = pneg %p147
        $region46: #{complete_dt_forward.9} parent=35 // pred_check_branch
          %635 = sbr.rel (%p633) target = $region48
        $region47: #{complete_dt_forward.9} parent=35 // pred_region
          _
        $region48: #{complete_dt_forward.9} parent=35 // pred_fallthru
          _
      $region36: #{complete_dt_forward.9} parent=5 // pred_fallthru
        _
      %p636 = scmp.le.s32.totalorder 2, %s12
      // Predicated region
      $region49: #{complete_dt_forward.9} parent=5 // pred_check
        %p637 = pneg %p636
      $region50: #{complete_dt_forward.9} parent=5 // pred_check_branch
        %639 = sbr.rel (%p637) target = $region52
      $region51: #{complete_dt_forward.9} parent=5 // pred_region
        %s640 = ssub.s32 %s12, 2
        // Predicated region
        $region53: #{complete_dt_forward.9} parent=51 // pred_check
          %p641 = pneg %p153
        $region54: #{complete_dt_forward.9} parent=51 // pred_check_branch
          %643 = sbr.rel (%p641) target = $region56
        $region55: #{complete_dt_forward.9} parent=51 // pred_region
          %p644 = scmp.lt.s32.totalorder %s23, 1
          %s645 = scalar_select %p644, %s23, 1
          %p646 = scmp.lt.s32.totalorder %s24, 1
          %s647 = scalar_select %p646, %s24, 1
          %s648 = smul.addr %s647, 2
          %s649 = smul.addr %s645, 4
          %s650 = sadd.s32 %s648, %s649
          %s651 = smul.addr %s650, 4
          %s652 = scalar_lea.vmem %s4, %s651
        $region56: #{complete_dt_forward.9} parent=51 // pred_fallthru
          _
      $region52: #{complete_dt_forward.9} parent=5 // pred_fallthru
        _
    $region6: #{complete_dt_forward.9} parent=1 // loop_footer
      %s16 = sadd.s32 1, %s12
    $region7: #{complete_dt_forward.9} parent=1 // loop_footer_branch
      %11 = sbr.rel target = $region3
    $region8: #{complete_dt_forward.9} parent=1 // loop_exit
      _
    %653 = vsyncpa [#allocation3], 1
    %s654 = scalar_lea.sflag [#allocation3], 1
    %655 = vsyncpa %s654, 1
    %656 = vsyncpa [#allocation5], 1

// kernel: complete_dt_forward.10
$region0: #{complete_dt_forward.10}
  #allocation0 [shape = 'u32[]', space=smem, size = 0x4, offset = 0x4, fixed_abs, tag = 'smem constant byte address 0x4 - core index']
  #allocation1 [shape = 'u32[144,128]{1,0:T(1,128)}', space=vmem, size = 0x12000, scoped, tag = 'internal scratch']
  %s0 = inlined_call_operand.vmem [shape: bf16[2,16,256], index: 0, kind: input, shape index: {}]
  %s1 = inlined_call_operand.hbm [shape: bf16[256,512], index: 1, kind: input, shape index: {}]
  %s2 = inlined_call_operand.hbm [shape: f32[1,512], index: 2, kind: input, shape index: {}]
  %s3 = inlined_call_operand.hbm [shape: bf16[512,512], index: 3, kind: input, shape index: {}]
  %s4 = inlined_call_operand.hbm [shape: f32[1,512], index: 4, kind: input, shape index: {}]
  %s5 = inlined_call_operand.vmem [shape: bf16[2,1,512], index: 5, kind: output, shape index: {}]
  %s6 = sld [smem:[#allocation0]]
  $region69: #{complete_dt_forward.10} parent=0
    _
  %s8 = ssub.s32 1, %s6
  %s9 = scalar_select 0, %s8, %s6
  $region1: #{complete_dt_forward.10} parent=0
    #allocation2 [shape = 'u8[262144]{0}', space=vmem, size = 0x40000, scoped, tag = 'input window, operand 1, single buffered']
    #allocation3 [shape = 's32[2]{0}', space=sflag, size = 0x8, scoped, tag = 'scoped memory for complete_dt_forward.10']
    #allocation4 [shape = 'u8[2048]{0}', space=vmem, size = 0x800, scoped, tag = 'input window, operand 2, single buffered']
    #allocation5 [shape = 's32[1]{0}', space=sflag, size = 0x4, scoped, tag = 'scoped memory for complete_dt_forward.10']
    #allocation6 [shape = 'u8[524288]{0}', space=vmem, size = 0x80000, scoped, tag = 'input window, operand 3, single buffered']
    #allocation7 [shape = 'u8[2048]{0}', space=vmem, size = 0x800, scoped, tag = 'input window, operand 4, single buffered']
    #allocation8 [shape = 's32[1]{0}', space=sflag, size = 0x4, scoped, tag = 'scoped memory for complete_dt_forward.10']
    %10 = vsyncpa [#allocation3], 0
    %11 = vsyncpa [#allocation5], 0
    %12 = vsyncpa [#allocation8], 0
    loop: start=0, step=1, limit=4
    $region2: #{complete_dt_forward.10} parent=1 // loop_pre_header
      _
    $region3: #{complete_dt_forward.10} parent=1 // loop_header
      %s14 = sphi 0, %s18
      %p15 = scmp.ge.s32.totalorder %s14, 4
      %s24 = sphi 0, %s26
      %s27 = sphi 0, %s24
      %s28 = sphi 0, %s27
      %s44 = sphi 0, %s28
      %s48 = sphi 0, %s48
      %s50 = sphi 0, %s48
      %s51 = sphi 0, %s50
      %s65 = sphi 0, %s51
      %s69 = sphi 0, %s69
      %s71 = sphi 0, %s69
      %s72 = sphi 0, %s71
      %s86 = sphi 0, %s72
      %s90 = sphi 0, %s90
      %s92 = sphi 0, %s90
      %s93 = sphi 0, %s92
      %s107 = sphi 0, %s93
      %s111 = sphi 0, %s111
      %s113 = sphi 0, %s111
      %s114 = sphi 0, %s113
      %s128 = sphi 0, %s114
      %s134 = sphi 0, %s136
      %s137 = sphi 0, %s134
      %s138 = sphi 0, %s137
      %s154 = sphi 0, %s138
    $region4: #{complete_dt_forward.10} parent=1 // loop_header_branch
      %17 = sbr.rel (%p15) target = $region8
    $region5: #{complete_dt_forward.10} parent=1 // loop_body
      %s19 = ssub.s32 %s14, 1
      %s20 = ssub.s32 %s14, 2
      %s21 = sadd.s32 %s14, 1
      %s22 = ssub.s32 %s14, %s21
      %p23 = scmp.eq.s32.totalorder %s22, 0
      %s25 = sadd.s32 %s24, 1
      %s26 = scalar_select %p23, %s24, %s25
      %p29 = pneg %p23
      %p30 = scmp.eq.s32.totalorder %s14, 1
      %p31 = por %p29, %p30
      %p32 = scmp.ne.s32.totalorder %s24, %s27
      %p33 = scmp.eq.s32.totalorder %s14, 0
      %p34 = por %p32, %p33
      %p35 = scmp.ne.s32.totalorder %s24, %s27
      %p36 = scmp.eq.s32.totalorder %s19, 1
      %p37 = por %p35, %p36
      %p38 = scmp.ne.s32.totalorder %s27, %s28
      %p39 = scmp.eq.s32.totalorder %s19, 0
      %p40 = por %p38, %p39
      %p41 = scmp.ne.s32.totalorder %s27, %s28
      %p42 = scmp.eq.s32.totalorder %s20, 1
      %p43 = por %p41, %p42
      %p45 = scmp.ne.s32.totalorder %s28, %s44
      %p46 = scmp.eq.s32.totalorder %s20, 0
      %p47 = por %p45, %p46
      %s49 = sadd.s32 %s48, 1
      %p52 = scmp.eq.s32.totalorder %s14, 1
      %p53 = scmp.ne.s32.totalorder %s48, %s50
      %p54 = scmp.eq.s32.totalorder %s14, 0
      %p55 = por %p53, %p54
      %p56 = scmp.ne.s32.totalorder %s48, %s50
      %p57 = scmp.eq.s32.totalorder %s19, 1
      %p58 = por %p56, %p57
      %p59 = scmp.ne.s32.totalorder %s50, %s51
      %p60 = scmp.eq.s32.totalorder %s19, 0
      %p61 = por %p59, %p60
      %p62 = scmp.ne.s32.totalorder %s50, %s51
      %p63 = scmp.eq.s32.totalorder %s20, 1
      %p64 = por %p62, %p63
      %p66 = scmp.ne.s32.totalorder %s51, %s65
      %p67 = scmp.eq.s32.totalorder %s20, 0
      %p68 = por %p66, %p67
      %s70 = sadd.s32 %s69, 1
      %p73 = scmp.eq.s32.totalorder %s14, 1
      %p74 = scmp.ne.s32.totalorder %s69, %s71
      %p75 = scmp.eq.s32.totalorder %s14, 0
      %p76 = por %p74, %p75
      %p77 = scmp.ne.s32.totalorder %s69, %s71
      %p78 = scmp.eq.s32.totalorder %s19, 1
      %p79 = por %p77, %p78
      %p80 = scmp.ne.s32.totalorder %s71, %s72
      %p81 = scmp.eq.s32.totalorder %s19, 0
      %p82 = por %p80, %p81
      %p83 = scmp.ne.s32.totalorder %s71, %s72
      %p84 = scmp.eq.s32.totalorder %s20, 1
      %p85 = por %p83, %p84
      %p87 = scmp.ne.s32.totalorder %s72, %s86
      %p88 = scmp.eq.s32.totalorder %s20, 0
      %p89 = por %p87, %p88
      %s91 = sadd.s32 %s90, 1
      %p94 = scmp.eq.s32.totalorder %s14, 1
      %p95 = scmp.ne.s32.totalorder %s90, %s92
      %p96 = scmp.eq.s32.totalorder %s14, 0
      %p97 = por %p95, %p96
      %p98 = scmp.ne.s32.totalorder %s90, %s92
      %p99 = scmp.eq.s32.totalorder %s19, 1
      %p100 = por %p98, %p99
      %p101 = scmp.ne.s32.totalorder %s92, %s93
      %p102 = scmp.eq.s32.totalorder %s19, 0
      %p103 = por %p101, %p102
      %p104 = scmp.ne.s32.totalorder %s92, %s93
      %p105 = scmp.eq.s32.totalorder %s20, 1
      %p106 = por %p104, %p105
      %p108 = scmp.ne.s32.totalorder %s93, %s107
      %p109 = scmp.eq.s32.totalorder %s20, 0
      %p110 = por %p108, %p109
      %s112 = sadd.s32 %s111, 1
      %p115 = scmp.eq.s32.totalorder %s14, 1
      %p116 = scmp.ne.s32.totalorder %s111, %s113
      %p117 = scmp.eq.s32.totalorder %s14, 0
      %p118 = por %p116, %p117
      %p119 = scmp.ne.s32.totalorder %s111, %s113
      %p120 = scmp.eq.s32.totalorder %s19, 1
      %p121 = por %p119, %p120
      %p122 = scmp.ne.s32.totalorder %s113, %s114
      %p123 = scmp.eq.s32.totalorder %s19, 0
      %p124 = por %p122, %p123
      %p125 = scmp.ne.s32.totalorder %s113, %s114
      %p126 = scmp.eq.s32.totalorder %s20, 1
      %p127 = por %p125, %p126
      %p129 = scmp.ne.s32.totalorder %s114, %s128
      %p130 = scmp.eq.s32.totalorder %s20, 0
      %p131 = por %p129, %p130
      %s132 = ssub.s32 %s14, %s21
      %p133 = scmp.eq.s32.totalorder %s132, 0
      %s135 = sadd.s32 %s134, 1
      %s136 = scalar_select %p133, %s134, %s135
      %p139 = pneg %p133
      %p140 = scmp.eq.s32.totalorder %s14, 1
      %p141 = por %p139, %p140
      %p142 = scmp.ne.s32.totalorder %s134, %s137
      %p143 = scmp.eq.s32.totalorder %s14, 0
      %p144 = por %p142, %p143
      %p145 = scmp.ne.s32.totalorder %s134, %s137
      %p146 = scmp.eq.s32.totalorder %s19, 1
      %p147 = por %p145, %p146
      %p148 = scmp.ne.s32.totalorder %s137, %s138
      %p149 = scmp.eq.s32.totalorder %s19, 0
      %p150 = por %p148, %p149
      %p151 = scmp.ne.s32.totalorder %s137, %s138
      %p152 = scmp.eq.s32.totalorder %s20, 1
      %p153 = por %p151, %p152
      %p155 = scmp.ne.s32.totalorder %s138, %s154
      %p156 = scmp.eq.s32.totalorder %s20, 0
      %p157 = por %p155, %p156
      %p158 = scmp.le.s32.totalorder 1, %s14
      %p159 = scmp.lt.s32.totalorder %s14, 3
      %p160 = pnand %p158, %p159
      %p161 = pneg %p160
      // Predicated region
      $region9: #{complete_dt_forward.10} parent=5 // pred_check
        _
      $region10: #{complete_dt_forward.10} parent=5 // pred_check_branch
        %163 = sbr.rel (%p160) target = $region12
      $region11: #{complete_dt_forward.10} parent=5 // pred_region
        %s164 = ssub.s32 %s14, 1
        // Predicated region
        $region13: #{complete_dt_forward.10} parent=11 // pred_check
          %p165 = pneg %p61
        $region14: #{complete_dt_forward.10} parent=11 // pred_check_branch
          %167 = sbr.rel (%p165) target = $region16
        $region15: #{complete_dt_forward.10} parent=11 // pred_region
          %s169 = ssub.s32 8192, 8192
          %170 = vsyncadd [#allocation3], %s169
          %s171 = sshll.u32 [#allocation2], 4
          %s172 = int_to_ptr.vmem [resolvable:$true] %s171
          %177 = dma.hbm_to_vmem [thread:$0]  %s1, 8192, %s172, [#allocation3], 256, 256, 16
        $region16: #{complete_dt_forward.10} parent=11 // pred_fallthru
          _
        // Predicated region
        $region17: #{complete_dt_forward.10} parent=11 // pred_check
          %p178 = pneg %p82
        $region18: #{complete_dt_forward.10} parent=11 // pred_check_branch
          %180 = sbr.rel (%p178) target = $region20
        $region19: #{complete_dt_forward.10} parent=11 // pred_region
          %s182 = ssub.s32 64, 64
          %183 = vsyncadd [#allocation5], %s182
          %s185 = sshll.u32 [#allocation4], 4
          %s186 = int_to_ptr.vmem [resolvable:$true] %s185
          %188 = dma.hbm_to_vmem [thread:$0]  %s2, 64, %s186, [#allocation5]
        $region20: #{complete_dt_forward.10} parent=11 // pred_fallthru
          _
        // Predicated region
        $region21: #{complete_dt_forward.10} parent=11 // pred_check
          %p189 = pneg %p103
        $region22: #{complete_dt_forward.10} parent=11 // pred_check_branch
          %191 = sbr.rel (%p189) target = $region24
        $region23: #{complete_dt_forward.10} parent=11 // pred_region
          %s193 = ssub.s32 16384, 16384
          %194 = vsyncadd [#allocation5], %s193
          %s195 = sshll.u32 [#allocation6], 4
          %s196 = int_to_ptr.vmem [resolvable:$true] %s195
          %201 = dma.hbm_to_vmem [thread:$0]  %s3, 16384, %s196, [#allocation5], 256, 256, 16
        $region24: #{complete_dt_forward.10} parent=11 // pred_fallthru
          _
        // Predicated region
        $region25: #{complete_dt_forward.10} parent=11 // pred_check
          %p202 = pneg %p124
        $region26: #{complete_dt_forward.10} parent=11 // pred_check_branch
          %204 = sbr.rel (%p202) target = $region28
        $region27: #{complete_dt_forward.10} parent=11 // pred_region
          %s206 = ssub.s32 64, 64
          %207 = vsyncadd [#allocation8], %s206
          %s209 = sshll.u32 [#allocation7], 4
          %s210 = int_to_ptr.vmem [resolvable:$true] %s209
          %212 = dma.hbm_to_vmem [thread:$0]  %s4, 64, %s210, [#allocation8]
        $region28: #{complete_dt_forward.10} parent=11 // pred_fallthru
          _
      $region12: #{complete_dt_forward.10} parent=5 // pred_fallthru
        _
      %p213 = scmp.lt.s32.totalorder %s14, 2
      // Predicated region
      $region29: #{complete_dt_forward.10} parent=5 // pred_check
        %p214 = pneg %p213
      $region30: #{complete_dt_forward.10} parent=5 // pred_check_branch
        %216 = sbr.rel (%p214) target = $region32
      $region31: #{complete_dt_forward.10} parent=5 // pred_region
        // Predicated region
        $region33: #{complete_dt_forward.10} parent=31 // pred_check
          %p217 = pneg %p34
        $region34: #{complete_dt_forward.10} parent=31 // pred_check_branch
          %219 = sbr.rel (%p217) target = $region36
        $region35: #{complete_dt_forward.10} parent=31 // pred_region
          %p220 = scmp.lt.s32.totalorder %s14, 1
          %s221 = scalar_select %p220, %s14, 1
          %s222 = smul.addr %s221, 4
          %s223 = smul.addr %s222, 4
          %s224 = scalar_lea.vmem %s0, %s223
        $region36: #{complete_dt_forward.10} parent=31 // pred_fallthru
          _
      $region32: #{complete_dt_forward.10} parent=5 // pred_fallthru
        _
      %p225 = scmp.le.s32.totalorder 1, %s14
      %p226 = scmp.lt.s32.totalorder %s14, 3
      %p227 = pnand %p225, %p226
      %p228 = pneg %p227
      // Predicated region
      $region37: #{complete_dt_forward.10} parent=5 // pred_check
        _
      $region38: #{complete_dt_forward.10} parent=5 // pred_check_branch
        %230 = sbr.rel (%p227) target = $region40
      $region39: #{complete_dt_forward.10} parent=5 // pred_region
        %s231 = ssub.s32 %s14, 1
        // Predicated region
        $region41: #{complete_dt_forward.10} parent=39 // pred_check
          %p232 = pneg %p61
        $region42: #{complete_dt_forward.10} parent=39 // pred_check_branch
          %234 = sbr.rel (%p232) target = $region44
        $region43: #{complete_dt_forward.10} parent=39 // pred_region
          %235 = dma.done [#allocation3], 8192
        $region44: #{complete_dt_forward.10} parent=39 // pred_fallthru
          _
        // Predicated region
        $region45: #{complete_dt_forward.10} parent=39 // pred_check
          %p236 = pneg %p82
        $region46: #{complete_dt_forward.10} parent=39 // pred_check_branch
          %238 = sbr.rel (%p236) target = $region48
        $region47: #{complete_dt_forward.10} parent=39 // pred_region
          %239 = dma.done [#allocation5], 64
        $region48: #{complete_dt_forward.10} parent=39 // pred_fallthru
          _
        // Predicated region
        $region49: #{complete_dt_forward.10} parent=39 // pred_check
          %p240 = pneg %p103
        $region50: #{complete_dt_forward.10} parent=39 // pred_check_branch
          %242 = sbr.rel (%p240) target = $region52
        $region51: #{complete_dt_forward.10} parent=39 // pred_region
          %243 = dma.done [#allocation5], 16384
        $region52: #{complete_dt_forward.10} parent=39 // pred_fallthru
          _
        // Predicated region
        $region53: #{complete_dt_forward.10} parent=39 // pred_check
          %p244 = pneg %p124
        $region54: #{complete_dt_forward.10} parent=39 // pred_check_branch
          %246 = sbr.rel (%p244) target = $region56
        $region55: #{complete_dt_forward.10} parent=39 // pred_region
          %247 = dma.done [#allocation8], 64
        $region56: #{complete_dt_forward.10} parent=39 // pred_fallthru
          _
        %p248 = scmp.lt.s32.totalorder %s19, 1
        %s249 = scalar_select %p248, %s19, 1
        %s250 = smul.addr %s249, 4
        %s251 = smul.addr %s250, 4
        %s252 = scalar_lea.vmem %s0, %s251
        %p253 = pneg %p40
        %p254 = pneg %p37
        %p255 = pneg %p61
        %p256 = pneg %p58
        %p257 = pneg %p82
        %p258 = pneg %p79
        %p259 = pneg %p103
        %p260 = pneg %p100
        %p261 = pneg %p124
        %p262 = pneg %p121
        %p263 = pneg %p150
        %p264 = pneg %p147
        %p265 = scmp.lt.s32.totalorder %s19, 1
        %s266 = scalar_select %p265, %s19, 1
        %s267 = smul.addr %s266, 4
        %s268 = scalar_lea.vmem %s5, %s267
        %p269 = scmp.lt.s32.totalorder %s19, 1
        %s270 = scalar_select %p269, %s19, 1
        %s271 = smul.addr %s270, 4
        %s272 = smul.addr %s271, 4
        %s273 = scalar_lea.vmem %s0, %s272
        %p274 = scmp.lt.s32.totalorder %s19, 1
        %s275 = scalar_select %p274, %s19, 1
        %s276 = smul.addr %s275, 4
        %s277 = scalar_lea.vmem %s5, %s276
        %v278 = vld [vmem:[%s273] sm:$0xff]
        %v279 = vld [vmem:[%s273 + $0x8] sm:$0xff]
        %v280 = vld [vmem:[#allocation2] sm:$0xff]
        %v281 = vld [vmem:[#allocation2 + $0x8] sm:$0xff]
        %v282 = vld [vmem:[#allocation2 + $0x10] sm:$0xff]
        %v283 = vld [vmem:[#allocation2 + $0x18] sm:$0xff]
        %v284 = vld [vmem:[#allocation2 + $0x20] sm:$0xff]
        %v285 = vld [vmem:[#allocation2 + $0x28] sm:$0xff]
        %v286 = vld [vmem:[#allocation2 + $0x30] sm:$0xff]
        %v287 = vld [vmem:[#allocation2 + $0x38] sm:$0xff]
        %v288 = vld [vmem:[#allocation2 + $0x40] sm:$0xff]
        %v289 = vld [vmem:[#allocation2 + $0x48] sm:$0xff]
        %v290 = vld [vmem:[#allocation2 + $0x50] sm:$0xff]
        %v291 = vld [vmem:[#allocation2 + $0x58] sm:$0xff]
        %v292 = vld [vmem:[#allocation2 + $0x60] sm:$0xff]
        %v293 = vld [vmem:[#allocation2 + $0x68] sm:$0xff]
        %v294 = vld [vmem:[#allocation2 + $0x70] sm:$0xff]
        %v295 = vld [vmem:[#allocation2 + $0x78] sm:$0xff]
        %v296 = vld [vmem:[#allocation2 + $0x80] sm:$0xff]
        %v297 = vld [vmem:[#allocation2 + $0x88] sm:$0xff]
        %v298 = vld [vmem:[#allocation2 + $0x90] sm:$0xff]
        %v299 = vld [vmem:[#allocation2 + $0x98] sm:$0xff]
        %v300 = vld [vmem:[#allocation2 + $0xa0] sm:$0xff]
        %v301 = vld [vmem:[#allocation2 + $0xa8] sm:$0xff]
        %v302 = vld [vmem:[#allocation2 + $0xb0] sm:$0xff]
        %v303 = vld [vmem:[#allocation2 + $0xb8] sm:$0xff]
        %v304 = vld [vmem:[#allocation2 + $0xc0] sm:$0xff]
        %v305 = vld [vmem:[#allocation2 + $0xc8] sm:$0xff]
        %v306 = vld [vmem:[#allocation2 + $0xd0] sm:$0xff]
        %v307 = vld [vmem:[#allocation2 + $0xd8] sm:$0xff]
        %v308 = vld [vmem:[#allocation2 + $0xe0] sm:$0xff]
        %v309 = vld [vmem:[#allocation2 + $0xe8] sm:$0xff]
        %v310 = vld [vmem:[#allocation2 + $0xf0] sm:$0xff]
        %v311 = vld [vmem:[#allocation2 + $0xf8] sm:$0xff]
        %v312 = vld [vmem:[#allocation2 + $0x100] sm:$0xff]
        %v313 = vld [vmem:[#allocation2 + $0x108] sm:$0xff]
        %v314 = vld [vmem:[#allocation2 + $0x110] sm:$0xff]
        %v315 = vld [vmem:[#allocation2 + $0x118] sm:$0xff]
        %v316 = vld [vmem:[#allocation2 + $0x120] sm:$0xff]
        %v317 = vld [vmem:[#allocation2 + $0x128] sm:$0xff]
        %v318 = vld [vmem:[#allocation2 + $0x130] sm:$0xff]
        %v319 = vld [vmem:[#allocation2 + $0x138] sm:$0xff]
        %v320 = vld [vmem:[#allocation2 + $0x140] sm:$0xff]
        %v321 = vld [vmem:[#allocation2 + $0x148] sm:$0xff]
        %v322 = vld [vmem:[#allocation2 + $0x150] sm:$0xff]
        %v323 = vld [vmem:[#allocation2 + $0x158] sm:$0xff]
        %v324 = vld [vmem:[#allocation2 + $0x160] sm:$0xff]
        %v325 = vld [vmem:[#allocation2 + $0x168] sm:$0xff]
        %v326 = vld [vmem:[#allocation2 + $0x170] sm:$0xff]
        %v327 = vld [vmem:[#allocation2 + $0x178] sm:$0xff]
        %v328 = vld [vmem:[#allocation2 + $0x180] sm:$0xff]
        %v329 = vld [vmem:[#allocation2 + $0x188] sm:$0xff]
        %v330 = vld [vmem:[#allocation2 + $0x190] sm:$0xff]
        %v331 = vld [vmem:[#allocation2 + $0x198] sm:$0xff]
        %v332 = vld [vmem:[#allocation2 + $0x1a0] sm:$0xff]
        %v333 = vld [vmem:[#allocation2 + $0x1a8] sm:$0xff]
        %v334 = vld [vmem:[#allocation2 + $0x1b0] sm:$0xff]
        %v335 = vld [vmem:[#allocation2 + $0x1b8] sm:$0xff]
        %v336 = vld [vmem:[#allocation2 + $0x1c0] sm:$0xff]
        %v337 = vld [vmem:[#allocation2 + $0x1c8] sm:$0xff]
        %v338 = vld [vmem:[#allocation2 + $0x1d0] sm:$0xff]
        %v339 = vld [vmem:[#allocation2 + $0x1d8] sm:$0xff]
        %v340 = vld [vmem:[#allocation2 + $0x1e0] sm:$0xff]
        %v341 = vld [vmem:[#allocation2 + $0x1e8] sm:$0xff]
        %v342 = vld [vmem:[#allocation2 + $0x1f0] sm:$0xff]
        %v343 = vld [vmem:[#allocation2 + $0x1f8] sm:$0xff]
        %v344 = vld [vmem:[#allocation4] sm:$0xf]
        %v346 = vlaneseq
        %v347 = vshrl.u32 %v346, 7
        %v348 = vsub.s32 0, %v347
        %v349 = vrot.slane %v344, %v348
        %v350 = vlaneseq
        %v351 = vshrl.u32 %v350, 7
        %v352 = vsub.s32 1, %v351
        %v353 = vrot.slane %v344, %v352
        %v354 = vlaneseq
        %v355 = vshrl.u32 %v354, 7
        %v356 = vsub.s32 2, %v355
        %v357 = vrot.slane %v344, %v356
        %v358 = vlaneseq
        %v359 = vshrl.u32 %v358, 7
        %v360 = vsub.s32 3, %v359
        %v361 = vrot.slane %v344, %v360
        %v368 = vunpack.c.l.b16 %v278
        %v369 = vunpack.c.h.b16 %v278
        %v370 = vunpack.c.l.b16 %v279
        %v371 = vunpack.c.h.b16 %v279
        %v372 = vpack.c.b16 %v370, %v368
        %v373 = vpack.c.b16 %v371, %v369
        %v440 = vunpack.c.l.b16 %v280
        %v441 = vunpack.c.h.b16 %v280
        %v442 = vunpack.c.l.b16 %v281
        %v443 = vunpack.c.h.b16 %v281
        %v444 = vunpack.c.l.b16 %v282
        %v445 = vunpack.c.h.b16 %v282
        %v446 = vunpack.c.l.b16 %v283
        %v447 = vunpack.c.h.b16 %v283
        %v448 = vunpack.c.l.b16 %v284
        %v449 = vunpack.c.h.b16 %v284
        %v450 = vunpack.c.l.b16 %v285
        %v451 = vunpack.c.h.b16 %v285
        %v452 = vunpack.c.l.b16 %v286
        %v453 = vunpack.c.h.b16 %v286
        %v454 = vunpack.c.l.b16 %v287
        %v455 = vunpack.c.h.b16 %v287
        %v456 = vunpack.c.l.b16 %v288
        %v457 = vunpack.c.h.b16 %v288
        %v458 = vunpack.c.l.b16 %v289
        %v459 = vunpack.c.h.b16 %v289
        %v460 = vunpack.c.l.b16 %v290
        %v461 = vunpack.c.h.b16 %v290
        %v462 = vunpack.c.l.b16 %v291
        %v463 = vunpack.c.h.b16 %v291
        %v464 = vunpack.c.l.b16 %v292
        %v465 = vunpack.c.h.b16 %v292
        %v466 = vunpack.c.l.b16 %v293
        %v467 = vunpack.c.h.b16 %v293
        %v468 = vunpack.c.l.b16 %v294
        %v469 = vunpack.c.h.b16 %v294
        %v470 = vunpack.c.l.b16 %v295
        %v471 = vunpack.c.h.b16 %v295
        %v472 = vunpack.c.l.b16 %v296
        %v473 = vunpack.c.h.b16 %v296
        %v474 = vunpack.c.l.b16 %v297
        %v475 = vunpack.c.h.b16 %v297
        %v476 = vunpack.c.l.b16 %v298
        %v477 = vunpack.c.h.b16 %v298
        %v478 = vunpack.c.l.b16 %v299
        %v479 = vunpack.c.h.b16 %v299
        %v480 = vunpack.c.l.b16 %v300
        %v481 = vunpack.c.h.b16 %v300
        %v482 = vunpack.c.l.b16 %v301
        %v483 = vunpack.c.h.b16 %v301
        %v484 = vunpack.c.l.b16 %v302
        %v485 = vunpack.c.h.b16 %v302
        %v486 = vunpack.c.l.b16 %v303
        %v487 = vunpack.c.h.b16 %v303
        %v488 = vunpack.c.l.b16 %v304
        %v489 = vunpack.c.h.b16 %v304
        %v490 = vunpack.c.l.b16 %v305
        %v491 = vunpack.c.h.b16 %v305
        %v492 = vunpack.c.l.b16 %v306
        %v493 = vunpack.c.h.b16 %v306
        %v494 = vunpack.c.l.b16 %v307
        %v495 = vunpack.c.h.b16 %v307
        %v496 = vunpack.c.l.b16 %v308
        %v497 = vunpack.c.h.b16 %v308
        %v498 = vunpack.c.l.b16 %v309
        %v499 = vunpack.c.h.b16 %v309
        %v500 = vunpack.c.l.b16 %v310
        %v501 = vunpack.c.h.b16 %v310
        %v502 = vunpack.c.l.b16 %v311
        %v503 = vunpack.c.h.b16 %v311
        %v504 = vunpack.c.l.b16 %v312
        %v505 = vunpack.c.h.b16 %v312
        %v506 = vunpack.c.l.b16 %v313
        %v507 = vunpack.c.h.b16 %v313
        %v508 = vunpack.c.l.b16 %v314
        %v509 = vunpack.c.h.b16 %v314
        %v510 = vunpack.c.l.b16 %v315
        %v511 = vunpack.c.h.b16 %v315
        %v512 = vunpack.c.l.b16 %v316
        %v513 = vunpack.c.h.b16 %v316
        %v514 = vunpack.c.l.b16 %v317
        %v515 = vunpack.c.h.b16 %v317
        %v516 = vunpack.c.l.b16 %v318
        %v517 = vunpack.c.h.b16 %v318
        %v518 = vunpack.c.l.b16 %v319
        %v519 = vunpack.c.h.b16 %v319
        %v520 = vunpack.c.l.b16 %v320
        %v521 = vunpack.c.h.b16 %v320
        %v522 = vunpack.c.l.b16 %v321
        %v523 = vunpack.c.h.b16 %v321
        %v524 = vunpack.c.l.b16 %v322
        %v525 = vunpack.c.h.b16 %v322
        %v526 = vunpack.c.l.b16 %v323
        %v527 = vunpack.c.h.b16 %v323
        %v528 = vunpack.c.l.b16 %v324
        %v529 = vunpack.c.h.b16 %v324
        %v530 = vunpack.c.l.b16 %v325
        %v531 = vunpack.c.h.b16 %v325
        %v532 = vunpack.c.l.b16 %v326
        %v533 = vunpack.c.h.b16 %v326
        %v534 = vunpack.c.l.b16 %v327
        %v535 = vunpack.c.h.b16 %v327
        %v536 = vunpack.c.l.b16 %v328
        %v537 = vunpack.c.h.b16 %v328
        %v538 = vunpack.c.l.b16 %v329
        %v539 = vunpack.c.h.b16 %v329
        %v540 = vunpack.c.l.b16 %v330
        %v541 = vunpack.c.h.b16 %v330
        %v542 = vunpack.c.l.b16 %v331
        %v543 = vunpack.c.h.b16 %v331
        %v544 = vunpack.c.l.b16 %v332
        %v545 = vunpack.c.h.b16 %v332
        %v546 = vunpack.c.l.b16 %v333
        %v547 = vunpack.c.h.b16 %v333
        %v548 = vunpack.c.l.b16 %v334
        %v549 = vunpack.c.h.b16 %v334
        %v550 = vunpack.c.l.b16 %v335
        %v551 = vunpack.c.h.b16 %v335
        %v552 = vunpack.c.l.b16 %v336
        %v553 = vunpack.c.h.b16 %v336
        %v554 = vunpack.c.l.b16 %v337
        %v555 = vunpack.c.h.b16 %v337
        %v556 = vunpack.c.l.b16 %v338
        %v557 = vunpack.c.h.b16 %v338
        %v558 = vunpack.c.l.b16 %v339
        %v559 = vunpack.c.h.b16 %v339
        %v560 = vunpack.c.l.b16 %v340
        %v561 = vunpack.c.h.b16 %v340
        %v562 = vunpack.c.l.b16 %v341
        %v563 = vunpack.c.h.b16 %v341
        %v564 = vunpack.c.l.b16 %v342
        %v565 = vunpack.c.h.b16 %v342
        %v566 = vunpack.c.l.b16 %v343
        %v567 = vunpack.c.h.b16 %v343
        %v568 = vpack.c.b16 %v444, %v440
        %v569 = vpack.c.b16 %v445, %v441
        %v570 = vpack.c.b16 %v446, %v442
        %v571 = vpack.c.b16 %v447, %v443
        %v572 = vpack.c.b16 %v452, %v448
        %v573 = vpack.c.b16 %v453, %v449
        %v574 = vpack.c.b16 %v454, %v450
        %v575 = vpack.c.b16 %v455, %v451
        %v576 = vpack.c.b16 %v460, %v456
        %v577 = vpack.c.b16 %v461, %v457
        %v578 = vpack.c.b16 %v462, %v458
        %v579 = vpack.c.b16 %v463, %v459
        %v580 = vpack.c.b16 %v468, %v464
        %v581 = vpack.c.b16 %v469, %v465
        %v582 = vpack.c.b16 %v470, %v466
        %v583 = vpack.c.b16 %v471, %v467
        %v584 = vpack.c.b16 %v476, %v472
        %v585 = vpack.c.b16 %v477, %v473
        %v586 = vpack.c.b16 %v478, %v474
        %v587 = vpack.c.b16 %v479, %v475
        %v588 = vpack.c.b16 %v484, %v480
        %v589 = vpack.c.b16 %v485, %v481
        %v590 = vpack.c.b16 %v486, %v482
        %v591 = vpack.c.b16 %v487, %v483
        %v592 = vpack.c.b16 %v492, %v488
        %v593 = vpack.c.b16 %v493, %v489
        %v594 = vpack.c.b16 %v494, %v490
        %v595 = vpack.c.b16 %v495, %v491
        %v596 = vpack.c.b16 %v500, %v496
        %v597 = vpack.c.b16 %v501, %v497
        %v598 = vpack.c.b16 %v502, %v498
        %v599 = vpack.c.b16 %v503, %v499
        %v600 = vpack.c.b16 %v508, %v504
        %v601 = vpack.c.b16 %v509, %v505
        %v602 = vpack.c.b16 %v510, %v506
        %v603 = vpack.c.b16 %v511, %v507
        %v604 = vpack.c.b16 %v516, %v512
        %v605 = vpack.c.b16 %v517, %v513
        %v606 = vpack.c.b16 %v518, %v514
        %v607 = vpack.c.b16 %v519, %v515
        %v608 = vpack.c.b16 %v524, %v520
        %v609 = vpack.c.b16 %v525, %v521
        %v610 = vpack.c.b16 %v526, %v522
        %v611 = vpack.c.b16 %v527, %v523
        %v612 = vpack.c.b16 %v532, %v528
        %v613 = vpack.c.b16 %v533, %v529
        %v614 = vpack.c.b16 %v534, %v530
        %v615 = vpack.c.b16 %v535, %v531
        %v616 = vpack.c.b16 %v540, %v536
        %v617 = vpack.c.b16 %v541, %v537
        %v618 = vpack.c.b16 %v542, %v538
        %v619 = vpack.c.b16 %v543, %v539
        %v620 = vpack.c.b16 %v548, %v544
        %v621 = vpack.c.b16 %v549, %v545
        %v622 = vpack.c.b16 %v550, %v546
        %v623 = vpack.c.b16 %v551, %v547
        %v624 = vpack.c.b16 %v556, %v552
        %v625 = vpack.c.b16 %v557, %v553
        %v626 = vpack.c.b16 %v558, %v554
        %v627 = vpack.c.b16 %v559, %v555
        %v628 = vpack.c.b16 %v564, %v560
        %v629 = vpack.c.b16 %v565, %v561
        %v630 = vpack.c.b16 %v566, %v562
        %v631 = vpack.c.b16 %v567, %v563
        %696 = vmatprep.subr.bf16.mxu0 %v597
        %697 = vmatpush1.bf16.msra.mxu0 %v596
        %698 = vmatprep.subr.bf16.mxu0 %v593
        %699 = vmatpush1.bf16.msra.mxu0 %v592
        %700 = vmatprep.subr.bf16.mxu0 %v589
        %701 = vmatpush1.bf16.msra.mxu0 %v588
        %702 = vmatprep.subr.bf16.mxu0 %v585
        %703 = vmatpush1.bf16.msra.mxu0 %v584
        %704 = vmatprep.subr.bf16.mxu0 %v581
        %705 = vmatpush1.bf16.msra.mxu0 %v580
        %706 = vmatprep.subr.bf16.mxu0 %v577
        %707 = vmatpush1.bf16.msra.mxu0 %v576
        %708 = vmatprep.subr.bf16.mxu0 %v573
        %709 = vmatpush1.bf16.msra.mxu0 %v572
        %710 = vmatprep.subr.bf16.mxu0 %v569
        %711 = vmatpush1.bf16.msra.mxu0 %v568
        %712 = vmatprep.subr.bf16.mxu0 %v629
        %713 = vmatpush2.bf16.msra.mxu0 %v628
        %714 = vmatprep.subr.bf16.mxu0 %v625
        %715 = vmatpush2.bf16.msra.mxu0 %v624
        %716 = vmatprep.subr.bf16.mxu0 %v621
        %717 = vmatpush2.bf16.msra.mxu0 %v620
        %718 = vmatprep.subr.bf16.mxu0 %v617
        %719 = vmatpush2.bf16.msra.mxu0 %v616
        %720 = vmatprep.subr.bf16.mxu0 %v613
        %721 = vmatpush2.bf16.msra.mxu0 %v612
        %722 = vmatprep.subr.bf16.mxu0 %v609
        %723 = vmatpush2.bf16.msra.mxu0 %v608
        %724 = vmatprep.subr.bf16.mxu0 %v605
        %725 = vmatpush2.bf16.msra.mxu0 %v604
        %726 = vmatprep.subr.bf16.mxu0 %v601
        %727 = vmatpush2.bf16.msra.mxu0 %v600
        %728 = vmatprep.mubr.bf16.mxu0 %v373
        %729 = vmatmul.mubr.bf16.gmra.mxu0 %v372
        %v730 = vpop.f32.mrf.mxu0
        %v731 = vadd.f32 %v349, %v730
        %v732 = vpop.f32.mrf.mxu0
        %v733 = vadd.f32 %v353, %v732
        %v734 = vpop.f32.mrf.mxu0
        %v735 = vadd.f32 %v349, %v734
        %v736 = vpop.f32.mrf.mxu0
        %v737 = vadd.f32 %v353, %v736
        %738 = vdwg.mxu0
        %739 = vmatprep.subr.bf16.mxu0 %v599
        %740 = vmatpush1.bf16.msra.mxu0 %v598
        %741 = vmatprep.subr.bf16.mxu0 %v595
        %742 = vmatpush1.bf16.msra.mxu0 %v594
        %743 = vmatprep.subr.bf16.mxu0 %v591
        %744 = vmatpush1.bf16.msra.mxu0 %v590
        %745 = vmatprep.subr.bf16.mxu0 %v587
        %746 = vmatpush1.bf16.msra.mxu0 %v586
        %747 = vmatprep.subr.bf16.mxu0 %v583
        %748 = vmatpush1.bf16.msra.mxu0 %v582
        %749 = vmatprep.subr.bf16.mxu0 %v579
        %750 = vmatpush1.bf16.msra.mxu0 %v578
        %751 = vmatprep.subr.bf16.mxu0 %v575
        %752 = vmatpush1.bf16.msra.mxu0 %v574
        %753 = vmatprep.subr.bf16.mxu0 %v571
        %754 = vmatpush1.bf16.msra.mxu0 %v570
        %755 = vmatprep.subr.bf16.mxu0 %v631
        %756 = vmatpush2.bf16.msra.mxu0 %v630
        %757 = vmatprep.subr.bf16.mxu0 %v627
        %758 = vmatpush2.bf16.msra.mxu0 %v626
        %759 = vmatprep.subr.bf16.mxu0 %v623
        %760 = vmatpush2.bf16.msra.mxu0 %v622
        %761 = vmatprep.subr.bf16.mxu0 %v619
        %762 = vmatpush2.bf16.msra.mxu0 %v618
        %763 = vmatprep.subr.bf16.mxu0 %v615
        %764 = vmatpush2.bf16.msra.mxu0 %v614
        %765 = vmatprep.subr.bf16.mxu0 %v611
        %766 = vmatpush2.bf16.msra.mxu0 %v610
        %767 = vmatprep.subr.bf16.mxu0 %v607
        %768 = vmatpush2.bf16.msra.mxu0 %v606
        %769 = vmatprep.subr.bf16.mxu0 %v603
        %770 = vmatpush2.bf16.msra.mxu0 %v602
        %771 = vmatprep.mubr.bf16.mxu0 %v373
        %772 = vmatmul.mubr.bf16.gmra.mxu0 %v372
        %v773 = vpop.f32.mrf.mxu0
        %v774 = vadd.f32 %v357, %v773
        %v775 = vpop.f32.mrf.mxu0
        %v776 = vadd.f32 %v361, %v775
        %v777 = vpop.f32.mrf.mxu0
        %v778 = vadd.f32 %v357, %v777
        %v779 = vpop.f32.mrf.mxu0
        %v780 = vadd.f32 %v361, %v779
        %781 = vdwg.mxu0
        %v782 = vmul.f32 %v731, 0.5
        %v783 = vmul.f32 %v733, 0.5
        %v784 = vmul.f32 %v774, 0.5
        %v785 = vmul.f32 %v776, 0.5
        %v786 = vmul.f32 %v735, 0.5
        %v787 = vmul.f32 %v737, 0.5
        %v788 = vmul.f32 %v778, 0.5
        %v789 = vmul.f32 %v780, 0.5
        %v790 = vmul.f32 %v731, 0.044715
        %v791 = vmul.f32 %v733, 0.044715
        %v792 = vmul.f32 %v774, 0.044715
        %v793 = vmul.f32 %v776, 0.044715
        %v794 = vmul.f32 %v735, 0.044715
        %v795 = vmul.f32 %v737, 0.044715
        %v796 = vmul.f32 %v778, 0.044715
        %v797 = vmul.f32 %v780, 0.044715
        %v798 = vmul.f32 %v790, %v731
        %v799 = vmul.f32 %v791, %v733
        %v800 = vmul.f32 %v792, %v774
        %v801 = vmul.f32 %v793, %v776
        %v802 = vmul.f32 %v794, %v735
        %v803 = vmul.f32 %v795, %v737
        %v804 = vmul.f32 %v796, %v778
        %v805 = vmul.f32 %v797, %v780
        %v806 = vmul.f32 %v798, %v731
        %v807 = vmul.f32 %v799, %v733
        %v808 = vmul.f32 %v800, %v774
        %v809 = vmul.f32 %v801, %v776
        %v810 = vmul.f32 %v802, %v735
        %v811 = vmul.f32 %v803, %v737
        %v812 = vmul.f32 %v804, %v778
        %v813 = vmul.f32 %v805, %v780
        %v814 = vadd.f32 %v731, %v806
        %v815 = vadd.f32 %v733, %v807
        %v816 = vadd.f32 %v774, %v808
        %v817 = vadd.f32 %v776, %v809
        %v818 = vadd.f32 %v735, %v810
        %v819 = vadd.f32 %v737, %v811
        %v820 = vadd.f32 %v778, %v812
        %v821 = vadd.f32 %v780, %v813
        %v822 = vmul.f32 %v814, 0.7978846
        %v823 = vmul.f32 %v815, 0.7978846
        %v824 = vmul.f32 %v816, 0.7978846
        %v825 = vmul.f32 %v817, 0.7978846
        %v826 = vmul.f32 %v818, 0.7978846
        %v827 = vmul.f32 %v819, 0.7978846
        %v828 = vmul.f32 %v820, 0.7978846
        %v829 = vmul.f32 %v821, 0.7978846
        %v830 = vtanh.pop %v822
        %v831 = vtanh.pop %v823
        %v832 = vtanh.pop %v824
        %v833 = vtanh.pop %v825
        %v834 = vtanh.pop %v826
        %v835 = vtanh.pop %v827
        %v836 = vtanh.pop %v828
        %v837 = vtanh.pop %v829
        %v838 = vadd.f32 %v830, 1.0
        %v839 = vadd.f32 %v831, 1.0
        %v840 = vadd.f32 %v832, 1.0
        %v841 = vadd.f32 %v833, 1.0
        %v842 = vadd.f32 %v834, 1.0
        %v843 = vadd.f32 %v835, 1.0
        %v844 = vadd.f32 %v836, 1.0
        %v845 = vadd.f32 %v837, 1.0
        %v846 = vmul.f32 %v782, %v838
        %v847 = vmul.f32 %v783, %v839
        %v848 = vmul.f32 %v784, %v840
        %v849 = vmul.f32 %v785, %v841
        %v850 = vmul.f32 %v786, %v842
        %v851 = vmul.f32 %v787, %v843
        %v852 = vmul.f32 %v788, %v844
        %v853 = vmul.f32 %v789, %v845
        %v854 = vmax.f32 %v846, %v850
        %v855 = vrot.slane %v854, 4
        %v856 = vmax.f32 %v854, %v855
        %v857 = vrot.slane %v856, 2
        %v858 = vmax.f32 %v856, %v857
        %v859 = vrot.slane %v858, 1
        %v860 = vmax.f32 %v858, %v859
        %v861 = vmax.f32 %v847, %v851
        %v862 = vrot.slane %v861, 4
        %v863 = vmax.f32 %v861, %v862
        %v864 = vrot.slane %v863, 2
        %v865 = vmax.f32 %v863, %v864
        %v866 = vrot.slane %v865, 1
        %v867 = vmax.f32 %v865, %v866
        %v868 = vmax.f32 %v848, %v852
        %v869 = vrot.slane %v868, 4
        %v870 = vmax.f32 %v868, %v869
        %v871 = vrot.slane %v870, 2
        %v872 = vmax.f32 %v870, %v871
        %v873 = vrot.slane %v872, 1
        %v874 = vmax.f32 %v872, %v873
        %v875 = vmax.f32 %v849, %v853
        %v876 = vrot.slane %v875, 4
        %v877 = vmax.f32 %v875, %v876
        %v878 = vrot.slane %v877, 2
        %v879 = vmax.f32 %v877, %v878
        %v880 = vrot.slane %v879, 1
        %v881 = vmax.f32 %v879, %v880
        %v882 = vpack.c.bf16 %v860, %v860
        %v883 = vpack.c.bf16 %v867, %v867
        %v884 = vpack.c.bf16 %v874, %v874
        %v885 = vpack.c.bf16 %v881, %v881
        %v886 = vld [vmem:[#allocation6] sm:$0xff]
        %v887 = vld [vmem:[#allocation6 + $0x8] sm:$0xff]
        %v888 = vld [vmem:[#allocation6 + $0x10] sm:$0xff]
        %v889 = vld [vmem:[#allocation6 + $0x18] sm:$0xff]
        %v890 = vld [vmem:[#allocation6 + $0x20] sm:$0xff]
        %v891 = vld [vmem:[#allocation6 + $0x28] sm:$0xff]
        %v892 = vld [vmem:[#allocation6 + $0x30] sm:$0xff]
        %v893 = vld [vmem:[#allocation6 + $0x38] sm:$0xff]
        %v894 = vld [vmem:[#allocation6 + $0x40] sm:$0xff]
        %v895 = vld [vmem:[#allocation6 + $0x48] sm:$0xff]
        %v896 = vld [vmem:[#allocation6 + $0x50] sm:$0xff]
        %v897 = vld [vmem:[#allocation6 + $0x58] sm:$0xff]
        %v898 = vld [vmem:[#allocation6 + $0x60] sm:$0xff]
        %v899 = vld [vmem:[#allocation6 + $0x68] sm:$0xff]
        %v900 = vld [vmem:[#allocation6 + $0x70] sm:$0xff]
        %v901 = vld [vmem:[#allocation6 + $0x78] sm:$0xff]
        %v902 = vld [vmem:[#allocation6 + $0x80] sm:$0xff]
        %v903 = vld [vmem:[#allocation6 + $0x88] sm:$0xff]
        %v904 = vld [vmem:[#allocation6 + $0x90] sm:$0xff]
        %v905 = vld [vmem:[#allocation6 + $0x98] sm:$0xff]
        %v906 = vld [vmem:[#allocation6 + $0xa0] sm:$0xff]
        %v907 = vld [vmem:[#allocation6 + $0xa8] sm:$0xff]
        %v908 = vld [vmem:[#allocation6 + $0xb0] sm:$0xff]
        %v909 = vld [vmem:[#allocation6 + $0xb8] sm:$0xff]
        %v910 = vld [vmem:[#allocation6 + $0xc0] sm:$0xff]
        %v911 = vld [vmem:[#allocation6 + $0xc8] sm:$0xff]
        %v912 = vld [vmem:[#allocation6 + $0xd0] sm:$0xff]
        %v913 = vld [vmem:[#allocation6 + $0xd8] sm:$0xff]
        %v914 = vld [vmem:[#allocation6 + $0xe0] sm:$0xff]
        %v915 = vld [vmem:[#allocation6 + $0xe8] sm:$0xff]
        %v916 = vld [vmem:[#allocation6 + $0xf0] sm:$0xff]
        %v917 = vld [vmem:[#allocation6 + $0xf8] sm:$0xff]
        %v918 = vld [vmem:[#allocation6 + $0x100] sm:$0xff]
        %v919 = vld [vmem:[#allocation6 + $0x108] sm:$0xff]
        %v920 = vld [vmem:[#allocation6 + $0x110] sm:$0xff]
        %v921 = vld [vmem:[#allocation6 + $0x118] sm:$0xff]
        %v922 = vld [vmem:[#allocation6 + $0x120] sm:$0xff]
        %v923 = vld [vmem:[#allocation6 + $0x128] sm:$0xff]
        %v924 = vld [vmem:[#allocation6 + $0x130] sm:$0xff]
        %v925 = vld [vmem:[#allocation6 + $0x138] sm:$0xff]
        %v926 = vld [vmem:[#allocation6 + $0x140] sm:$0xff]
        %v927 = vld [vmem:[#allocation6 + $0x148] sm:$0xff]
        %v928 = vld [vmem:[#allocation6 + $0x150] sm:$0xff]
        %v929 = vld [vmem:[#allocation6 + $0x158] sm:$0xff]
        %v930 = vld [vmem:[#allocation6 + $0x160] sm:$0xff]
        %v931 = vld [vmem:[#allocation6 + $0x168] sm:$0xff]
        %v932 = vld [vmem:[#allocation6 + $0x170] sm:$0xff]
        %v933 = vld [vmem:[#allocation6 + $0x178] sm:$0xff]
        %v934 = vld [vmem:[#allocation6 + $0x180] sm:$0xff]
        %v935 = vld [vmem:[#allocation6 + $0x188] sm:$0xff]
        %v936 = vld [vmem:[#allocation6 + $0x190] sm:$0xff]
        %v937 = vld [vmem:[#allocation6 + $0x198] sm:$0xff]
        %v938 = vld [vmem:[#allocation6 + $0x1a0] sm:$0xff]
        %v939 = vld [vmem:[#allocation6 + $0x1a8] sm:$0xff]
        %v940 = vld [vmem:[#allocation6 + $0x1b0] sm:$0xff]
        %v941 = vld [vmem:[#allocation6 + $0x1b8] sm:$0xff]
        %v942 = vld [vmem:[#allocation6 + $0x1c0] sm:$0xff]
        %v943 = vld [vmem:[#allocation6 + $0x1c8] sm:$0xff]
        %v944 = vld [vmem:[#allocation6 + $0x1d0] sm:$0xff]
        %v945 = vld [vmem:[#allocation6 + $0x1d8] sm:$0xff]
        %v946 = vld [vmem:[#allocation6 + $0x1e0] sm:$0xff]
        %v947 = vld [vmem:[#allocation6 + $0x1e8] sm:$0xff]
        %v948 = vld [vmem:[#allocation6 + $0x1f0] sm:$0xff]
        %v949 = vld [vmem:[#allocation6 + $0x1f8] sm:$0xff]
        %v950 = vld [vmem:[#allocation6 + $0x200] sm:$0xff]
        %v951 = vld [vmem:[#allocation6 + $0x208] sm:$0xff]
        %v952 = vld [vmem:[#allocation6 + $0x210] sm:$0xff]
        %v953 = vld [vmem:[#allocation6 + $0x218] sm:$0xff]
        %v954 = vld [vmem:[#allocation6 + $0x220] sm:$0xff]
        %v955 = vld [vmem:[#allocation6 + $0x228] sm:$0xff]
        %v956 = vld [vmem:[#allocation6 + $0x230] sm:$0xff]
        %v957 = vld [vmem:[#allocation6 + $0x238] sm:$0xff]
        %v958 = vld [vmem:[#allocation6 + $0x240] sm:$0xff]
        %v959 = vld [vmem:[#allocation6 + $0x248] sm:$0xff]
        %v960 = vld [vmem:[#allocation6 + $0x250] sm:$0xff]
        %v961 = vld [vmem:[#allocation6 + $0x258] sm:$0xff]
        %v962 = vld [vmem:[#allocation6 + $0x260] sm:$0xff]
        %v963 = vld [vmem:[#allocation6 + $0x268] sm:$0xff]
        %v964 = vld [vmem:[#allocation6 + $0x270] sm:$0xff]
        %v965 = vld [vmem:[#allocation6 + $0x278] sm:$0xff]
        %v966 = vld [vmem:[#allocation6 + $0x280] sm:$0xff]
        %v967 = vld [vmem:[#allocation6 + $0x288] sm:$0xff]
        %v968 = vld [vmem:[#allocation6 + $0x290] sm:$0xff]
        %v969 = vld [vmem:[#allocation6 + $0x298] sm:$0xff]
        %v970 = vld [vmem:[#allocation6 + $0x2a0] sm:$0xff]
        %v971 = vld [vmem:[#allocation6 + $0x2a8] sm:$0xff]
        %v972 = vld [vmem:[#allocation6 + $0x2b0] sm:$0xff]
        %v973 = vld [vmem:[#allocation6 + $0x2b8] sm:$0xff]
        %v974 = vld [vmem:[#allocation6 + $0x2c0] sm:$0xff]
        %v975 = vld [vmem:[#allocation6 + $0x2c8] sm:$0xff]
        %v976 = vld [vmem:[#allocation6 + $0x2d0] sm:$0xff]
        %v977 = vld [vmem:[#allocation6 + $0x2d8] sm:$0xff]
        %v978 = vld [vmem:[#allocation6 + $0x2e0] sm:$0xff]
        %v979 = vld [vmem:[#allocation6 + $0x2e8] sm:$0xff]
        %v980 = vld [vmem:[#allocation6 + $0x2f0] sm:$0xff]
        %v981 = vld [vmem:[#allocation6 + $0x2f8] sm:$0xff]
        %v982 = vld [vmem:[#allocation6 + $0x300] sm:$0xff]
        %v983 = vld [vmem:[#allocation6 + $0x308] sm:$0xff]
        %v984 = vld [vmem:[#allocation6 + $0x310] sm:$0xff]
        %v985 = vld [vmem:[#allocation6 + $0x318] sm:$0xff]
        %v986 = vld [vmem:[#allocation6 + $0x320] sm:$0xff]
        %v987 = vld [vmem:[#allocation6 + $0x328] sm:$0xff]
        %v988 = vld [vmem:[#allocation6 + $0x330] sm:$0xff]
        %v989 = vld [vmem:[#allocation6 + $0x338] sm:$0xff]
        %v990 = vld [vmem:[#allocation6 + $0x340] sm:$0xff]
        %v991 = vld [vmem:[#allocation6 + $0x348] sm:$0xff]
        %v992 = vld [vmem:[#allocation6 + $0x350] sm:$0xff]
        %v993 = vld [vmem:[#allocation6 + $0x358] sm:$0xff]
        %v994 = vld [vmem:[#allocation6 + $0x360] sm:$0xff]
        %v995 = vld [vmem:[#allocation6 + $0x368] sm:$0xff]
        %v996 = vld [vmem:[#allocation6 + $0x370] sm:$0xff]
        %v997 = vld [vmem:[#allocation6 + $0x378] sm:$0xff]
        %v998 = vld [vmem:[#allocation6 + $0x380] sm:$0xff]
        %v999 = vld [vmem:[#allocation6 + $0x388] sm:$0xff]
        %v1000 = vld [vmem:[#allocation6 + $0x390] sm:$0xff]
        %v1001 = vld [vmem:[#allocation6 + $0x398] sm:$0xff]
        %v1002 = vld [vmem:[#allocation6 + $0x3a0] sm:$0xff]
        %v1003 = vld [vmem:[#allocation6 + $0x3a8] sm:$0xff]
        %v1004 = vld [vmem:[#allocation6 + $0x3b0] sm:$0xff]
        %v1005 = vld [vmem:[#allocation6 + $0x3b8] sm:$0xff]
        %v1006 = vld [vmem:[#allocation6 + $0x3c0] sm:$0xff]
        %v1007 = vld [vmem:[#allocation6 + $0x3c8] sm:$0xff]
        %v1008 = vld [vmem:[#allocation6 + $0x3d0] sm:$0xff]
        %v1009 = vld [vmem:[#allocation6 + $0x3d8] sm:$0xff]
        %v1010 = vld [vmem:[#allocation6 + $0x3e0] sm:$0xff]
        %v1011 = vld [vmem:[#allocation6 + $0x3e8] sm:$0xff]
        %v1012 = vld [vmem:[#allocation6 + $0x3f0] sm:$0xff]
        %v1013 = vld [vmem:[#allocation6 + $0x3f8] sm:$0xff]
        %v1014 = vld [vmem:[#allocation7] sm:$0xf]
        %v1143 = vunpack.c.l.b16 %v886
        %v1144 = vunpack.c.h.b16 %v886
        %v1145 = vunpack.c.l.b16 %v887
        %v1146 = vunpack.c.h.b16 %v887
        %v1147 = vunpack.c.l.b16 %v888
        %v1148 = vunpack.c.h.b16 %v888
        %v1149 = vunpack.c.l.b16 %v889
        %v1150 = vunpack.c.h.b16 %v889
        %v1151 = vunpack.c.l.b16 %v890
        %v1152 = vunpack.c.h.b16 %v890
        %v1153 = vunpack.c.l.b16 %v891
        %v1154 = vunpack.c.h.b16 %v891
        %v1155 = vunpack.c.l.b16 %v892
        %v1156 = vunpack.c.h.b16 %v892
        %v1157 = vunpack.c.l.b16 %v893
        %v1158 = vunpack.c.h.b16 %v893
        %v1159 = vunpack.c.l.b16 %v894
        %v1160 = vunpack.c.h.b16 %v894
        %v1161 = vunpack.c.l.b16 %v895
        %v1162 = vunpack.c.h.b16 %v895
        %v1163 = vunpack.c.l.b16 %v896
        %v1164 = vunpack.c.h.b16 %v896
        %v1165 = vunpack.c.l.b16 %v897
        %v1166 = vunpack.c.h.b16 %v897
        %v1167 = vunpack.c.l.b16 %v898
        %v1168 = vunpack.c.h.b16 %v898
        %v1169 = vunpack.c.l.b16 %v899
        %v1170 = vunpack.c.h.b16 %v899
        %v1171 = vunpack.c.l.b16 %v900
        %v1172 = vunpack.c.h.b16 %v900
        %v1173 = vunpack.c.l.b16 %v901
        %v1174 = vunpack.c.h.b16 %v901
        %v1175 = vunpack.c.l.b16 %v902
        %v1176 = vunpack.c.h.b16 %v902
        %v1177 = vunpack.c.l.b16 %v903
        %v1178 = vunpack.c.h.b16 %v903
        %v1179 = vunpack.c.l.b16 %v904
        %v1180 = vunpack.c.h.b16 %v904
        %v1181 = vunpack.c.l.b16 %v905
        %v1182 = vunpack.c.h.b16 %v905
        %v1183 = vunpack.c.l.b16 %v906
        %v1184 = vunpack.c.h.b16 %v906
        %v1185 = vunpack.c.l.b16 %v907
        %v1186 = vunpack.c.h.b16 %v907
        %v1187 = vunpack.c.l.b16 %v908
        %v1188 = vunpack.c.h.b16 %v908
        %v1189 = vunpack.c.l.b16 %v909
        %v1190 = vunpack.c.h.b16 %v909
        %v1191 = vunpack.c.l.b16 %v910
        %v1192 = vunpack.c.h.b16 %v910
        %v1193 = vunpack.c.l.b16 %v911
        %v1194 = vunpack.c.h.b16 %v911
        %v1195 = vunpack.c.l.b16 %v912
        %v1196 = vunpack.c.h.b16 %v912
        %v1197 = vunpack.c.l.b16 %v913
        %v1198 = vunpack.c.h.b16 %v913
        %v1199 = vunpack.c.l.b16 %v914
        %v1200 = vunpack.c.h.b16 %v914
        %v1201 = vunpack.c.l.b16 %v915
        %v1202 = vunpack.c.h.b16 %v915
        %v1203 = vunpack.c.l.b16 %v916
        %v1204 = vunpack.c.h.b16 %v916
        %v1205 = vunpack.c.l.b16 %v917
        %v1206 = vunpack.c.h.b16 %v917
        %v1207 = vunpack.c.l.b16 %v918
        %v1208 = vunpack.c.h.b16 %v918
        %v1209 = vunpack.c.l.b16 %v919
        %v1210 = vunpack.c.h.b16 %v919
        %v1211 = vunpack.c.l.b16 %v920
        %v1212 = vunpack.c.h.b16 %v920
        %v1213 = vunpack.c.l.b16 %v921
        %v1214 = vunpack.c.h.b16 %v921
        %v1215 = vunpack.c.l.b16 %v922
        %v1216 = vunpack.c.h.b16 %v922
        %v1217 = vunpack.c.l.b16 %v923
        %v1218 = vunpack.c.h.b16 %v923
        %v1219 = vunpack.c.l.b16 %v924
        %v1220 = vunpack.c.h.b16 %v924
        %v1221 = vunpack.c.l.b16 %v925
        %v1222 = vunpack.c.h.b16 %v925
        %v1223 = vunpack.c.l.b16 %v926
        %v1224 = vunpack.c.h.b16 %v926
        %v1225 = vunpack.c.l.b16 %v927
        %v1226 = vunpack.c.h.b16 %v927
        %v1227 = vunpack.c.l.b16 %v928
        %v1228 = vunpack.c.h.b16 %v928
        %v1229 = vunpack.c.l.b16 %v929
        %v1230 = vunpack.c.h.b16 %v929
        %v1231 = vunpack.c.l.b16 %v930
        %v1232 = vunpack.c.h.b16 %v930
        %v1233 = vunpack.c.l.b16 %v931
        %v1234 = vunpack.c.h.b16 %v931
        %v1235 = vunpack.c.l.b16 %v932
        %v1236 = vunpack.c.h.b16 %v932
        %v1237 = vunpack.c.l.b16 %v933
        %v1238 = vunpack.c.h.b16 %v933
        %v1239 = vunpack.c.l.b16 %v934
        %v1240 = vunpack.c.h.b16 %v934
        %v1241 = vunpack.c.l.b16 %v935
        %v1242 = vunpack.c.h.b16 %v935
        %v1243 = vunpack.c.l.b16 %v936
        %v1244 = vunpack.c.h.b16 %v936
        %v1245 = vunpack.c.l.b16 %v937
        %v1246 = vunpack.c.h.b16 %v937
        %v1247 = vunpack.c.l.b16 %v938
        %v1248 = vunpack.c.h.b16 %v938
        %v1249 = vunpack.c.l.b16 %v939
        %v1250 = vunpack.c.h.b16 %v939
        %v1251 = vunpack.c.l.b16 %v940
        %v1252 = vunpack.c.h.b16 %v940
        %v1253 = vunpack.c.l.b16 %v941
        %v1254 = vunpack.c.h.b16 %v941
        %v1255 = vunpack.c.l.b16 %v942
        %v1256 = vunpack.c.h.b16 %v942
        %v1257 = vunpack.c.l.b16 %v943
        %v1258 = vunpack.c.h.b16 %v943
        %v1259 = vunpack.c.l.b16 %v944
        %v1260 = vunpack.c.h.b16 %v944
        %v1261 = vunpack.c.l.b16 %v945
        %v1262 = vunpack.c.h.b16 %v945
        %v1263 = vunpack.c.l.b16 %v946
        %v1264 = vunpack.c.h.b16 %v946
        %v1265 = vunpack.c.l.b16 %v947
        %v1266 = vunpack.c.h.b16 %v947
        %v1267 = vunpack.c.l.b16 %v948
        %v1268 = vunpack.c.h.b16 %v948
        %v1269 = vunpack.c.l.b16 %v949
        %v1270 = vunpack.c.h.b16 %v949
        %v1271 = vunpack.c.l.b16 %v950
        %v1272 = vunpack.c.h.b16 %v950
        %v1273 = vunpack.c.l.b16 %v951
        %v1274 = vunpack.c.h.b16 %v951
        %v1275 = vunpack.c.l.b16 %v952
        %v1276 = vunpack.c.h.b16 %v952
        %v1277 = vunpack.c.l.b16 %v953
        %v1278 = vunpack.c.h.b16 %v953
        %v1279 = vunpack.c.l.b16 %v954
        %v1280 = vunpack.c.h.b16 %v954
        %v1281 = vunpack.c.l.b16 %v955
        %v1282 = vunpack.c.h.b16 %v955
        %v1283 = vunpack.c.l.b16 %v956
        %v1284 = vunpack.c.h.b16 %v956
        %v1285 = vunpack.c.l.b16 %v957
        %v1286 = vunpack.c.h.b16 %v957
        %v1287 = vunpack.c.l.b16 %v958
        %v1288 = vunpack.c.h.b16 %v958
        %v1289 = vunpack.c.l.b16 %v959
        %v1290 = vunpack.c.h.b16 %v959
        %v1291 = vunpack.c.l.b16 %v960
        %v1292 = vunpack.c.h.b16 %v960
        %v1293 = vunpack.c.l.b16 %v961
        %v1294 = vunpack.c.h.b16 %v961
        %v1295 = vunpack.c.l.b16 %v962
        %v1296 = vunpack.c.h.b16 %v962
        %v1297 = vunpack.c.l.b16 %v963
        %v1298 = vunpack.c.h.b16 %v963
        %v1299 = vunpack.c.l.b16 %v964
        %v1300 = vunpack.c.h.b16 %v964
        %v1301 = vunpack.c.l.b16 %v965
        %v1302 = vunpack.c.h.b16 %v965
        %v1303 = vunpack.c.l.b16 %v966
        %v1304 = vunpack.c.h.b16 %v966
        %v1305 = vunpack.c.l.b16 %v967
        %v1306 = vunpack.c.h.b16 %v967
        %v1307 = vunpack.c.l.b16 %v968
        %v1308 = vunpack.c.h.b16 %v968
        %v1309 = vunpack.c.l.b16 %v969
        %v1310 = vunpack.c.h.b16 %v969
        %v1311 = vunpack.c.l.b16 %v970
        %v1312 = vunpack.c.h.b16 %v970
        %v1313 = vunpack.c.l.b16 %v971
        %v1314 = vunpack.c.h.b16 %v971
        %v1315 = vunpack.c.l.b16 %v972
        %v1316 = vunpack.c.h.b16 %v972
        %v1317 = vunpack.c.l.b16 %v973
        %v1318 = vunpack.c.h.b16 %v973
        %v1319 = vunpack.c.l.b16 %v974
        %v1320 = vunpack.c.h.b16 %v974
        %v1321 = vunpack.c.l.b16 %v975
        %v1322 = vunpack.c.h.b16 %v975
        %v1323 = vunpack.c.l.b16 %v976
        %v1324 = vunpack.c.h.b16 %v976
        %v1325 = vunpack.c.l.b16 %v977
        %v1326 = vunpack.c.h.b16 %v977
        %v1327 = vunpack.c.l.b16 %v978
        %v1328 = vunpack.c.h.b16 %v978
        %v1329 = vunpack.c.l.b16 %v979
        %v1330 = vunpack.c.h.b16 %v979
        %v1331 = vunpack.c.l.b16 %v980
        %v1332 = vunpack.c.h.b16 %v980
        %v1333 = vunpack.c.l.b16 %v981
        %v1334 = vunpack.c.h.b16 %v981
        %v1335 = vunpack.c.l.b16 %v982
        %v1336 = vunpack.c.h.b16 %v982
        %v1337 = vunpack.c.l.b16 %v983
        %v1338 = vunpack.c.h.b16 %v983
        %v1339 = vunpack.c.l.b16 %v984
        %v1340 = vunpack.c.h.b16 %v984
        %v1341 = vunpack.c.l.b16 %v985
        %v1342 = vunpack.c.h.b16 %v985
        %v1343 = vunpack.c.l.b16 %v986
        %v1344 = vunpack.c.h.b16 %v986
        %v1345 = vunpack.c.l.b16 %v987
        %v1346 = vunpack.c.h.b16 %v987
        %v1347 = vunpack.c.l.b16 %v988
        %v1348 = vunpack.c.h.b16 %v988
        %v1349 = vunpack.c.l.b16 %v989
        %v1350 = vunpack.c.h.b16 %v989
        %v1351 = vunpack.c.l.b16 %v990
        %v1352 = vunpack.c.h.b16 %v990
        %v1353 = vunpack.c.l.b16 %v991
        %v1354 = vunpack.c.h.b16 %v991
        %v1355 = vunpack.c.l.b16 %v992
        %v1356 = vunpack.c.h.b16 %v992
        %v1357 = vunpack.c.l.b16 %v993
        %v1358 = vunpack.c.h.b16 %v993
        %v1359 = vunpack.c.l.b16 %v994
        %v1360 = vunpack.c.h.b16 %v994
        %v1361 = vunpack.c.l.b16 %v995
        %v1362 = vunpack.c.h.b16 %v995
        %v1363 = vunpack.c.l.b16 %v996
        %v1364 = vunpack.c.h.b16 %v996
        %v1365 = vunpack.c.l.b16 %v997
        %v1366 = vunpack.c.h.b16 %v997
        %v1367 = vunpack.c.l.b16 %v998
        %v1368 = vunpack.c.h.b16 %v998
        %v1369 = vunpack.c.l.b16 %v999
        %v1370 = vunpack.c.h.b16 %v999
        %v1371 = vunpack.c.l.b16 %v1000
        %v1372 = vunpack.c.h.b16 %v1000
        %v1373 = vunpack.c.l.b16 %v1001
        %v1374 = vunpack.c.h.b16 %v1001
        %v1375 = vunpack.c.l.b16 %v1002
        %v1376 = vunpack.c.h.b16 %v1002
        %v1377 = vunpack.c.l.b16 %v1003
        %v1378 = vunpack.c.h.b16 %v1003
        %v1379 = vunpack.c.l.b16 %v1004
        %v1380 = vunpack.c.h.b16 %v1004
        %v1381 = vunpack.c.l.b16 %v1005
        %v1382 = vunpack.c.h.b16 %v1005
        %v1383 = vunpack.c.l.b16 %v1006
        %v1384 = vunpack.c.h.b16 %v1006
        %v1385 = vunpack.c.l.b16 %v1007
        %v1386 = vunpack.c.h.b16 %v1007
        %v1387 = vunpack.c.l.b16 %v1008
        %v1388 = vunpack.c.h.b16 %v1008
        %v1389 = vunpack.c.l.b16 %v1009
        %v1390 = vunpack.c.h.b16 %v1009
        %v1391 = vunpack.c.l.b16 %v1010
        %v1392 = vunpack.c.h.b16 %v1010
        %v1393 = vunpack.c.l.b16 %v1011
        %v1394 = vunpack.c.h.b16 %v1011
        %v1395 = vunpack.c.l.b16 %v1012
        %v1396 = vunpack.c.h.b16 %v1012
        %v1397 = vunpack.c.l.b16 %v1013
        %v1398 = vunpack.c.h.b16 %v1013
        %v1399 = vpack.c.b16 %v1147, %v1143
        %v1400 = vpack.c.b16 %v1148, %v1144
        %v1401 = vpack.c.b16 %v1149, %v1145
        %v1402 = vpack.c.b16 %v1150, %v1146
        %v1403 = vpack.c.b16 %v1155, %v1151
        %v1404 = vpack.c.b16 %v1156, %v1152
        %v1405 = vpack.c.b16 %v1157, %v1153
        %v1406 = vpack.c.b16 %v1158, %v1154
        %v1407 = vpack.c.b16 %v1163, %v1159
        %v1408 = vpack.c.b16 %v1164, %v1160
        %v1409 = vpack.c.b16 %v1165, %v1161
        %v1410 = vpack.c.b16 %v1166, %v1162
        %v1411 = vpack.c.b16 %v1171, %v1167
        %v1412 = vpack.c.b16 %v1172, %v1168
        %v1413 = vpack.c.b16 %v1173, %v1169
        %v1414 = vpack.c.b16 %v1174, %v1170
        %v1415 = vpack.c.b16 %v1179, %v1175
        %v1416 = vpack.c.b16 %v1180, %v1176
        %v1417 = vpack.c.b16 %v1181, %v1177
        %v1418 = vpack.c.b16 %v1182, %v1178
        %v1419 = vpack.c.b16 %v1187, %v1183
        %v1420 = vpack.c.b16 %v1188, %v1184
        %v1421 = vpack.c.b16 %v1189, %v1185
        %v1422 = vpack.c.b16 %v1190, %v1186
        %v1423 = vpack.c.b16 %v1195, %v1191
        %v1424 = vpack.c.b16 %v1196, %v1192
        %v1425 = vpack.c.b16 %v1197, %v1193
        %v1426 = vpack.c.b16 %v1198, %v1194
        %v1427 = vpack.c.b16 %v1203, %v1199
        %v1428 = vpack.c.b16 %v1204, %v1200
        %v1429 = vpack.c.b16 %v1205, %v1201
        %v1430 = vpack.c.b16 %v1206, %v1202
        %v1431 = vpack.c.b16 %v1211, %v1207
        %v1432 = vpack.c.b16 %v1212, %v1208
        %v1433 = vpack.c.b16 %v1213, %v1209
        %v1434 = vpack.c.b16 %v1214, %v1210
        %v1435 = vpack.c.b16 %v1219, %v1215
        %v1436 = vpack.c.b16 %v1220, %v1216
        %v1437 = vpack.c.b16 %v1221, %v1217
        %v1438 = vpack.c.b16 %v1222, %v1218
        %v1439 = vpack.c.b16 %v1227, %v1223
        %v1440 = vpack.c.b16 %v1228, %v1224
        %v1441 = vpack.c.b16 %v1229, %v1225
        %v1442 = vpack.c.b16 %v1230, %v1226
        %v1443 = vpack.c.b16 %v1235, %v1231
        %v1444 = vpack.c.b16 %v1236, %v1232
        %v1445 = vpack.c.b16 %v1237, %v1233
        %v1446 = vpack.c.b16 %v1238, %v1234
        %v1447 = vpack.c.b16 %v1243, %v1239
        %v1448 = vpack.c.b16 %v1244, %v1240
        %v1449 = vpack.c.b16 %v1245, %v1241
        %v1450 = vpack.c.b16 %v1246, %v1242
        %v1451 = vpack.c.b16 %v1251, %v1247
        %v1452 = vpack.c.b16 %v1252, %v1248
        %v1453 = vpack.c.b16 %v1253, %v1249
        %v1454 = vpack.c.b16 %v1254, %v1250
        %v1455 = vpack.c.b16 %v1259, %v1255
        %v1456 = vpack.c.b16 %v1260, %v1256
        %v1457 = vpack.c.b16 %v1261, %v1257
        %v1458 = vpack.c.b16 %v1262, %v1258
        %v1459 = vpack.c.b16 %v1267, %v1263
        %v1460 = vpack.c.b16 %v1268, %v1264
        %v1461 = vpack.c.b16 %v1269, %v1265
        %v1462 = vpack.c.b16 %v1270, %v1266
        %v1463 = vpack.c.b16 %v1275, %v1271
        %v1464 = vpack.c.b16 %v1276, %v1272
        %v1465 = vpack.c.b16 %v1277, %v1273
        %v1466 = vpack.c.b16 %v1278, %v1274
        %v1467 = vpack.c.b16 %v1283, %v1279
        %v1468 = vpack.c.b16 %v1284, %v1280
        %v1469 = vpack.c.b16 %v1285, %v1281
        %v1470 = vpack.c.b16 %v1286, %v1282
        %v1471 = vpack.c.b16 %v1291, %v1287
        %v1472 = vpack.c.b16 %v1292, %v1288
        %v1473 = vpack.c.b16 %v1293, %v1289
        %v1474 = vpack.c.b16 %v1294, %v1290
        %v1475 = vpack.c.b16 %v1299, %v1295
        %v1476 = vpack.c.b16 %v1300, %v1296
        %v1477 = vpack.c.b16 %v1301, %v1297
        %v1478 = vpack.c.b16 %v1302, %v1298
        %v1479 = vpack.c.b16 %v1307, %v1303
        %v1480 = vpack.c.b16 %v1308, %v1304
        %v1481 = vpack.c.b16 %v1309, %v1305
        %v1482 = vpack.c.b16 %v1310, %v1306
        %v1483 = vpack.c.b16 %v1315, %v1311
        %v1484 = vpack.c.b16 %v1316, %v1312
        %v1485 = vpack.c.b16 %v1317, %v1313
        %v1486 = vpack.c.b16 %v1318, %v1314
        %v1487 = vpack.c.b16 %v1323, %v1319
        %v1488 = vpack.c.b16 %v1324, %v1320
        %v1489 = vpack.c.b16 %v1325, %v1321
        %v1490 = vpack.c.b16 %v1326, %v1322
        %v1491 = vpack.c.b16 %v1331, %v1327
        %v1492 = vpack.c.b16 %v1332, %v1328
        %v1493 = vpack.c.b16 %v1333, %v1329
        %v1494 = vpack.c.b16 %v1334, %v1330
        %v1495 = vpack.c.b16 %v1339, %v1335
        %v1496 = vpack.c.b16 %v1340, %v1336
        %v1497 = vpack.c.b16 %v1341, %v1337
        %v1498 = vpack.c.b16 %v1342, %v1338
        %v1499 = vpack.c.b16 %v1347, %v1343
        %v1500 = vpack.c.b16 %v1348, %v1344
        %v1501 = vpack.c.b16 %v1349, %v1345
        %v1502 = vpack.c.b16 %v1350, %v1346
        %v1503 = vpack.c.b16 %v1355, %v1351
        %v1504 = vpack.c.b16 %v1356, %v1352
        %v1505 = vpack.c.b16 %v1357, %v1353
        %v1506 = vpack.c.b16 %v1358, %v1354
        %v1507 = vpack.c.b16 %v1363, %v1359
        %v1508 = vpack.c.b16 %v1364, %v1360
        %v1509 = vpack.c.b16 %v1365, %v1361
        %v1510 = vpack.c.b16 %v1366, %v1362
        %v1511 = vpack.c.b16 %v1371, %v1367
        %v1512 = vpack.c.b16 %v1372, %v1368
        %v1513 = vpack.c.b16 %v1373, %v1369
        %v1514 = vpack.c.b16 %v1374, %v1370
        %v1515 = vpack.c.b16 %v1379, %v1375
        %v1516 = vpack.c.b16 %v1380, %v1376
        %v1517 = vpack.c.b16 %v1381, %v1377
        %v1518 = vpack.c.b16 %v1382, %v1378
        %v1519 = vpack.c.b16 %v1387, %v1383
        %v1520 = vpack.c.b16 %v1388, %v1384
        %v1521 = vpack.c.b16 %v1389, %v1385
        %v1522 = vpack.c.b16 %v1390, %v1386
        %v1523 = vpack.c.b16 %v1395, %v1391
        %v1524 = vpack.c.b16 %v1396, %v1392
        %v1525 = vpack.c.b16 %v1397, %v1393
        %v1526 = vpack.c.b16 %v1398, %v1394
        %v1656 = vlaneseq
        %v1657 = vshrl.u32 %v1656, 7
        %v1658 = vsub.s32 0, %v1657
        %v1659 = vrot.slane %v1014, %v1658
        %v1660 = vlaneseq
        %v1661 = vshrl.u32 %v1660, 7
        %v1662 = vsub.s32 1, %v1661
        %v1663 = vrot.slane %v1014, %v1662
        %v1664 = vlaneseq
        %v1665 = vshrl.u32 %v1664, 7
        %v1666 = vsub.s32 2, %v1665
        %v1667 = vrot.slane %v1014, %v1666
        %v1668 = vlaneseq
        %v1669 = vshrl.u32 %v1668, 7
        %v1670 = vsub.s32 3, %v1669
        %v1671 = vrot.slane %v1014, %v1670
        %1676 = vmatprep.subr.bf16.mxu0 %v1428
        %1677 = vmatpush1.bf16.msra.mxu0 %v1427
        %1678 = vmatprep.subr.bf16.mxu0 %v1424
        %1679 = vmatpush1.bf16.msra.mxu0 %v1423
        %1680 = vmatprep.subr.bf16.mxu0 %v1420
        %1681 = vmatpush1.bf16.msra.mxu0 %v1419
        %1682 = vmatprep.subr.bf16.mxu0 %v1416
        %1683 = vmatpush1.bf16.msra.mxu0 %v1415
        %1684 = vmatprep.subr.bf16.mxu0 %v1412
        %1685 = vmatpush1.bf16.msra.mxu0 %v1411
        %1686 = vmatprep.subr.bf16.mxu0 %v1408
        %1687 = vmatpush1.bf16.msra.mxu0 %v1407
        %1688 = vmatprep.subr.bf16.mxu0 %v1404
        %1689 = vmatpush1.bf16.msra.mxu0 %v1403
        %1690 = vmatprep.subr.bf16.mxu0 %v1400
        %1691 = vmatpush1.bf16.msra.mxu0 %v1399
        %1692 = vmatprep.subr.bf16.mxu0 %v1460
        %1693 = vmatpush2.bf16.msra.mxu0 %v1459
        %1694 = vmatprep.subr.bf16.mxu0 %v1456
        %1695 = vmatpush2.bf16.msra.mxu0 %v1455
        %1696 = vmatprep.subr.bf16.mxu0 %v1452
        %1697 = vmatpush2.bf16.msra.mxu0 %v1451
        %1698 = vmatprep.subr.bf16.mxu0 %v1448
        %1699 = vmatpush2.bf16.msra.mxu0 %v1447
        %1700 = vmatprep.subr.bf16.mxu0 %v1444
        %1701 = vmatpush2.bf16.msra.mxu0 %v1443
        %1702 = vmatprep.subr.bf16.mxu0 %v1440
        %1703 = vmatpush2.bf16.msra.mxu0 %v1439
        %1704 = vmatprep.subr.bf16.mxu0 %v1436
        %1705 = vmatpush2.bf16.msra.mxu0 %v1435
        %1706 = vmatprep.subr.bf16.mxu0 %v1432
        %1707 = vmatpush2.bf16.msra.mxu0 %v1431
        %1708 = vmatprep.mubr.bf16.mxu0 %v883
        %1709 = vmatmul.mubr.bf16.gmra.mxu0 %v882
        %v1710 = vpop.f32.mrf.mxu0
        %v1711 = vadd.f32 %v1659, %v1710
        %v1712 = vpop.f32.mrf.mxu0
        %v1713 = vadd.f32 %v1663, %v1712
        %v1714 = vpop.f32.mrf.mxu0
        %v1715 = vpop.f32.mrf.mxu0
        %1716 = vdwg.mxu0
        %1717 = vmatprep.subr.bf16.mxu0 %v1492
        %1718 = vmatpush1.bf16.msra.mxu0 %v1491
        %1719 = vmatprep.subr.bf16.mxu0 %v1488
        %1720 = vmatpush1.bf16.msra.mxu0 %v1487
        %1721 = vmatprep.subr.bf16.mxu0 %v1484
        %1722 = vmatpush1.bf16.msra.mxu0 %v1483
        %1723 = vmatprep.subr.bf16.mxu0 %v1480
        %1724 = vmatpush1.bf16.msra.mxu0 %v1479
        %1725 = vmatprep.subr.bf16.mxu0 %v1476
        %1726 = vmatpush1.bf16.msra.mxu0 %v1475
        %1727 = vmatprep.subr.bf16.mxu0 %v1472
        %1728 = vmatpush1.bf16.msra.mxu0 %v1471
        %1729 = vmatprep.subr.bf16.mxu0 %v1468
        %1730 = vmatpush1.bf16.msra.mxu0 %v1467
        %1731 = vmatprep.subr.bf16.mxu0 %v1464
        %1732 = vmatpush1.bf16.msra.mxu0 %v1463
        %1733 = vmatprep.subr.bf16.mxu0 %v1524
        %1734 = vmatpush2.bf16.msra.mxu0 %v1523
        %1735 = vmatprep.subr.bf16.mxu0 %v1520
        %1736 = vmatpush2.bf16.msra.mxu0 %v1519
        %1737 = vmatprep.subr.bf16.mxu0 %v1516
        %1738 = vmatpush2.bf16.msra.mxu0 %v1515
        %1739 = vmatprep.subr.bf16.mxu0 %v1512
        %1740 = vmatpush2.bf16.msra.mxu0 %v1511
        %1741 = vmatprep.subr.bf16.mxu0 %v1508
        %1742 = vmatpush2.bf16.msra.mxu0 %v1507
        %1743 = vmatprep.subr.bf16.mxu0 %v1504
        %1744 = vmatpush2.bf16.msra.mxu0 %v1503
        %1745 = vmatprep.subr.bf16.mxu0 %v1500
        %1746 = vmatpush2.bf16.msra.mxu0 %v1499
        %1747 = vmatprep.subr.bf16.mxu0 %v1496
        %1748 = vmatpush2.bf16.msra.mxu0 %v1495
        %1749 = vmatprep.mubr.bf16.mxu0 %v885
        %1750 = vmatmul.mubr.bf16.gmra.mxu0 %v884
        %v1751 = vpop.f32.mrf.mxu0
        %v1752 = vadd.f32 %v1711, %v1751
        %v1753 = vpop.f32.mrf.mxu0
        %v1754 = vadd.f32 %v1713, %v1753
        %v1755 = vpop.f32.mrf.mxu0
        %v1756 = vpop.f32.mrf.mxu0
        %1757 = vdwg.mxu0
        %1758 = vmatprep.subr.bf16.mxu0 %v1430
        %1759 = vmatpush1.bf16.msra.mxu0 %v1429
        %1760 = vmatprep.subr.bf16.mxu0 %v1426
        %1761 = vmatpush1.bf16.msra.mxu0 %v1425
        %1762 = vmatprep.subr.bf16.mxu0 %v1422
        %1763 = vmatpush1.bf16.msra.mxu0 %v1421
        %1764 = vmatprep.subr.bf16.mxu0 %v1418
        %1765 = vmatpush1.bf16.msra.mxu0 %v1417
        %1766 = vmatprep.subr.bf16.mxu0 %v1414
        %1767 = vmatpush1.bf16.msra.mxu0 %v1413
        %1768 = vmatprep.subr.bf16.mxu0 %v1410
        %1769 = vmatpush1.bf16.msra.mxu0 %v1409
        %1770 = vmatprep.subr.bf16.mxu0 %v1406
        %1771 = vmatpush1.bf16.msra.mxu0 %v1405
        %1772 = vmatprep.subr.bf16.mxu0 %v1402
        %1773 = vmatpush1.bf16.msra.mxu0 %v1401
        %1774 = vmatprep.subr.bf16.mxu0 %v1462
        %1775 = vmatpush2.bf16.msra.mxu0 %v1461
        %1776 = vmatprep.subr.bf16.mxu0 %v1458
        %1777 = vmatpush2.bf16.msra.mxu0 %v1457
        %1778 = vmatprep.subr.bf16.mxu0 %v1454
        %1779 = vmatpush2.bf16.msra.mxu0 %v1453
        %1780 = vmatprep.subr.bf16.mxu0 %v1450
        %1781 = vmatpush2.bf16.msra.mxu0 %v1449
        %1782 = vmatprep.subr.bf16.mxu0 %v1446
        %1783 = vmatpush2.bf16.msra.mxu0 %v1445
        %1784 = vmatprep.subr.bf16.mxu0 %v1442
        %1785 = vmatpush2.bf16.msra.mxu0 %v1441
        %1786 = vmatprep.subr.bf16.mxu0 %v1438
        %1787 = vmatpush2.bf16.msra.mxu0 %v1437
        %1788 = vmatprep.subr.bf16.mxu0 %v1434
        %1789 = vmatpush2.bf16.msra.mxu0 %v1433
        %1790 = vmatprep.mubr.bf16.mxu0 %v883
        %1791 = vmatmul.mubr.bf16.gmra.mxu0 %v882
        %v1792 = vpop.f32.mrf.mxu0
        %v1793 = vadd.f32 %v1667, %v1792
        %v1794 = vpop.f32.mrf.mxu0
        %v1795 = vadd.f32 %v1671, %v1794
        %v1796 = vpop.f32.mrf.mxu0
        %v1797 = vpop.f32.mrf.mxu0
        %1798 = vdwg.mxu0
        %1799 = vmatprep.subr.bf16.mxu0 %v1494
        %1800 = vmatpush1.bf16.msra.mxu0 %v1493
        %1801 = vmatprep.subr.bf16.mxu0 %v1490
        %1802 = vmatpush1.bf16.msra.mxu0 %v1489
        %1803 = vmatprep.subr.bf16.mxu0 %v1486
        %1804 = vmatpush1.bf16.msra.mxu0 %v1485
        %1805 = vmatprep.subr.bf16.mxu0 %v1482
        %1806 = vmatpush1.bf16.msra.mxu0 %v1481
        %1807 = vmatprep.subr.bf16.mxu0 %v1478
        %1808 = vmatpush1.bf16.msra.mxu0 %v1477
        %1809 = vmatprep.subr.bf16.mxu0 %v1474
        %1810 = vmatpush1.bf16.msra.mxu0 %v1473
        %1811 = vmatprep.subr.bf16.mxu0 %v1470
        %1812 = vmatpush1.bf16.msra.mxu0 %v1469
        %1813 = vmatprep.subr.bf16.mxu0 %v1466
        %1814 = vmatpush1.bf16.msra.mxu0 %v1465
        %1815 = vmatprep.subr.bf16.mxu0 %v1526
        %1816 = vmatpush2.bf16.msra.mxu0 %v1525
        %1817 = vmatprep.subr.bf16.mxu0 %v1522
        %1818 = vmatpush2.bf16.msra.mxu0 %v1521
        %1819 = vmatprep.subr.bf16.mxu0 %v1518
        %1820 = vmatpush2.bf16.msra.mxu0 %v1517
        %1821 = vmatprep.subr.bf16.mxu0 %v1514
        %1822 = vmatpush2.bf16.msra.mxu0 %v1513
        %1823 = vmatprep.subr.bf16.mxu0 %v1510
        %1824 = vmatpush2.bf16.msra.mxu0 %v1509
        %1825 = vmatprep.subr.bf16.mxu0 %v1506
        %1826 = vmatpush2.bf16.msra.mxu0 %v1505
        %1827 = vmatprep.subr.bf16.mxu0 %v1502
        %1828 = vmatpush2.bf16.msra.mxu0 %v1501
        %1829 = vmatprep.subr.bf16.mxu0 %v1498
        %1830 = vmatpush2.bf16.msra.mxu0 %v1497
        %1831 = vmatprep.mubr.bf16.mxu0 %v885
        %1832 = vmatmul.mubr.bf16.gmra.mxu0 %v884
        %v1833 = vpop.f32.mrf.mxu0
        %v1834 = vadd.f32 %v1793, %v1833
        %v1835 = vpop.f32.mrf.mxu0
        %v1836 = vadd.f32 %v1795, %v1835
        %v1837 = vpop.f32.mrf.mxu0
        %v1838 = vpop.f32.mrf.mxu0
        %1839 = vdwg.mxu0
        %v1840 = vmul.f32 %v1752, 0.5
        %v1841 = vmul.f32 %v1754, 0.5
        %v1842 = vmul.f32 %v1834, 0.5
        %v1843 = vmul.f32 %v1836, 0.5
        %v1844 = vmul.f32 %v1752, 0.044715
        %v1845 = vmul.f32 %v1754, 0.044715
        %v1846 = vmul.f32 %v1834, 0.044715
        %v1847 = vmul.f32 %v1836, 0.044715
        %v1848 = vmul.f32 %v1844, %v1752
        %v1849 = vmul.f32 %v1845, %v1754
        %v1850 = vmul.f32 %v1846, %v1834
        %v1851 = vmul.f32 %v1847, %v1836
        %v1852 = vmul.f32 %v1848, %v1752
        %v1853 = vmul.f32 %v1849, %v1754
        %v1854 = vmul.f32 %v1850, %v1834
        %v1855 = vmul.f32 %v1851, %v1836
        %v1856 = vadd.f32 %v1752, %v1852
        %v1857 = vadd.f32 %v1754, %v1853
        %v1858 = vadd.f32 %v1834, %v1854
        %v1859 = vadd.f32 %v1836, %v1855
        %v1860 = vmul.f32 %v1856, 0.7978846
        %v1861 = vmul.f32 %v1857, 0.7978846
        %v1862 = vmul.f32 %v1858, 0.7978846
        %v1863 = vmul.f32 %v1859, 0.7978846
        %v1864 = vtanh.pop %v1860
        %v1865 = vtanh.pop %v1861
        %v1866 = vtanh.pop %v1862
        %v1867 = vtanh.pop %v1863
        %v1868 = vadd.f32 %v1864, 1.0
        %v1869 = vadd.f32 %v1865, 1.0
        %v1870 = vadd.f32 %v1866, 1.0
        %v1871 = vadd.f32 %v1867, 1.0
        %v1872 = vmul.f32 %v1840, %v1868
        %v1873 = vmul.f32 %v1841, %v1869
        %v1874 = vmul.f32 %v1842, %v1870
        %v1875 = vmul.f32 %v1843, %v1871
        %v1876 = vpack.c.bf16 %v1872, %v1872
        %v1877 = vpack.c.bf16 %v1873, %v1873
        %v1878 = vpack.c.bf16 %v1874, %v1874
        %v1879 = vpack.c.bf16 %v1875, %v1875
        %v1884 = vcombine.low %v1876, %v1877
        %v1885 = vcombine.low %v1878, %v1879
        %v1887 = vunpack.c.l.s4 1966171168
        %v1888 = vunpack.c.0.s8 %v1887
        %v1889 = vlaneseq
        %v1890 = vshrl.u32 %v1889, 7
        %v1891 = vsub.s32 %v1888, %v1890
        %v1892 = vrot.slane %v1884, %v1891
        %v1894 = vunpack.c.l.s4 1966171168
        %v1895 = vunpack.c.0.s8 %v1894
        %v1896 = vlaneseq
        %v1897 = vshrl.u32 %v1896, 7
        %v1898 = vsub.s32 %v1895, %v1897
        %v1899 = vrot.slane %v1885, %v1898
        %v1900 = vcombine.low %v1892, %v1899
        %v1902 = vunpack.c.l.s4 1966171168
        %v1903 = vunpack.c.0.s8 %v1902
        %v1904 = vlaneseq
        %v1905 = vshrl.u32 %v1904, 7
        %v1906 = vsub.s32 %v1903, %v1905
        %v1907 = vrot.slane %v1900, %v1906
        %vm1909 = vcmask 1040384
        %vm1910 = vsmask.f32 256
        %vm1911 = vmand %vm1909, %vm1910
        %vm1912 = vcmask 1041409
        %vm1913 = vsmask.f32 1280
        %vm1914 = vmand %vm1912, %vm1913
        %vm1915 = vmor %vm1914, %vm1911
        %vm1916 = vcmask 1042434
        %vm1917 = vsmask.f32 2304
        %vm1918 = vmand %vm1916, %vm1917
        %vm1919 = vmor %vm1918, %vm1915
        %vm1920 = vcmask 1043459
        %vm1921 = vsmask.f32 3328
        %vm1922 = vmand %vm1920, %vm1921
        %vm1923 = vmor %vm1922, %vm1919
        %v1924 = vld [vmem:[%s277] sm:$0xf]
        %v1925 = vsel %vm1923, %v1907, %v1924
        %1926 = vst [vmem:[%s277] sm:$0xf] %v1925
        %p1927 = scmp.lt.s32.totalorder %s19, 1
        %s1928 = scalar_select %p1927, %s19, 1
        %s1929 = smul.addr %s1928, 4
        %s1930 = scalar_lea.vmem %s5, %s1929
        // Predicated region
        $region57: #{complete_dt_forward.10} parent=39 // pred_check
          %p1931 = pneg %p147
        $region58: #{complete_dt_forward.10} parent=39 // pred_check_branch
          %1933 = sbr.rel (%p1931) target = $region60
        $region59: #{complete_dt_forward.10} parent=39 // pred_region
          _
        $region60: #{complete_dt_forward.10} parent=39 // pred_fallthru
          _
      $region40: #{complete_dt_forward.10} parent=5 // pred_fallthru
        _
      %p1934 = scmp.le.s32.totalorder 2, %s14
      // Predicated region
      $region61: #{complete_dt_forward.10} parent=5 // pred_check
        %p1935 = pneg %p1934
      $region62: #{complete_dt_forward.10} parent=5 // pred_check_branch
        %1937 = sbr.rel (%p1935) target = $region64
      $region63: #{complete_dt_forward.10} parent=5 // pred_region
        %s1938 = ssub.s32 %s14, 2
        // Predicated region
        $region65: #{complete_dt_forward.10} parent=63 // pred_check
          %p1939 = pneg %p153
        $region66: #{complete_dt_forward.10} parent=63 // pred_check_branch
          %1941 = sbr.rel (%p1939) target = $region68
        $region67: #{complete_dt_forward.10} parent=63 // pred_region
          %p1942 = scmp.lt.s32.totalorder %s20, 1
          %s1943 = scalar_select %p1942, %s20, 1
          %s1944 = smul.addr %s1943, 4
          %s1945 = scalar_lea.vmem %s5, %s1944
        $region68: #{complete_dt_forward.10} parent=63 // pred_fallthru
          _
      $region64: #{complete_dt_forward.10} parent=5 // pred_fallthru
        _
    $region6: #{complete_dt_forward.10} parent=1 // loop_footer
      %s18 = sadd.s32 1, %s14
    $region7: #{complete_dt_forward.10} parent=1 // loop_footer_branch
      %13 = sbr.rel target = $region3
    $region8: #{complete_dt_forward.10} parent=1 // loop_exit
      _
    %1946 = vsyncpa [#allocation3], 1
    %s1947 = scalar_lea.sflag [#allocation3], 1
    %1948 = vsyncpa %s1947, 1
    %1949 = vsyncpa [#allocation5], 1
    %1950 = vsyncpa [#allocation8], 1

// kernel: complete_dt_forward.13
$region0: #{complete_dt_forward.13}
  #allocation0 [shape = 'u32[]', space=smem, size = 0x4, offset = 0x4, fixed_abs, tag = 'smem constant byte address 0x4 - core index']
  #allocation1 [shape = 'u32[144,128]{1,0:T(1,128)}', space=vmem, size = 0x12000, scoped, tag = 'internal scratch']
  %s0 = inlined_call_operand.vmem [shape: bf16[2,32,256], index: 0, kind: input, shape index: {}]
  %s1 = inlined_call_operand.vmem [shape: bf16[2,32,128], index: 1, kind: input, shape index: {}]
  %s2 = inlined_call_operand.vmem [shape: bf16[256,128], index: 2, kind: input, shape index: {}]
  %s3 = inlined_call_operand.vmem [shape: f32[1,128], index: 3, kind: input, shape index: {}]
  %s4 = inlined_call_operand.vmem [shape: f32[2,128], index: 4, kind: input, shape index: {}]
  %s5 = inlined_call_operand.vmem [shape: f32[2,128], index: 5, kind: input, shape index: {}]
  %s6 = inlined_call_operand.vmem [shape: bf16[128,128], index: 6, kind: input, shape index: {}]
  %s7 = inlined_call_operand.hbm [shape: bf16[2,64,128], index: 7, kind: output, shape index: {0}]
  %s8 = inlined_call_operand.vmem [shape: f32[2,64,128], index: 8, kind: output, shape index: {1}]
  %9 = xla_tuple %s7, %s8
  %s10 = sld [smem:[#allocation0]]
  $region69: #{complete_dt_forward.13} parent=0
    _
  %s12 = ssub.s32 1, %s10
  %s13 = scalar_select 0, %s12, %s10
  $region1: #{complete_dt_forward.13} parent=0
    #allocation2 [shape = 'u8[16384]{0}', space=vmem, size = 0x4000, scoped, tag = 'output window, operand 0']
    #allocation3 [shape = 's32[2]{0}', space=sflag, size = 0x8, scoped, tag = 'scoped memory for complete_dt_forward.13']
    %14 = vsyncpa [#allocation3], 0
    %s15 = scalar_lea.sflag [#allocation3], 1
    %16 = vsyncpa %s15, 0
    loop: start=0, step=1, limit=6
    $region2: #{complete_dt_forward.13} parent=1 // loop_pre_header
      _
    $region3: #{complete_dt_forward.13} parent=1 // loop_header
      %s18 = sphi 0, %s22
      %p19 = scmp.ge.s32.totalorder %s18, 6
      %s25 = sphi 0, %s37
      %s26 = sphi 0, %s33
      %s27 = sphi 0, %s25
      %s28 = sphi 0, %s26
      %s29 = sphi 0, %s27
      %s30 = sphi 0, %s28
      %s42 = sphi 0, %s44
      %s45 = sphi 0, %s42
      %s46 = sphi 0, %s45
      %s62 = sphi 0, %s46
      %s70 = sphi 0, %s72
      %s73 = sphi 0, %s70
      %s74 = sphi 0, %s73
      %s90 = sphi 0, %s74
      %s94 = sphi 0, %s94
      %s96 = sphi 0, %s94
      %s97 = sphi 0, %s96
      %s111 = sphi 0, %s97
      %s115 = sphi 0, %s115
      %s117 = sphi 0, %s115
      %s118 = sphi 0, %s117
      %s132 = sphi 0, %s118
      %s136 = sphi 0, %s136
      %s138 = sphi 0, %s136
      %s139 = sphi 0, %s138
      %s153 = sphi 0, %s139
      %s157 = sphi 0, %s157
      %s159 = sphi 0, %s157
      %s160 = sphi 0, %s159
      %s174 = sphi 0, %s160
      %s178 = sphi 0, %s178
      %s180 = sphi 0, %s178
      %s181 = sphi 0, %s180
      %s195 = sphi 0, %s181
      %s203 = sphi 0, %s205
      %s206 = sphi 0, %s203
      %s207 = sphi 0, %s206
      %s223 = sphi 0, %s207
      %s231 = sphi 0, %s233
      %s234 = sphi 0, %s231
      %s235 = sphi 0, %s234
      %s251 = sphi 0, %s235
    $region4: #{complete_dt_forward.13} parent=1 // loop_header_branch
      %21 = sbr.rel (%p19) target = $region8
    $region5: #{complete_dt_forward.13} parent=1 // loop_body
      %s23 = ssub.s32 %s18, 1
      %s24 = ssub.s32 %s18, 2
      %s31 = sadd.s32 1, %s26
      %p32 = scmp.ge.s32.totalorder %s31, 2
      %s33 = scalar_select %p32, 0, %s31
      %s34 = sadd.s32 1, %s25
      %s35 = scalar_select %p32, %s34, %s25
      %p36 = scmp.ge.s32.totalorder %s35, 2
      %s37 = scalar_select %p36, 0, %s35
      %s38 = ssub.s32 %s25, %s37
      %s39 = ssub.s32 %s26, %s33
      %s40 = sor.u32 %s38, %s39
      %p41 = scmp.eq.s32.totalorder %s40, 0
      %s43 = sadd.s32 %s42, 1
      %s44 = scalar_select %p41, %s42, %s43
      %p47 = pneg %p41
      %p48 = scmp.eq.s32.totalorder %s18, 3
      %p49 = por %p47, %p48
      %p50 = scmp.ne.s32.totalorder %s42, %s45
      %p51 = scmp.eq.s32.totalorder %s18, 0
      %p52 = por %p50, %p51
      %p53 = scmp.ne.s32.totalorder %s42, %s45
      %p54 = scmp.eq.s32.totalorder %s23, 3
      %p55 = por %p53, %p54
      %p56 = scmp.ne.s32.totalorder %s45, %s46
      %p57 = scmp.eq.s32.totalorder %s23, 0
      %p58 = por %p56, %p57
      %p59 = scmp.ne.s32.totalorder %s45, %s46
      %p60 = scmp.eq.s32.totalorder %s24, 3
      %p61 = por %p59, %p60
      %p63 = scmp.ne.s32.totalorder %s46, %s62
      %p64 = scmp.eq.s32.totalorder %s24, 0
      %p65 = por %p63, %p64
      %s66 = ssub.s32 %s25, %s37
      %s67 = ssub.s32 %s26, %s33
      %s68 = sor.u32 %s66, %s67
      %p69 = scmp.eq.s32.totalorder %s68, 0
      %s71 = sadd.s32 %s70, 1
      %s72 = scalar_select %p69, %s70, %s71
      %p75 = pneg %p69
      %p76 = scmp.eq.s32.totalorder %s18, 3
      %p77 = por %p75, %p76
      %p78 = scmp.ne.s32.totalorder %s70, %s73
      %p79 = scmp.eq.s32.totalorder %s18, 0
      %p80 = por %p78, %p79
      %p81 = scmp.ne.s32.totalorder %s70, %s73
      %p82 = scmp.eq.s32.totalorder %s23, 3
      %p83 = por %p81, %p82
      %p84 = scmp.ne.s32.totalorder %s73, %s74
      %p85 = scmp.eq.s32.totalorder %s23, 0
      %p86 = por %p84, %p85
      %p87 = scmp.ne.s32.totalorder %s73, %s74
      %p88 = scmp.eq.s32.totalorder %s24, 3
      %p89 = por %p87, %p88
      %p91 = scmp.ne.s32.totalorder %s74, %s90
      %p92 = scmp.eq.s32.totalorder %s24, 0
      %p93 = por %p91, %p92
      %s95 = sadd.s32 %s94, 1
      %p98 = scmp.eq.s32.totalorder %s18, 3
      %p99 = scmp.ne.s32.totalorder %s94, %s96
      %p100 = scmp.eq.s32.totalorder %s18, 0
      %p101 = por %p99, %p100
      %p102 = scmp.ne.s32.totalorder %s94, %s96
      %p103 = scmp.eq.s32.totalorder %s23, 3
      %p104 = por %p102, %p103
      %p105 = scmp.ne.s32.totalorder %s96, %s97
      %p106 = scmp.eq.s32.totalorder %s23, 0
      %p107 = por %p105, %p106
      %p108 = scmp.ne.s32.totalorder %s96, %s97
      %p109 = scmp.eq.s32.totalorder %s24, 3
      %p110 = por %p108, %p109
      %p112 = scmp.ne.s32.totalorder %s97, %s111
      %p113 = scmp.eq.s32.totalorder %s24, 0
      %p114 = por %p112, %p113
      %s116 = sadd.s32 %s115, 1
      %p119 = scmp.eq.s32.totalorder %s18, 3
      %p120 = scmp.ne.s32.totalorder %s115, %s117
      %p121 = scmp.eq.s32.totalorder %s18, 0
      %p122 = por %p120, %p121
      %p123 = scmp.ne.s32.totalorder %s115, %s117
      %p124 = scmp.eq.s32.totalorder %s23, 3
      %p125 = por %p123, %p124
      %p126 = scmp.ne.s32.totalorder %s117, %s118
      %p127 = scmp.eq.s32.totalorder %s23, 0
      %p128 = por %p126, %p127
      %p129 = scmp.ne.s32.totalorder %s117, %s118
      %p130 = scmp.eq.s32.totalorder %s24, 3
      %p131 = por %p129, %p130
      %p133 = scmp.ne.s32.totalorder %s118, %s132
      %p134 = scmp.eq.s32.totalorder %s24, 0
      %p135 = por %p133, %p134
      %s137 = sadd.s32 %s136, 1
      %p140 = scmp.eq.s32.totalorder %s18, 3
      %p141 = scmp.ne.s32.totalorder %s136, %s138
      %p142 = scmp.eq.s32.totalorder %s18, 0
      %p143 = por %p141, %p142
      %p144 = scmp.ne.s32.totalorder %s136, %s138
      %p145 = scmp.eq.s32.totalorder %s23, 3
      %p146 = por %p144, %p145
      %p147 = scmp.ne.s32.totalorder %s138, %s139
      %p148 = scmp.eq.s32.totalorder %s23, 0
      %p149 = por %p147, %p148
      %p150 = scmp.ne.s32.totalorder %s138, %s139
      %p151 = scmp.eq.s32.totalorder %s24, 3
      %p152 = por %p150, %p151
      %p154 = scmp.ne.s32.totalorder %s139, %s153
      %p155 = scmp.eq.s32.totalorder %s24, 0
      %p156 = por %p154, %p155
      %s158 = sadd.s32 %s157, 1
      %p161 = scmp.eq.s32.totalorder %s18, 3
      %p162 = scmp.ne.s32.totalorder %s157, %s159
      %p163 = scmp.eq.s32.totalorder %s18, 0
      %p164 = por %p162, %p163
      %p165 = scmp.ne.s32.totalorder %s157, %s159
      %p166 = scmp.eq.s32.totalorder %s23, 3
      %p167 = por %p165, %p166
      %p168 = scmp.ne.s32.totalorder %s159, %s160
      %p169 = scmp.eq.s32.totalorder %s23, 0
      %p170 = por %p168, %p169
      %p171 = scmp.ne.s32.totalorder %s159, %s160
      %p172 = scmp.eq.s32.totalorder %s24, 3
      %p173 = por %p171, %p172
      %p175 = scmp.ne.s32.totalorder %s160, %s174
      %p176 = scmp.eq.s32.totalorder %s24, 0
      %p177 = por %p175, %p176
      %s179 = sadd.s32 %s178, 1
      %p182 = scmp.eq.s32.totalorder %s18, 3
      %p183 = scmp.ne.s32.totalorder %s178, %s180
      %p184 = scmp.eq.s32.totalorder %s18, 0
      %p185 = por %p183, %p184
      %p186 = scmp.ne.s32.totalorder %s178, %s180
      %p187 = scmp.eq.s32.totalorder %s23, 3
      %p188 = por %p186, %p187
      %p189 = scmp.ne.s32.totalorder %s180, %s181
      %p190 = scmp.eq.s32.totalorder %s23, 0
      %p191 = por %p189, %p190
      %p192 = scmp.ne.s32.totalorder %s180, %s181
      %p193 = scmp.eq.s32.totalorder %s24, 3
      %p194 = por %p192, %p193
      %p196 = scmp.ne.s32.totalorder %s181, %s195
      %p197 = scmp.eq.s32.totalorder %s24, 0
      %p198 = por %p196, %p197
      %s199 = ssub.s32 %s25, %s37
      %s200 = ssub.s32 %s26, %s33
      %s201 = sor.u32 %s199, %s200
      %p202 = scmp.eq.s32.totalorder %s201, 0
      %s204 = sadd.s32 %s203, 1
      %s205 = scalar_select %p202, %s203, %s204
      %p208 = pneg %p202
      %p209 = scmp.eq.s32.totalorder %s18, 3
      %p210 = por %p208, %p209
      %p211 = scmp.ne.s32.totalorder %s203, %s206
      %p212 = scmp.eq.s32.totalorder %s18, 0
      %p213 = por %p211, %p212
      %p214 = scmp.ne.s32.totalorder %s203, %s206
      %p215 = scmp.eq.s32.totalorder %s23, 3
      %p216 = por %p214, %p215
      %p217 = scmp.ne.s32.totalorder %s206, %s207
      %p218 = scmp.eq.s32.totalorder %s23, 0
      %p219 = por %p217, %p218
      %p220 = scmp.ne.s32.totalorder %s206, %s207
      %p221 = scmp.eq.s32.totalorder %s24, 3
      %p222 = por %p220, %p221
      %p224 = scmp.ne.s32.totalorder %s207, %s223
      %p225 = scmp.eq.s32.totalorder %s24, 0
      %p226 = por %p224, %p225
      %s227 = ssub.s32 %s25, %s37
      %s228 = ssub.s32 %s26, %s33
      %s229 = sor.u32 %s227, %s228
      %p230 = scmp.eq.s32.totalorder %s229, 0
      %s232 = sadd.s32 %s231, 1
      %s233 = scalar_select %p230, %s231, %s232
      %p236 = pneg %p230
      %p237 = scmp.eq.s32.totalorder %s18, 3
      %p238 = por %p236, %p237
      %p239 = scmp.ne.s32.totalorder %s231, %s234
      %p240 = scmp.eq.s32.totalorder %s18, 0
      %p241 = por %p239, %p240
      %p242 = scmp.ne.s32.totalorder %s231, %s234
      %p243 = scmp.eq.s32.totalorder %s23, 3
      %p244 = por %p242, %p243
      %p245 = scmp.ne.s32.totalorder %s234, %s235
      %p246 = scmp.eq.s32.totalorder %s23, 0
      %p247 = por %p245, %p246
      %p248 = scmp.ne.s32.totalorder %s234, %s235
      %p249 = scmp.eq.s32.totalorder %s24, 3
      %p250 = por %p248, %p249
      %p252 = scmp.ne.s32.totalorder %s235, %s251
      %p253 = scmp.eq.s32.totalorder %s24, 0
      %p254 = por %p252, %p253
      %p255 = scmp.le.s32.totalorder 1, %s18
      %p256 = scmp.lt.s32.totalorder %s18, 5
      %p257 = pnand %p255, %p256
      %p258 = pneg %p257
      // Predicated region
      $region9: #{complete_dt_forward.13} parent=5 // pred_check
        _
      $region10: #{complete_dt_forward.13} parent=5 // pred_check_branch
        %260 = sbr.rel (%p257) target = $region12
      $region11: #{complete_dt_forward.13} parent=5 // pred_region
        %s261 = ssub.s32 %s18, 1
        // Predicated region
        $region13: #{complete_dt_forward.13} parent=11 // pred_check
          %p262 = pneg %p107
        $region14: #{complete_dt_forward.13} parent=11 // pred_check_branch
          %264 = sbr.rel (%p262) target = $region16
        $region15: #{complete_dt_forward.13} parent=11 // pred_region
          _
        $region16: #{complete_dt_forward.13} parent=11 // pred_fallthru
          _
        // Predicated region
        $region17: #{complete_dt_forward.13} parent=11 // pred_check
          %p265 = pneg %p128
        $region18: #{complete_dt_forward.13} parent=11 // pred_check_branch
          %267 = sbr.rel (%p265) target = $region20
        $region19: #{complete_dt_forward.13} parent=11 // pred_region
          _
        $region20: #{complete_dt_forward.13} parent=11 // pred_fallthru
          _
        // Predicated region
        $region21: #{complete_dt_forward.13} parent=11 // pred_check
          %p268 = pneg %p149
        $region22: #{complete_dt_forward.13} parent=11 // pred_check_branch
          %270 = sbr.rel (%p268) target = $region24
        $region23: #{complete_dt_forward.13} parent=11 // pred_region
          _
        $region24: #{complete_dt_forward.13} parent=11 // pred_fallthru
          _
        // Predicated region
        $region25: #{complete_dt_forward.13} parent=11 // pred_check
          %p271 = pneg %p170
        $region26: #{complete_dt_forward.13} parent=11 // pred_check_branch
          %273 = sbr.rel (%p271) target = $region28
        $region27: #{complete_dt_forward.13} parent=11 // pred_region
          _
        $region28: #{complete_dt_forward.13} parent=11 // pred_fallthru
          _
        // Predicated region
        $region29: #{complete_dt_forward.13} parent=11 // pred_check
          %p274 = pneg %p191
        $region30: #{complete_dt_forward.13} parent=11 // pred_check_branch
          %276 = sbr.rel (%p274) target = $region32
        $region31: #{complete_dt_forward.13} parent=11 // pred_region
          _
        $region32: #{complete_dt_forward.13} parent=11 // pred_fallthru
          _
      $region12: #{complete_dt_forward.13} parent=5 // pred_fallthru
        _
      %p277 = scmp.lt.s32.totalorder %s18, 4
      // Predicated region
      $region33: #{complete_dt_forward.13} parent=5 // pred_check
        %p278 = pneg %p277
      $region34: #{complete_dt_forward.13} parent=5 // pred_check_branch
        %280 = sbr.rel (%p278) target = $region36
      $region35: #{complete_dt_forward.13} parent=5 // pred_region
        // Predicated region
        $region37: #{complete_dt_forward.13} parent=35 // pred_check
          %p281 = pneg %p52
        $region38: #{complete_dt_forward.13} parent=35 // pred_check_branch
          %283 = sbr.rel (%p281) target = $region40
        $region39: #{complete_dt_forward.13} parent=35 // pred_region
          %s284 = smul.u32 2, %s26
          %p285 = scmp.lt.s32.totalorder %s25, 1
          %s286 = scalar_select %p285, %s25, 1
          %p287 = scmp.lt.s32.totalorder %s284, 3
          %s288 = scalar_select %p287, %s284, 3
          %s289 = smul.addr %s288, 2
          %s290 = smul.addr %s286, 8
          %s291 = sadd.s32 %s289, %s290
          %s292 = smul.addr %s291, 4
          %s293 = scalar_lea.vmem %s0, %s292
          %s294 = smul.u32 2, %s26
        $region40: #{complete_dt_forward.13} parent=35 // pred_fallthru
          _
        // Predicated region
        $region41: #{complete_dt_forward.13} parent=35 // pred_check
          %p295 = pneg %p80
        $region42: #{complete_dt_forward.13} parent=35 // pred_check_branch
          %297 = sbr.rel (%p295) target = $region44
        $region43: #{complete_dt_forward.13} parent=35 // pred_region
          %s298 = smul.u32 2, %s26
          %p299 = scmp.lt.s32.totalorder %s25, 1
          %s300 = scalar_select %p299, %s25, 1
          %p301 = scmp.lt.s32.totalorder %s298, 3
          %s302 = scalar_select %p301, %s298, 3
          %s303 = smul.addr %s300, 4
          %s304 = sadd.s32 %s302, %s303
          %s305 = smul.addr %s304, 4
          %s306 = scalar_lea.vmem %s1, %s305
          %s307 = smul.u32 2, %s26
        $region44: #{complete_dt_forward.13} parent=35 // pred_fallthru
          _
      $region36: #{complete_dt_forward.13} parent=5 // pred_fallthru
        _
      %p308 = scmp.le.s32.totalorder 1, %s18
      %p309 = scmp.lt.s32.totalorder %s18, 5
      %p310 = pnand %p308, %p309
      %p311 = pneg %p310
      // Predicated region
      $region45: #{complete_dt_forward.13} parent=5 // pred_check
        _
      $region46: #{complete_dt_forward.13} parent=5 // pred_check_branch
        %313 = sbr.rel (%p310) target = $region48
      $region47: #{complete_dt_forward.13} parent=5 // pred_region
        %s314 = ssub.s32 %s18, 1
        %s315 = smul.u32 2, %s28
        %p316 = scmp.lt.s32.totalorder %s27, 1
        %s317 = scalar_select %p316, %s27, 1
        %p318 = scmp.lt.s32.totalorder %s315, 3
        %s319 = scalar_select %p318, %s315, 3
        %s320 = smul.addr %s319, 2
        %s321 = smul.addr %s317, 8
        %s322 = sadd.s32 %s320, %s321
        %s323 = smul.addr %s322, 4
        %s324 = scalar_lea.vmem %s0, %s323
        %p325 = pneg %p58
        %p326 = pneg %p55
        %s327 = smul.u32 2, %s28
        %p328 = scmp.lt.s32.totalorder %s27, 1
        %s329 = scalar_select %p328, %s27, 1
        %p330 = scmp.lt.s32.totalorder %s327, 3
        %s331 = scalar_select %p330, %s327, 3
        %s332 = smul.addr %s329, 4
        %s333 = sadd.s32 %s331, %s332
        %s334 = smul.addr %s333, 4
        %s335 = scalar_lea.vmem %s1, %s334
        %p336 = pneg %p86
        %p337 = pneg %p83
        %p338 = pneg %p107
        %p339 = pneg %p104
        %p340 = pneg %p128
        %p341 = pneg %p125
        %p342 = pneg %p149
        %p343 = pneg %p146
        %p344 = pneg %p170
        %p345 = pneg %p167
        %p346 = pneg %p191
        %p347 = pneg %p188
        %p348 = pneg %p219
        %p349 = pneg %p216
        %s350 = sand.u32 %s206, 1
        %s351 = scalar_lea.sflag [#allocation3], %s350
        %s352 = sand.u32 %s206, 1
        %s353 = smul.addr %s352, 16
        %s354 = scalar_lea.vmem [#allocation2], %s353
        %p355 = pneg %p247
        %p356 = pneg %p244
        %s357 = smul.u32 4, %s28
        %p358 = scmp.lt.s32.totalorder %s27, 1
        %s359 = scalar_select %p358, %s27, 1
        %p360 = scmp.lt.s32.totalorder %s357, 7
        %s361 = scalar_select %p360, %s357, 7
        %s362 = smul.addr %s359, 8
        %s363 = sadd.s32 %s361, %s362
        %s364 = smul.addr %s363, 8
        %s365 = scalar_lea.vmem %s8, %s364
        %s366 = smul.u32 2, %s28
        %p367 = scmp.lt.s32.totalorder %s27, 1
        %s368 = scalar_select %p367, %s27, 1
        %p369 = scmp.lt.s32.totalorder %s366, 3
        %s370 = scalar_select %p369, %s366, 3
        %s371 = smul.addr %s370, 2
        %s372 = smul.addr %s368, 8
        %s373 = sadd.s32 %s371, %s372
        %s374 = smul.addr %s373, 4
        %s375 = scalar_lea.vmem %s0, %s374
        %s376 = smul.u32 2, %s28
        %s377 = smul.u32 2, %s28
        %p378 = scmp.lt.s32.totalorder %s27, 1
        %s379 = scalar_select %p378, %s27, 1
        %p380 = scmp.lt.s32.totalorder %s377, 3
        %s381 = scalar_select %p380, %s377, 3
        %s382 = smul.addr %s379, 4
        %s383 = sadd.s32 %s381, %s382
        %s384 = smul.addr %s383, 4
        %s385 = scalar_lea.vmem %s1, %s384
        %s386 = smul.u32 2, %s28
        %s387 = smul.u32 4, %s28
        %s388 = smul.u32 4, %s28
        %p389 = scmp.lt.s32.totalorder %s27, 1
        %s390 = scalar_select %p389, %s27, 1
        %p391 = scmp.lt.s32.totalorder %s388, 7
        %s392 = scalar_select %p391, %s388, 7
        %s393 = smul.addr %s390, 8
        %s394 = sadd.s32 %s392, %s393
        %s395 = smul.addr %s394, 8
        %s396 = scalar_lea.vmem %s8, %s395
        %s397 = smul.u32 4, %s28
        %v399 = vld [vmem:[%s375] sm:$0xff]
        %v400 = vld [vmem:[%s375 + $0x8] sm:$0xff]
        %v401 = vld [vmem:[%s2] sm:$0xf]
        %v402 = vld [vmem:[%s2 + $0x4] sm:$0xf]
        %v403 = vld [vmem:[%s2 + $0x8] sm:$0xf]
        %v404 = vld [vmem:[%s2 + $0xc] sm:$0xf]
        %v405 = vld [vmem:[%s2 + $0x10] sm:$0xf]
        %v406 = vld [vmem:[%s2 + $0x14] sm:$0xf]
        %v407 = vld [vmem:[%s2 + $0x18] sm:$0xf]
        %v408 = vld [vmem:[%s2 + $0x1c] sm:$0xf]
        %v409 = vld [vmem:[%s2 + $0x20] sm:$0xf]
        %v410 = vld [vmem:[%s2 + $0x24] sm:$0xf]
        %v411 = vld [vmem:[%s2 + $0x28] sm:$0xf]
        %v412 = vld [vmem:[%s2 + $0x2c] sm:$0xf]
        %v413 = vld [vmem:[%s2 + $0x30] sm:$0xf]
        %v414 = vld [vmem:[%s2 + $0x34] sm:$0xf]
        %v415 = vld [vmem:[%s2 + $0x38] sm:$0xf]
        %v416 = vld [vmem:[%s2 + $0x3c] sm:$0xf]
        %v417 = vld [vmem:[%s2 + $0x40] sm:$0xf]
        %v418 = vld [vmem:[%s2 + $0x44] sm:$0xf]
        %v419 = vld [vmem:[%s2 + $0x48] sm:$0xf]
        %v420 = vld [vmem:[%s2 + $0x4c] sm:$0xf]
        %v421 = vld [vmem:[%s2 + $0x50] sm:$0xf]
        %v422 = vld [vmem:[%s2 + $0x54] sm:$0xf]
        %v423 = vld [vmem:[%s2 + $0x58] sm:$0xf]
        %v424 = vld [vmem:[%s2 + $0x5c] sm:$0xf]
        %v425 = vld [vmem:[%s2 + $0x60] sm:$0xf]
        %v426 = vld [vmem:[%s2 + $0x64] sm:$0xf]
        %v427 = vld [vmem:[%s2 + $0x68] sm:$0xf]
        %v428 = vld [vmem:[%s2 + $0x6c] sm:$0xf]
        %v429 = vld [vmem:[%s2 + $0x70] sm:$0xf]
        %v430 = vld [vmem:[%s2 + $0x74] sm:$0xf]
        %v431 = vld [vmem:[%s2 + $0x78] sm:$0xf]
        %v432 = vld [vmem:[%s2 + $0x7c] sm:$0xf]
        %v433 = vld [vmem:[%s3] sm:$0x1]
        %v435 = vlaneseq
        %v436 = vshrl.u32 %v435, 7
        %v437 = vsub.s32 0, %v436
        %v438 = vrot.slane %v433, %v437
        %v442 = vunpack.c.l.b16 %v399
        %v443 = vunpack.c.h.b16 %v399
        %v444 = vunpack.c.l.b16 %v400
        %v445 = vunpack.c.h.b16 %v400
        %v446 = vpack.c.b16 %v444, %v442
        %v447 = vpack.c.b16 %v445, %v443
        %v482 = vunpack.c.l.b16 %v401
        %v483 = vunpack.c.l.b16 %v402
        %v484 = vunpack.c.l.b16 %v403
        %v485 = vunpack.c.l.b16 %v404
        %v486 = vunpack.c.l.b16 %v405
        %v487 = vunpack.c.l.b16 %v406
        %v488 = vunpack.c.l.b16 %v407
        %v489 = vunpack.c.l.b16 %v408
        %v490 = vunpack.c.l.b16 %v409
        %v491 = vunpack.c.l.b16 %v410
        %v492 = vunpack.c.l.b16 %v411
        %v493 = vunpack.c.l.b16 %v412
        %v494 = vunpack.c.l.b16 %v413
        %v495 = vunpack.c.l.b16 %v414
        %v496 = vunpack.c.l.b16 %v415
        %v497 = vunpack.c.l.b16 %v416
        %v498 = vunpack.c.l.b16 %v417
        %v499 = vunpack.c.l.b16 %v418
        %v500 = vunpack.c.l.b16 %v419
        %v501 = vunpack.c.l.b16 %v420
        %v502 = vunpack.c.l.b16 %v421
        %v503 = vunpack.c.l.b16 %v422
        %v504 = vunpack.c.l.b16 %v423
        %v505 = vunpack.c.l.b16 %v424
        %v506 = vunpack.c.l.b16 %v425
        %v507 = vunpack.c.l.b16 %v426
        %v508 = vunpack.c.l.b16 %v427
        %v509 = vunpack.c.l.b16 %v428
        %v510 = vunpack.c.l.b16 %v429
        %v511 = vunpack.c.l.b16 %v430
        %v512 = vunpack.c.l.b16 %v431
        %v513 = vunpack.c.l.b16 %v432
        %v514 = vpack.c.b16 %v483, %v482
        %v515 = vpack.c.b16 %v485, %v484
        %v516 = vpack.c.b16 %v487, %v486
        %v517 = vpack.c.b16 %v489, %v488
        %v518 = vpack.c.b16 %v491, %v490
        %v519 = vpack.c.b16 %v493, %v492
        %v520 = vpack.c.b16 %v495, %v494
        %v521 = vpack.c.b16 %v497, %v496
        %v522 = vpack.c.b16 %v499, %v498
        %v523 = vpack.c.b16 %v501, %v500
        %v524 = vpack.c.b16 %v503, %v502
        %v525 = vpack.c.b16 %v505, %v504
        %v526 = vpack.c.b16 %v507, %v506
        %v527 = vpack.c.b16 %v509, %v508
        %v528 = vpack.c.b16 %v511, %v510
        %v529 = vpack.c.b16 %v513, %v512
        %546 = vmatprep.subr.bf16.mxu0 0
        %547 = vmatpush1.bf16.msra.mxu0 %v521
        %548 = vmatprep.subr.bf16.mxu0 0
        %549 = vmatpush1.bf16.msra.mxu0 %v520
        %550 = vmatprep.subr.bf16.mxu0 0
        %551 = vmatpush1.bf16.msra.mxu0 %v519
        %552 = vmatprep.subr.bf16.mxu0 0
        %553 = vmatpush1.bf16.msra.mxu0 %v518
        %554 = vmatprep.subr.bf16.mxu0 0
        %555 = vmatpush1.bf16.msra.mxu0 %v517
        %556 = vmatprep.subr.bf16.mxu0 0
        %557 = vmatpush1.bf16.msra.mxu0 %v516
        %558 = vmatprep.subr.bf16.mxu0 0
        %559 = vmatpush1.bf16.msra.mxu0 %v515
        %560 = vmatprep.subr.bf16.mxu0 0
        %561 = vmatpush1.bf16.msra.mxu0 %v514
        %562 = vmatprep.subr.bf16.mxu0 0
        %563 = vmatpush2.bf16.msra.mxu0 %v529
        %564 = vmatprep.subr.bf16.mxu0 0
        %565 = vmatpush2.bf16.msra.mxu0 %v528
        %566 = vmatprep.subr.bf16.mxu0 0
        %567 = vmatpush2.bf16.msra.mxu0 %v527
        %568 = vmatprep.subr.bf16.mxu0 0
        %569 = vmatpush2.bf16.msra.mxu0 %v526
        %570 = vmatprep.subr.bf16.mxu0 0
        %571 = vmatpush2.bf16.msra.mxu0 %v525
        %572 = vmatprep.subr.bf16.mxu0 0
        %573 = vmatpush2.bf16.msra.mxu0 %v524
        %574 = vmatprep.subr.bf16.mxu0 0
        %575 = vmatpush2.bf16.msra.mxu0 %v523
        %576 = vmatprep.subr.bf16.mxu0 0
        %577 = vmatpush2.bf16.msra.mxu0 %v522
        %578 = vmatprep.mubr.bf16.mxu0 %v447
        %579 = vmatmul.mubr.bf16.gmra.mxu0 %v446
        %v580 = vpop.f32.mrf.mxu0
        %v581 = vadd.f32 %v438, %v580
        %v582 = vpop.f32.mrf.mxu0
        %v583 = vpop.f32.mrf.mxu0
        %v584 = vadd.f32 %v438, %v583
        %v585 = vpop.f32.mrf.mxu0
        %586 = vdwg.mxu0
        %v587 = vld [vmem:[%s385] sm:$0xf]
        %v588 = vld [vmem:[%s385 + $0x4] sm:$0xf]
        %v589 = vunpack.c.l.bf16 %v587
        %v590 = vunpack.c.l.bf16 %v588
        %v591 = vadd.f32 %v581, %v589
        %v592 = vadd.f32 %v584, %v590
        %v593 = vmul.f32 %v591, 0.5
        %v594 = vmul.f32 %v592, 0.5
        %v595 = vmul.f32 %v591, 0.044715
        %v596 = vmul.f32 %v592, 0.044715
        %v597 = vmul.f32 %v595, %v591
        %v598 = vmul.f32 %v596, %v592
        %v599 = vmul.f32 %v597, %v591
        %v600 = vmul.f32 %v598, %v592
        %v601 = vadd.f32 %v591, %v599
        %v602 = vadd.f32 %v592, %v600
        %v603 = vmul.f32 %v601, 0.7978846
        %v604 = vmul.f32 %v602, 0.7978846
        %v605 = vtanh.pop %v603
        %v606 = vtanh.pop %v604
        %v607 = vadd.f32 %v605, 1.0
        %v608 = vadd.f32 %v606, 1.0
        %v609 = vmul.f32 %v593, %v607
        %v610 = vmul.f32 %v594, %v608
        %v611 = vld [vmem:[%s4] sm:$0x3]
        %v614 = vcombine.high %v609, %v609
        %v616 = vunpack.c.l.s4 1966171168
        %v617 = vunpack.c.0.s8 %v616
        %v618 = vlaneseq
        %v619 = vshrl.u32 %v618, 7
        %v620 = vsub.s32 %v617, %v619
        %v621 = vrot.slane %v609, %v620
        %v623 = vunpack.c.l.s4 1966171168
        %v624 = vunpack.c.0.s8 %v623
        %v625 = vlaneseq
        %v626 = vshrl.u32 %v625, 7
        %v627 = vsub.s32 %v624, %v626
        %v628 = vrot.slane %v614, %v627
        %v629 = vcombine.high %v621, %v621
        %v630 = vcombine.high %v628, %v628
        %v632 = vunpack.c.l.s4 1966171168
        %v633 = vunpack.c.0.s8 %v632
        %v634 = vlaneseq
        %v635 = vshrl.u32 %v634, 7
        %v636 = vsub.s32 %v633, %v635
        %v637 = vrot.slane %v621, %v636
        %v639 = vunpack.c.l.s4 1966171168
        %v640 = vunpack.c.0.s8 %v639
        %v641 = vlaneseq
        %v642 = vshrl.u32 %v641, 7
        %v643 = vsub.s32 %v640, %v642
        %v644 = vrot.slane %v628, %v643
        %v646 = vunpack.c.l.s4 1966171168
        %v647 = vunpack.c.0.s8 %v646
        %v648 = vlaneseq
        %v649 = vshrl.u32 %v648, 7
        %v650 = vsub.s32 %v647, %v649
        %v651 = vrot.slane %v629, %v650
        %v653 = vunpack.c.l.s4 1966171168
        %v654 = vunpack.c.0.s8 %v653
        %v655 = vlaneseq
        %v656 = vshrl.u32 %v655, 7
        %v657 = vsub.s32 %v654, %v656
        %v658 = vrot.slane %v630, %v657
        %v659 = vcombine.high %v637, %v637
        %v660 = vcombine.high %v644, %v644
        %v661 = vcombine.high %v651, %v651
        %v662 = vcombine.high %v658, %v658
        %v663 = vcombine.high %v610, %v610
        %v665 = vunpack.c.l.s4 1966171168
        %v666 = vunpack.c.0.s8 %v665
        %v667 = vlaneseq
        %v668 = vshrl.u32 %v667, 7
        %v669 = vsub.s32 %v666, %v668
        %v670 = vrot.slane %v610, %v669
        %v672 = vunpack.c.l.s4 1966171168
        %v673 = vunpack.c.0.s8 %v672
        %v674 = vlaneseq
        %v675 = vshrl.u32 %v674, 7
        %v676 = vsub.s32 %v673, %v675
        %v677 = vrot.slane %v663, %v676
        %v678 = vcombine.high %v670, %v670
        %v679 = vcombine.high %v677, %v677
        %v681 = vunpack.c.l.s4 1966171168
        %v682 = vunpack.c.0.s8 %v681
        %v683 = vlaneseq
        %v684 = vshrl.u32 %v683, 7
        %v685 = vsub.s32 %v682, %v684
        %v686 = vrot.slane %v670, %v685
        %v688 = vunpack.c.l.s4 1966171168
        %v689 = vunpack.c.0.s8 %v688
        %v690 = vlaneseq
        %v691 = vshrl.u32 %v690, 7
        %v692 = vsub.s32 %v689, %v691
        %v693 = vrot.slane %v677, %v692
        %v695 = vunpack.c.l.s4 1966171168
        %v696 = vunpack.c.0.s8 %v695
        %v697 = vlaneseq
        %v698 = vshrl.u32 %v697, 7
        %v699 = vsub.s32 %v696, %v698
        %v700 = vrot.slane %v678, %v699
        %v702 = vunpack.c.l.s4 1966171168
        %v703 = vunpack.c.0.s8 %v702
        %v704 = vlaneseq
        %v705 = vshrl.u32 %v704, 7
        %v706 = vsub.s32 %v703, %v705
        %v707 = vrot.slane %v679, %v706
        %v708 = vcombine.high %v686, %v686
        %v709 = vcombine.high %v693, %v693
        %v710 = vcombine.high %v700, %v700
        %v711 = vcombine.high %v707, %v707
        %v712 = vlaneseq
        %v713 = vshrl.u32 %v712, 7
        %v714 = vsub.s32 0, %v713
        %v715 = vrot.slane %v637, %v714
        %v716 = vlaneseq
        %v717 = vshrl.u32 %v716, 7
        %v718 = vsub.s32 0, %v717
        %v719 = vrot.slane %v651, %v718
        %v720 = vlaneseq
        %v721 = vshrl.u32 %v720, 7
        %v722 = vsub.s32 0, %v721
        %v723 = vrot.slane %v659, %v722
        %v724 = vlaneseq
        %v725 = vshrl.u32 %v724, 7
        %v726 = vsub.s32 0, %v725
        %v727 = vrot.slane %v661, %v726
        %v728 = vlaneseq
        %v729 = vshrl.u32 %v728, 7
        %v730 = vsub.s32 0, %v729
        %v731 = vrot.slane %v644, %v730
        %v732 = vlaneseq
        %v733 = vshrl.u32 %v732, 7
        %v734 = vsub.s32 0, %v733
        %v735 = vrot.slane %v658, %v734
        %v736 = vlaneseq
        %v737 = vshrl.u32 %v736, 7
        %v738 = vsub.s32 0, %v737
        %v739 = vrot.slane %v660, %v738
        %v740 = vlaneseq
        %v741 = vshrl.u32 %v740, 7
        %v742 = vsub.s32 0, %v741
        %v743 = vrot.slane %v662, %v742
        %v744 = vlaneseq
        %v745 = vshrl.u32 %v744, 7
        %v746 = vsub.s32 0, %v745
        %v747 = vrot.slane %v686, %v746
        %v748 = vlaneseq
        %v749 = vshrl.u32 %v748, 7
        %v750 = vsub.s32 0, %v749
        %v751 = vrot.slane %v700, %v750
        %v752 = vlaneseq
        %v753 = vshrl.u32 %v752, 7
        %v754 = vsub.s32 0, %v753
        %v755 = vrot.slane %v708, %v754
        %v756 = vlaneseq
        %v757 = vshrl.u32 %v756, 7
        %v758 = vsub.s32 0, %v757
        %v759 = vrot.slane %v710, %v758
        %v760 = vlaneseq
        %v761 = vshrl.u32 %v760, 7
        %v762 = vsub.s32 0, %v761
        %v763 = vrot.slane %v693, %v762
        %v764 = vlaneseq
        %v765 = vshrl.u32 %v764, 7
        %v766 = vsub.s32 0, %v765
        %v767 = vrot.slane %v707, %v766
        %v768 = vlaneseq
        %v769 = vshrl.u32 %v768, 7
        %v770 = vsub.s32 0, %v769
        %v771 = vrot.slane %v709, %v770
        %v772 = vlaneseq
        %v773 = vshrl.u32 %v772, 7
        %v774 = vsub.s32 0, %v773
        %v775 = vrot.slane %v711, %v774
        %v792 = vadd.f32 %v715, %v611
        %v793 = vadd.f32 %v719, %v611
        %v794 = vadd.f32 %v723, %v611
        %v795 = vadd.f32 %v727, %v611
        %v796 = vadd.f32 %v731, %v611
        %v797 = vadd.f32 %v735, %v611
        %v798 = vadd.f32 %v739, %v611
        %v799 = vadd.f32 %v743, %v611
        %v800 = vadd.f32 %v747, %v611
        %v801 = vadd.f32 %v751, %v611
        %v802 = vadd.f32 %v755, %v611
        %v803 = vadd.f32 %v759, %v611
        %v804 = vadd.f32 %v763, %v611
        %v805 = vadd.f32 %v767, %v611
        %v806 = vadd.f32 %v771, %v611
        %v807 = vadd.f32 %v775, %v611
        %v824 = vcombine.low %v792, %v793
        %v825 = vcombine.low %v794, %v795
        %v827 = vunpack.c.l.s4 1983009808
        %v828 = vunpack.c.0.s8 %v827
        %v829 = vlaneseq
        %v830 = vshrl.u32 %v829, 7
        %v831 = vsub.s32 %v828, %v830
        %v832 = vrot.slane %v824, %v831
        %v834 = vunpack.c.l.s4 1983009808
        %v835 = vunpack.c.0.s8 %v834
        %v836 = vlaneseq
        %v837 = vshrl.u32 %v836, 7
        %v838 = vsub.s32 %v835, %v837
        %v839 = vrot.slane %v825, %v838
        %v840 = vcombine.low %v832, %v839
        %v841 = vcombine.low %v796, %v797
        %v842 = vcombine.low %v798, %v799
        %v844 = vunpack.c.l.s4 1983009808
        %v845 = vunpack.c.0.s8 %v844
        %v846 = vlaneseq
        %v847 = vshrl.u32 %v846, 7
        %v848 = vsub.s32 %v845, %v847
        %v849 = vrot.slane %v841, %v848
        %v851 = vunpack.c.l.s4 1983009808
        %v852 = vunpack.c.0.s8 %v851
        %v853 = vlaneseq
        %v854 = vshrl.u32 %v853, 7
        %v855 = vsub.s32 %v852, %v854
        %v856 = vrot.slane %v842, %v855
        %v857 = vcombine.low %v849, %v856
        %v858 = vcombine.low %v800, %v801
        %v859 = vcombine.low %v802, %v803
        %v861 = vunpack.c.l.s4 1983009808
        %v862 = vunpack.c.0.s8 %v861
        %v863 = vlaneseq
        %v864 = vshrl.u32 %v863, 7
        %v865 = vsub.s32 %v862, %v864
        %v866 = vrot.slane %v858, %v865
        %v868 = vunpack.c.l.s4 1983009808
        %v869 = vunpack.c.0.s8 %v868
        %v870 = vlaneseq
        %v871 = vshrl.u32 %v870, 7
        %v872 = vsub.s32 %v869, %v871
        %v873 = vrot.slane %v859, %v872
        %v874 = vcombine.low %v866, %v873
        %v875 = vcombine.low %v804, %v805
        %v876 = vcombine.low %v806, %v807
        %v878 = vunpack.c.l.s4 1983009808
        %v879 = vunpack.c.0.s8 %v878
        %v880 = vlaneseq
        %v881 = vshrl.u32 %v880, 7
        %v882 = vsub.s32 %v879, %v881
        %v883 = vrot.slane %v875, %v882
        %v885 = vunpack.c.l.s4 1983009808
        %v886 = vunpack.c.0.s8 %v885
        %v887 = vlaneseq
        %v888 = vshrl.u32 %v887, 7
        %v889 = vsub.s32 %v886, %v888
        %v890 = vrot.slane %v876, %v889
        %v891 = vcombine.low %v883, %v890
        %v896 = vpack.c.bf16 %v857, %v840
        %v897 = vpack.c.bf16 %v891, %v874
        %v900 = vunpack.c.l.b16 %v896
        %v901 = vunpack.c.h.b16 %v896
        %v902 = vunpack.c.l.b16 %v897
        %v903 = vunpack.c.h.b16 %v897
        %v904 = vpack.c.b16 %v900, %v900
        %v905 = vpack.c.b16 %v901, %v901
        %v906 = vpack.c.b16 %v902, %v902
        %v907 = vpack.c.b16 %v903, %v903
        %912 = vst [vmem:[%s354] sm:$0xf] %v904
        %913 = vst [vmem:[%s354 + $0x4] sm:$0xf] %v905
        %914 = vst [vmem:[%s354 + $0x8] sm:$0xf] %v906
        %915 = vst [vmem:[%s354 + $0xc] sm:$0xf] %v907
        %v916 = vpack.c.bf16 %v610, %v609
        %v917 = vld [vmem:[%s6] sm:$0xf]
        %v918 = vld [vmem:[%s6 + $0x4] sm:$0xf]
        %v919 = vld [vmem:[%s6 + $0x8] sm:$0xf]
        %v920 = vld [vmem:[%s6 + $0xc] sm:$0xf]
        %v921 = vld [vmem:[%s6 + $0x10] sm:$0xf]
        %v922 = vld [vmem:[%s6 + $0x14] sm:$0xf]
        %v923 = vld [vmem:[%s6 + $0x18] sm:$0xf]
        %v924 = vld [vmem:[%s6 + $0x1c] sm:$0xf]
        %v925 = vld [vmem:[%s6 + $0x20] sm:$0xf]
        %v926 = vld [vmem:[%s6 + $0x24] sm:$0xf]
        %v927 = vld [vmem:[%s6 + $0x28] sm:$0xf]
        %v928 = vld [vmem:[%s6 + $0x2c] sm:$0xf]
        %v929 = vld [vmem:[%s6 + $0x30] sm:$0xf]
        %v930 = vld [vmem:[%s6 + $0x34] sm:$0xf]
        %v931 = vld [vmem:[%s6 + $0x38] sm:$0xf]
        %v932 = vld [vmem:[%s6 + $0x3c] sm:$0xf]
        %v949 = vunpack.c.l.b16 %v917
        %v950 = vunpack.c.l.b16 %v918
        %v951 = vunpack.c.l.b16 %v919
        %v952 = vunpack.c.l.b16 %v920
        %v953 = vunpack.c.l.b16 %v921
        %v954 = vunpack.c.l.b16 %v922
        %v955 = vunpack.c.l.b16 %v923
        %v956 = vunpack.c.l.b16 %v924
        %v957 = vunpack.c.l.b16 %v925
        %v958 = vunpack.c.l.b16 %v926
        %v959 = vunpack.c.l.b16 %v927
        %v960 = vunpack.c.l.b16 %v928
        %v961 = vunpack.c.l.b16 %v929
        %v962 = vunpack.c.l.b16 %v930
        %v963 = vunpack.c.l.b16 %v931
        %v964 = vunpack.c.l.b16 %v932
        %v965 = vpack.c.b16 %v950, %v949
        %v966 = vpack.c.b16 %v952, %v951
        %v967 = vpack.c.b16 %v954, %v953
        %v968 = vpack.c.b16 %v956, %v955
        %v969 = vpack.c.b16 %v958, %v957
        %v970 = vpack.c.b16 %v960, %v959
        %v971 = vpack.c.b16 %v962, %v961
        %v972 = vpack.c.b16 %v964, %v963
        %981 = vmatprep.subr.bf16.mxu0 0
        %982 = vmatpush1.bf16.msra.mxu0 %v972
        %983 = vmatprep.subr.bf16.mxu0 0
        %984 = vmatpush1.bf16.msra.mxu0 %v971
        %985 = vmatprep.subr.bf16.mxu0 0
        %986 = vmatpush1.bf16.msra.mxu0 %v970
        %987 = vmatprep.subr.bf16.mxu0 0
        %988 = vmatpush1.bf16.msra.mxu0 %v969
        %989 = vmatprep.subr.bf16.mxu0 0
        %990 = vmatpush1.bf16.msra.mxu0 %v968
        %991 = vmatprep.subr.bf16.mxu0 0
        %992 = vmatpush1.bf16.msra.mxu0 %v967
        %993 = vmatprep.subr.bf16.mxu0 0
        %994 = vmatpush1.bf16.msra.mxu0 %v966
        %995 = vmatprep.subr.bf16.mxu0 0
        %996 = vmatpush1.bf16.msra.mxu0 %v965
        %997 = vmatprep.subr.bf16.mxu0 0
        %998 = vmatpush2.bf16.msra.mxu0 0
        %999 = vmatprep.subr.bf16.mxu0 0
        %1000 = vmatpush2.bf16.msra.mxu0 0
        %1001 = vmatprep.subr.bf16.mxu0 0
        %1002 = vmatpush2.bf16.msra.mxu0 0
        %1003 = vmatprep.subr.bf16.mxu0 0
        %1004 = vmatpush2.bf16.msra.mxu0 0
        %1005 = vmatprep.subr.bf16.mxu0 0
        %1006 = vmatpush2.bf16.msra.mxu0 0
        %1007 = vmatprep.subr.bf16.mxu0 0
        %1008 = vmatpush2.bf16.msra.mxu0 0
        %1009 = vmatprep.subr.bf16.mxu0 0
        %1010 = vmatpush2.bf16.msra.mxu0 0
        %1011 = vmatprep.subr.bf16.mxu0 0
        %1012 = vmatpush2.bf16.msra.mxu0 0
        %1013 = vmatprep.mubr.bf16.mxu0 0
        %1014 = vmatmul.mubr.bf16.gmra.mxu0 %v916
        %v1015 = vpop.f32.mrf.mxu0
        %v1016 = vadd.f32 0.0, %v1015
        %v1017 = vpop.f32.mrf.mxu0
        %v1018 = vpop.f32.mrf.mxu0
        %v1019 = vadd.f32 0.0, %v1018
        %v1020 = vpop.f32.mrf.mxu0
        %1021 = vdwg.mxu0
        %v1022 = vld [vmem:[%s5] sm:$0x3]
        %v1025 = vcombine.high %v1016, %v1016
        %v1027 = vunpack.c.l.s4 1966171168
        %v1028 = vunpack.c.0.s8 %v1027
        %v1029 = vlaneseq
        %v1030 = vshrl.u32 %v1029, 7
        %v1031 = vsub.s32 %v1028, %v1030
        %v1032 = vrot.slane %v1016, %v1031
        %v1034 = vunpack.c.l.s4 1966171168
        %v1035 = vunpack.c.0.s8 %v1034
        %v1036 = vlaneseq
        %v1037 = vshrl.u32 %v1036, 7
        %v1038 = vsub.s32 %v1035, %v1037
        %v1039 = vrot.slane %v1025, %v1038
        %v1040 = vcombine.high %v1032, %v1032
        %v1041 = vcombine.high %v1039, %v1039
        %v1043 = vunpack.c.l.s4 1966171168
        %v1044 = vunpack.c.0.s8 %v1043
        %v1045 = vlaneseq
        %v1046 = vshrl.u32 %v1045, 7
        %v1047 = vsub.s32 %v1044, %v1046
        %v1048 = vrot.slane %v1032, %v1047
        %v1050 = vunpack.c.l.s4 1966171168
        %v1051 = vunpack.c.0.s8 %v1050
        %v1052 = vlaneseq
        %v1053 = vshrl.u32 %v1052, 7
        %v1054 = vsub.s32 %v1051, %v1053
        %v1055 = vrot.slane %v1039, %v1054
        %v1057 = vunpack.c.l.s4 1966171168
        %v1058 = vunpack.c.0.s8 %v1057
        %v1059 = vlaneseq
        %v1060 = vshrl.u32 %v1059, 7
        %v1061 = vsub.s32 %v1058, %v1060
        %v1062 = vrot.slane %v1040, %v1061
        %v1064 = vunpack.c.l.s4 1966171168
        %v1065 = vunpack.c.0.s8 %v1064
        %v1066 = vlaneseq
        %v1067 = vshrl.u32 %v1066, 7
        %v1068 = vsub.s32 %v1065, %v1067
        %v1069 = vrot.slane %v1041, %v1068
        %v1070 = vcombine.high %v1048, %v1048
        %v1071 = vcombine.high %v1055, %v1055
        %v1072 = vcombine.high %v1062, %v1062
        %v1073 = vcombine.high %v1069, %v1069
        %v1074 = vcombine.high %v1019, %v1019
        %v1076 = vunpack.c.l.s4 1966171168
        %v1077 = vunpack.c.0.s8 %v1076
        %v1078 = vlaneseq
        %v1079 = vshrl.u32 %v1078, 7
        %v1080 = vsub.s32 %v1077, %v1079
        %v1081 = vrot.slane %v1019, %v1080
        %v1083 = vunpack.c.l.s4 1966171168
        %v1084 = vunpack.c.0.s8 %v1083
        %v1085 = vlaneseq
        %v1086 = vshrl.u32 %v1085, 7
        %v1087 = vsub.s32 %v1084, %v1086
        %v1088 = vrot.slane %v1074, %v1087
        %v1089 = vcombine.high %v1081, %v1081
        %v1090 = vcombine.high %v1088, %v1088
        %v1092 = vunpack.c.l.s4 1966171168
        %v1093 = vunpack.c.0.s8 %v1092
        %v1094 = vlaneseq
        %v1095 = vshrl.u32 %v1094, 7
        %v1096 = vsub.s32 %v1093, %v1095
        %v1097 = vrot.slane %v1081, %v1096
        %v1099 = vunpack.c.l.s4 1966171168
        %v1100 = vunpack.c.0.s8 %v1099
        %v1101 = vlaneseq
        %v1102 = vshrl.u32 %v1101, 7
        %v1103 = vsub.s32 %v1100, %v1102
        %v1104 = vrot.slane %v1088, %v1103
        %v1106 = vunpack.c.l.s4 1966171168
        %v1107 = vunpack.c.0.s8 %v1106
        %v1108 = vlaneseq
        %v1109 = vshrl.u32 %v1108, 7
        %v1110 = vsub.s32 %v1107, %v1109
        %v1111 = vrot.slane %v1089, %v1110
        %v1113 = vunpack.c.l.s4 1966171168
        %v1114 = vunpack.c.0.s8 %v1113
        %v1115 = vlaneseq
        %v1116 = vshrl.u32 %v1115, 7
        %v1117 = vsub.s32 %v1114, %v1116
        %v1118 = vrot.slane %v1090, %v1117
        %v1119 = vcombine.high %v1097, %v1097
        %v1120 = vcombine.high %v1104, %v1104
        %v1121 = vcombine.high %v1111, %v1111
        %v1122 = vcombine.high %v1118, %v1118
        %v1123 = vlaneseq
        %v1124 = vshrl.u32 %v1123, 7
        %v1125 = vsub.s32 0, %v1124
        %v1126 = vrot.slane %v1048, %v1125
        %v1127 = vlaneseq
        %v1128 = vshrl.u32 %v1127, 7
        %v1129 = vsub.s32 0, %v1128
        %v1130 = vrot.slane %v1062, %v1129
        %v1131 = vlaneseq
        %v1132 = vshrl.u32 %v1131, 7
        %v1133 = vsub.s32 0, %v1132
        %v1134 = vrot.slane %v1070, %v1133
        %v1135 = vlaneseq
        %v1136 = vshrl.u32 %v1135, 7
        %v1137 = vsub.s32 0, %v1136
        %v1138 = vrot.slane %v1072, %v1137
        %v1139 = vlaneseq
        %v1140 = vshrl.u32 %v1139, 7
        %v1141 = vsub.s32 0, %v1140
        %v1142 = vrot.slane %v1055, %v1141
        %v1143 = vlaneseq
        %v1144 = vshrl.u32 %v1143, 7
        %v1145 = vsub.s32 0, %v1144
        %v1146 = vrot.slane %v1069, %v1145
        %v1147 = vlaneseq
        %v1148 = vshrl.u32 %v1147, 7
        %v1149 = vsub.s32 0, %v1148
        %v1150 = vrot.slane %v1071, %v1149
        %v1151 = vlaneseq
        %v1152 = vshrl.u32 %v1151, 7
        %v1153 = vsub.s32 0, %v1152
        %v1154 = vrot.slane %v1073, %v1153
        %v1155 = vlaneseq
        %v1156 = vshrl.u32 %v1155, 7
        %v1157 = vsub.s32 0, %v1156
        %v1158 = vrot.slane %v1097, %v1157
        %v1159 = vlaneseq
        %v1160 = vshrl.u32 %v1159, 7
        %v1161 = vsub.s32 0, %v1160
        %v1162 = vrot.slane %v1111, %v1161
        %v1163 = vlaneseq
        %v1164 = vshrl.u32 %v1163, 7
        %v1165 = vsub.s32 0, %v1164
        %v1166 = vrot.slane %v1119, %v1165
        %v1167 = vlaneseq
        %v1168 = vshrl.u32 %v1167, 7
        %v1169 = vsub.s32 0, %v1168
        %v1170 = vrot.slane %v1121, %v1169
        %v1171 = vlaneseq
        %v1172 = vshrl.u32 %v1171, 7
        %v1173 = vsub.s32 0, %v1172
        %v1174 = vrot.slane %v1104, %v1173
        %v1175 = vlaneseq
        %v1176 = vshrl.u32 %v1175, 7
        %v1177 = vsub.s32 0, %v1176
        %v1178 = vrot.slane %v1118, %v1177
        %v1179 = vlaneseq
        %v1180 = vshrl.u32 %v1179, 7
        %v1181 = vsub.s32 0, %v1180
        %v1182 = vrot.slane %v1120, %v1181
        %v1183 = vlaneseq
        %v1184 = vshrl.u32 %v1183, 7
        %v1185 = vsub.s32 0, %v1184
        %v1186 = vrot.slane %v1122, %v1185
        %v1203 = vadd.f32 %v1126, %v1022
        %v1204 = vadd.f32 %v1130, %v1022
        %v1205 = vadd.f32 %v1134, %v1022
        %v1206 = vadd.f32 %v1138, %v1022
        %v1207 = vadd.f32 %v1142, %v1022
        %v1208 = vadd.f32 %v1146, %v1022
        %v1209 = vadd.f32 %v1150, %v1022
        %v1210 = vadd.f32 %v1154, %v1022
        %v1211 = vadd.f32 %v1158, %v1022
        %v1212 = vadd.f32 %v1162, %v1022
        %v1213 = vadd.f32 %v1166, %v1022
        %v1214 = vadd.f32 %v1170, %v1022
        %v1215 = vadd.f32 %v1174, %v1022
        %v1216 = vadd.f32 %v1178, %v1022
        %v1217 = vadd.f32 %v1182, %v1022
        %v1218 = vadd.f32 %v1186, %v1022
        %v1235 = vcombine.low %v1203, %v1204
        %v1236 = vcombine.low %v1205, %v1206
        %v1238 = vunpack.c.l.s4 1983009808
        %v1239 = vunpack.c.0.s8 %v1238
        %v1240 = vlaneseq
        %v1241 = vshrl.u32 %v1240, 7
        %v1242 = vsub.s32 %v1239, %v1241
        %v1243 = vrot.slane %v1235, %v1242
        %v1245 = vunpack.c.l.s4 1983009808
        %v1246 = vunpack.c.0.s8 %v1245
        %v1247 = vlaneseq
        %v1248 = vshrl.u32 %v1247, 7
        %v1249 = vsub.s32 %v1246, %v1248
        %v1250 = vrot.slane %v1236, %v1249
        %v1251 = vcombine.low %v1243, %v1250
        %v1252 = vcombine.low %v1207, %v1208
        %v1253 = vcombine.low %v1209, %v1210
        %v1255 = vunpack.c.l.s4 1983009808
        %v1256 = vunpack.c.0.s8 %v1255
        %v1257 = vlaneseq
        %v1258 = vshrl.u32 %v1257, 7
        %v1259 = vsub.s32 %v1256, %v1258
        %v1260 = vrot.slane %v1252, %v1259
        %v1262 = vunpack.c.l.s4 1983009808
        %v1263 = vunpack.c.0.s8 %v1262
        %v1264 = vlaneseq
        %v1265 = vshrl.u32 %v1264, 7
        %v1266 = vsub.s32 %v1263, %v1265
        %v1267 = vrot.slane %v1253, %v1266
        %v1268 = vcombine.low %v1260, %v1267
        %v1269 = vcombine.low %v1211, %v1212
        %v1270 = vcombine.low %v1213, %v1214
        %v1272 = vunpack.c.l.s4 1983009808
        %v1273 = vunpack.c.0.s8 %v1272
        %v1274 = vlaneseq
        %v1275 = vshrl.u32 %v1274, 7
        %v1276 = vsub.s32 %v1273, %v1275
        %v1277 = vrot.slane %v1269, %v1276
        %v1279 = vunpack.c.l.s4 1983009808
        %v1280 = vunpack.c.0.s8 %v1279
        %v1281 = vlaneseq
        %v1282 = vshrl.u32 %v1281, 7
        %v1283 = vsub.s32 %v1280, %v1282
        %v1284 = vrot.slane %v1270, %v1283
        %v1285 = vcombine.low %v1277, %v1284
        %v1286 = vcombine.low %v1215, %v1216
        %v1287 = vcombine.low %v1217, %v1218
        %v1289 = vunpack.c.l.s4 1983009808
        %v1290 = vunpack.c.0.s8 %v1289
        %v1291 = vlaneseq
        %v1292 = vshrl.u32 %v1291, 7
        %v1293 = vsub.s32 %v1290, %v1292
        %v1294 = vrot.slane %v1286, %v1293
        %v1296 = vunpack.c.l.s4 1983009808
        %v1297 = vunpack.c.0.s8 %v1296
        %v1298 = vlaneseq
        %v1299 = vshrl.u32 %v1298, 7
        %v1300 = vsub.s32 %v1297, %v1299
        %v1301 = vrot.slane %v1287, %v1300
        %v1302 = vcombine.low %v1294, %v1301
        %1307 = vst [vmem:[%s396] sm:$0xff] %v1251
        %1308 = vst [vmem:[%s396 + $0x8] sm:$0xff] %v1268
        %1309 = vst [vmem:[%s396 + $0x10] sm:$0xff] %v1285
        %1310 = vst [vmem:[%s396 + $0x18] sm:$0xff] %v1302
        %s1311 = sand.u32 %s206, 1
        %s1312 = scalar_lea.sflag [#allocation3], %s1311
        %s1313 = sand.u32 %s206, 1
        %s1314 = smul.addr %s1313, 16
        %s1315 = scalar_lea.vmem [#allocation2], %s1314
        %s1316 = smul.u32 4, %s28
        %p1317 = scmp.lt.s32.totalorder %s27, 1
        %s1318 = scalar_select %p1317, %s27, 1
        %p1319 = scmp.lt.s32.totalorder %s1316, 7
        %s1320 = scalar_select %p1319, %s1316, 7
        %s1321 = smul.addr %s1318, 8
        %s1322 = sadd.s32 %s1320, %s1321
        %s1323 = smul.addr %s1322, 8
        %s1324 = scalar_lea.vmem %s8, %s1323
        // Predicated region
        $region49: #{complete_dt_forward.13} parent=47 // pred_check
          %p1325 = pneg %p216
        $region50: #{complete_dt_forward.13} parent=47 // pred_check_branch
          %1327 = sbr.rel (%p1325) target = $region52
        $region51: #{complete_dt_forward.13} parent=47 // pred_region
          %s1328 = smul.u32 4, %s28
          %s1330 = ssub.s32 256, 256
          %1331 = vsyncadd %s1312, %s1330
          %s1332 = smul.addr %s27, 8
          %s1333 = sadd.s32 %s1328, %s1332
          %s1334 = smul.addr %s1333, 64
          %s1335 = scalar_lea.hbm %s7, %s1334
          %s1336 = sshll.u32 %s1315, 4
          %s1337 = int_to_ptr.vmem [resolvable:$true] %s1336
          %1342 = dma.vmem_to_hbm [thread:$0]  %s1337, 256, %s1335, %s1312, 64, 64, 4
        $region52: #{complete_dt_forward.13} parent=47 // pred_fallthru
          _
        // Predicated region
        $region53: #{complete_dt_forward.13} parent=47 // pred_check
          %p1343 = pneg %p244
        $region54: #{complete_dt_forward.13} parent=47 // pred_check_branch
          %1345 = sbr.rel (%p1343) target = $region56
        $region55: #{complete_dt_forward.13} parent=47 // pred_region
          %s1346 = smul.u32 4, %s28
        $region56: #{complete_dt_forward.13} parent=47 // pred_fallthru
          _
      $region48: #{complete_dt_forward.13} parent=5 // pred_fallthru
        _
      %p1347 = scmp.le.s32.totalorder 2, %s18
      // Predicated region
      $region57: #{complete_dt_forward.13} parent=5 // pred_check
        %p1348 = pneg %p1347
      $region58: #{complete_dt_forward.13} parent=5 // pred_check_branch
        %1350 = sbr.rel (%p1348) target = $region60
      $region59: #{complete_dt_forward.13} parent=5 // pred_region
        %s1351 = ssub.s32 %s18, 2
        // Predicated region
        $region61: #{complete_dt_forward.13} parent=59 // pred_check
          %p1352 = pneg %p222
        $region62: #{complete_dt_forward.13} parent=59 // pred_check_branch
          %1354 = sbr.rel (%p1352) target = $region64
        $region63: #{complete_dt_forward.13} parent=59 // pred_region
          %s1355 = sand.u32 %s207, 1
          %s1356 = scalar_lea.sflag [#allocation3], %s1355
          %s1357 = sand.u32 %s207, 1
          %s1358 = smul.addr %s1357, 16
          %s1359 = scalar_lea.vmem [#allocation2], %s1358
          %1360 = dma.done %s1356, 256
        $region64: #{complete_dt_forward.13} parent=59 // pred_fallthru
          _
        // Predicated region
        $region65: #{complete_dt_forward.13} parent=59 // pred_check
          %p1361 = pneg %p250
        $region66: #{complete_dt_forward.13} parent=59 // pred_check_branch
          %1363 = sbr.rel (%p1361) target = $region68
        $region67: #{complete_dt_forward.13} parent=59 // pred_region
          %s1364 = smul.u32 4, %s30
          %p1365 = scmp.lt.s32.totalorder %s29, 1
          %s1366 = scalar_select %p1365, %s29, 1
          %p1367 = scmp.lt.s32.totalorder %s1364, 7
          %s1368 = scalar_select %p1367, %s1364, 7
          %s1369 = smul.addr %s1366, 8
          %s1370 = sadd.s32 %s1368, %s1369
          %s1371 = smul.addr %s1370, 8
          %s1372 = scalar_lea.vmem %s8, %s1371
        $region68: #{complete_dt_forward.13} parent=59 // pred_fallthru
          _
      $region60: #{complete_dt_forward.13} parent=5 // pred_fallthru
        _
    $region6: #{complete_dt_forward.13} parent=1 // loop_footer
      %s22 = sadd.s32 1, %s18
    $region7: #{complete_dt_forward.13} parent=1 // loop_footer_branch
      %17 = sbr.rel target = $region3
    $region8: #{complete_dt_forward.13} parent=1 // loop_exit
      _
    %1373 = vsyncpa [#allocation3], 1
    %s1374 = scalar_lea.sflag [#allocation3], 1
    %1375 = vsyncpa %s1374, 1

// kernel: complete_dt_forward.12
$region0: #{complete_dt_forward.12}
  #allocation0 [shape = 'u32[]', space=smem, size = 0x4, offset = 0x4, fixed_abs, tag = 'smem constant byte address 0x4 - core index']
  #allocation1 [shape = 'u32[144,128]{1,0:T(1,128)}', space=vmem, size = 0x12000, scoped, tag = 'internal scratch']
  %s0 = inlined_call_operand.vmem [shape: bf16[2,16,256], index: 0, kind: input, shape index: {}]
  %s1 = inlined_call_operand.vmem [shape: bf16[2,16,256], index: 1, kind: input, shape index: {}]
  %s2 = inlined_call_operand.vmem [shape: bf16[256,256], index: 2, kind: input, shape index: {}]
  %s3 = inlined_call_operand.vmem [shape: f32[1,256], index: 3, kind: input, shape index: {}]
  %s4 = inlined_call_operand.vmem [shape: f32[2,256], index: 4, kind: input, shape index: {}]
  %s5 = inlined_call_operand.vmem [shape: f32[2,256], index: 5, kind: input, shape index: {}]
  %s6 = inlined_call_operand.vmem [shape: bf16[256,256], index: 6, kind: input, shape index: {}]
  %s7 = inlined_call_operand.vmem [shape: bf16[2,32,256], index: 7, kind: output, shape index: {0}]
  %s8 = inlined_call_operand.vmem [shape: f32[2,32,256], index: 8, kind: output, shape index: {1}]
  %9 = xla_tuple %s7, %s8
  %s10 = sld [smem:[#allocation0]]
  $region69: #{complete_dt_forward.12} parent=0
    _
  %s12 = ssub.s32 1, %s10
  %s13 = scalar_select 0, %s12, %s10
  loop: start=0, step=1, limit=6
  $region2: #{complete_dt_forward.12} parent=0 // loop_pre_header
    _
  $region3: #{complete_dt_forward.12} parent=0 // loop_header
    %s15 = sphi 0, %s19
    %p16 = scmp.ge.s32.totalorder %s15, 6
    %s22 = sphi 0, %s34
    %s23 = sphi 0, %s30
    %s24 = sphi 0, %s22
    %s25 = sphi 0, %s23
    %s26 = sphi 0, %s24
    %s27 = sphi 0, %s25
    %s39 = sphi 0, %s41
    %s42 = sphi 0, %s39
    %s43 = sphi 0, %s42
    %s59 = sphi 0, %s43
    %s67 = sphi 0, %s69
    %s70 = sphi 0, %s67
    %s71 = sphi 0, %s70
    %s87 = sphi 0, %s71
    %s91 = sphi 0, %s91
    %s93 = sphi 0, %s91
    %s94 = sphi 0, %s93
    %s108 = sphi 0, %s94
    %s112 = sphi 0, %s112
    %s114 = sphi 0, %s112
    %s115 = sphi 0, %s114
    %s129 = sphi 0, %s115
    %s133 = sphi 0, %s133
    %s135 = sphi 0, %s133
    %s136 = sphi 0, %s135
    %s150 = sphi 0, %s136
    %s154 = sphi 0, %s154
    %s156 = sphi 0, %s154
    %s157 = sphi 0, %s156
    %s171 = sphi 0, %s157
    %s175 = sphi 0, %s175
    %s177 = sphi 0, %s175
    %s178 = sphi 0, %s177
    %s192 = sphi 0, %s178
    %s200 = sphi 0, %s202
    %s203 = sphi 0, %s200
    %s204 = sphi 0, %s203
    %s220 = sphi 0, %s204
    %s228 = sphi 0, %s230
    %s231 = sphi 0, %s228
    %s232 = sphi 0, %s231
    %s248 = sphi 0, %s232
  $region4: #{complete_dt_forward.12} parent=0 // loop_header_branch
    %18 = sbr.rel (%p16) target = $region8
  $region5: #{complete_dt_forward.12} parent=0 // loop_body
    %s20 = ssub.s32 %s15, 1
    %s21 = ssub.s32 %s15, 2
    %s28 = sadd.s32 1, %s23
    %p29 = scmp.ge.s32.totalorder %s28, 2
    %s30 = scalar_select %p29, 0, %s28
    %s31 = sadd.s32 1, %s22
    %s32 = scalar_select %p29, %s31, %s22
    %p33 = scmp.ge.s32.totalorder %s32, 2
    %s34 = scalar_select %p33, 0, %s32
    %s35 = ssub.s32 %s22, %s34
    %s36 = ssub.s32 %s23, %s30
    %s37 = sor.u32 %s35, %s36
    %p38 = scmp.eq.s32.totalorder %s37, 0
    %s40 = sadd.s32 %s39, 1
    %s41 = scalar_select %p38, %s39, %s40
    %p44 = pneg %p38
    %p45 = scmp.eq.s32.totalorder %s15, 3
    %p46 = por %p44, %p45
    %p47 = scmp.ne.s32.totalorder %s39, %s42
    %p48 = scmp.eq.s32.totalorder %s15, 0
    %p49 = por %p47, %p48
    %p50 = scmp.ne.s32.totalorder %s39, %s42
    %p51 = scmp.eq.s32.totalorder %s20, 3
    %p52 = por %p50, %p51
    %p53 = scmp.ne.s32.totalorder %s42, %s43
    %p54 = scmp.eq.s32.totalorder %s20, 0
    %p55 = por %p53, %p54
    %p56 = scmp.ne.s32.totalorder %s42, %s43
    %p57 = scmp.eq.s32.totalorder %s21, 3
    %p58 = por %p56, %p57
    %p60 = scmp.ne.s32.totalorder %s43, %s59
    %p61 = scmp.eq.s32.totalorder %s21, 0
    %p62 = por %p60, %p61
    %s63 = ssub.s32 %s22, %s34
    %s64 = ssub.s32 %s23, %s30
    %s65 = sor.u32 %s63, %s64
    %p66 = scmp.eq.s32.totalorder %s65, 0
    %s68 = sadd.s32 %s67, 1
    %s69 = scalar_select %p66, %s67, %s68
    %p72 = pneg %p66
    %p73 = scmp.eq.s32.totalorder %s15, 3
    %p74 = por %p72, %p73
    %p75 = scmp.ne.s32.totalorder %s67, %s70
    %p76 = scmp.eq.s32.totalorder %s15, 0
    %p77 = por %p75, %p76
    %p78 = scmp.ne.s32.totalorder %s67, %s70
    %p79 = scmp.eq.s32.totalorder %s20, 3
    %p80 = por %p78, %p79
    %p81 = scmp.ne.s32.totalorder %s70, %s71
    %p82 = scmp.eq.s32.totalorder %s20, 0
    %p83 = por %p81, %p82
    %p84 = scmp.ne.s32.totalorder %s70, %s71
    %p85 = scmp.eq.s32.totalorder %s21, 3
    %p86 = por %p84, %p85
    %p88 = scmp.ne.s32.totalorder %s71, %s87
    %p89 = scmp.eq.s32.totalorder %s21, 0
    %p90 = por %p88, %p89
    %s92 = sadd.s32 %s91, 1
    %p95 = scmp.eq.s32.totalorder %s15, 3
    %p96 = scmp.ne.s32.totalorder %s91, %s93
    %p97 = scmp.eq.s32.totalorder %s15, 0
    %p98 = por %p96, %p97
    %p99 = scmp.ne.s32.totalorder %s91, %s93
    %p100 = scmp.eq.s32.totalorder %s20, 3
    %p101 = por %p99, %p100
    %p102 = scmp.ne.s32.totalorder %s93, %s94
    %p103 = scmp.eq.s32.totalorder %s20, 0
    %p104 = por %p102, %p103
    %p105 = scmp.ne.s32.totalorder %s93, %s94
    %p106 = scmp.eq.s32.totalorder %s21, 3
    %p107 = por %p105, %p106
    %p109 = scmp.ne.s32.totalorder %s94, %s108
    %p110 = scmp.eq.s32.totalorder %s21, 0
    %p111 = por %p109, %p110
    %s113 = sadd.s32 %s112, 1
    %p116 = scmp.eq.s32.totalorder %s15, 3
    %p117 = scmp.ne.s32.totalorder %s112, %s114
    %p118 = scmp.eq.s32.totalorder %s15, 0
    %p119 = por %p117, %p118
    %p120 = scmp.ne.s32.totalorder %s112, %s114
    %p121 = scmp.eq.s32.totalorder %s20, 3
    %p122 = por %p120, %p121
    %p123 = scmp.ne.s32.totalorder %s114, %s115
    %p124 = scmp.eq.s32.totalorder %s20, 0
    %p125 = por %p123, %p124
    %p126 = scmp.ne.s32.totalorder %s114, %s115
    %p127 = scmp.eq.s32.totalorder %s21, 3
    %p128 = por %p126, %p127
    %p130 = scmp.ne.s32.totalorder %s115, %s129
    %p131 = scmp.eq.s32.totalorder %s21, 0
    %p132 = por %p130, %p131
    %s134 = sadd.s32 %s133, 1
    %p137 = scmp.eq.s32.totalorder %s15, 3
    %p138 = scmp.ne.s32.totalorder %s133, %s135
    %p139 = scmp.eq.s32.totalorder %s15, 0
    %p140 = por %p138, %p139
    %p141 = scmp.ne.s32.totalorder %s133, %s135
    %p142 = scmp.eq.s32.totalorder %s20, 3
    %p143 = por %p141, %p142
    %p144 = scmp.ne.s32.totalorder %s135, %s136
    %p145 = scmp.eq.s32.totalorder %s20, 0
    %p146 = por %p144, %p145
    %p147 = scmp.ne.s32.totalorder %s135, %s136
    %p148 = scmp.eq.s32.totalorder %s21, 3
    %p149 = por %p147, %p148
    %p151 = scmp.ne.s32.totalorder %s136, %s150
    %p152 = scmp.eq.s32.totalorder %s21, 0
    %p153 = por %p151, %p152
    %s155 = sadd.s32 %s154, 1
    %p158 = scmp.eq.s32.totalorder %s15, 3
    %p159 = scmp.ne.s32.totalorder %s154, %s156
    %p160 = scmp.eq.s32.totalorder %s15, 0
    %p161 = por %p159, %p160
    %p162 = scmp.ne.s32.totalorder %s154, %s156
    %p163 = scmp.eq.s32.totalorder %s20, 3
    %p164 = por %p162, %p163
    %p165 = scmp.ne.s32.totalorder %s156, %s157
    %p166 = scmp.eq.s32.totalorder %s20, 0
    %p167 = por %p165, %p166
    %p168 = scmp.ne.s32.totalorder %s156, %s157
    %p169 = scmp.eq.s32.totalorder %s21, 3
    %p170 = por %p168, %p169
    %p172 = scmp.ne.s32.totalorder %s157, %s171
    %p173 = scmp.eq.s32.totalorder %s21, 0
    %p174 = por %p172, %p173
    %s176 = sadd.s32 %s175, 1
    %p179 = scmp.eq.s32.totalorder %s15, 3
    %p180 = scmp.ne.s32.totalorder %s175, %s177
    %p181 = scmp.eq.s32.totalorder %s15, 0
    %p182 = por %p180, %p181
    %p183 = scmp.ne.s32.totalorder %s175, %s177
    %p184 = scmp.eq.s32.totalorder %s20, 3
    %p185 = por %p183, %p184
    %p186 = scmp.ne.s32.totalorder %s177, %s178
    %p187 = scmp.eq.s32.totalorder %s20, 0
    %p188 = por %p186, %p187
    %p189 = scmp.ne.s32.totalorder %s177, %s178
    %p190 = scmp.eq.s32.totalorder %s21, 3
    %p191 = por %p189, %p190
    %p193 = scmp.ne.s32.totalorder %s178, %s192
    %p194 = scmp.eq.s32.totalorder %s21, 0
    %p195 = por %p193, %p194
    %s196 = ssub.s32 %s22, %s34
    %s197 = ssub.s32 %s23, %s30
    %s198 = sor.u32 %s196, %s197
    %p199 = scmp.eq.s32.totalorder %s198, 0
    %s201 = sadd.s32 %s200, 1
    %s202 = scalar_select %p199, %s200, %s201
    %p205 = pneg %p199
    %p206 = scmp.eq.s32.totalorder %s15, 3
    %p207 = por %p205, %p206
    %p208 = scmp.ne.s32.totalorder %s200, %s203
    %p209 = scmp.eq.s32.totalorder %s15, 0
    %p210 = por %p208, %p209
    %p211 = scmp.ne.s32.totalorder %s200, %s203
    %p212 = scmp.eq.s32.totalorder %s20, 3
    %p213 = por %p211, %p212
    %p214 = scmp.ne.s32.totalorder %s203, %s204
    %p215 = scmp.eq.s32.totalorder %s20, 0
    %p216 = por %p214, %p215
    %p217 = scmp.ne.s32.totalorder %s203, %s204
    %p218 = scmp.eq.s32.totalorder %s21, 3
    %p219 = por %p217, %p218
    %p221 = scmp.ne.s32.totalorder %s204, %s220
    %p222 = scmp.eq.s32.totalorder %s21, 0
    %p223 = por %p221, %p222
    %s224 = ssub.s32 %s22, %s34
    %s225 = ssub.s32 %s23, %s30
    %s226 = sor.u32 %s224, %s225
    %p227 = scmp.eq.s32.totalorder %s226, 0
    %s229 = sadd.s32 %s228, 1
    %s230 = scalar_select %p227, %s228, %s229
    %p233 = pneg %p227
    %p234 = scmp.eq.s32.totalorder %s15, 3
    %p235 = por %p233, %p234
    %p236 = scmp.ne.s32.totalorder %s228, %s231
    %p237 = scmp.eq.s32.totalorder %s15, 0
    %p238 = por %p236, %p237
    %p239 = scmp.ne.s32.totalorder %s228, %s231
    %p240 = scmp.eq.s32.totalorder %s20, 3
    %p241 = por %p239, %p240
    %p242 = scmp.ne.s32.totalorder %s231, %s232
    %p243 = scmp.eq.s32.totalorder %s20, 0
    %p244 = por %p242, %p243
    %p245 = scmp.ne.s32.totalorder %s231, %s232
    %p246 = scmp.eq.s32.totalorder %s21, 3
    %p247 = por %p245, %p246
    %p249 = scmp.ne.s32.totalorder %s232, %s248
    %p250 = scmp.eq.s32.totalorder %s21, 0
    %p251 = por %p249, %p250
    %p252 = scmp.le.s32.totalorder 1, %s15
    %p253 = scmp.lt.s32.totalorder %s15, 5
    %p254 = pnand %p252, %p253
    %p255 = pneg %p254
    // Predicated region
    $region9: #{complete_dt_forward.12} parent=5 // pred_check
      _
    $region10: #{complete_dt_forward.12} parent=5 // pred_check_branch
      %257 = sbr.rel (%p254) target = $region12
    $region11: #{complete_dt_forward.12} parent=5 // pred_region
      %s258 = ssub.s32 %s15, 1
      // Predicated region
      $region13: #{complete_dt_forward.12} parent=11 // pred_check
        %p259 = pneg %p104
      $region14: #{complete_dt_forward.12} parent=11 // pred_check_branch
        %261 = sbr.rel (%p259) target = $region16
      $region15: #{complete_dt_forward.12} parent=11 // pred_region
        _
      $region16: #{complete_dt_forward.12} parent=11 // pred_fallthru
        _
      // Predicated region
      $region17: #{complete_dt_forward.12} parent=11 // pred_check
        %p262 = pneg %p125
      $region18: #{complete_dt_forward.12} parent=11 // pred_check_branch
        %264 = sbr.rel (%p262) target = $region20
      $region19: #{complete_dt_forward.12} parent=11 // pred_region
        _
      $region20: #{complete_dt_forward.12} parent=11 // pred_fallthru
        _
      // Predicated region
      $region21: #{complete_dt_forward.12} parent=11 // pred_check
        %p265 = pneg %p146
      $region22: #{complete_dt_forward.12} parent=11 // pred_check_branch
        %267 = sbr.rel (%p265) target = $region24
      $region23: #{complete_dt_forward.12} parent=11 // pred_region
        _
      $region24: #{complete_dt_forward.12} parent=11 // pred_fallthru
        _
      // Predicated region
      $region25: #{complete_dt_forward.12} parent=11 // pred_check
        %p268 = pneg %p167
      $region26: #{complete_dt_forward.12} parent=11 // pred_check_branch
        %270 = sbr.rel (%p268) target = $region28
      $region27: #{complete_dt_forward.12} parent=11 // pred_region
        _
      $region28: #{complete_dt_forward.12} parent=11 // pred_fallthru
        _
      // Predicated region
      $region29: #{complete_dt_forward.12} parent=11 // pred_check
        %p271 = pneg %p188
      $region30: #{complete_dt_forward.12} parent=11 // pred_check_branch
        %273 = sbr.rel (%p271) target = $region32
      $region31: #{complete_dt_forward.12} parent=11 // pred_region
        _
      $region32: #{complete_dt_forward.12} parent=11 // pred_fallthru
        _
    $region12: #{complete_dt_forward.12} parent=5 // pred_fallthru
      _
    %p274 = scmp.lt.s32.totalorder %s15, 4
    // Predicated region
    $region33: #{complete_dt_forward.12} parent=5 // pred_check
      %p275 = pneg %p274
    $region34: #{complete_dt_forward.12} parent=5 // pred_check_branch
      %277 = sbr.rel (%p275) target = $region36
    $region35: #{complete_dt_forward.12} parent=5 // pred_region
      // Predicated region
      $region37: #{complete_dt_forward.12} parent=35 // pred_check
        %p278 = pneg %p49
      $region38: #{complete_dt_forward.12} parent=35 // pred_check_branch
        %280 = sbr.rel (%p278) target = $region40
      $region39: #{complete_dt_forward.12} parent=35 // pred_region
        %p281 = scmp.lt.s32.totalorder %s22, 1
        %s282 = scalar_select %p281, %s22, 1
        %p283 = scmp.lt.s32.totalorder %s23, 1
        %s284 = scalar_select %p283, %s23, 1
        %s285 = smul.addr %s284, 2
        %s286 = smul.addr %s282, 4
        %s287 = sadd.s32 %s285, %s286
        %s288 = smul.addr %s287, 4
        %s289 = scalar_lea.vmem %s0, %s288
      $region40: #{complete_dt_forward.12} parent=35 // pred_fallthru
        _
      // Predicated region
      $region41: #{complete_dt_forward.12} parent=35 // pred_check
        %p290 = pneg %p77
      $region42: #{complete_dt_forward.12} parent=35 // pred_check_branch
        %292 = sbr.rel (%p290) target = $region44
      $region43: #{complete_dt_forward.12} parent=35 // pred_region
        %p293 = scmp.lt.s32.totalorder %s22, 1
        %s294 = scalar_select %p293, %s22, 1
        %p295 = scmp.lt.s32.totalorder %s23, 1
        %s296 = scalar_select %p295, %s23, 1
        %s297 = smul.addr %s296, 2
        %s298 = smul.addr %s294, 4
        %s299 = sadd.s32 %s297, %s298
        %s300 = smul.addr %s299, 4
        %s301 = scalar_lea.vmem %s1, %s300
      $region44: #{complete_dt_forward.12} parent=35 // pred_fallthru
        _
    $region36: #{complete_dt_forward.12} parent=5 // pred_fallthru
      _
    %p302 = scmp.le.s32.totalorder 1, %s15
    %p303 = scmp.lt.s32.totalorder %s15, 5
    %p304 = pnand %p302, %p303
    %p305 = pneg %p304
    // Predicated region
    $region45: #{complete_dt_forward.12} parent=5 // pred_check
      _
    $region46: #{complete_dt_forward.12} parent=5 // pred_check_branch
      %307 = sbr.rel (%p304) target = $region48
    $region47: #{complete_dt_forward.12} parent=5 // pred_region
      %s308 = ssub.s32 %s15, 1
      %p309 = scmp.lt.s32.totalorder %s24, 1
      %s310 = scalar_select %p309, %s24, 1
      %p311 = scmp.lt.s32.totalorder %s25, 1
      %s312 = scalar_select %p311, %s25, 1
      %s313 = smul.addr %s312, 2
      %s314 = smul.addr %s310, 4
      %s315 = sadd.s32 %s313, %s314
      %s316 = smul.addr %s315, 4
      %s317 = scalar_lea.vmem %s0, %s316
      %p318 = pneg %p55
      %p319 = pneg %p52
      %p320 = scmp.lt.s32.totalorder %s24, 1
      %s321 = scalar_select %p320, %s24, 1
      %p322 = scmp.lt.s32.totalorder %s25, 1
      %s323 = scalar_select %p322, %s25, 1
      %s324 = smul.addr %s323, 2
      %s325 = smul.addr %s321, 4
      %s326 = sadd.s32 %s324, %s325
      %s327 = smul.addr %s326, 4
      %s328 = scalar_lea.vmem %s1, %s327
      %p329 = pneg %p83
      %p330 = pneg %p80
      %p331 = pneg %p104
      %p332 = pneg %p101
      %p333 = pneg %p125
      %p334 = pneg %p122
      %p335 = pneg %p146
      %p336 = pneg %p143
      %p337 = pneg %p167
      %p338 = pneg %p164
      %p339 = pneg %p188
      %p340 = pneg %p185
      %p341 = pneg %p216
      %p342 = pneg %p213
      %s343 = smul.u32 2, %s25
      %p344 = scmp.lt.s32.totalorder %s24, 1
      %s345 = scalar_select %p344, %s24, 1
      %p346 = scmp.lt.s32.totalorder %s343, 3
      %s347 = scalar_select %p346, %s343, 3
      %s348 = smul.addr %s347, 2
      %s349 = smul.addr %s345, 8
      %s350 = sadd.s32 %s348, %s349
      %s351 = smul.addr %s350, 4
      %s352 = scalar_lea.vmem %s7, %s351
      %p353 = pneg %p244
      %p354 = pneg %p241
      %s355 = smul.u32 2, %s25
      %p356 = scmp.lt.s32.totalorder %s24, 1
      %s357 = scalar_select %p356, %s24, 1
      %p358 = scmp.lt.s32.totalorder %s355, 3
      %s359 = scalar_select %p358, %s355, 3
      %s360 = smul.addr %s359, 2
      %s361 = smul.addr %s357, 8
      %s362 = sadd.s32 %s360, %s361
      %s363 = smul.addr %s362, 8
      %s364 = scalar_lea.vmem %s8, %s363
      %p365 = scmp.lt.s32.totalorder %s24, 1
      %s366 = scalar_select %p365, %s24, 1
      %p367 = scmp.lt.s32.totalorder %s25, 1
      %s368 = scalar_select %p367, %s25, 1
      %s369 = smul.addr %s368, 2
      %s370 = smul.addr %s366, 4
      %s371 = sadd.s32 %s369, %s370
      %s372 = smul.addr %s371, 4
      %s373 = scalar_lea.vmem %s0, %s372
      %p374 = scmp.lt.s32.totalorder %s24, 1
      %s375 = scalar_select %p374, %s24, 1
      %p376 = scmp.lt.s32.totalorder %s25, 1
      %s377 = scalar_select %p376, %s25, 1
      %s378 = smul.addr %s377, 2
      %s379 = smul.addr %s375, 4
      %s380 = sadd.s32 %s378, %s379
      %s381 = smul.addr %s380, 4
      %s382 = scalar_lea.vmem %s1, %s381
      %s383 = smul.u32 2, %s25
      %p384 = scmp.lt.s32.totalorder %s24, 1
      %s385 = scalar_select %p384, %s24, 1
      %p386 = scmp.lt.s32.totalorder %s383, 3
      %s387 = scalar_select %p386, %s383, 3
      %s388 = smul.addr %s387, 2
      %s389 = smul.addr %s385, 8
      %s390 = sadd.s32 %s388, %s389
      %s391 = smul.addr %s390, 4
      %s392 = scalar_lea.vmem %s7, %s391
      %s393 = smul.u32 2, %s25
      %s394 = smul.u32 2, %s25
      %p395 = scmp.lt.s32.totalorder %s24, 1
      %s396 = scalar_select %p395, %s24, 1
      %p397 = scmp.lt.s32.totalorder %s394, 3
      %s398 = scalar_select %p397, %s394, 3
      %s399 = smul.addr %s398, 2
      %s400 = smul.addr %s396, 8
      %s401 = sadd.s32 %s399, %s400
      %s402 = smul.addr %s401, 8
      %s403 = scalar_lea.vmem %s8, %s402
      %s404 = smul.u32 2, %s25
      %v405 = vld [vmem:[%s373] sm:$0xff]
      %v406 = vld [vmem:[%s2] sm:$0xff]
      %v407 = vld [vmem:[%s2 + $0x8] sm:$0xff]
      %v408 = vld [vmem:[%s2 + $0x10] sm:$0xff]
      %v409 = vld [vmem:[%s2 + $0x18] sm:$0xff]
      %v410 = vld [vmem:[%s2 + $0x20] sm:$0xff]
      %v411 = vld [vmem:[%s2 + $0x28] sm:$0xff]
      %v412 = vld [vmem:[%s2 + $0x30] sm:$0xff]
      %v413 = vld [vmem:[%s2 + $0x38] sm:$0xff]
      %v414 = vld [vmem:[%s2 + $0x40] sm:$0xff]
      %v415 = vld [vmem:[%s2 + $0x48] sm:$0xff]
      %v416 = vld [vmem:[%s2 + $0x50] sm:$0xff]
      %v417 = vld [vmem:[%s2 + $0x58] sm:$0xff]
      %v418 = vld [vmem:[%s2 + $0x60] sm:$0xff]
      %v419 = vld [vmem:[%s2 + $0x68] sm:$0xff]
      %v420 = vld [vmem:[%s2 + $0x70] sm:$0xff]
      %v421 = vld [vmem:[%s2 + $0x78] sm:$0xff]
      %v422 = vld [vmem:[%s2 + $0x80] sm:$0xff]
      %v423 = vld [vmem:[%s2 + $0x88] sm:$0xff]
      %v424 = vld [vmem:[%s2 + $0x90] sm:$0xff]
      %v425 = vld [vmem:[%s2 + $0x98] sm:$0xff]
      %v426 = vld [vmem:[%s2 + $0xa0] sm:$0xff]
      %v427 = vld [vmem:[%s2 + $0xa8] sm:$0xff]
      %v428 = vld [vmem:[%s2 + $0xb0] sm:$0xff]
      %v429 = vld [vmem:[%s2 + $0xb8] sm:$0xff]
      %v430 = vld [vmem:[%s2 + $0xc0] sm:$0xff]
      %v431 = vld [vmem:[%s2 + $0xc8] sm:$0xff]
      %v432 = vld [vmem:[%s2 + $0xd0] sm:$0xff]
      %v433 = vld [vmem:[%s2 + $0xd8] sm:$0xff]
      %v434 = vld [vmem:[%s2 + $0xe0] sm:$0xff]
      %v435 = vld [vmem:[%s2 + $0xe8] sm:$0xff]
      %v436 = vld [vmem:[%s2 + $0xf0] sm:$0xff]
      %v437 = vld [vmem:[%s2 + $0xf8] sm:$0xff]
      %v438 = vld [vmem:[%s3] sm:$0x3]
      %v440 = vlaneseq
      %v441 = vshrl.u32 %v440, 7
      %v442 = vsub.s32 0, %v441
      %v443 = vrot.slane %v438, %v442
      %v444 = vlaneseq
      %v445 = vshrl.u32 %v444, 7
      %v446 = vsub.s32 1, %v445
      %v447 = vrot.slane %v438, %v446
      %v451 = vunpack.c.l.b16 %v405
      %v452 = vunpack.c.h.b16 %v405
      %v453 = vpack.c.b16 %v451, %v451
      %v454 = vpack.c.b16 %v452, %v452
      %v489 = vunpack.c.l.b16 %v406
      %v490 = vunpack.c.h.b16 %v406
      %v491 = vunpack.c.l.b16 %v407
      %v492 = vunpack.c.h.b16 %v407
      %v493 = vunpack.c.l.b16 %v408
      %v494 = vunpack.c.h.b16 %v408
      %v495 = vunpack.c.l.b16 %v409
      %v496 = vunpack.c.h.b16 %v409
      %v497 = vunpack.c.l.b16 %v410
      %v498 = vunpack.c.h.b16 %v410
      %v499 = vunpack.c.l.b16 %v411
      %v500 = vunpack.c.h.b16 %v411
      %v501 = vunpack.c.l.b16 %v412
      %v502 = vunpack.c.h.b16 %v412
      %v503 = vunpack.c.l.b16 %v413
      %v504 = vunpack.c.h.b16 %v413
      %v505 = vunpack.c.l.b16 %v414
      %v506 = vunpack.c.h.b16 %v414
      %v507 = vunpack.c.l.b16 %v415
      %v508 = vunpack.c.h.b16 %v415
      %v509 = vunpack.c.l.b16 %v416
      %v510 = vunpack.c.h.b16 %v416
      %v511 = vunpack.c.l.b16 %v417
      %v512 = vunpack.c.h.b16 %v417
      %v513 = vunpack.c.l.b16 %v418
      %v514 = vunpack.c.h.b16 %v418
      %v515 = vunpack.c.l.b16 %v419
      %v516 = vunpack.c.h.b16 %v419
      %v517 = vunpack.c.l.b16 %v420
      %v518 = vunpack.c.h.b16 %v420
      %v519 = vunpack.c.l.b16 %v421
      %v520 = vunpack.c.h.b16 %v421
      %v521 = vunpack.c.l.b16 %v422
      %v522 = vunpack.c.h.b16 %v422
      %v523 = vunpack.c.l.b16 %v423
      %v524 = vunpack.c.h.b16 %v423
      %v525 = vunpack.c.l.b16 %v424
      %v526 = vunpack.c.h.b16 %v424
      %v527 = vunpack.c.l.b16 %v425
      %v528 = vunpack.c.h.b16 %v425
      %v529 = vunpack.c.l.b16 %v426
      %v530 = vunpack.c.h.b16 %v426
      %v531 = vunpack.c.l.b16 %v427
      %v532 = vunpack.c.h.b16 %v427
      %v533 = vunpack.c.l.b16 %v428
      %v534 = vunpack.c.h.b16 %v428
      %v535 = vunpack.c.l.b16 %v429
      %v536 = vunpack.c.h.b16 %v429
      %v537 = vunpack.c.l.b16 %v430
      %v538 = vunpack.c.h.b16 %v430
      %v539 = vunpack.c.l.b16 %v431
      %v540 = vunpack.c.h.b16 %v431
      %v541 = vunpack.c.l.b16 %v432
      %v542 = vunpack.c.h.b16 %v432
      %v543 = vunpack.c.l.b16 %v433
      %v544 = vunpack.c.h.b16 %v433
      %v545 = vunpack.c.l.b16 %v434
      %v546 = vunpack.c.h.b16 %v434
      %v547 = vunpack.c.l.b16 %v435
      %v548 = vunpack.c.h.b16 %v435
      %v549 = vunpack.c.l.b16 %v436
      %v550 = vunpack.c.h.b16 %v436
      %v551 = vunpack.c.l.b16 %v437
      %v552 = vunpack.c.h.b16 %v437
      %v553 = vpack.c.b16 %v491, %v489
      %v554 = vpack.c.b16 %v492, %v490
      %v555 = vpack.c.b16 %v495, %v493
      %v556 = vpack.c.b16 %v496, %v494
      %v557 = vpack.c.b16 %v499, %v497
      %v558 = vpack.c.b16 %v500, %v498
      %v559 = vpack.c.b16 %v503, %v501
      %v560 = vpack.c.b16 %v504, %v502
      %v561 = vpack.c.b16 %v507, %v505
      %v562 = vpack.c.b16 %v508, %v506
      %v563 = vpack.c.b16 %v511, %v509
      %v564 = vpack.c.b16 %v512, %v510
      %v565 = vpack.c.b16 %v515, %v513
      %v566 = vpack.c.b16 %v516, %v514
      %v567 = vpack.c.b16 %v519, %v517
      %v568 = vpack.c.b16 %v520, %v518
      %v569 = vpack.c.b16 %v523, %v521
      %v570 = vpack.c.b16 %v524, %v522
      %v571 = vpack.c.b16 %v527, %v525
      %v572 = vpack.c.b16 %v528, %v526
      %v573 = vpack.c.b16 %v531, %v529
      %v574 = vpack.c.b16 %v532, %v530
      %v575 = vpack.c.b16 %v535, %v533
      %v576 = vpack.c.b16 %v536, %v534
      %v577 = vpack.c.b16 %v539, %v537
      %v578 = vpack.c.b16 %v540, %v538
      %v579 = vpack.c.b16 %v543, %v541
      %v580 = vpack.c.b16 %v544, %v542
      %v581 = vpack.c.b16 %v547, %v545
      %v582 = vpack.c.b16 %v548, %v546
      %v583 = vpack.c.b16 %v551, %v549
      %v584 = vpack.c.b16 %v552, %v550
      %617 = vmatprep.subr.bf16.mxu0 %v568
      %618 = vmatpush1.bf16.msra.mxu0 %v567
      %619 = vmatprep.subr.bf16.mxu0 %v566
      %620 = vmatpush1.bf16.msra.mxu0 %v565
      %621 = vmatprep.subr.bf16.mxu0 %v564
      %622 = vmatpush1.bf16.msra.mxu0 %v563
      %623 = vmatprep.subr.bf16.mxu0 %v562
      %624 = vmatpush1.bf16.msra.mxu0 %v561
      %625 = vmatprep.subr.bf16.mxu0 %v560
      %626 = vmatpush1.bf16.msra.mxu0 %v559
      %627 = vmatprep.subr.bf16.mxu0 %v558
      %628 = vmatpush1.bf16.msra.mxu0 %v557
      %629 = vmatprep.subr.bf16.mxu0 %v556
      %630 = vmatpush1.bf16.msra.mxu0 %v555
      %631 = vmatprep.subr.bf16.mxu0 %v554
      %632 = vmatpush1.bf16.msra.mxu0 %v553
      %633 = vmatprep.subr.bf16.mxu0 %v584
      %634 = vmatpush2.bf16.msra.mxu0 %v583
      %635 = vmatprep.subr.bf16.mxu0 %v582
      %636 = vmatpush2.bf16.msra.mxu0 %v581
      %637 = vmatprep.subr.bf16.mxu0 %v580
      %638 = vmatpush2.bf16.msra.mxu0 %v579
      %639 = vmatprep.subr.bf16.mxu0 %v578
      %640 = vmatpush2.bf16.msra.mxu0 %v577
      %641 = vmatprep.subr.bf16.mxu0 %v576
      %642 = vmatpush2.bf16.msra.mxu0 %v575
      %643 = vmatprep.subr.bf16.mxu0 %v574
      %644 = vmatpush2.bf16.msra.mxu0 %v573
      %645 = vmatprep.subr.bf16.mxu0 %v572
      %646 = vmatpush2.bf16.msra.mxu0 %v571
      %647 = vmatprep.subr.bf16.mxu0 %v570
      %648 = vmatpush2.bf16.msra.mxu0 %v569
      %649 = vmatprep.mubr.bf16.mxu0 %v454
      %650 = vmatmul.mubr.bf16.gmra.mxu0 %v453
      %v651 = vpop.f32.mrf.mxu0
      %v652 = vadd.f32 %v443, %v651
      %v653 = vpop.f32.mrf.mxu0
      %v654 = vadd.f32 %v447, %v653
      %v655 = vpop.f32.mrf.mxu0
      %v656 = vpop.f32.mrf.mxu0
      %657 = vdwg.mxu0
      %v658 = vld [vmem:[%s382] sm:$0xff]
      %v659 = vunpack.c.l.bf16 %v658
      %v660 = vunpack.c.h.bf16 %v658
      %v661 = vadd.f32 %v652, %v659
      %v662 = vadd.f32 %v654, %v660
      %v663 = vmul.f32 %v661, 0.5
      %v664 = vmul.f32 %v662, 0.5
      %v665 = vmul.f32 %v661, 0.044715
      %v666 = vmul.f32 %v662, 0.044715
      %v667 = vmul.f32 %v665, %v661
      %v668 = vmul.f32 %v666, %v662
      %v669 = vmul.f32 %v667, %v661
      %v670 = vmul.f32 %v668, %v662
      %v671 = vadd.f32 %v661, %v669
      %v672 = vadd.f32 %v662, %v670
      %v673 = vmul.f32 %v671, 0.7978846
      %v674 = vmul.f32 %v672, 0.7978846
      %v675 = vtanh.pop %v673
      %v676 = vtanh.pop %v674
      %v677 = vadd.f32 %v675, 1.0
      %v678 = vadd.f32 %v676, 1.0
      %v679 = vmul.f32 %v663, %v677
      %v680 = vmul.f32 %v664, %v678
      %v681 = vld [vmem:[%s4] sm:$0xf]
      %v684 = vcombine.low %v679, %v680
      %v685 = vcombine.high %v679, %v680
      %v687 = vunpack.c.l.s4 1966171168
      %v688 = vunpack.c.0.s8 %v687
      %v689 = vlaneseq
      %v690 = vshrl.u32 %v689, 7
      %v691 = vsub.s32 %v688, %v690
      %v692 = vrot.slane %v684, %v691
      %v694 = vunpack.c.l.s4 1966171168
      %v695 = vunpack.c.0.s8 %v694
      %v696 = vlaneseq
      %v697 = vshrl.u32 %v696, 7
      %v698 = vsub.s32 %v695, %v697
      %v699 = vrot.slane %v685, %v698
      %v700 = vcombine.high %v692, %v692
      %v701 = vcombine.high %v699, %v699
      %v703 = vunpack.c.l.s4 1966171168
      %v704 = vunpack.c.0.s8 %v703
      %v705 = vlaneseq
      %v706 = vshrl.u32 %v705, 7
      %v707 = vsub.s32 %v704, %v706
      %v708 = vrot.slane %v692, %v707
      %v710 = vunpack.c.l.s4 1966171168
      %v711 = vunpack.c.0.s8 %v710
      %v712 = vlaneseq
      %v713 = vshrl.u32 %v712, 7
      %v714 = vsub.s32 %v711, %v713
      %v715 = vrot.slane %v699, %v714
      %v717 = vunpack.c.l.s4 1966171168
      %v718 = vunpack.c.0.s8 %v717
      %v719 = vlaneseq
      %v720 = vshrl.u32 %v719, 7
      %v721 = vsub.s32 %v718, %v720
      %v722 = vrot.slane %v700, %v721
      %v724 = vunpack.c.l.s4 1966171168
      %v725 = vunpack.c.0.s8 %v724
      %v726 = vlaneseq
      %v727 = vshrl.u32 %v726, 7
      %v728 = vsub.s32 %v725, %v727
      %v729 = vrot.slane %v701, %v728
      %v730 = vcombine.high %v708, %v708
      %v731 = vcombine.high %v715, %v715
      %v732 = vcombine.high %v722, %v722
      %v733 = vcombine.high %v729, %v729
      %v734 = vlaneseq
      %v735 = vshrl.u32 %v734, 7
      %v736 = vsub.s32 0, %v735
      %v737 = vrot.slane %v708, %v736
      %v738 = vlaneseq
      %v739 = vshrl.u32 %v738, 7
      %v740 = vsub.s32 1, %v739
      %v741 = vrot.slane %v708, %v740
      %v742 = vlaneseq
      %v743 = vshrl.u32 %v742, 7
      %v744 = vsub.s32 0, %v743
      %v745 = vrot.slane %v722, %v744
      %v746 = vlaneseq
      %v747 = vshrl.u32 %v746, 7
      %v748 = vsub.s32 1, %v747
      %v749 = vrot.slane %v722, %v748
      %v750 = vlaneseq
      %v751 = vshrl.u32 %v750, 7
      %v752 = vsub.s32 0, %v751
      %v753 = vrot.slane %v730, %v752
      %v754 = vlaneseq
      %v755 = vshrl.u32 %v754, 7
      %v756 = vsub.s32 1, %v755
      %v757 = vrot.slane %v730, %v756
      %v758 = vlaneseq
      %v759 = vshrl.u32 %v758, 7
      %v760 = vsub.s32 0, %v759
      %v761 = vrot.slane %v732, %v760
      %v762 = vlaneseq
      %v763 = vshrl.u32 %v762, 7
      %v764 = vsub.s32 1, %v763
      %v765 = vrot.slane %v732, %v764
      %v766 = vlaneseq
      %v767 = vshrl.u32 %v766, 7
      %v768 = vsub.s32 0, %v767
      %v769 = vrot.slane %v715, %v768
      %v770 = vlaneseq
      %v771 = vshrl.u32 %v770, 7
      %v772 = vsub.s32 1, %v771
      %v773 = vrot.slane %v715, %v772
      %v774 = vlaneseq
      %v775 = vshrl.u32 %v774, 7
      %v776 = vsub.s32 0, %v775
      %v777 = vrot.slane %v729, %v776
      %v778 = vlaneseq
      %v779 = vshrl.u32 %v778, 7
      %v780 = vsub.s32 1, %v779
      %v781 = vrot.slane %v729, %v780
      %v782 = vlaneseq
      %v783 = vshrl.u32 %v782, 7
      %v784 = vsub.s32 0, %v783
      %v785 = vrot.slane %v731, %v784
      %v786 = vlaneseq
      %v787 = vshrl.u32 %v786, 7
      %v788 = vsub.s32 1, %v787
      %v789 = vrot.slane %v731, %v788
      %v790 = vlaneseq
      %v791 = vshrl.u32 %v790, 7
      %v792 = vsub.s32 0, %v791
      %v793 = vrot.slane %v733, %v792
      %v794 = vlaneseq
      %v795 = vshrl.u32 %v794, 7
      %v796 = vsub.s32 1, %v795
      %v797 = vrot.slane %v733, %v796
      %v816 = vunpack.c.l.s4 1983009808
      %v817 = vunpack.c.0.s8 %v816
      %v818 = vlaneseq
      %v819 = vshrl.u32 %v818, 7
      %v820 = vsub.s32 %v817, %v819
      %v821 = vrot.slane %v681, %v820
      %v822 = vcombine.high %v821, %v821
      %v825 = vadd.f32 %v737, %v821
      %v826 = vadd.f32 %v741, %v822
      %v827 = vadd.f32 %v745, %v821
      %v828 = vadd.f32 %v749, %v822
      %v829 = vadd.f32 %v753, %v821
      %v830 = vadd.f32 %v757, %v822
      %v831 = vadd.f32 %v761, %v821
      %v832 = vadd.f32 %v765, %v822
      %v833 = vadd.f32 %v769, %v821
      %v834 = vadd.f32 %v773, %v822
      %v835 = vadd.f32 %v777, %v821
      %v836 = vadd.f32 %v781, %v822
      %v837 = vadd.f32 %v785, %v821
      %v838 = vadd.f32 %v789, %v822
      %v839 = vadd.f32 %v793, %v821
      %v840 = vadd.f32 %v797, %v822
      %v857 = vcombine.low %v825, %v826
      %v859 = vunpack.c.l.s4 1983009808
      %v860 = vunpack.c.0.s8 %v859
      %v861 = vlaneseq
      %v862 = vshrl.u32 %v861, 7
      %v863 = vsub.s32 %v860, %v862
      %v864 = vrot.slane %v857, %v863
      %v865 = vcombine.low %v827, %v828
      %v867 = vunpack.c.l.s4 1983009808
      %v868 = vunpack.c.0.s8 %v867
      %v869 = vlaneseq
      %v870 = vshrl.u32 %v869, 7
      %v871 = vsub.s32 %v868, %v870
      %v872 = vrot.slane %v865, %v871
      %v873 = vcombine.low %v829, %v830
      %v875 = vunpack.c.l.s4 1983009808
      %v876 = vunpack.c.0.s8 %v875
      %v877 = vlaneseq
      %v878 = vshrl.u32 %v877, 7
      %v879 = vsub.s32 %v876, %v878
      %v880 = vrot.slane %v873, %v879
      %v881 = vcombine.low %v831, %v832
      %v883 = vunpack.c.l.s4 1983009808
      %v884 = vunpack.c.0.s8 %v883
      %v885 = vlaneseq
      %v886 = vshrl.u32 %v885, 7
      %v887 = vsub.s32 %v884, %v886
      %v888 = vrot.slane %v881, %v887
      %v889 = vcombine.low %v833, %v834
      %v891 = vunpack.c.l.s4 1983009808
      %v892 = vunpack.c.0.s8 %v891
      %v893 = vlaneseq
      %v894 = vshrl.u32 %v893, 7
      %v895 = vsub.s32 %v892, %v894
      %v896 = vrot.slane %v889, %v895
      %v897 = vcombine.low %v835, %v836
      %v899 = vunpack.c.l.s4 1983009808
      %v900 = vunpack.c.0.s8 %v899
      %v901 = vlaneseq
      %v902 = vshrl.u32 %v901, 7
      %v903 = vsub.s32 %v900, %v902
      %v904 = vrot.slane %v897, %v903
      %v905 = vcombine.low %v837, %v838
      %v907 = vunpack.c.l.s4 1983009808
      %v908 = vunpack.c.0.s8 %v907
      %v909 = vlaneseq
      %v910 = vshrl.u32 %v909, 7
      %v911 = vsub.s32 %v908, %v910
      %v912 = vrot.slane %v905, %v911
      %v913 = vcombine.low %v839, %v840
      %v915 = vunpack.c.l.s4 1983009808
      %v916 = vunpack.c.0.s8 %v915
      %v917 = vlaneseq
      %v918 = vshrl.u32 %v917, 7
      %v919 = vsub.s32 %v916, %v918
      %v920 = vrot.slane %v913, %v919
      %v921 = vcombine.low %v864, %v872
      %v922 = vcombine.low %v880, %v888
      %v924 = vunpack.c.l.s4 1983009808
      %v925 = vunpack.c.0.s8 %v924
      %v926 = vlaneseq
      %v927 = vshrl.u32 %v926, 7
      %v928 = vsub.s32 %v925, %v927
      %v929 = vrot.slane %v921, %v928
      %v931 = vunpack.c.l.s4 1983009808
      %v932 = vunpack.c.0.s8 %v931
      %v933 = vlaneseq
      %v934 = vshrl.u32 %v933, 7
      %v935 = vsub.s32 %v932, %v934
      %v936 = vrot.slane %v922, %v935
      %v937 = vcombine.low %v929, %v936
      %v938 = vcombine.high %v929, %v936
      %v939 = vcombine.low %v896, %v904
      %v940 = vcombine.low %v912, %v920
      %v942 = vunpack.c.l.s4 1983009808
      %v943 = vunpack.c.0.s8 %v942
      %v944 = vlaneseq
      %v945 = vshrl.u32 %v944, 7
      %v946 = vsub.s32 %v943, %v945
      %v947 = vrot.slane %v939, %v946
      %v949 = vunpack.c.l.s4 1983009808
      %v950 = vunpack.c.0.s8 %v949
      %v951 = vlaneseq
      %v952 = vshrl.u32 %v951, 7
      %v953 = vsub.s32 %v950, %v952
      %v954 = vrot.slane %v940, %v953
      %v955 = vcombine.low %v947, %v954
      %v956 = vcombine.high %v947, %v954
      %v961 = vpack.c.bf16 %v955, %v937
      %v962 = vpack.c.bf16 %v956, %v938
      %v965 = vunpack.c.l.b16 %v961
      %v966 = vunpack.c.l.b16 %v962
      %v967 = vunpack.c.h.b16 %v961
      %v968 = vunpack.c.h.b16 %v962
      %v969 = vpack.c.b16 %v966, %v965
      %v970 = vpack.c.b16 %v968, %v967
      %973 = vst [vmem:[%s392] sm:$0xff] %v969
      %974 = vst [vmem:[%s392 + $0x8] sm:$0xff] %v970
      %v975 = vpack.c.bf16 %v679, %v679
      %v976 = vpack.c.bf16 %v680, %v680
      %v977 = vld [vmem:[%s6] sm:$0xff]
      %v978 = vld [vmem:[%s6 + $0x8] sm:$0xff]
      %v979 = vld [vmem:[%s6 + $0x10] sm:$0xff]
      %v980 = vld [vmem:[%s6 + $0x18] sm:$0xff]
      %v981 = vld [vmem:[%s6 + $0x20] sm:$0xff]
      %v982 = vld [vmem:[%s6 + $0x28] sm:$0xff]
      %v983 = vld [vmem:[%s6 + $0x30] sm:$0xff]
      %v984 = vld [vmem:[%s6 + $0x38] sm:$0xff]
      %v985 = vld [vmem:[%s6 + $0x40] sm:$0xff]
      %v986 = vld [vmem:[%s6 + $0x48] sm:$0xff]
      %v987 = vld [vmem:[%s6 + $0x50] sm:$0xff]
      %v988 = vld [vmem:[%s6 + $0x58] sm:$0xff]
      %v989 = vld [vmem:[%s6 + $0x60] sm:$0xff]
      %v990 = vld [vmem:[%s6 + $0x68] sm:$0xff]
      %v991 = vld [vmem:[%s6 + $0x70] sm:$0xff]
      %v992 = vld [vmem:[%s6 + $0x78] sm:$0xff]
      %v993 = vld [vmem:[%s6 + $0x80] sm:$0xff]
      %v994 = vld [vmem:[%s6 + $0x88] sm:$0xff]
      %v995 = vld [vmem:[%s6 + $0x90] sm:$0xff]
      %v996 = vld [vmem:[%s6 + $0x98] sm:$0xff]
      %v997 = vld [vmem:[%s6 + $0xa0] sm:$0xff]
      %v998 = vld [vmem:[%s6 + $0xa8] sm:$0xff]
      %v999 = vld [vmem:[%s6 + $0xb0] sm:$0xff]
      %v1000 = vld [vmem:[%s6 + $0xb8] sm:$0xff]
      %v1001 = vld [vmem:[%s6 + $0xc0] sm:$0xff]
      %v1002 = vld [vmem:[%s6 + $0xc8] sm:$0xff]
      %v1003 = vld [vmem:[%s6 + $0xd0] sm:$0xff]
      %v1004 = vld [vmem:[%s6 + $0xd8] sm:$0xff]
      %v1005 = vld [vmem:[%s6 + $0xe0] sm:$0xff]
      %v1006 = vld [vmem:[%s6 + $0xe8] sm:$0xff]
      %v1007 = vld [vmem:[%s6 + $0xf0] sm:$0xff]
      %v1008 = vld [vmem:[%s6 + $0xf8] sm:$0xff]
      %v1041 = vunpack.c.l.b16 %v977
      %v1042 = vunpack.c.h.b16 %v977
      %v1043 = vunpack.c.l.b16 %v978
      %v1044 = vunpack.c.h.b16 %v978
      %v1045 = vunpack.c.l.b16 %v979
      %v1046 = vunpack.c.h.b16 %v979
      %v1047 = vunpack.c.l.b16 %v980
      %v1048 = vunpack.c.h.b16 %v980
      %v1049 = vunpack.c.l.b16 %v981
      %v1050 = vunpack.c.h.b16 %v981
      %v1051 = vunpack.c.l.b16 %v982
      %v1052 = vunpack.c.h.b16 %v982
      %v1053 = vunpack.c.l.b16 %v983
      %v1054 = vunpack.c.h.b16 %v983
      %v1055 = vunpack.c.l.b16 %v984
      %v1056 = vunpack.c.h.b16 %v984
      %v1057 = vunpack.c.l.b16 %v985
      %v1058 = vunpack.c.h.b16 %v985
      %v1059 = vunpack.c.l.b16 %v986
      %v1060 = vunpack.c.h.b16 %v986
      %v1061 = vunpack.c.l.b16 %v987
      %v1062 = vunpack.c.h.b16 %v987
      %v1063 = vunpack.c.l.b16 %v988
      %v1064 = vunpack.c.h.b16 %v988
      %v1065 = vunpack.c.l.b16 %v989
      %v1066 = vunpack.c.h.b16 %v989
      %v1067 = vunpack.c.l.b16 %v990
      %v1068 = vunpack.c.h.b16 %v990
      %v1069 = vunpack.c.l.b16 %v991
      %v1070 = vunpack.c.h.b16 %v991
      %v1071 = vunpack.c.l.b16 %v992
      %v1072 = vunpack.c.h.b16 %v992
      %v1073 = vunpack.c.l.b16 %v993
      %v1074 = vunpack.c.h.b16 %v993
      %v1075 = vunpack.c.l.b16 %v994
      %v1076 = vunpack.c.h.b16 %v994
      %v1077 = vunpack.c.l.b16 %v995
      %v1078 = vunpack.c.h.b16 %v995
      %v1079 = vunpack.c.l.b16 %v996
      %v1080 = vunpack.c.h.b16 %v996
      %v1081 = vunpack.c.l.b16 %v997
      %v1082 = vunpack.c.h.b16 %v997
      %v1083 = vunpack.c.l.b16 %v998
      %v1084 = vunpack.c.h.b16 %v998
      %v1085 = vunpack.c.l.b16 %v999
      %v1086 = vunpack.c.h.b16 %v999
      %v1087 = vunpack.c.l.b16 %v1000
      %v1088 = vunpack.c.h.b16 %v1000
      %v1089 = vunpack.c.l.b16 %v1001
      %v1090 = vunpack.c.h.b16 %v1001
      %v1091 = vunpack.c.l.b16 %v1002
      %v1092 = vunpack.c.h.b16 %v1002
      %v1093 = vunpack.c.l.b16 %v1003
      %v1094 = vunpack.c.h.b16 %v1003
      %v1095 = vunpack.c.l.b16 %v1004
      %v1096 = vunpack.c.h.b16 %v1004
      %v1097 = vunpack.c.l.b16 %v1005
      %v1098 = vunpack.c.h.b16 %v1005
      %v1099 = vunpack.c.l.b16 %v1006
      %v1100 = vunpack.c.h.b16 %v1006
      %v1101 = vunpack.c.l.b16 %v1007
      %v1102 = vunpack.c.h.b16 %v1007
      %v1103 = vunpack.c.l.b16 %v1008
      %v1104 = vunpack.c.h.b16 %v1008
      %v1105 = vpack.c.b16 %v1043, %v1041
      %v1106 = vpack.c.b16 %v1044, %v1042
      %v1107 = vpack.c.b16 %v1047, %v1045
      %v1108 = vpack.c.b16 %v1048, %v1046
      %v1109 = vpack.c.b16 %v1051, %v1049
      %v1110 = vpack.c.b16 %v1052, %v1050
      %v1111 = vpack.c.b16 %v1055, %v1053
      %v1112 = vpack.c.b16 %v1056, %v1054
      %v1113 = vpack.c.b16 %v1059, %v1057
      %v1114 = vpack.c.b16 %v1060, %v1058
      %v1115 = vpack.c.b16 %v1063, %v1061
      %v1116 = vpack.c.b16 %v1064, %v1062
      %v1117 = vpack.c.b16 %v1067, %v1065
      %v1118 = vpack.c.b16 %v1068, %v1066
      %v1119 = vpack.c.b16 %v1071, %v1069
      %v1120 = vpack.c.b16 %v1072, %v1070
      %v1121 = vpack.c.b16 %v1075, %v1073
      %v1122 = vpack.c.b16 %v1076, %v1074
      %v1123 = vpack.c.b16 %v1079, %v1077
      %v1124 = vpack.c.b16 %v1080, %v1078
      %v1125 = vpack.c.b16 %v1083, %v1081
      %v1126 = vpack.c.b16 %v1084, %v1082
      %v1127 = vpack.c.b16 %v1087, %v1085
      %v1128 = vpack.c.b16 %v1088, %v1086
      %v1129 = vpack.c.b16 %v1091, %v1089
      %v1130 = vpack.c.b16 %v1092, %v1090
      %v1131 = vpack.c.b16 %v1095, %v1093
      %v1132 = vpack.c.b16 %v1096, %v1094
      %v1133 = vpack.c.b16 %v1099, %v1097
      %v1134 = vpack.c.b16 %v1100, %v1098
      %v1135 = vpack.c.b16 %v1103, %v1101
      %v1136 = vpack.c.b16 %v1104, %v1102
      %1169 = vmatprep.subr.bf16.mxu0 %v1120
      %1170 = vmatpush1.bf16.msra.mxu0 %v1119
      %1171 = vmatprep.subr.bf16.mxu0 %v1118
      %1172 = vmatpush1.bf16.msra.mxu0 %v1117
      %1173 = vmatprep.subr.bf16.mxu0 %v1116
      %1174 = vmatpush1.bf16.msra.mxu0 %v1115
      %1175 = vmatprep.subr.bf16.mxu0 %v1114
      %1176 = vmatpush1.bf16.msra.mxu0 %v1113
      %1177 = vmatprep.subr.bf16.mxu0 %v1112
      %1178 = vmatpush1.bf16.msra.mxu0 %v1111
      %1179 = vmatprep.subr.bf16.mxu0 %v1110
      %1180 = vmatpush1.bf16.msra.mxu0 %v1109
      %1181 = vmatprep.subr.bf16.mxu0 %v1108
      %1182 = vmatpush1.bf16.msra.mxu0 %v1107
      %1183 = vmatprep.subr.bf16.mxu0 %v1106
      %1184 = vmatpush1.bf16.msra.mxu0 %v1105
      %1185 = vmatprep.subr.bf16.mxu0 %v1136
      %1186 = vmatpush2.bf16.msra.mxu0 %v1135
      %1187 = vmatprep.subr.bf16.mxu0 %v1134
      %1188 = vmatpush2.bf16.msra.mxu0 %v1133
      %1189 = vmatprep.subr.bf16.mxu0 %v1132
      %1190 = vmatpush2.bf16.msra.mxu0 %v1131
      %1191 = vmatprep.subr.bf16.mxu0 %v1130
      %1192 = vmatpush2.bf16.msra.mxu0 %v1129
      %1193 = vmatprep.subr.bf16.mxu0 %v1128
      %1194 = vmatpush2.bf16.msra.mxu0 %v1127
      %1195 = vmatprep.subr.bf16.mxu0 %v1126
      %1196 = vmatpush2.bf16.msra.mxu0 %v1125
      %1197 = vmatprep.subr.bf16.mxu0 %v1124
      %1198 = vmatpush2.bf16.msra.mxu0 %v1123
      %1199 = vmatprep.subr.bf16.mxu0 %v1122
      %1200 = vmatpush2.bf16.msra.mxu0 %v1121
      %1201 = vmatprep.mubr.bf16.mxu0 %v976
      %1202 = vmatmul.mubr.bf16.gmra.mxu0 %v975
      %v1203 = vpop.f32.mrf.mxu0
      %v1204 = vadd.f32 0.0, %v1203
      %v1205 = vpop.f32.mrf.mxu0
      %v1206 = vadd.f32 0.0, %v1205
      %v1207 = vpop.f32.mrf.mxu0
      %v1208 = vpop.f32.mrf.mxu0
      %1209 = vdwg.mxu0
      %v1210 = vld [vmem:[%s5] sm:$0xf]
      %v1213 = vcombine.low %v1204, %v1206
      %v1214 = vcombine.high %v1204, %v1206
      %v1216 = vunpack.c.l.s4 1966171168
      %v1217 = vunpack.c.0.s8 %v1216
      %v1218 = vlaneseq
      %v1219 = vshrl.u32 %v1218, 7
      %v1220 = vsub.s32 %v1217, %v1219
      %v1221 = vrot.slane %v1213, %v1220
      %v1223 = vunpack.c.l.s4 1966171168
      %v1224 = vunpack.c.0.s8 %v1223
      %v1225 = vlaneseq
      %v1226 = vshrl.u32 %v1225, 7
      %v1227 = vsub.s32 %v1224, %v1226
      %v1228 = vrot.slane %v1214, %v1227
      %v1229 = vcombine.high %v1221, %v1221
      %v1230 = vcombine.high %v1228, %v1228
      %v1232 = vunpack.c.l.s4 1966171168
      %v1233 = vunpack.c.0.s8 %v1232
      %v1234 = vlaneseq
      %v1235 = vshrl.u32 %v1234, 7
      %v1236 = vsub.s32 %v1233, %v1235
      %v1237 = vrot.slane %v1221, %v1236
      %v1239 = vunpack.c.l.s4 1966171168
      %v1240 = vunpack.c.0.s8 %v1239
      %v1241 = vlaneseq
      %v1242 = vshrl.u32 %v1241, 7
      %v1243 = vsub.s32 %v1240, %v1242
      %v1244 = vrot.slane %v1228, %v1243
      %v1246 = vunpack.c.l.s4 1966171168
      %v1247 = vunpack.c.0.s8 %v1246
      %v1248 = vlaneseq
      %v1249 = vshrl.u32 %v1248, 7
      %v1250 = vsub.s32 %v1247, %v1249
      %v1251 = vrot.slane %v1229, %v1250
      %v1253 = vunpack.c.l.s4 1966171168
      %v1254 = vunpack.c.0.s8 %v1253
      %v1255 = vlaneseq
      %v1256 = vshrl.u32 %v1255, 7
      %v1257 = vsub.s32 %v1254, %v1256
      %v1258 = vrot.slane %v1230, %v1257
      %v1259 = vcombine.high %v1237, %v1237
      %v1260 = vcombine.high %v1244, %v1244
      %v1261 = vcombine.high %v1251, %v1251
      %v1262 = vcombine.high %v1258, %v1258
      %v1263 = vlaneseq
      %v1264 = vshrl.u32 %v1263, 7
      %v1265 = vsub.s32 0, %v1264
      %v1266 = vrot.slane %v1237, %v1265
      %v1267 = vlaneseq
      %v1268 = vshrl.u32 %v1267, 7
      %v1269 = vsub.s32 1, %v1268
      %v1270 = vrot.slane %v1237, %v1269
      %v1271 = vlaneseq
      %v1272 = vshrl.u32 %v1271, 7
      %v1273 = vsub.s32 0, %v1272
      %v1274 = vrot.slane %v1251, %v1273
      %v1275 = vlaneseq
      %v1276 = vshrl.u32 %v1275, 7
      %v1277 = vsub.s32 1, %v1276
      %v1278 = vrot.slane %v1251, %v1277
      %v1279 = vlaneseq
      %v1280 = vshrl.u32 %v1279, 7
      %v1281 = vsub.s32 0, %v1280
      %v1282 = vrot.slane %v1259, %v1281
      %v1283 = vlaneseq
      %v1284 = vshrl.u32 %v1283, 7
      %v1285 = vsub.s32 1, %v1284
      %v1286 = vrot.slane %v1259, %v1285
      %v1287 = vlaneseq
      %v1288 = vshrl.u32 %v1287, 7
      %v1289 = vsub.s32 0, %v1288
      %v1290 = vrot.slane %v1261, %v1289
      %v1291 = vlaneseq
      %v1292 = vshrl.u32 %v1291, 7
      %v1293 = vsub.s32 1, %v1292
      %v1294 = vrot.slane %v1261, %v1293
      %v1295 = vlaneseq
      %v1296 = vshrl.u32 %v1295, 7
      %v1297 = vsub.s32 0, %v1296
      %v1298 = vrot.slane %v1244, %v1297
      %v1299 = vlaneseq
      %v1300 = vshrl.u32 %v1299, 7
      %v1301 = vsub.s32 1, %v1300
      %v1302 = vrot.slane %v1244, %v1301
      %v1303 = vlaneseq
      %v1304 = vshrl.u32 %v1303, 7
      %v1305 = vsub.s32 0, %v1304
      %v1306 = vrot.slane %v1258, %v1305
      %v1307 = vlaneseq
      %v1308 = vshrl.u32 %v1307, 7
      %v1309 = vsub.s32 1, %v1308
      %v1310 = vrot.slane %v1258, %v1309
      %v1311 = vlaneseq
      %v1312 = vshrl.u32 %v1311, 7
      %v1313 = vsub.s32 0, %v1312
      %v1314 = vrot.slane %v1260, %v1313
      %v1315 = vlaneseq
      %v1316 = vshrl.u32 %v1315, 7
      %v1317 = vsub.s32 1, %v1316
      %v1318 = vrot.slane %v1260, %v1317
      %v1319 = vlaneseq
      %v1320 = vshrl.u32 %v1319, 7
      %v1321 = vsub.s32 0, %v1320
      %v1322 = vrot.slane %v1262, %v1321
      %v1323 = vlaneseq
      %v1324 = vshrl.u32 %v1323, 7
      %v1325 = vsub.s32 1, %v1324
      %v1326 = vrot.slane %v1262, %v1325
      %v1345 = vunpack.c.l.s4 1983009808
      %v1346 = vunpack.c.0.s8 %v1345
      %v1347 = vlaneseq
      %v1348 = vshrl.u32 %v1347, 7
      %v1349 = vsub.s32 %v1346, %v1348
      %v1350 = vrot.slane %v1210, %v1349
      %v1351 = vcombine.high %v1350, %v1350
      %v1354 = vadd.f32 %v1266, %v1350
      %v1355 = vadd.f32 %v1270, %v1351
      %v1356 = vadd.f32 %v1274, %v1350
      %v1357 = vadd.f32 %v1278, %v1351
      %v1358 = vadd.f32 %v1282, %v1350
      %v1359 = vadd.f32 %v1286, %v1351
      %v1360 = vadd.f32 %v1290, %v1350
      %v1361 = vadd.f32 %v1294, %v1351
      %v1362 = vadd.f32 %v1298, %v1350
      %v1363 = vadd.f32 %v1302, %v1351
      %v1364 = vadd.f32 %v1306, %v1350
      %v1365 = vadd.f32 %v1310, %v1351
      %v1366 = vadd.f32 %v1314, %v1350
      %v1367 = vadd.f32 %v1318, %v1351
      %v1368 = vadd.f32 %v1322, %v1350
      %v1369 = vadd.f32 %v1326, %v1351
      %v1386 = vcombine.low %v1354, %v1355
      %v1388 = vunpack.c.l.s4 1983009808
      %v1389 = vunpack.c.0.s8 %v1388
      %v1390 = vlaneseq
      %v1391 = vshrl.u32 %v1390, 7
      %v1392 = vsub.s32 %v1389, %v1391
      %v1393 = vrot.slane %v1386, %v1392
      %v1394 = vcombine.low %v1356, %v1357
      %v1396 = vunpack.c.l.s4 1983009808
      %v1397 = vunpack.c.0.s8 %v1396
      %v1398 = vlaneseq
      %v1399 = vshrl.u32 %v1398, 7
      %v1400 = vsub.s32 %v1397, %v1399
      %v1401 = vrot.slane %v1394, %v1400
      %v1402 = vcombine.low %v1358, %v1359
      %v1404 = vunpack.c.l.s4 1983009808
      %v1405 = vunpack.c.0.s8 %v1404
      %v1406 = vlaneseq
      %v1407 = vshrl.u32 %v1406, 7
      %v1408 = vsub.s32 %v1405, %v1407
      %v1409 = vrot.slane %v1402, %v1408
      %v1410 = vcombine.low %v1360, %v1361
      %v1412 = vunpack.c.l.s4 1983009808
      %v1413 = vunpack.c.0.s8 %v1412
      %v1414 = vlaneseq
      %v1415 = vshrl.u32 %v1414, 7
      %v1416 = vsub.s32 %v1413, %v1415
      %v1417 = vrot.slane %v1410, %v1416
      %v1418 = vcombine.low %v1362, %v1363
      %v1420 = vunpack.c.l.s4 1983009808
      %v1421 = vunpack.c.0.s8 %v1420
      %v1422 = vlaneseq
      %v1423 = vshrl.u32 %v1422, 7
      %v1424 = vsub.s32 %v1421, %v1423
      %v1425 = vrot.slane %v1418, %v1424
      %v1426 = vcombine.low %v1364, %v1365
      %v1428 = vunpack.c.l.s4 1983009808
      %v1429 = vunpack.c.0.s8 %v1428
      %v1430 = vlaneseq
      %v1431 = vshrl.u32 %v1430, 7
      %v1432 = vsub.s32 %v1429, %v1431
      %v1433 = vrot.slane %v1426, %v1432
      %v1434 = vcombine.low %v1366, %v1367
      %v1436 = vunpack.c.l.s4 1983009808
      %v1437 = vunpack.c.0.s8 %v1436
      %v1438 = vlaneseq
      %v1439 = vshrl.u32 %v1438, 7
      %v1440 = vsub.s32 %v1437, %v1439
      %v1441 = vrot.slane %v1434, %v1440
      %v1442 = vcombine.low %v1368, %v1369
      %v1444 = vunpack.c.l.s4 1983009808
      %v1445 = vunpack.c.0.s8 %v1444
      %v1446 = vlaneseq
      %v1447 = vshrl.u32 %v1446, 7
      %v1448 = vsub.s32 %v1445, %v1447
      %v1449 = vrot.slane %v1442, %v1448
      %v1458 = vlaneseq
      %v1459 = vand.u32 %v1458, 127
      %v1460 = vadd.s32 %v1459, 128
      %vm1461 = vcmp.lt.s32.totalorder %v1459, 192
      %vm1462 = vcmp.lt.s32.totalorder %v1460, 192
      %v1463 = vmul.f32 %v1393, 0.5
      %v1464 = vmul.f32 %v1401, 0.5
      %v1465 = vmul.f32 %v1409, 0.5
      %v1466 = vmul.f32 %v1417, 0.5
      %v1467 = vmul.f32 %v1425, 0.5
      %v1468 = vmul.f32 %v1433, 0.5
      %v1469 = vmul.f32 %v1441, 0.5
      %v1470 = vmul.f32 %v1449, 0.5
      %v1471 = vmul.f32 %v1393, 0.044715
      %v1472 = vmul.f32 %v1401, 0.044715
      %v1473 = vmul.f32 %v1409, 0.044715
      %v1474 = vmul.f32 %v1417, 0.044715
      %v1475 = vmul.f32 %v1425, 0.044715
      %v1476 = vmul.f32 %v1433, 0.044715
      %v1477 = vmul.f32 %v1441, 0.044715
      %v1478 = vmul.f32 %v1449, 0.044715
      %v1479 = vmul.f32 %v1471, %v1393
      %v1480 = vmul.f32 %v1472, %v1401
      %v1481 = vmul.f32 %v1473, %v1409
      %v1482 = vmul.f32 %v1474, %v1417
      %v1483 = vmul.f32 %v1475, %v1425
      %v1484 = vmul.f32 %v1476, %v1433
      %v1485 = vmul.f32 %v1477, %v1441
      %v1486 = vmul.f32 %v1478, %v1449
      %v1487 = vmul.f32 %v1479, %v1393
      %v1488 = vmul.f32 %v1480, %v1401
      %v1489 = vmul.f32 %v1481, %v1409
      %v1490 = vmul.f32 %v1482, %v1417
      %v1491 = vmul.f32 %v1483, %v1425
      %v1492 = vmul.f32 %v1484, %v1433
      %v1493 = vmul.f32 %v1485, %v1441
      %v1494 = vmul.f32 %v1486, %v1449
      %v1495 = vadd.f32 %v1393, %v1487
      %v1496 = vadd.f32 %v1401, %v1488
      %v1497 = vadd.f32 %v1409, %v1489
      %v1498 = vadd.f32 %v1417, %v1490
      %v1499 = vadd.f32 %v1425, %v1491
      %v1500 = vadd.f32 %v1433, %v1492
      %v1501 = vadd.f32 %v1441, %v1493
      %v1502 = vadd.f32 %v1449, %v1494
      %v1503 = vmul.f32 %v1495, 0.7978846
      %v1504 = vmul.f32 %v1496, 0.7978846
      %v1505 = vmul.f32 %v1497, 0.7978846
      %v1506 = vmul.f32 %v1498, 0.7978846
      %v1507 = vmul.f32 %v1499, 0.7978846
      %v1508 = vmul.f32 %v1500, 0.7978846
      %v1509 = vmul.f32 %v1501, 0.7978846
      %v1510 = vmul.f32 %v1502, 0.7978846
      %v1511 = vtanh.pop %v1503
      %v1512 = vtanh.pop %v1504
      %v1513 = vtanh.pop %v1505
      %v1514 = vtanh.pop %v1506
      %v1515 = vtanh.pop %v1507
      %v1516 = vtanh.pop %v1508
      %v1517 = vtanh.pop %v1509
      %v1518 = vtanh.pop %v1510
      %v1519 = vadd.f32 %v1511, 1.0
      %v1520 = vadd.f32 %v1512, 1.0
      %v1521 = vadd.f32 %v1513, 1.0
      %v1522 = vadd.f32 %v1514, 1.0
      %v1523 = vadd.f32 %v1515, 1.0
      %v1524 = vadd.f32 %v1516, 1.0
      %v1525 = vadd.f32 %v1517, 1.0
      %v1526 = vadd.f32 %v1518, 1.0
      %v1527 = vmul.f32 %v1463, %v1519
      %v1528 = vmul.f32 %v1464, %v1520
      %v1529 = vmul.f32 %v1465, %v1521
      %v1530 = vmul.f32 %v1466, %v1522
      %v1531 = vmul.f32 %v1467, %v1523
      %v1532 = vmul.f32 %v1468, %v1524
      %v1533 = vmul.f32 %v1469, %v1525
      %v1534 = vmul.f32 %v1470, %v1526
      %v1543 = vcombine.low %v1527, %v1528
      %v1544 = vcombine.low %v1529, %v1530
      %v1546 = vunpack.c.l.s4 1983009808
      %v1547 = vunpack.c.0.s8 %v1546
      %v1548 = vlaneseq
      %v1549 = vshrl.u32 %v1548, 7
      %v1550 = vsub.s32 %v1547, %v1549
      %v1551 = vrot.slane %v1543, %v1550
      %v1553 = vunpack.c.l.s4 1983009808
      %v1554 = vunpack.c.0.s8 %v1553
      %v1555 = vlaneseq
      %v1556 = vshrl.u32 %v1555, 7
      %v1557 = vsub.s32 %v1554, %v1556
      %v1558 = vrot.slane %v1544, %v1557
      %v1559 = vcombine.low %v1551, %v1558
      %v1560 = vcombine.high %v1551, %v1558
      %v1561 = vcombine.low %v1531, %v1532
      %v1562 = vcombine.low %v1533, %v1534
      %v1564 = vunpack.c.l.s4 1983009808
      %v1565 = vunpack.c.0.s8 %v1564
      %v1566 = vlaneseq
      %v1567 = vshrl.u32 %v1566, 7
      %v1568 = vsub.s32 %v1565, %v1567
      %v1569 = vrot.slane %v1561, %v1568
      %v1571 = vunpack.c.l.s4 1983009808
      %v1572 = vunpack.c.0.s8 %v1571
      %v1573 = vlaneseq
      %v1574 = vshrl.u32 %v1573, 7
      %v1575 = vsub.s32 %v1572, %v1574
      %v1576 = vrot.slane %v1562, %v1575
      %v1577 = vcombine.low %v1569, %v1576
      %v1578 = vcombine.high %v1569, %v1576
      %v1583 = vcombine.low %v1393, %v1401
      %v1584 = vcombine.low %v1409, %v1417
      %v1586 = vunpack.c.l.s4 1983009808
      %v1587 = vunpack.c.0.s8 %v1586
      %v1588 = vlaneseq
      %v1589 = vshrl.u32 %v1588, 7
      %v1590 = vsub.s32 %v1587, %v1589
      %v1591 = vrot.slane %v1583, %v1590
      %v1593 = vunpack.c.l.s4 1983009808
      %v1594 = vunpack.c.0.s8 %v1593
      %v1595 = vlaneseq
      %v1596 = vshrl.u32 %v1595, 7
      %v1597 = vsub.s32 %v1594, %v1596
      %v1598 = vrot.slane %v1584, %v1597
      %v1599 = vcombine.low %v1591, %v1598
      %v1600 = vcombine.high %v1591, %v1598
      %v1601 = vcombine.low %v1425, %v1433
      %v1602 = vcombine.low %v1441, %v1449
      %v1604 = vunpack.c.l.s4 1983009808
      %v1605 = vunpack.c.0.s8 %v1604
      %v1606 = vlaneseq
      %v1607 = vshrl.u32 %v1606, 7
      %v1608 = vsub.s32 %v1605, %v1607
      %v1609 = vrot.slane %v1601, %v1608
      %v1611 = vunpack.c.l.s4 1983009808
      %v1612 = vunpack.c.0.s8 %v1611
      %v1613 = vlaneseq
      %v1614 = vshrl.u32 %v1613, 7
      %v1615 = vsub.s32 %v1612, %v1614
      %v1616 = vrot.slane %v1602, %v1615
      %v1617 = vcombine.low %v1609, %v1616
      %v1618 = vcombine.high %v1609, %v1616
      %v1623 = vsel %vm1461, %v1559, %v1599
      %v1624 = vsel %vm1462, %v1560, %v1600
      %v1625 = vsel %vm1461, %v1577, %v1617
      %v1626 = vsel %vm1462, %v1578, %v1618
      %1627 = vst [vmem:[%s403] sm:$0xff] %v1623
      %1628 = vst [vmem:[%s403 + $0x8] sm:$0xff] %v1624
      %1629 = vst [vmem:[%s403 + $0x10] sm:$0xff] %v1625
      %1630 = vst [vmem:[%s403 + $0x18] sm:$0xff] %v1626
      %s1631 = smul.u32 2, %s25
      %p1632 = scmp.lt.s32.totalorder %s24, 1
      %s1633 = scalar_select %p1632, %s24, 1
      %p1634 = scmp.lt.s32.totalorder %s1631, 3
      %s1635 = scalar_select %p1634, %s1631, 3
      %s1636 = smul.addr %s1635, 2
      %s1637 = smul.addr %s1633, 8
      %s1638 = sadd.s32 %s1636, %s1637
      %s1639 = smul.addr %s1638, 4
      %s1640 = scalar_lea.vmem %s7, %s1639
      %s1641 = smul.u32 2, %s25
      %p1642 = scmp.lt.s32.totalorder %s24, 1
      %s1643 = scalar_select %p1642, %s24, 1
      %p1644 = scmp.lt.s32.totalorder %s1641, 3
      %s1645 = scalar_select %p1644, %s1641, 3
      %s1646 = smul.addr %s1645, 2
      %s1647 = smul.addr %s1643, 8
      %s1648 = sadd.s32 %s1646, %s1647
      %s1649 = smul.addr %s1648, 8
      %s1650 = scalar_lea.vmem %s8, %s1649
      // Predicated region
      $region49: #{complete_dt_forward.12} parent=47 // pred_check
        %p1651 = pneg %p213
      $region50: #{complete_dt_forward.12} parent=47 // pred_check_branch
        %1653 = sbr.rel (%p1651) target = $region52
      $region51: #{complete_dt_forward.12} parent=47 // pred_region
        %s1654 = smul.u32 2, %s25
      $region52: #{complete_dt_forward.12} parent=47 // pred_fallthru
        _
      // Predicated region
      $region53: #{complete_dt_forward.12} parent=47 // pred_check
        %p1655 = pneg %p241
      $region54: #{complete_dt_forward.12} parent=47 // pred_check_branch
        %1657 = sbr.rel (%p1655) target = $region56
      $region55: #{complete_dt_forward.12} parent=47 // pred_region
        %s1658 = smul.u32 2, %s25
      $region56: #{complete_dt_forward.12} parent=47 // pred_fallthru
        _
    $region48: #{complete_dt_forward.12} parent=5 // pred_fallthru
      _
    %p1659 = scmp.le.s32.totalorder 2, %s15
    // Predicated region
    $region57: #{complete_dt_forward.12} parent=5 // pred_check
      %p1660 = pneg %p1659
    $region58: #{complete_dt_forward.12} parent=5 // pred_check_branch
      %1662 = sbr.rel (%p1660) target = $region60
    $region59: #{complete_dt_forward.12} parent=5 // pred_region
      %s1663 = ssub.s32 %s15, 2
      // Predicated region
      $region61: #{complete_dt_forward.12} parent=59 // pred_check
        %p1664 = pneg %p219
      $region62: #{complete_dt_forward.12} parent=59 // pred_check_branch
        %1666 = sbr.rel (%p1664) target = $region64
      $region63: #{complete_dt_forward.12} parent=59 // pred_region
        %s1667 = smul.u32 2, %s27
        %p1668 = scmp.lt.s32.totalorder %s26, 1
        %s1669 = scalar_select %p1668, %s26, 1
        %p1670 = scmp.lt.s32.totalorder %s1667, 3
        %s1671 = scalar_select %p1670, %s1667, 3
        %s1672 = smul.addr %s1671, 2
        %s1673 = smul.addr %s1669, 8
        %s1674 = sadd.s32 %s1672, %s1673
        %s1675 = smul.addr %s1674, 4
        %s1676 = scalar_lea.vmem %s7, %s1675
      $region64: #{complete_dt_forward.12} parent=59 // pred_fallthru
        _
      // Predicated region
      $region65: #{complete_dt_forward.12} parent=59 // pred_check
        %p1677 = pneg %p247
      $region66: #{complete_dt_forward.12} parent=59 // pred_check_branch
        %1679 = sbr.rel (%p1677) target = $region68
      $region67: #{complete_dt_forward.12} parent=59 // pred_region
        %s1680 = smul.u32 2, %s27
        %p1681 = scmp.lt.s32.totalorder %s26, 1
        %s1682 = scalar_select %p1681, %s26, 1
        %p1683 = scmp.lt.s32.totalorder %s1680, 3
        %s1684 = scalar_select %p1683, %s1680, 3
        %s1685 = smul.addr %s1684, 2
        %s1686 = smul.addr %s1682, 8
        %s1687 = sadd.s32 %s1685, %s1686
        %s1688 = smul.addr %s1687, 8
        %s1689 = scalar_lea.vmem %s8, %s1688
      $region68: #{complete_dt_forward.12} parent=59 // pred_fallthru
        _
    $region60: #{complete_dt_forward.12} parent=5 // pred_fallthru
      _
  $region6: #{complete_dt_forward.12} parent=0 // loop_footer
    %s19 = sadd.s32 1, %s15
  $region7: #{complete_dt_forward.12} parent=0 // loop_footer_branch
    %14 = sbr.rel target = $region3
  $region8: #{complete_dt_forward.12} parent=0 // loop_exit
    _

// kernel: complete_dt_forward.11
$region0: #{complete_dt_forward.11}
  #allocation0 [shape = 'u32[]', space=smem, size = 0x4, offset = 0x4, fixed_abs, tag = 'smem constant byte address 0x4 - core index']
  #allocation1 [shape = 'u32[144,128]{1,0:T(1,128)}', space=vmem, size = 0x12000, scoped, tag = 'internal scratch']
  %s0 = inlined_call_operand.vmem [shape: bf16[2,1,512], index: 0, kind: input, shape index: {}]
  %s1 = inlined_call_operand.hbm [shape: bf16[512,4096], index: 1, kind: input, shape index: {}]
  %s2 = inlined_call_operand.hbm [shape: f32[1,4096], index: 2, kind: input, shape index: {}]
  %s3 = inlined_call_operand.vmem [shape: bf16[2,4096], index: 3, kind: output, shape index: {}]
  %s4 = sld [smem:[#allocation0]]
  $region53: #{complete_dt_forward.11} parent=0
    _
  %s6 = ssub.s32 1, %s4
  %s7 = scalar_select 0, %s6, %s4
  $region1: #{complete_dt_forward.11} parent=0
    #allocation2 [shape = 'u8[2097152]{0}', space=vmem, size = 0x200000, scoped, tag = 'input window, operand 1']
    #allocation3 [shape = 's32[2]{0}', space=sflag, size = 0x8, scoped, tag = 'scoped memory for complete_dt_forward.11']
    #allocation4 [shape = 'u8[8192]{0}', space=vmem, size = 0x2000, scoped, tag = 'input window, operand 2']
    #allocation5 [shape = 's32[2]{0}', space=sflag, size = 0x8, scoped, tag = 'scoped memory for complete_dt_forward.11']
    %8 = vsyncpa [#allocation3], 0
    %s9 = scalar_lea.sflag [#allocation3], 1
    %10 = vsyncpa %s9, 0
    %11 = vsyncpa [#allocation5], 0
    %s12 = scalar_lea.sflag [#allocation5], 1
    %13 = vsyncpa %s12, 0
    loop: start=0, step=1, limit=6
    $region2: #{complete_dt_forward.11} parent=1 // loop_pre_header
      _
    $region3: #{complete_dt_forward.11} parent=1 // loop_header
      %s15 = sphi 0, %s19
      %p16 = scmp.ge.s32.totalorder %s15, 6
      %s23 = sphi 0, %s23
      %s25 = sphi 0, %s23
      %s26 = sphi 0, %s25
      %s40 = sphi 0, %s26
      %s46 = sphi 0, %s48
      %s49 = sphi 0, %s46
      %s50 = sphi 0, %s49
      %s66 = sphi 0, %s50
      %s72 = sphi 0, %s74
      %s75 = sphi 0, %s72
      %s76 = sphi 0, %s75
      %s92 = sphi 0, %s76
      %s98 = sphi 0, %s100
      %s101 = sphi 0, %s98
      %s102 = sphi 0, %s101
      %s118 = sphi 0, %s102
    $region4: #{complete_dt_forward.11} parent=1 // loop_header_branch
      %18 = sbr.rel (%p16) target = $region8
    $region5: #{complete_dt_forward.11} parent=1 // loop_body
      %s20 = ssub.s32 %s15, 1
      %s21 = ssub.s32 %s15, 2
      %s22 = sadd.s32 %s15, 1
      %s24 = sadd.s32 %s23, 1
      %p27 = scmp.eq.s32.totalorder %s15, 3
      %p28 = scmp.ne.s32.totalorder %s23, %s25
      %p29 = scmp.eq.s32.totalorder %s15, 0
      %p30 = por %p28, %p29
      %p31 = scmp.ne.s32.totalorder %s23, %s25
      %p32 = scmp.eq.s32.totalorder %s20, 3
      %p33 = por %p31, %p32
      %p34 = scmp.ne.s32.totalorder %s25, %s26
      %p35 = scmp.eq.s32.totalorder %s20, 0
      %p36 = por %p34, %p35
      %p37 = scmp.ne.s32.totalorder %s25, %s26
      %p38 = scmp.eq.s32.totalorder %s21, 3
      %p39 = por %p37, %p38
      %p41 = scmp.ne.s32.totalorder %s26, %s40
      %p42 = scmp.eq.s32.totalorder %s21, 0
      %p43 = por %p41, %p42
      %s44 = ssub.s32 %s15, %s22
      %p45 = scmp.eq.s32.totalorder %s44, 0
      %s47 = sadd.s32 %s46, 1
      %s48 = scalar_select %p45, %s46, %s47
      %p51 = pneg %p45
      %p52 = scmp.eq.s32.totalorder %s15, 3
      %p53 = por %p51, %p52
      %p54 = scmp.ne.s32.totalorder %s46, %s49
      %p55 = scmp.eq.s32.totalorder %s15, 0
      %p56 = por %p54, %p55
      %p57 = scmp.ne.s32.totalorder %s46, %s49
      %p58 = scmp.eq.s32.totalorder %s20, 3
      %p59 = por %p57, %p58
      %p60 = scmp.ne.s32.totalorder %s49, %s50
      %p61 = scmp.eq.s32.totalorder %s20, 0
      %p62 = por %p60, %p61
      %p63 = scmp.ne.s32.totalorder %s49, %s50
      %p64 = scmp.eq.s32.totalorder %s21, 3
      %p65 = por %p63, %p64
      %p67 = scmp.ne.s32.totalorder %s50, %s66
      %p68 = scmp.eq.s32.totalorder %s21, 0
      %p69 = por %p67, %p68
      %s70 = ssub.s32 %s15, %s22
      %p71 = scmp.eq.s32.totalorder %s70, 0
      %s73 = sadd.s32 %s72, 1
      %s74 = scalar_select %p71, %s72, %s73
      %p77 = pneg %p71
      %p78 = scmp.eq.s32.totalorder %s15, 3
      %p79 = por %p77, %p78
      %p80 = scmp.ne.s32.totalorder %s72, %s75
      %p81 = scmp.eq.s32.totalorder %s15, 0
      %p82 = por %p80, %p81
      %p83 = scmp.ne.s32.totalorder %s72, %s75
      %p84 = scmp.eq.s32.totalorder %s20, 3
      %p85 = por %p83, %p84
      %p86 = scmp.ne.s32.totalorder %s75, %s76
      %p87 = scmp.eq.s32.totalorder %s20, 0
      %p88 = por %p86, %p87
      %p89 = scmp.ne.s32.totalorder %s75, %s76
      %p90 = scmp.eq.s32.totalorder %s21, 3
      %p91 = por %p89, %p90
      %p93 = scmp.ne.s32.totalorder %s76, %s92
      %p94 = scmp.eq.s32.totalorder %s21, 0
      %p95 = por %p93, %p94
      %s96 = ssub.s32 %s15, %s22
      %p97 = scmp.eq.s32.totalorder %s96, 0
      %s99 = sadd.s32 %s98, 1
      %s100 = scalar_select %p97, %s98, %s99
      %p103 = pneg %p97
      %p104 = scmp.eq.s32.totalorder %s15, 3
      %p105 = por %p103, %p104
      %p106 = scmp.ne.s32.totalorder %s98, %s101
      %p107 = scmp.eq.s32.totalorder %s15, 0
      %p108 = por %p106, %p107
      %p109 = scmp.ne.s32.totalorder %s98, %s101
      %p110 = scmp.eq.s32.totalorder %s20, 3
      %p111 = por %p109, %p110
      %p112 = scmp.ne.s32.totalorder %s101, %s102
      %p113 = scmp.eq.s32.totalorder %s20, 0
      %p114 = por %p112, %p113
      %p115 = scmp.ne.s32.totalorder %s101, %s102
      %p116 = scmp.eq.s32.totalorder %s21, 3
      %p117 = por %p115, %p116
      %p119 = scmp.ne.s32.totalorder %s102, %s118
      %p120 = scmp.eq.s32.totalorder %s21, 0
      %p121 = por %p119, %p120
      %p122 = scmp.le.s32.totalorder 1, %s15
      %p123 = scmp.lt.s32.totalorder %s15, 5
      %p124 = pnand %p122, %p123
      %p125 = pneg %p124
      // Predicated region
      $region9: #{complete_dt_forward.11} parent=5 // pred_check
        _
      $region10: #{complete_dt_forward.11} parent=5 // pred_check_branch
        %127 = sbr.rel (%p124) target = $region12
      $region11: #{complete_dt_forward.11} parent=5 // pred_region
        %s128 = ssub.s32 %s15, 1
        // Predicated region
        $region13: #{complete_dt_forward.11} parent=11 // pred_check
          %p129 = pneg %p36
        $region14: #{complete_dt_forward.11} parent=11 // pred_check_branch
          %131 = sbr.rel (%p129) target = $region16
        $region15: #{complete_dt_forward.11} parent=11 // pred_region
          _
        $region16: #{complete_dt_forward.11} parent=11 // pred_fallthru
          _
      $region12: #{complete_dt_forward.11} parent=5 // pred_fallthru
        _
      %p132 = scmp.lt.s32.totalorder %s15, 4
      // Predicated region
      $region17: #{complete_dt_forward.11} parent=5 // pred_check
        %p133 = pneg %p132
      $region18: #{complete_dt_forward.11} parent=5 // pred_check_branch
        %135 = sbr.rel (%p133) target = $region20
      $region19: #{complete_dt_forward.11} parent=5 // pred_region
        // Predicated region
        $region21: #{complete_dt_forward.11} parent=19 // pred_check
          %p136 = pneg %p56
        $region22: #{complete_dt_forward.11} parent=19 // pred_check_branch
          %138 = sbr.rel (%p136) target = $region24
        $region23: #{complete_dt_forward.11} parent=19 // pred_region
          %s139 = sand.u32 %s46, 1
          %s140 = scalar_lea.sflag [#allocation3], %s139
          %s141 = sand.u32 %s46, 1
          %s142 = smul.addr %s141, 2048
          %s143 = scalar_lea.vmem [#allocation2], %s142
          %s144 = smul.u32 8, %s15
          %s146 = ssub.s32 32768, 32768
          %147 = vsyncadd %s140, %s146
          %s148 = smul.addr %s144, 64
          %s149 = scalar_lea.hbm %s1, %s148
          %s150 = sshll.u32 %s143, 4
          %s151 = int_to_ptr.vmem [resolvable:$true] %s150
          %156 = dma.hbm_to_vmem [thread:$0]  %s149, 32768, %s151, %s140, 2048, 512, 32
        $region24: #{complete_dt_forward.11} parent=19 // pred_fallthru
          _
        // Predicated region
        $region25: #{complete_dt_forward.11} parent=19 // pred_check
          %p157 = pneg %p82
        $region26: #{complete_dt_forward.11} parent=19 // pred_check_branch
          %159 = sbr.rel (%p157) target = $region28
        $region27: #{complete_dt_forward.11} parent=19 // pred_region
          %s160 = sand.u32 %s72, 1
          %s161 = scalar_lea.sflag [#allocation5], %s160
          %s162 = sand.u32 %s72, 1
          %s163 = smul.addr %s162, 8
          %s164 = scalar_lea.vmem [#allocation4], %s163
          %s165 = smul.u32 8, %s15
          %s167 = ssub.s32 128, 128
          %168 = vsyncadd %s161, %s167
          %s169 = smul.addr %s165, 16
          %s170 = scalar_lea.hbm %s2, %s169
          %s172 = sshll.u32 %s164, 4
          %s173 = int_to_ptr.vmem [resolvable:$true] %s172
          %175 = dma.hbm_to_vmem [thread:$0]  %s170, 128, %s173, %s161
        $region28: #{complete_dt_forward.11} parent=19 // pred_fallthru
          _
      $region20: #{complete_dt_forward.11} parent=5 // pred_fallthru
        _
      %p176 = scmp.le.s32.totalorder 1, %s15
      %p177 = scmp.lt.s32.totalorder %s15, 5
      %p178 = pnand %p176, %p177
      %p179 = pneg %p178
      // Predicated region
      $region29: #{complete_dt_forward.11} parent=5 // pred_check
        _
      $region30: #{complete_dt_forward.11} parent=5 // pred_check_branch
        %181 = sbr.rel (%p178) target = $region32
      $region31: #{complete_dt_forward.11} parent=5 // pred_region
        %s182 = ssub.s32 %s15, 1
        %s183 = sand.u32 %s49, 1
        %s184 = scalar_lea.sflag [#allocation3], %s183
        %s185 = sand.u32 %s49, 1
        %s186 = smul.addr %s185, 2048
        %s187 = scalar_lea.vmem [#allocation2], %s186
        // Predicated region
        $region33: #{complete_dt_forward.11} parent=31 // pred_check
          %p188 = pneg %p62
        $region34: #{complete_dt_forward.11} parent=31 // pred_check_branch
          %190 = sbr.rel (%p188) target = $region36
        $region35: #{complete_dt_forward.11} parent=31 // pred_region
          %191 = dma.done %s184, 32768
        $region36: #{complete_dt_forward.11} parent=31 // pred_fallthru
          _
        %s192 = sand.u32 %s75, 1
        %s193 = scalar_lea.sflag [#allocation5], %s192
        %s194 = sand.u32 %s75, 1
        %s195 = smul.addr %s194, 8
        %s196 = scalar_lea.vmem [#allocation4], %s195
        // Predicated region
        $region37: #{complete_dt_forward.11} parent=31 // pred_check
          %p197 = pneg %p88
        $region38: #{complete_dt_forward.11} parent=31 // pred_check_branch
          %199 = sbr.rel (%p197) target = $region40
        $region39: #{complete_dt_forward.11} parent=31 // pred_region
          %200 = dma.done %s193, 128
        $region40: #{complete_dt_forward.11} parent=31 // pred_fallthru
          _
        %p201 = pneg %p36
        %p202 = pneg %p33
        %s203 = sand.u32 %s49, 1
        %s204 = scalar_lea.sflag [#allocation3], %s203
        %s205 = sand.u32 %s49, 1
        %s206 = smul.addr %s205, 2048
        %s207 = scalar_lea.vmem [#allocation2], %s206
        %p208 = pneg %p62
        %p209 = pneg %p59
        %s210 = sand.u32 %s75, 1
        %s211 = scalar_lea.sflag [#allocation5], %s210
        %s212 = sand.u32 %s75, 1
        %s213 = smul.addr %s212, 8
        %s214 = scalar_lea.vmem [#allocation4], %s213
        %p215 = pneg %p88
        %p216 = pneg %p85
        %p217 = pneg %p114
        %p218 = pneg %p111
        %s219 = smul.u32 8, %s20
        %p220 = scmp.lt.s32.totalorder %s219, 31
        %s221 = scalar_select %p220, %s219, 31
        %s222 = scalar_lea.vmem %s3, %s221
        %s223 = smul.u32 8, %s20
        %s224 = smul.u32 8, %s20
        %s225 = smul.u32 8, %s20
        %p226 = scmp.lt.s32.totalorder %s225, 31
        %s227 = scalar_select %p226, %s225, 31
        %s228 = scalar_lea.vmem %s3, %s227
        %s229 = smul.u32 8, %s20
        %v230 = vld [vmem:[%s0] sm:$0xf]
        %v231 = vld [vmem:[%s0 + $0x4] sm:$0xf]
        %v232 = vld [vmem:[%s187] sm:$0xff]
        %v233 = vld [vmem:[%s187 + $0x8] sm:$0xff]
        %v234 = vld [vmem:[%s187 + $0x10] sm:$0xff]
        %v235 = vld [vmem:[%s187 + $0x18] sm:$0xff]
        %v236 = vld [vmem:[%s187 + $0x20] sm:$0xff]
        %v237 = vld [vmem:[%s187 + $0x28] sm:$0xff]
        %v238 = vld [vmem:[%s187 + $0x30] sm:$0xff]
        %v239 = vld [vmem:[%s187 + $0x38] sm:$0xff]
        %v240 = vld [vmem:[%s187 + $0x40] sm:$0xff]
        %v241 = vld [vmem:[%s187 + $0x48] sm:$0xff]
        %v242 = vld [vmem:[%s187 + $0x50] sm:$0xff]
        %v243 = vld [vmem:[%s187 + $0x58] sm:$0xff]
        %v244 = vld [vmem:[%s187 + $0x60] sm:$0xff]
        %v245 = vld [vmem:[%s187 + $0x68] sm:$0xff]
        %v246 = vld [vmem:[%s187 + $0x70] sm:$0xff]
        %v247 = vld [vmem:[%s187 + $0x78] sm:$0xff]
        %v248 = vld [vmem:[%s187 + $0x80] sm:$0xff]
        %v249 = vld [vmem:[%s187 + $0x88] sm:$0xff]
        %v250 = vld [vmem:[%s187 + $0x90] sm:$0xff]
        %v251 = vld [vmem:[%s187 + $0x98] sm:$0xff]
        %v252 = vld [vmem:[%s187 + $0xa0] sm:$0xff]
        %v253 = vld [vmem:[%s187 + $0xa8] sm:$0xff]
        %v254 = vld [vmem:[%s187 + $0xb0] sm:$0xff]
        %v255 = vld [vmem:[%s187 + $0xb8] sm:$0xff]
        %v256 = vld [vmem:[%s187 + $0xc0] sm:$0xff]
        %v257 = vld [vmem:[%s187 + $0xc8] sm:$0xff]
        %v258 = vld [vmem:[%s187 + $0xd0] sm:$0xff]
        %v259 = vld [vmem:[%s187 + $0xd8] sm:$0xff]
        %v260 = vld [vmem:[%s187 + $0xe0] sm:$0xff]
        %v261 = vld [vmem:[%s187 + $0xe8] sm:$0xff]
        %v262 = vld [vmem:[%s187 + $0xf0] sm:$0xff]
        %v263 = vld [vmem:[%s187 + $0xf8] sm:$0xff]
        %v264 = vld [vmem:[%s187 + $0x100] sm:$0xff]
        %v265 = vld [vmem:[%s187 + $0x108] sm:$0xff]
        %v266 = vld [vmem:[%s187 + $0x110] sm:$0xff]
        %v267 = vld [vmem:[%s187 + $0x118] sm:$0xff]
        %v268 = vld [vmem:[%s187 + $0x120] sm:$0xff]
        %v269 = vld [vmem:[%s187 + $0x128] sm:$0xff]
        %v270 = vld [vmem:[%s187 + $0x130] sm:$0xff]
        %v271 = vld [vmem:[%s187 + $0x138] sm:$0xff]
        %v272 = vld [vmem:[%s187 + $0x140] sm:$0xff]
        %v273 = vld [vmem:[%s187 + $0x148] sm:$0xff]
        %v274 = vld [vmem:[%s187 + $0x150] sm:$0xff]
        %v275 = vld [vmem:[%s187 + $0x158] sm:$0xff]
        %v276 = vld [vmem:[%s187 + $0x160] sm:$0xff]
        %v277 = vld [vmem:[%s187 + $0x168] sm:$0xff]
        %v278 = vld [vmem:[%s187 + $0x170] sm:$0xff]
        %v279 = vld [vmem:[%s187 + $0x178] sm:$0xff]
        %v280 = vld [vmem:[%s187 + $0x180] sm:$0xff]
        %v281 = vld [vmem:[%s187 + $0x188] sm:$0xff]
        %v282 = vld [vmem:[%s187 + $0x190] sm:$0xff]
        %v283 = vld [vmem:[%s187 + $0x198] sm:$0xff]
        %v284 = vld [vmem:[%s187 + $0x1a0] sm:$0xff]
        %v285 = vld [vmem:[%s187 + $0x1a8] sm:$0xff]
        %v286 = vld [vmem:[%s187 + $0x1b0] sm:$0xff]
        %v287 = vld [vmem:[%s187 + $0x1b8] sm:$0xff]
        %v288 = vld [vmem:[%s187 + $0x1c0] sm:$0xff]
        %v289 = vld [vmem:[%s187 + $0x1c8] sm:$0xff]
        %v290 = vld [vmem:[%s187 + $0x1d0] sm:$0xff]
        %v291 = vld [vmem:[%s187 + $0x1d8] sm:$0xff]
        %v292 = vld [vmem:[%s187 + $0x1e0] sm:$0xff]
        %v293 = vld [vmem:[%s187 + $0x1e8] sm:$0xff]
        %v294 = vld [vmem:[%s187 + $0x1f0] sm:$0xff]
        %v295 = vld [vmem:[%s187 + $0x1f8] sm:$0xff]
        %v296 = vld [vmem:[%s187 + $0x200] sm:$0xff]
        %v297 = vld [vmem:[%s187 + $0x208] sm:$0xff]
        %v298 = vld [vmem:[%s187 + $0x210] sm:$0xff]
        %v299 = vld [vmem:[%s187 + $0x218] sm:$0xff]
        %v300 = vld [vmem:[%s187 + $0x220] sm:$0xff]
        %v301 = vld [vmem:[%s187 + $0x228] sm:$0xff]
        %v302 = vld [vmem:[%s187 + $0x230] sm:$0xff]
        %v303 = vld [vmem:[%s187 + $0x238] sm:$0xff]
        %v304 = vld [vmem:[%s187 + $0x240] sm:$0xff]
        %v305 = vld [vmem:[%s187 + $0x248] sm:$0xff]
        %v306 = vld [vmem:[%s187 + $0x250] sm:$0xff]
        %v307 = vld [vmem:[%s187 + $0x258] sm:$0xff]
        %v308 = vld [vmem:[%s187 + $0x260] sm:$0xff]
        %v309 = vld [vmem:[%s187 + $0x268] sm:$0xff]
        %v310 = vld [vmem:[%s187 + $0x270] sm:$0xff]
        %v311 = vld [vmem:[%s187 + $0x278] sm:$0xff]
        %v312 = vld [vmem:[%s187 + $0x280] sm:$0xff]
        %v313 = vld [vmem:[%s187 + $0x288] sm:$0xff]
        %v314 = vld [vmem:[%s187 + $0x290] sm:$0xff]
        %v315 = vld [vmem:[%s187 + $0x298] sm:$0xff]
        %v316 = vld [vmem:[%s187 + $0x2a0] sm:$0xff]
        %v317 = vld [vmem:[%s187 + $0x2a8] sm:$0xff]
        %v318 = vld [vmem:[%s187 + $0x2b0] sm:$0xff]
        %v319 = vld [vmem:[%s187 + $0x2b8] sm:$0xff]
        %v320 = vld [vmem:[%s187 + $0x2c0] sm:$0xff]
        %v321 = vld [vmem:[%s187 + $0x2c8] sm:$0xff]
        %v322 = vld [vmem:[%s187 + $0x2d0] sm:$0xff]
        %v323 = vld [vmem:[%s187 + $0x2d8] sm:$0xff]
        %v324 = vld [vmem:[%s187 + $0x2e0] sm:$0xff]
        %v325 = vld [vmem:[%s187 + $0x2e8] sm:$0xff]
        %v326 = vld [vmem:[%s187 + $0x2f0] sm:$0xff]
        %v327 = vld [vmem:[%s187 + $0x2f8] sm:$0xff]
        %v328 = vld [vmem:[%s187 + $0x300] sm:$0xff]
        %v329 = vld [vmem:[%s187 + $0x308] sm:$0xff]
        %v330 = vld [vmem:[%s187 + $0x310] sm:$0xff]
        %v331 = vld [vmem:[%s187 + $0x318] sm:$0xff]
        %v332 = vld [vmem:[%s187 + $0x320] sm:$0xff]
        %v333 = vld [vmem:[%s187 + $0x328] sm:$0xff]
        %v334 = vld [vmem:[%s187 + $0x330] sm:$0xff]
        %v335 = vld [vmem:[%s187 + $0x338] sm:$0xff]
        %v336 = vld [vmem:[%s187 + $0x340] sm:$0xff]
        %v337 = vld [vmem:[%s187 + $0x348] sm:$0xff]
        %v338 = vld [vmem:[%s187 + $0x350] sm:$0xff]
        %v339 = vld [vmem:[%s187 + $0x358] sm:$0xff]
        %v340 = vld [vmem:[%s187 + $0x360] sm:$0xff]
        %v341 = vld [vmem:[%s187 + $0x368] sm:$0xff]
        %v342 = vld [vmem:[%s187 + $0x370] sm:$0xff]
        %v343 = vld [vmem:[%s187 + $0x378] sm:$0xff]
        %v344 = vld [vmem:[%s187 + $0x380] sm:$0xff]
        %v345 = vld [vmem:[%s187 + $0x388] sm:$0xff]
        %v346 = vld [vmem:[%s187 + $0x390] sm:$0xff]
        %v347 = vld [vmem:[%s187 + $0x398] sm:$0xff]
        %v348 = vld [vmem:[%s187 + $0x3a0] sm:$0xff]
        %v349 = vld [vmem:[%s187 + $0x3a8] sm:$0xff]
        %v350 = vld [vmem:[%s187 + $0x3b0] sm:$0xff]
        %v351 = vld [vmem:[%s187 + $0x3b8] sm:$0xff]
        %v352 = vld [vmem:[%s187 + $0x3c0] sm:$0xff]
        %v353 = vld [vmem:[%s187 + $0x3c8] sm:$0xff]
        %v354 = vld [vmem:[%s187 + $0x3d0] sm:$0xff]
        %v355 = vld [vmem:[%s187 + $0x3d8] sm:$0xff]
        %v356 = vld [vmem:[%s187 + $0x3e0] sm:$0xff]
        %v357 = vld [vmem:[%s187 + $0x3e8] sm:$0xff]
        %v358 = vld [vmem:[%s187 + $0x3f0] sm:$0xff]
        %v359 = vld [vmem:[%s187 + $0x3f8] sm:$0xff]
        %v360 = vld [vmem:[%s187 + $0x400] sm:$0xff]
        %v361 = vld [vmem:[%s187 + $0x408] sm:$0xff]
        %v362 = vld [vmem:[%s187 + $0x410] sm:$0xff]
        %v363 = vld [vmem:[%s187 + $0x418] sm:$0xff]
        %v364 = vld [vmem:[%s187 + $0x420] sm:$0xff]
        %v365 = vld [vmem:[%s187 + $0x428] sm:$0xff]
        %v366 = vld [vmem:[%s187 + $0x430] sm:$0xff]
        %v367 = vld [vmem:[%s187 + $0x438] sm:$0xff]
        %v368 = vld [vmem:[%s187 + $0x440] sm:$0xff]
        %v369 = vld [vmem:[%s187 + $0x448] sm:$0xff]
        %v370 = vld [vmem:[%s187 + $0x450] sm:$0xff]
        %v371 = vld [vmem:[%s187 + $0x458] sm:$0xff]
        %v372 = vld [vmem:[%s187 + $0x460] sm:$0xff]
        %v373 = vld [vmem:[%s187 + $0x468] sm:$0xff]
        %v374 = vld [vmem:[%s187 + $0x470] sm:$0xff]
        %v375 = vld [vmem:[%s187 + $0x478] sm:$0xff]
        %v376 = vld [vmem:[%s187 + $0x480] sm:$0xff]
        %v377 = vld [vmem:[%s187 + $0x488] sm:$0xff]
        %v378 = vld [vmem:[%s187 + $0x490] sm:$0xff]
        %v379 = vld [vmem:[%s187 + $0x498] sm:$0xff]
        %v380 = vld [vmem:[%s187 + $0x4a0] sm:$0xff]
        %v381 = vld [vmem:[%s187 + $0x4a8] sm:$0xff]
        %v382 = vld [vmem:[%s187 + $0x4b0] sm:$0xff]
        %v383 = vld [vmem:[%s187 + $0x4b8] sm:$0xff]
        %v384 = vld [vmem:[%s187 + $0x4c0] sm:$0xff]
        %v385 = vld [vmem:[%s187 + $0x4c8] sm:$0xff]
        %v386 = vld [vmem:[%s187 + $0x4d0] sm:$0xff]
        %v387 = vld [vmem:[%s187 + $0x4d8] sm:$0xff]
        %v388 = vld [vmem:[%s187 + $0x4e0] sm:$0xff]
        %v389 = vld [vmem:[%s187 + $0x4e8] sm:$0xff]
        %v390 = vld [vmem:[%s187 + $0x4f0] sm:$0xff]
        %v391 = vld [vmem:[%s187 + $0x4f8] sm:$0xff]
        %v392 = vld [vmem:[%s187 + $0x500] sm:$0xff]
        %v393 = vld [vmem:[%s187 + $0x508] sm:$0xff]
        %v394 = vld [vmem:[%s187 + $0x510] sm:$0xff]
        %v395 = vld [vmem:[%s187 + $0x518] sm:$0xff]
        %v396 = vld [vmem:[%s187 + $0x520] sm:$0xff]
        %v397 = vld [vmem:[%s187 + $0x528] sm:$0xff]
        %v398 = vld [vmem:[%s187 + $0x530] sm:$0xff]
        %v399 = vld [vmem:[%s187 + $0x538] sm:$0xff]
        %v400 = vld [vmem:[%s187 + $0x540] sm:$0xff]
        %v401 = vld [vmem:[%s187 + $0x548] sm:$0xff]
        %v402 = vld [vmem:[%s187 + $0x550] sm:$0xff]
        %v403 = vld [vmem:[%s187 + $0x558] sm:$0xff]
        %v404 = vld [vmem:[%s187 + $0x560] sm:$0xff]
        %v405 = vld [vmem:[%s187 + $0x568] sm:$0xff]
        %v406 = vld [vmem:[%s187 + $0x570] sm:$0xff]
        %v407 = vld [vmem:[%s187 + $0x578] sm:$0xff]
        %v408 = vld [vmem:[%s187 + $0x580] sm:$0xff]
        %v409 = vld [vmem:[%s187 + $0x588] sm:$0xff]
        %v410 = vld [vmem:[%s187 + $0x590] sm:$0xff]
        %v411 = vld [vmem:[%s187 + $0x598] sm:$0xff]
        %v412 = vld [vmem:[%s187 + $0x5a0] sm:$0xff]
        %v413 = vld [vmem:[%s187 + $0x5a8] sm:$0xff]
        %v414 = vld [vmem:[%s187 + $0x5b0] sm:$0xff]
        %v415 = vld [vmem:[%s187 + $0x5b8] sm:$0xff]
        %v416 = vld [vmem:[%s187 + $0x5c0] sm:$0xff]
        %v417 = vld [vmem:[%s187 + $0x5c8] sm:$0xff]
        %v418 = vld [vmem:[%s187 + $0x5d0] sm:$0xff]
        %v419 = vld [vmem:[%s187 + $0x5d8] sm:$0xff]
        %v420 = vld [vmem:[%s187 + $0x5e0] sm:$0xff]
        %v421 = vld [vmem:[%s187 + $0x5e8] sm:$0xff]
        %v422 = vld [vmem:[%s187 + $0x5f0] sm:$0xff]
        %v423 = vld [vmem:[%s187 + $0x5f8] sm:$0xff]
        %v424 = vld [vmem:[%s187 + $0x600] sm:$0xff]
        %v425 = vld [vmem:[%s187 + $0x608] sm:$0xff]
        %v426 = vld [vmem:[%s187 + $0x610] sm:$0xff]
        %v427 = vld [vmem:[%s187 + $0x618] sm:$0xff]
        %v428 = vld [vmem:[%s187 + $0x620] sm:$0xff]
        %v429 = vld [vmem:[%s187 + $0x628] sm:$0xff]
        %v430 = vld [vmem:[%s187 + $0x630] sm:$0xff]
        %v431 = vld [vmem:[%s187 + $0x638] sm:$0xff]
        %v432 = vld [vmem:[%s187 + $0x640] sm:$0xff]
        %v433 = vld [vmem:[%s187 + $0x648] sm:$0xff]
        %v434 = vld [vmem:[%s187 + $0x650] sm:$0xff]
        %v435 = vld [vmem:[%s187 + $0x658] sm:$0xff]
        %v436 = vld [vmem:[%s187 + $0x660] sm:$0xff]
        %v437 = vld [vmem:[%s187 + $0x668] sm:$0xff]
        %v438 = vld [vmem:[%s187 + $0x670] sm:$0xff]
        %v439 = vld [vmem:[%s187 + $0x678] sm:$0xff]
        %v440 = vld [vmem:[%s187 + $0x680] sm:$0xff]
        %v441 = vld [vmem:[%s187 + $0x688] sm:$0xff]
        %v442 = vld [vmem:[%s187 + $0x690] sm:$0xff]
        %v443 = vld [vmem:[%s187 + $0x698] sm:$0xff]
        %v444 = vld [vmem:[%s187 + $0x6a0] sm:$0xff]
        %v445 = vld [vmem:[%s187 + $0x6a8] sm:$0xff]
        %v446 = vld [vmem:[%s187 + $0x6b0] sm:$0xff]
        %v447 = vld [vmem:[%s187 + $0x6b8] sm:$0xff]
        %v448 = vld [vmem:[%s187 + $0x6c0] sm:$0xff]
        %v449 = vld [vmem:[%s187 + $0x6c8] sm:$0xff]
        %v450 = vld [vmem:[%s187 + $0x6d0] sm:$0xff]
        %v451 = vld [vmem:[%s187 + $0x6d8] sm:$0xff]
        %v452 = vld [vmem:[%s187 + $0x6e0] sm:$0xff]
        %v453 = vld [vmem:[%s187 + $0x6e8] sm:$0xff]
        %v454 = vld [vmem:[%s187 + $0x6f0] sm:$0xff]
        %v455 = vld [vmem:[%s187 + $0x6f8] sm:$0xff]
        %v456 = vld [vmem:[%s187 + $0x700] sm:$0xff]
        %v457 = vld [vmem:[%s187 + $0x708] sm:$0xff]
        %v458 = vld [vmem:[%s187 + $0x710] sm:$0xff]
        %v459 = vld [vmem:[%s187 + $0x718] sm:$0xff]
        %v460 = vld [vmem:[%s187 + $0x720] sm:$0xff]
        %v461 = vld [vmem:[%s187 + $0x728] sm:$0xff]
        %v462 = vld [vmem:[%s187 + $0x730] sm:$0xff]
        %v463 = vld [vmem:[%s187 + $0x738] sm:$0xff]
        %v464 = vld [vmem:[%s187 + $0x740] sm:$0xff]
        %v465 = vld [vmem:[%s187 + $0x748] sm:$0xff]
        %v466 = vld [vmem:[%s187 + $0x750] sm:$0xff]
        %v467 = vld [vmem:[%s187 + $0x758] sm:$0xff]
        %v468 = vld [vmem:[%s187 + $0x760] sm:$0xff]
        %v469 = vld [vmem:[%s187 + $0x768] sm:$0xff]
        %v470 = vld [vmem:[%s187 + $0x770] sm:$0xff]
        %v471 = vld [vmem:[%s187 + $0x778] sm:$0xff]
        %v472 = vld [vmem:[%s187 + $0x780] sm:$0xff]
        %v473 = vld [vmem:[%s187 + $0x788] sm:$0xff]
        %v474 = vld [vmem:[%s187 + $0x790] sm:$0xff]
        %v475 = vld [vmem:[%s187 + $0x798] sm:$0xff]
        %v476 = vld [vmem:[%s187 + $0x7a0] sm:$0xff]
        %v477 = vld [vmem:[%s187 + $0x7a8] sm:$0xff]
        %v478 = vld [vmem:[%s187 + $0x7b0] sm:$0xff]
        %v479 = vld [vmem:[%s187 + $0x7b8] sm:$0xff]
        %v480 = vld [vmem:[%s187 + $0x7c0] sm:$0xff]
        %v481 = vld [vmem:[%s187 + $0x7c8] sm:$0xff]
        %v482 = vld [vmem:[%s187 + $0x7d0] sm:$0xff]
        %v483 = vld [vmem:[%s187 + $0x7d8] sm:$0xff]
        %v484 = vld [vmem:[%s187 + $0x7e0] sm:$0xff]
        %v485 = vld [vmem:[%s187 + $0x7e8] sm:$0xff]
        %v486 = vld [vmem:[%s187 + $0x7f0] sm:$0xff]
        %v487 = vld [vmem:[%s187 + $0x7f8] sm:$0xff]
        %v488 = vld [vmem:[%s196] sm:$0xff]
        %v490 = vlaneseq
        %v491 = vshrl.u32 %v490, 7
        %v492 = vsub.s32 0, %v491
        %v493 = vrot.slane %v488, %v492
        %v494 = vlaneseq
        %v495 = vshrl.u32 %v494, 7
        %v496 = vsub.s32 1, %v495
        %v497 = vrot.slane %v488, %v496
        %v498 = vlaneseq
        %v499 = vshrl.u32 %v498, 7
        %v500 = vsub.s32 2, %v499
        %v501 = vrot.slane %v488, %v500
        %v502 = vlaneseq
        %v503 = vshrl.u32 %v502, 7
        %v504 = vsub.s32 3, %v503
        %v505 = vrot.slane %v488, %v504
        %v506 = vlaneseq
        %v507 = vshrl.u32 %v506, 7
        %v508 = vsub.s32 4, %v507
        %v509 = vrot.slane %v488, %v508
        %v510 = vlaneseq
        %v511 = vshrl.u32 %v510, 7
        %v512 = vsub.s32 5, %v511
        %v513 = vrot.slane %v488, %v512
        %v514 = vlaneseq
        %v515 = vshrl.u32 %v514, 7
        %v516 = vsub.s32 6, %v515
        %v517 = vrot.slane %v488, %v516
        %v518 = vlaneseq
        %v519 = vshrl.u32 %v518, 7
        %v520 = vsub.s32 7, %v519
        %v521 = vrot.slane %v488, %v520
        %v533 = vunpack.c.l.s4 1966171168
        %v534 = vunpack.c.0.s8 %v533
        %v535 = vlaneseq
        %v536 = vshrl.u32 %v535, 7
        %v537 = vsub.s32 %v534, %v536
        %v538 = vrot.slane %v230, %v537
        %v539 = vcombine.high %v538, %v538
        %v541 = vunpack.c.l.s4 1966171168
        %v542 = vunpack.c.0.s8 %v541
        %v543 = vlaneseq
        %v544 = vshrl.u32 %v543, 7
        %v545 = vsub.s32 %v542, %v544
        %v546 = vrot.slane %v538, %v545
        %v548 = vunpack.c.l.s4 1966171168
        %v549 = vunpack.c.0.s8 %v548
        %v550 = vlaneseq
        %v551 = vshrl.u32 %v550, 7
        %v552 = vsub.s32 %v549, %v551
        %v553 = vrot.slane %v539, %v552
        %v554 = vcombine.high %v546, %v546
        %v555 = vcombine.high %v553, %v553
        %v557 = vunpack.c.l.s4 1966171168
        %v558 = vunpack.c.0.s8 %v557
        %v559 = vlaneseq
        %v560 = vshrl.u32 %v559, 7
        %v561 = vsub.s32 %v558, %v560
        %v562 = vrot.slane %v231, %v561
        %v563 = vcombine.high %v562, %v562
        %v565 = vunpack.c.l.s4 1966171168
        %v566 = vunpack.c.0.s8 %v565
        %v567 = vlaneseq
        %v568 = vshrl.u32 %v567, 7
        %v569 = vsub.s32 %v566, %v568
        %v570 = vrot.slane %v562, %v569
        %v572 = vunpack.c.l.s4 1966171168
        %v573 = vunpack.c.0.s8 %v572
        %v574 = vlaneseq
        %v575 = vshrl.u32 %v574, 7
        %v576 = vsub.s32 %v573, %v575
        %v577 = vrot.slane %v563, %v576
        %v578 = vcombine.high %v570, %v570
        %v579 = vcombine.high %v577, %v577
        %v580 = vunpack.c.l.b16 %v546
        %v581 = vunpack.c.l.b16 %v553
        %v582 = vunpack.c.l.b16 %v554
        %v583 = vunpack.c.l.b16 %v555
        %v584 = vunpack.c.l.b16 %v570
        %v585 = vunpack.c.l.b16 %v577
        %v586 = vunpack.c.l.b16 %v578
        %v587 = vunpack.c.l.b16 %v579
        %v588 = vrot.slane %v584, 7
        %vm589 = vcmask 1041409
        %v590 = vsel %vm589, %v588, %v580
        %v591 = vrot.slane %v585, 7
        %v592 = vsel %vm589, %v591, %v581
        %v593 = vrot.slane %v586, 7
        %v594 = vsel %vm589, %v593, %v582
        %v595 = vrot.slane %v587, 7
        %v596 = vsel %vm589, %v595, %v583
        %v597 = vpack.c.b16 %v590, %v590
        %v598 = vpack.c.b16 %v592, %v592
        %v599 = vpack.c.b16 %v594, %v594
        %v600 = vpack.c.b16 %v596, %v596
        %v861 = vunpack.c.l.b16 %v232
        %v862 = vunpack.c.h.b16 %v232
        %v863 = vunpack.c.l.b16 %v233
        %v864 = vunpack.c.h.b16 %v233
        %v865 = vunpack.c.l.b16 %v234
        %v866 = vunpack.c.h.b16 %v234
        %v867 = vunpack.c.l.b16 %v235
        %v868 = vunpack.c.h.b16 %v235
        %v869 = vunpack.c.l.b16 %v236
        %v870 = vunpack.c.h.b16 %v236
        %v871 = vunpack.c.l.b16 %v237
        %v872 = vunpack.c.h.b16 %v237
        %v873 = vunpack.c.l.b16 %v238
        %v874 = vunpack.c.h.b16 %v238
        %v875 = vunpack.c.l.b16 %v239
        %v876 = vunpack.c.h.b16 %v239
        %v877 = vunpack.c.l.b16 %v240
        %v878 = vunpack.c.h.b16 %v240
        %v879 = vunpack.c.l.b16 %v241
        %v880 = vunpack.c.h.b16 %v241
        %v881 = vunpack.c.l.b16 %v242
        %v882 = vunpack.c.h.b16 %v242
        %v883 = vunpack.c.l.b16 %v243
        %v884 = vunpack.c.h.b16 %v243
        %v885 = vunpack.c.l.b16 %v244
        %v886 = vunpack.c.h.b16 %v244
        %v887 = vunpack.c.l.b16 %v245
        %v888 = vunpack.c.h.b16 %v245
        %v889 = vunpack.c.l.b16 %v246
        %v890 = vunpack.c.h.b16 %v246
        %v891 = vunpack.c.l.b16 %v247
        %v892 = vunpack.c.h.b16 %v247
        %v893 = vunpack.c.l.b16 %v248
        %v894 = vunpack.c.h.b16 %v248
        %v895 = vunpack.c.l.b16 %v249
        %v896 = vunpack.c.h.b16 %v249
        %v897 = vunpack.c.l.b16 %v250
        %v898 = vunpack.c.h.b16 %v250
        %v899 = vunpack.c.l.b16 %v251
        %v900 = vunpack.c.h.b16 %v251
        %v901 = vunpack.c.l.b16 %v252
        %v902 = vunpack.c.h.b16 %v252
        %v903 = vunpack.c.l.b16 %v253
        %v904 = vunpack.c.h.b16 %v253
        %v905 = vunpack.c.l.b16 %v254
        %v906 = vunpack.c.h.b16 %v254
        %v907 = vunpack.c.l.b16 %v255
        %v908 = vunpack.c.h.b16 %v255
        %v909 = vunpack.c.l.b16 %v256
        %v910 = vunpack.c.h.b16 %v256
        %v911 = vunpack.c.l.b16 %v257
        %v912 = vunpack.c.h.b16 %v257
        %v913 = vunpack.c.l.b16 %v258
        %v914 = vunpack.c.h.b16 %v258
        %v915 = vunpack.c.l.b16 %v259
        %v916 = vunpack.c.h.b16 %v259
        %v917 = vunpack.c.l.b16 %v260
        %v918 = vunpack.c.h.b16 %v260
        %v919 = vunpack.c.l.b16 %v261
        %v920 = vunpack.c.h.b16 %v261
        %v921 = vunpack.c.l.b16 %v262
        %v922 = vunpack.c.h.b16 %v262
        %v923 = vunpack.c.l.b16 %v263
        %v924 = vunpack.c.h.b16 %v263
        %v925 = vunpack.c.l.b16 %v264
        %v926 = vunpack.c.h.b16 %v264
        %v927 = vunpack.c.l.b16 %v265
        %v928 = vunpack.c.h.b16 %v265
        %v929 = vunpack.c.l.b16 %v266
        %v930 = vunpack.c.h.b16 %v266
        %v931 = vunpack.c.l.b16 %v267
        %v932 = vunpack.c.h.b16 %v267
        %v933 = vunpack.c.l.b16 %v268
        %v934 = vunpack.c.h.b16 %v268
        %v935 = vunpack.c.l.b16 %v269
        %v936 = vunpack.c.h.b16 %v269
        %v937 = vunpack.c.l.b16 %v270
        %v938 = vunpack.c.h.b16 %v270
        %v939 = vunpack.c.l.b16 %v271
        %v940 = vunpack.c.h.b16 %v271
        %v941 = vunpack.c.l.b16 %v272
        %v942 = vunpack.c.h.b16 %v272
        %v943 = vunpack.c.l.b16 %v273
        %v944 = vunpack.c.h.b16 %v273
        %v945 = vunpack.c.l.b16 %v274
        %v946 = vunpack.c.h.b16 %v274
        %v947 = vunpack.c.l.b16 %v275
        %v948 = vunpack.c.h.b16 %v275
        %v949 = vunpack.c.l.b16 %v276
        %v950 = vunpack.c.h.b16 %v276
        %v951 = vunpack.c.l.b16 %v277
        %v952 = vunpack.c.h.b16 %v277
        %v953 = vunpack.c.l.b16 %v278
        %v954 = vunpack.c.h.b16 %v278
        %v955 = vunpack.c.l.b16 %v279
        %v956 = vunpack.c.h.b16 %v279
        %v957 = vunpack.c.l.b16 %v280
        %v958 = vunpack.c.h.b16 %v280
        %v959 = vunpack.c.l.b16 %v281
        %v960 = vunpack.c.h.b16 %v281
        %v961 = vunpack.c.l.b16 %v282
        %v962 = vunpack.c.h.b16 %v282
        %v963 = vunpack.c.l.b16 %v283
        %v964 = vunpack.c.h.b16 %v283
        %v965 = vunpack.c.l.b16 %v284
        %v966 = vunpack.c.h.b16 %v284
        %v967 = vunpack.c.l.b16 %v285
        %v968 = vunpack.c.h.b16 %v285
        %v969 = vunpack.c.l.b16 %v286
        %v970 = vunpack.c.h.b16 %v286
        %v971 = vunpack.c.l.b16 %v287
        %v972 = vunpack.c.h.b16 %v287
        %v973 = vunpack.c.l.b16 %v288
        %v974 = vunpack.c.h.b16 %v288
        %v975 = vunpack.c.l.b16 %v289
        %v976 = vunpack.c.h.b16 %v289
        %v977 = vunpack.c.l.b16 %v290
        %v978 = vunpack.c.h.b16 %v290
        %v979 = vunpack.c.l.b16 %v291
        %v980 = vunpack.c.h.b16 %v291
        %v981 = vunpack.c.l.b16 %v292
        %v982 = vunpack.c.h.b16 %v292
        %v983 = vunpack.c.l.b16 %v293
        %v984 = vunpack.c.h.b16 %v293
        %v985 = vunpack.c.l.b16 %v294
        %v986 = vunpack.c.h.b16 %v294
        %v987 = vunpack.c.l.b16 %v295
        %v988 = vunpack.c.h.b16 %v295
        %v989 = vunpack.c.l.b16 %v296
        %v990 = vunpack.c.h.b16 %v296
        %v991 = vunpack.c.l.b16 %v297
        %v992 = vunpack.c.h.b16 %v297
        %v993 = vunpack.c.l.b16 %v298
        %v994 = vunpack.c.h.b16 %v298
        %v995 = vunpack.c.l.b16 %v299
        %v996 = vunpack.c.h.b16 %v299
        %v997 = vunpack.c.l.b16 %v300
        %v998 = vunpack.c.h.b16 %v300
        %v999 = vunpack.c.l.b16 %v301
        %v1000 = vunpack.c.h.b16 %v301
        %v1001 = vunpack.c.l.b16 %v302
        %v1002 = vunpack.c.h.b16 %v302
        %v1003 = vunpack.c.l.b16 %v303
        %v1004 = vunpack.c.h.b16 %v303
        %v1005 = vunpack.c.l.b16 %v304
        %v1006 = vunpack.c.h.b16 %v304
        %v1007 = vunpack.c.l.b16 %v305
        %v1008 = vunpack.c.h.b16 %v305
        %v1009 = vunpack.c.l.b16 %v306
        %v1010 = vunpack.c.h.b16 %v306
        %v1011 = vunpack.c.l.b16 %v307
        %v1012 = vunpack.c.h.b16 %v307
        %v1013 = vunpack.c.l.b16 %v308
        %v1014 = vunpack.c.h.b16 %v308
        %v1015 = vunpack.c.l.b16 %v309
        %v1016 = vunpack.c.h.b16 %v309
        %v1017 = vunpack.c.l.b16 %v310
        %v1018 = vunpack.c.h.b16 %v310
        %v1019 = vunpack.c.l.b16 %v311
        %v1020 = vunpack.c.h.b16 %v311
        %v1021 = vunpack.c.l.b16 %v312
        %v1022 = vunpack.c.h.b16 %v312
        %v1023 = vunpack.c.l.b16 %v313
        %v1024 = vunpack.c.h.b16 %v313
        %v1025 = vunpack.c.l.b16 %v314
        %v1026 = vunpack.c.h.b16 %v314
        %v1027 = vunpack.c.l.b16 %v315
        %v1028 = vunpack.c.h.b16 %v315
        %v1029 = vunpack.c.l.b16 %v316
        %v1030 = vunpack.c.h.b16 %v316
        %v1031 = vunpack.c.l.b16 %v317
        %v1032 = vunpack.c.h.b16 %v317
        %v1033 = vunpack.c.l.b16 %v318
        %v1034 = vunpack.c.h.b16 %v318
        %v1035 = vunpack.c.l.b16 %v319
        %v1036 = vunpack.c.h.b16 %v319
        %v1037 = vunpack.c.l.b16 %v320
        %v1038 = vunpack.c.h.b16 %v320
        %v1039 = vunpack.c.l.b16 %v321
        %v1040 = vunpack.c.h.b16 %v321
        %v1041 = vunpack.c.l.b16 %v322
        %v1042 = vunpack.c.h.b16 %v322
        %v1043 = vunpack.c.l.b16 %v323
        %v1044 = vunpack.c.h.b16 %v323
        %v1045 = vunpack.c.l.b16 %v324
        %v1046 = vunpack.c.h.b16 %v324
        %v1047 = vunpack.c.l.b16 %v325
        %v1048 = vunpack.c.h.b16 %v325
        %v1049 = vunpack.c.l.b16 %v326
        %v1050 = vunpack.c.h.b16 %v326
        %v1051 = vunpack.c.l.b16 %v327
        %v1052 = vunpack.c.h.b16 %v327
        %v1053 = vunpack.c.l.b16 %v328
        %v1054 = vunpack.c.h.b16 %v328
        %v1055 = vunpack.c.l.b16 %v329
        %v1056 = vunpack.c.h.b16 %v329
        %v1057 = vunpack.c.l.b16 %v330
        %v1058 = vunpack.c.h.b16 %v330
        %v1059 = vunpack.c.l.b16 %v331
        %v1060 = vunpack.c.h.b16 %v331
        %v1061 = vunpack.c.l.b16 %v332
        %v1062 = vunpack.c.h.b16 %v332
        %v1063 = vunpack.c.l.b16 %v333
        %v1064 = vunpack.c.h.b16 %v333
        %v1065 = vunpack.c.l.b16 %v334
        %v1066 = vunpack.c.h.b16 %v334
        %v1067 = vunpack.c.l.b16 %v335
        %v1068 = vunpack.c.h.b16 %v335
        %v1069 = vunpack.c.l.b16 %v336
        %v1070 = vunpack.c.h.b16 %v336
        %v1071 = vunpack.c.l.b16 %v337
        %v1072 = vunpack.c.h.b16 %v337
        %v1073 = vunpack.c.l.b16 %v338
        %v1074 = vunpack.c.h.b16 %v338
        %v1075 = vunpack.c.l.b16 %v339
        %v1076 = vunpack.c.h.b16 %v339
        %v1077 = vunpack.c.l.b16 %v340
        %v1078 = vunpack.c.h.b16 %v340
        %v1079 = vunpack.c.l.b16 %v341
        %v1080 = vunpack.c.h.b16 %v341
        %v1081 = vunpack.c.l.b16 %v342
        %v1082 = vunpack.c.h.b16 %v342
        %v1083 = vunpack.c.l.b16 %v343
        %v1084 = vunpack.c.h.b16 %v343
        %v1085 = vunpack.c.l.b16 %v344
        %v1086 = vunpack.c.h.b16 %v344
        %v1087 = vunpack.c.l.b16 %v345
        %v1088 = vunpack.c.h.b16 %v345
        %v1089 = vunpack.c.l.b16 %v346
        %v1090 = vunpack.c.h.b16 %v346
        %v1091 = vunpack.c.l.b16 %v347
        %v1092 = vunpack.c.h.b16 %v347
        %v1093 = vunpack.c.l.b16 %v348
        %v1094 = vunpack.c.h.b16 %v348
        %v1095 = vunpack.c.l.b16 %v349
        %v1096 = vunpack.c.h.b16 %v349
        %v1097 = vunpack.c.l.b16 %v350
        %v1098 = vunpack.c.h.b16 %v350
        %v1099 = vunpack.c.l.b16 %v351
        %v1100 = vunpack.c.h.b16 %v351
        %v1101 = vunpack.c.l.b16 %v352
        %v1102 = vunpack.c.h.b16 %v352
        %v1103 = vunpack.c.l.b16 %v353
        %v1104 = vunpack.c.h.b16 %v353
        %v1105 = vunpack.c.l.b16 %v354
        %v1106 = vunpack.c.h.b16 %v354
        %v1107 = vunpack.c.l.b16 %v355
        %v1108 = vunpack.c.h.b16 %v355
        %v1109 = vunpack.c.l.b16 %v356
        %v1110 = vunpack.c.h.b16 %v356
        %v1111 = vunpack.c.l.b16 %v357
        %v1112 = vunpack.c.h.b16 %v357
        %v1113 = vunpack.c.l.b16 %v358
        %v1114 = vunpack.c.h.b16 %v358
        %v1115 = vunpack.c.l.b16 %v359
        %v1116 = vunpack.c.h.b16 %v359
        %v1117 = vunpack.c.l.b16 %v360
        %v1118 = vunpack.c.h.b16 %v360
        %v1119 = vunpack.c.l.b16 %v361
        %v1120 = vunpack.c.h.b16 %v361
        %v1121 = vunpack.c.l.b16 %v362
        %v1122 = vunpack.c.h.b16 %v362
        %v1123 = vunpack.c.l.b16 %v363
        %v1124 = vunpack.c.h.b16 %v363
        %v1125 = vunpack.c.l.b16 %v364
        %v1126 = vunpack.c.h.b16 %v364
        %v1127 = vunpack.c.l.b16 %v365
        %v1128 = vunpack.c.h.b16 %v365
        %v1129 = vunpack.c.l.b16 %v366
        %v1130 = vunpack.c.h.b16 %v366
        %v1131 = vunpack.c.l.b16 %v367
        %v1132 = vunpack.c.h.b16 %v367
        %v1133 = vunpack.c.l.b16 %v368
        %v1134 = vunpack.c.h.b16 %v368
        %v1135 = vunpack.c.l.b16 %v369
        %v1136 = vunpack.c.h.b16 %v369
        %v1137 = vunpack.c.l.b16 %v370
        %v1138 = vunpack.c.h.b16 %v370
        %v1139 = vunpack.c.l.b16 %v371
        %v1140 = vunpack.c.h.b16 %v371
        %v1141 = vunpack.c.l.b16 %v372
        %v1142 = vunpack.c.h.b16 %v372
        %v1143 = vunpack.c.l.b16 %v373
        %v1144 = vunpack.c.h.b16 %v373
        %v1145 = vunpack.c.l.b16 %v374
        %v1146 = vunpack.c.h.b16 %v374
        %v1147 = vunpack.c.l.b16 %v375
        %v1148 = vunpack.c.h.b16 %v375
        %v1149 = vunpack.c.l.b16 %v376
        %v1150 = vunpack.c.h.b16 %v376
        %v1151 = vunpack.c.l.b16 %v377
        %v1152 = vunpack.c.h.b16 %v377
        %v1153 = vunpack.c.l.b16 %v378
        %v1154 = vunpack.c.h.b16 %v378
        %v1155 = vunpack.c.l.b16 %v379
        %v1156 = vunpack.c.h.b16 %v379
        %v1157 = vunpack.c.l.b16 %v380
        %v1158 = vunpack.c.h.b16 %v380
        %v1159 = vunpack.c.l.b16 %v381
        %v1160 = vunpack.c.h.b16 %v381
        %v1161 = vunpack.c.l.b16 %v382
        %v1162 = vunpack.c.h.b16 %v382
        %v1163 = vunpack.c.l.b16 %v383
        %v1164 = vunpack.c.h.b16 %v383
        %v1165 = vunpack.c.l.b16 %v384
        %v1166 = vunpack.c.h.b16 %v384
        %v1167 = vunpack.c.l.b16 %v385
        %v1168 = vunpack.c.h.b16 %v385
        %v1169 = vunpack.c.l.b16 %v386
        %v1170 = vunpack.c.h.b16 %v386
        %v1171 = vunpack.c.l.b16 %v387
        %v1172 = vunpack.c.h.b16 %v387
        %v1173 = vunpack.c.l.b16 %v388
        %v1174 = vunpack.c.h.b16 %v388
        %v1175 = vunpack.c.l.b16 %v389
        %v1176 = vunpack.c.h.b16 %v389
        %v1177 = vunpack.c.l.b16 %v390
        %v1178 = vunpack.c.h.b16 %v390
        %v1179 = vunpack.c.l.b16 %v391
        %v1180 = vunpack.c.h.b16 %v391
        %v1181 = vunpack.c.l.b16 %v392
        %v1182 = vunpack.c.h.b16 %v392
        %v1183 = vunpack.c.l.b16 %v393
        %v1184 = vunpack.c.h.b16 %v393
        %v1185 = vunpack.c.l.b16 %v394
        %v1186 = vunpack.c.h.b16 %v394
        %v1187 = vunpack.c.l.b16 %v395
        %v1188 = vunpack.c.h.b16 %v395
        %v1189 = vunpack.c.l.b16 %v396
        %v1190 = vunpack.c.h.b16 %v396
        %v1191 = vunpack.c.l.b16 %v397
        %v1192 = vunpack.c.h.b16 %v397
        %v1193 = vunpack.c.l.b16 %v398
        %v1194 = vunpack.c.h.b16 %v398
        %v1195 = vunpack.c.l.b16 %v399
        %v1196 = vunpack.c.h.b16 %v399
        %v1197 = vunpack.c.l.b16 %v400
        %v1198 = vunpack.c.h.b16 %v400
        %v1199 = vunpack.c.l.b16 %v401
        %v1200 = vunpack.c.h.b16 %v401
        %v1201 = vunpack.c.l.b16 %v402
        %v1202 = vunpack.c.h.b16 %v402
        %v1203 = vunpack.c.l.b16 %v403
        %v1204 = vunpack.c.h.b16 %v403
        %v1205 = vunpack.c.l.b16 %v404
        %v1206 = vunpack.c.h.b16 %v404
        %v1207 = vunpack.c.l.b16 %v405
        %v1208 = vunpack.c.h.b16 %v405
        %v1209 = vunpack.c.l.b16 %v406
        %v1210 = vunpack.c.h.b16 %v406
        %v1211 = vunpack.c.l.b16 %v407
        %v1212 = vunpack.c.h.b16 %v407
        %v1213 = vunpack.c.l.b16 %v408
        %v1214 = vunpack.c.h.b16 %v408
        %v1215 = vunpack.c.l.b16 %v409
        %v1216 = vunpack.c.h.b16 %v409
        %v1217 = vunpack.c.l.b16 %v410
        %v1218 = vunpack.c.h.b16 %v410
        %v1219 = vunpack.c.l.b16 %v411
        %v1220 = vunpack.c.h.b16 %v411
        %v1221 = vunpack.c.l.b16 %v412
        %v1222 = vunpack.c.h.b16 %v412
        %v1223 = vunpack.c.l.b16 %v413
        %v1224 = vunpack.c.h.b16 %v413
        %v1225 = vunpack.c.l.b16 %v414
        %v1226 = vunpack.c.h.b16 %v414
        %v1227 = vunpack.c.l.b16 %v415
        %v1228 = vunpack.c.h.b16 %v415
        %v1229 = vunpack.c.l.b16 %v416
        %v1230 = vunpack.c.h.b16 %v416
        %v1231 = vunpack.c.l.b16 %v417
        %v1232 = vunpack.c.h.b16 %v417
        %v1233 = vunpack.c.l.b16 %v418
        %v1234 = vunpack.c.h.b16 %v418
        %v1235 = vunpack.c.l.b16 %v419
        %v1236 = vunpack.c.h.b16 %v419
        %v1237 = vunpack.c.l.b16 %v420
        %v1238 = vunpack.c.h.b16 %v420
        %v1239 = vunpack.c.l.b16 %v421
        %v1240 = vunpack.c.h.b16 %v421
        %v1241 = vunpack.c.l.b16 %v422
        %v1242 = vunpack.c.h.b16 %v422
        %v1243 = vunpack.c.l.b16 %v423
        %v1244 = vunpack.c.h.b16 %v423
        %v1245 = vunpack.c.l.b16 %v424
        %v1246 = vunpack.c.h.b16 %v424
        %v1247 = vunpack.c.l.b16 %v425
        %v1248 = vunpack.c.h.b16 %v425
        %v1249 = vunpack.c.l.b16 %v426
        %v1250 = vunpack.c.h.b16 %v426
        %v1251 = vunpack.c.l.b16 %v427
        %v1252 = vunpack.c.h.b16 %v427
        %v1253 = vunpack.c.l.b16 %v428
        %v1254 = vunpack.c.h.b16 %v428
        %v1255 = vunpack.c.l.b16 %v429
        %v1256 = vunpack.c.h.b16 %v429
        %v1257 = vunpack.c.l.b16 %v430
        %v1258 = vunpack.c.h.b16 %v430
        %v1259 = vunpack.c.l.b16 %v431
        %v1260 = vunpack.c.h.b16 %v431
        %v1261 = vunpack.c.l.b16 %v432
        %v1262 = vunpack.c.h.b16 %v432
        %v1263 = vunpack.c.l.b16 %v433
        %v1264 = vunpack.c.h.b16 %v433
        %v1265 = vunpack.c.l.b16 %v434
        %v1266 = vunpack.c.h.b16 %v434
        %v1267 = vunpack.c.l.b16 %v435
        %v1268 = vunpack.c.h.b16 %v435
        %v1269 = vunpack.c.l.b16 %v436
        %v1270 = vunpack.c.h.b16 %v436
        %v1271 = vunpack.c.l.b16 %v437
        %v1272 = vunpack.c.h.b16 %v437
        %v1273 = vunpack.c.l.b16 %v438
        %v1274 = vunpack.c.h.b16 %v438
        %v1275 = vunpack.c.l.b16 %v439
        %v1276 = vunpack.c.h.b16 %v439
        %v1277 = vunpack.c.l.b16 %v440
        %v1278 = vunpack.c.h.b16 %v440
        %v1279 = vunpack.c.l.b16 %v441
        %v1280 = vunpack.c.h.b16 %v441
        %v1281 = vunpack.c.l.b16 %v442
        %v1282 = vunpack.c.h.b16 %v442
        %v1283 = vunpack.c.l.b16 %v443
        %v1284 = vunpack.c.h.b16 %v443
        %v1285 = vunpack.c.l.b16 %v444
        %v1286 = vunpack.c.h.b16 %v444
        %v1287 = vunpack.c.l.b16 %v445
        %v1288 = vunpack.c.h.b16 %v445
        %v1289 = vunpack.c.l.b16 %v446
        %v1290 = vunpack.c.h.b16 %v446
        %v1291 = vunpack.c.l.b16 %v447
        %v1292 = vunpack.c.h.b16 %v447
        %v1293 = vunpack.c.l.b16 %v448
        %v1294 = vunpack.c.h.b16 %v448
        %v1295 = vunpack.c.l.b16 %v449
        %v1296 = vunpack.c.h.b16 %v449
        %v1297 = vunpack.c.l.b16 %v450
        %v1298 = vunpack.c.h.b16 %v450
        %v1299 = vunpack.c.l.b16 %v451
        %v1300 = vunpack.c.h.b16 %v451
        %v1301 = vunpack.c.l.b16 %v452
        %v1302 = vunpack.c.h.b16 %v452
        %v1303 = vunpack.c.l.b16 %v453
        %v1304 = vunpack.c.h.b16 %v453
        %v1305 = vunpack.c.l.b16 %v454
        %v1306 = vunpack.c.h.b16 %v454
        %v1307 = vunpack.c.l.b16 %v455
        %v1308 = vunpack.c.h.b16 %v455
        %v1309 = vunpack.c.l.b16 %v456
        %v1310 = vunpack.c.h.b16 %v456
        %v1311 = vunpack.c.l.b16 %v457
        %v1312 = vunpack.c.h.b16 %v457
        %v1313 = vunpack.c.l.b16 %v458
        %v1314 = vunpack.c.h.b16 %v458
        %v1315 = vunpack.c.l.b16 %v459
        %v1316 = vunpack.c.h.b16 %v459
        %v1317 = vunpack.c.l.b16 %v460
        %v1318 = vunpack.c.h.b16 %v460
        %v1319 = vunpack.c.l.b16 %v461
        %v1320 = vunpack.c.h.b16 %v461
        %v1321 = vunpack.c.l.b16 %v462
        %v1322 = vunpack.c.h.b16 %v462
        %v1323 = vunpack.c.l.b16 %v463
        %v1324 = vunpack.c.h.b16 %v463
        %v1325 = vunpack.c.l.b16 %v464
        %v1326 = vunpack.c.h.b16 %v464
        %v1327 = vunpack.c.l.b16 %v465
        %v1328 = vunpack.c.h.b16 %v465
        %v1329 = vunpack.c.l.b16 %v466
        %v1330 = vunpack.c.h.b16 %v466
        %v1331 = vunpack.c.l.b16 %v467
        %v1332 = vunpack.c.h.b16 %v467
        %v1333 = vunpack.c.l.b16 %v468
        %v1334 = vunpack.c.h.b16 %v468
        %v1335 = vunpack.c.l.b16 %v469
        %v1336 = vunpack.c.h.b16 %v469
        %v1337 = vunpack.c.l.b16 %v470
        %v1338 = vunpack.c.h.b16 %v470
        %v1339 = vunpack.c.l.b16 %v471
        %v1340 = vunpack.c.h.b16 %v471
        %v1341 = vunpack.c.l.b16 %v472
        %v1342 = vunpack.c.h.b16 %v472
        %v1343 = vunpack.c.l.b16 %v473
        %v1344 = vunpack.c.h.b16 %v473
        %v1345 = vunpack.c.l.b16 %v474
        %v1346 = vunpack.c.h.b16 %v474
        %v1347 = vunpack.c.l.b16 %v475
        %v1348 = vunpack.c.h.b16 %v475
        %v1349 = vunpack.c.l.b16 %v476
        %v1350 = vunpack.c.h.b16 %v476
        %v1351 = vunpack.c.l.b16 %v477
        %v1352 = vunpack.c.h.b16 %v477
        %v1353 = vunpack.c.l.b16 %v478
        %v1354 = vunpack.c.h.b16 %v478
        %v1355 = vunpack.c.l.b16 %v479
        %v1356 = vunpack.c.h.b16 %v479
        %v1357 = vunpack.c.l.b16 %v480
        %v1358 = vunpack.c.h.b16 %v480
        %v1359 = vunpack.c.l.b16 %v481
        %v1360 = vunpack.c.h.b16 %v481
        %v1361 = vunpack.c.l.b16 %v482
        %v1362 = vunpack.c.h.b16 %v482
        %v1363 = vunpack.c.l.b16 %v483
        %v1364 = vunpack.c.h.b16 %v483
        %v1365 = vunpack.c.l.b16 %v484
        %v1366 = vunpack.c.h.b16 %v484
        %v1367 = vunpack.c.l.b16 %v485
        %v1368 = vunpack.c.h.b16 %v485
        %v1369 = vunpack.c.l.b16 %v486
        %v1370 = vunpack.c.h.b16 %v486
        %v1371 = vunpack.c.l.b16 %v487
        %v1372 = vunpack.c.h.b16 %v487
        %v1373 = vpack.c.b16 %v869, %v861
        %v1374 = vpack.c.b16 %v870, %v862
        %v1375 = vpack.c.b16 %v871, %v863
        %v1376 = vpack.c.b16 %v872, %v864
        %v1377 = vpack.c.b16 %v873, %v865
        %v1378 = vpack.c.b16 %v874, %v866
        %v1379 = vpack.c.b16 %v875, %v867
        %v1380 = vpack.c.b16 %v876, %v868
        %v1381 = vpack.c.b16 %v885, %v877
        %v1382 = vpack.c.b16 %v886, %v878
        %v1383 = vpack.c.b16 %v887, %v879
        %v1384 = vpack.c.b16 %v888, %v880
        %v1385 = vpack.c.b16 %v889, %v881
        %v1386 = vpack.c.b16 %v890, %v882
        %v1387 = vpack.c.b16 %v891, %v883
        %v1388 = vpack.c.b16 %v892, %v884
        %v1389 = vpack.c.b16 %v901, %v893
        %v1390 = vpack.c.b16 %v902, %v894
        %v1391 = vpack.c.b16 %v903, %v895
        %v1392 = vpack.c.b16 %v904, %v896
        %v1393 = vpack.c.b16 %v905, %v897
        %v1394 = vpack.c.b16 %v906, %v898
        %v1395 = vpack.c.b16 %v907, %v899
        %v1396 = vpack.c.b16 %v908, %v900
        %v1397 = vpack.c.b16 %v917, %v909
        %v1398 = vpack.c.b16 %v918, %v910
        %v1399 = vpack.c.b16 %v919, %v911
        %v1400 = vpack.c.b16 %v920, %v912
        %v1401 = vpack.c.b16 %v921, %v913
        %v1402 = vpack.c.b16 %v922, %v914
        %v1403 = vpack.c.b16 %v923, %v915
        %v1404 = vpack.c.b16 %v924, %v916
        %v1405 = vpack.c.b16 %v933, %v925
        %v1406 = vpack.c.b16 %v934, %v926
        %v1407 = vpack.c.b16 %v935, %v927
        %v1408 = vpack.c.b16 %v936, %v928
        %v1409 = vpack.c.b16 %v937, %v929
        %v1410 = vpack.c.b16 %v938, %v930
        %v1411 = vpack.c.b16 %v939, %v931
        %v1412 = vpack.c.b16 %v940, %v932
        %v1413 = vpack.c.b16 %v949, %v941
        %v1414 = vpack.c.b16 %v950, %v942
        %v1415 = vpack.c.b16 %v951, %v943
        %v1416 = vpack.c.b16 %v952, %v944
        %v1417 = vpack.c.b16 %v953, %v945
        %v1418 = vpack.c.b16 %v954, %v946
        %v1419 = vpack.c.b16 %v955, %v947
        %v1420 = vpack.c.b16 %v956, %v948
        %v1421 = vpack.c.b16 %v965, %v957
        %v1422 = vpack.c.b16 %v966, %v958
        %v1423 = vpack.c.b16 %v967, %v959
        %v1424 = vpack.c.b16 %v968, %v960
        %v1425 = vpack.c.b16 %v969, %v961
        %v1426 = vpack.c.b16 %v970, %v962
        %v1427 = vpack.c.b16 %v971, %v963
        %v1428 = vpack.c.b16 %v972, %v964
        %v1429 = vpack.c.b16 %v981, %v973
        %v1430 = vpack.c.b16 %v982, %v974
        %v1431 = vpack.c.b16 %v983, %v975
        %v1432 = vpack.c.b16 %v984, %v976
        %v1433 = vpack.c.b16 %v985, %v977
        %v1434 = vpack.c.b16 %v986, %v978
        %v1435 = vpack.c.b16 %v987, %v979
        %v1436 = vpack.c.b16 %v988, %v980
        %v1437 = vpack.c.b16 %v997, %v989
        %v1438 = vpack.c.b16 %v998, %v990
        %v1439 = vpack.c.b16 %v999, %v991
        %v1440 = vpack.c.b16 %v1000, %v992
        %v1441 = vpack.c.b16 %v1001, %v993
        %v1442 = vpack.c.b16 %v1002, %v994
        %v1443 = vpack.c.b16 %v1003, %v995
        %v1444 = vpack.c.b16 %v1004, %v996
        %v1445 = vpack.c.b16 %v1013, %v1005
        %v1446 = vpack.c.b16 %v1014, %v1006
        %v1447 = vpack.c.b16 %v1015, %v1007
        %v1448 = vpack.c.b16 %v1016, %v1008
        %v1449 = vpack.c.b16 %v1017, %v1009
        %v1450 = vpack.c.b16 %v1018, %v1010
        %v1451 = vpack.c.b16 %v1019, %v1011
        %v1452 = vpack.c.b16 %v1020, %v1012
        %v1453 = vpack.c.b16 %v1029, %v1021
        %v1454 = vpack.c.b16 %v1030, %v1022
        %v1455 = vpack.c.b16 %v1031, %v1023
        %v1456 = vpack.c.b16 %v1032, %v1024
        %v1457 = vpack.c.b16 %v1033, %v1025
        %v1458 = vpack.c.b16 %v1034, %v1026
        %v1459 = vpack.c.b16 %v1035, %v1027
        %v1460 = vpack.c.b16 %v1036, %v1028
        %v1461 = vpack.c.b16 %v1045, %v1037
        %v1462 = vpack.c.b16 %v1046, %v1038
        %v1463 = vpack.c.b16 %v1047, %v1039
        %v1464 = vpack.c.b16 %v1048, %v1040
        %v1465 = vpack.c.b16 %v1049, %v1041
        %v1466 = vpack.c.b16 %v1050, %v1042
        %v1467 = vpack.c.b16 %v1051, %v1043
        %v1468 = vpack.c.b16 %v1052, %v1044
        %v1469 = vpack.c.b16 %v1061, %v1053
        %v1470 = vpack.c.b16 %v1062, %v1054
        %v1471 = vpack.c.b16 %v1063, %v1055
        %v1472 = vpack.c.b16 %v1064, %v1056
        %v1473 = vpack.c.b16 %v1065, %v1057
        %v1474 = vpack.c.b16 %v1066, %v1058
        %v1475 = vpack.c.b16 %v1067, %v1059
        %v1476 = vpack.c.b16 %v1068, %v1060
        %v1477 = vpack.c.b16 %v1077, %v1069
        %v1478 = vpack.c.b16 %v1078, %v1070
        %v1479 = vpack.c.b16 %v1079, %v1071
        %v1480 = vpack.c.b16 %v1080, %v1072
        %v1481 = vpack.c.b16 %v1081, %v1073
        %v1482 = vpack.c.b16 %v1082, %v1074
        %v1483 = vpack.c.b16 %v1083, %v1075
        %v1484 = vpack.c.b16 %v1084, %v1076
        %v1485 = vpack.c.b16 %v1093, %v1085
        %v1486 = vpack.c.b16 %v1094, %v1086
        %v1487 = vpack.c.b16 %v1095, %v1087
        %v1488 = vpack.c.b16 %v1096, %v1088
        %v1489 = vpack.c.b16 %v1097, %v1089
        %v1490 = vpack.c.b16 %v1098, %v1090
        %v1491 = vpack.c.b16 %v1099, %v1091
        %v1492 = vpack.c.b16 %v1100, %v1092
        %v1493 = vpack.c.b16 %v1109, %v1101
        %v1494 = vpack.c.b16 %v1110, %v1102
        %v1495 = vpack.c.b16 %v1111, %v1103
        %v1496 = vpack.c.b16 %v1112, %v1104
        %v1497 = vpack.c.b16 %v1113, %v1105
        %v1498 = vpack.c.b16 %v1114, %v1106
        %v1499 = vpack.c.b16 %v1115, %v1107
        %v1500 = vpack.c.b16 %v1116, %v1108
        %v1501 = vpack.c.b16 %v1125, %v1117
        %v1502 = vpack.c.b16 %v1126, %v1118
        %v1503 = vpack.c.b16 %v1127, %v1119
        %v1504 = vpack.c.b16 %v1128, %v1120
        %v1505 = vpack.c.b16 %v1129, %v1121
        %v1506 = vpack.c.b16 %v1130, %v1122
        %v1507 = vpack.c.b16 %v1131, %v1123
        %v1508 = vpack.c.b16 %v1132, %v1124
        %v1509 = vpack.c.b16 %v1141, %v1133
        %v1510 = vpack.c.b16 %v1142, %v1134
        %v1511 = vpack.c.b16 %v1143, %v1135
        %v1512 = vpack.c.b16 %v1144, %v1136
        %v1513 = vpack.c.b16 %v1145, %v1137
        %v1514 = vpack.c.b16 %v1146, %v1138
        %v1515 = vpack.c.b16 %v1147, %v1139
        %v1516 = vpack.c.b16 %v1148, %v1140
        %v1517 = vpack.c.b16 %v1157, %v1149
        %v1518 = vpack.c.b16 %v1158, %v1150
        %v1519 = vpack.c.b16 %v1159, %v1151
        %v1520 = vpack.c.b16 %v1160, %v1152
        %v1521 = vpack.c.b16 %v1161, %v1153
        %v1522 = vpack.c.b16 %v1162, %v1154
        %v1523 = vpack.c.b16 %v1163, %v1155
        %v1524 = vpack.c.b16 %v1164, %v1156
        %v1525 = vpack.c.b16 %v1173, %v1165
        %v1526 = vpack.c.b16 %v1174, %v1166
        %v1527 = vpack.c.b16 %v1175, %v1167
        %v1528 = vpack.c.b16 %v1176, %v1168
        %v1529 = vpack.c.b16 %v1177, %v1169
        %v1530 = vpack.c.b16 %v1178, %v1170
        %v1531 = vpack.c.b16 %v1179, %v1171
        %v1532 = vpack.c.b16 %v1180, %v1172
        %v1533 = vpack.c.b16 %v1189, %v1181
        %v1534 = vpack.c.b16 %v1190, %v1182
        %v1535 = vpack.c.b16 %v1191, %v1183
        %v1536 = vpack.c.b16 %v1192, %v1184
        %v1537 = vpack.c.b16 %v1193, %v1185
        %v1538 = vpack.c.b16 %v1194, %v1186
        %v1539 = vpack.c.b16 %v1195, %v1187
        %v1540 = vpack.c.b16 %v1196, %v1188
        %v1541 = vpack.c.b16 %v1205, %v1197
        %v1542 = vpack.c.b16 %v1206, %v1198
        %v1543 = vpack.c.b16 %v1207, %v1199
        %v1544 = vpack.c.b16 %v1208, %v1200
        %v1545 = vpack.c.b16 %v1209, %v1201
        %v1546 = vpack.c.b16 %v1210, %v1202
        %v1547 = vpack.c.b16 %v1211, %v1203
        %v1548 = vpack.c.b16 %v1212, %v1204
        %v1549 = vpack.c.b16 %v1221, %v1213
        %v1550 = vpack.c.b16 %v1222, %v1214
        %v1551 = vpack.c.b16 %v1223, %v1215
        %v1552 = vpack.c.b16 %v1224, %v1216
        %v1553 = vpack.c.b16 %v1225, %v1217
        %v1554 = vpack.c.b16 %v1226, %v1218
        %v1555 = vpack.c.b16 %v1227, %v1219
        %v1556 = vpack.c.b16 %v1228, %v1220
        %v1557 = vpack.c.b16 %v1237, %v1229
        %v1558 = vpack.c.b16 %v1238, %v1230
        %v1559 = vpack.c.b16 %v1239, %v1231
        %v1560 = vpack.c.b16 %v1240, %v1232
        %v1561 = vpack.c.b16 %v1241, %v1233
        %v1562 = vpack.c.b16 %v1242, %v1234
        %v1563 = vpack.c.b16 %v1243, %v1235
        %v1564 = vpack.c.b16 %v1244, %v1236
        %v1565 = vpack.c.b16 %v1253, %v1245
        %v1566 = vpack.c.b16 %v1254, %v1246
        %v1567 = vpack.c.b16 %v1255, %v1247
        %v1568 = vpack.c.b16 %v1256, %v1248
        %v1569 = vpack.c.b16 %v1257, %v1249
        %v1570 = vpack.c.b16 %v1258, %v1250
        %v1571 = vpack.c.b16 %v1259, %v1251
        %v1572 = vpack.c.b16 %v1260, %v1252
        %v1573 = vpack.c.b16 %v1269, %v1261
        %v1574 = vpack.c.b16 %v1270, %v1262
        %v1575 = vpack.c.b16 %v1271, %v1263
        %v1576 = vpack.c.b16 %v1272, %v1264
        %v1577 = vpack.c.b16 %v1273, %v1265
        %v1578 = vpack.c.b16 %v1274, %v1266
        %v1579 = vpack.c.b16 %v1275, %v1267
        %v1580 = vpack.c.b16 %v1276, %v1268
        %v1581 = vpack.c.b16 %v1285, %v1277
        %v1582 = vpack.c.b16 %v1286, %v1278
        %v1583 = vpack.c.b16 %v1287, %v1279
        %v1584 = vpack.c.b16 %v1288, %v1280
        %v1585 = vpack.c.b16 %v1289, %v1281
        %v1586 = vpack.c.b16 %v1290, %v1282
        %v1587 = vpack.c.b16 %v1291, %v1283
        %v1588 = vpack.c.b16 %v1292, %v1284
        %v1589 = vpack.c.b16 %v1301, %v1293
        %v1590 = vpack.c.b16 %v1302, %v1294
        %v1591 = vpack.c.b16 %v1303, %v1295
        %v1592 = vpack.c.b16 %v1304, %v1296
        %v1593 = vpack.c.b16 %v1305, %v1297
        %v1594 = vpack.c.b16 %v1306, %v1298
        %v1595 = vpack.c.b16 %v1307, %v1299
        %v1596 = vpack.c.b16 %v1308, %v1300
        %v1597 = vpack.c.b16 %v1317, %v1309
        %v1598 = vpack.c.b16 %v1318, %v1310
        %v1599 = vpack.c.b16 %v1319, %v1311
        %v1600 = vpack.c.b16 %v1320, %v1312
        %v1601 = vpack.c.b16 %v1321, %v1313
        %v1602 = vpack.c.b16 %v1322, %v1314
        %v1603 = vpack.c.b16 %v1323, %v1315
        %v1604 = vpack.c.b16 %v1324, %v1316
        %v1605 = vpack.c.b16 %v1333, %v1325
        %v1606 = vpack.c.b16 %v1334, %v1326
        %v1607 = vpack.c.b16 %v1335, %v1327
        %v1608 = vpack.c.b16 %v1336, %v1328
        %v1609 = vpack.c.b16 %v1337, %v1329
        %v1610 = vpack.c.b16 %v1338, %v1330
        %v1611 = vpack.c.b16 %v1339, %v1331
        %v1612 = vpack.c.b16 %v1340, %v1332
        %v1613 = vpack.c.b16 %v1349, %v1341
        %v1614 = vpack.c.b16 %v1350, %v1342
        %v1615 = vpack.c.b16 %v1351, %v1343
        %v1616 = vpack.c.b16 %v1352, %v1344
        %v1617 = vpack.c.b16 %v1353, %v1345
        %v1618 = vpack.c.b16 %v1354, %v1346
        %v1619 = vpack.c.b16 %v1355, %v1347
        %v1620 = vpack.c.b16 %v1356, %v1348
        %v1621 = vpack.c.b16 %v1365, %v1357
        %v1622 = vpack.c.b16 %v1366, %v1358
        %v1623 = vpack.c.b16 %v1367, %v1359
        %v1624 = vpack.c.b16 %v1368, %v1360
        %v1625 = vpack.c.b16 %v1369, %v1361
        %v1626 = vpack.c.b16 %v1370, %v1362
        %v1627 = vpack.c.b16 %v1371, %v1363
        %v1628 = vpack.c.b16 %v1372, %v1364
        %1885 = vmatprep.subr.bf16.mxu0 %v1430
        %1886 = vmatpush1.bf16.msra.mxu0 %v1429
        %1887 = vmatprep.subr.bf16.mxu0 %v1422
        %1888 = vmatpush1.bf16.msra.mxu0 %v1421
        %1889 = vmatprep.subr.bf16.mxu0 %v1414
        %1890 = vmatpush1.bf16.msra.mxu0 %v1413
        %1891 = vmatprep.subr.bf16.mxu0 %v1406
        %1892 = vmatpush1.bf16.msra.mxu0 %v1405
        %1893 = vmatprep.subr.bf16.mxu0 %v1398
        %1894 = vmatpush1.bf16.msra.mxu0 %v1397
        %1895 = vmatprep.subr.bf16.mxu0 %v1390
        %1896 = vmatpush1.bf16.msra.mxu0 %v1389
        %1897 = vmatprep.subr.bf16.mxu0 %v1382
        %1898 = vmatpush1.bf16.msra.mxu0 %v1381
        %1899 = vmatprep.subr.bf16.mxu0 %v1374
        %1900 = vmatpush1.bf16.msra.mxu0 %v1373
        %1901 = vmatprep.subr.bf16.mxu0 %v1494
        %1902 = vmatpush2.bf16.msra.mxu0 %v1493
        %1903 = vmatprep.subr.bf16.mxu0 %v1486
        %1904 = vmatpush2.bf16.msra.mxu0 %v1485
        %1905 = vmatprep.subr.bf16.mxu0 %v1478
        %1906 = vmatpush2.bf16.msra.mxu0 %v1477
        %1907 = vmatprep.subr.bf16.mxu0 %v1470
        %1908 = vmatpush2.bf16.msra.mxu0 %v1469
        %1909 = vmatprep.subr.bf16.mxu0 %v1462
        %1910 = vmatpush2.bf16.msra.mxu0 %v1461
        %1911 = vmatprep.subr.bf16.mxu0 %v1454
        %1912 = vmatpush2.bf16.msra.mxu0 %v1453
        %1913 = vmatprep.subr.bf16.mxu0 %v1446
        %1914 = vmatpush2.bf16.msra.mxu0 %v1445
        %1915 = vmatprep.subr.bf16.mxu0 %v1438
        %1916 = vmatpush2.bf16.msra.mxu0 %v1437
        %1917 = vmatprep.mubr.bf16.mxu0 %v598
        %1918 = vmatmul.mubr.bf16.gmra.mxu0 %v597
        %v1919 = vpop.f32.mrf.mxu0
        %v1920 = vadd.f32 %v493, %v1919
        %v1921 = vpop.f32.mrf.mxu0
        %v1922 = vadd.f32 %v497, %v1921
        %v1923 = vpop.f32.mrf.mxu0
        %v1924 = vpop.f32.mrf.mxu0
        %1925 = vdwg.mxu0
        %1926 = vmatprep.subr.bf16.mxu0 %v1558
        %1927 = vmatpush1.bf16.msra.mxu0 %v1557
        %1928 = vmatprep.subr.bf16.mxu0 %v1550
        %1929 = vmatpush1.bf16.msra.mxu0 %v1549
        %1930 = vmatprep.subr.bf16.mxu0 %v1542
        %1931 = vmatpush1.bf16.msra.mxu0 %v1541
        %1932 = vmatprep.subr.bf16.mxu0 %v1534
        %1933 = vmatpush1.bf16.msra.mxu0 %v1533
        %1934 = vmatprep.subr.bf16.mxu0 %v1526
        %1935 = vmatpush1.bf16.msra.mxu0 %v1525
        %1936 = vmatprep.subr.bf16.mxu0 %v1518
        %1937 = vmatpush1.bf16.msra.mxu0 %v1517
        %1938 = vmatprep.subr.bf16.mxu0 %v1510
        %1939 = vmatpush1.bf16.msra.mxu0 %v1509
        %1940 = vmatprep.subr.bf16.mxu0 %v1502
        %1941 = vmatpush1.bf16.msra.mxu0 %v1501
        %1942 = vmatprep.subr.bf16.mxu0 %v1622
        %1943 = vmatpush2.bf16.msra.mxu0 %v1621
        %1944 = vmatprep.subr.bf16.mxu0 %v1614
        %1945 = vmatpush2.bf16.msra.mxu0 %v1613
        %1946 = vmatprep.subr.bf16.mxu0 %v1606
        %1947 = vmatpush2.bf16.msra.mxu0 %v1605
        %1948 = vmatprep.subr.bf16.mxu0 %v1598
        %1949 = vmatpush2.bf16.msra.mxu0 %v1597
        %1950 = vmatprep.subr.bf16.mxu0 %v1590
        %1951 = vmatpush2.bf16.msra.mxu0 %v1589
        %1952 = vmatprep.subr.bf16.mxu0 %v1582
        %1953 = vmatpush2.bf16.msra.mxu0 %v1581
        %1954 = vmatprep.subr.bf16.mxu0 %v1574
        %1955 = vmatpush2.bf16.msra.mxu0 %v1573
        %1956 = vmatprep.subr.bf16.mxu0 %v1566
        %1957 = vmatpush2.bf16.msra.mxu0 %v1565
        %1958 = vmatprep.mubr.bf16.mxu0 %v600
        %1959 = vmatmul.mubr.bf16.gmra.mxu0 %v599
        %v1960 = vpop.f32.mrf.mxu0
        %v1961 = vadd.f32 %v1920, %v1960
        %v1962 = vpop.f32.mrf.mxu0
        %v1963 = vadd.f32 %v1922, %v1962
        %v1964 = vpop.f32.mrf.mxu0
        %v1965 = vpop.f32.mrf.mxu0
        %1966 = vdwg.mxu0
        %1967 = vmatprep.subr.bf16.mxu0 %v1432
        %1968 = vmatpush1.bf16.msra.mxu0 %v1431
        %1969 = vmatprep.subr.bf16.mxu0 %v1424
        %1970 = vmatpush1.bf16.msra.mxu0 %v1423
        %1971 = vmatprep.subr.bf16.mxu0 %v1416
        %1972 = vmatpush1.bf16.msra.mxu0 %v1415
        %1973 = vmatprep.subr.bf16.mxu0 %v1408
        %1974 = vmatpush1.bf16.msra.mxu0 %v1407
        %1975 = vmatprep.subr.bf16.mxu0 %v1400
        %1976 = vmatpush1.bf16.msra.mxu0 %v1399
        %1977 = vmatprep.subr.bf16.mxu0 %v1392
        %1978 = vmatpush1.bf16.msra.mxu0 %v1391
        %1979 = vmatprep.subr.bf16.mxu0 %v1384
        %1980 = vmatpush1.bf16.msra.mxu0 %v1383
        %1981 = vmatprep.subr.bf16.mxu0 %v1376
        %1982 = vmatpush1.bf16.msra.mxu0 %v1375
        %1983 = vmatprep.subr.bf16.mxu0 %v1496
        %1984 = vmatpush2.bf16.msra.mxu0 %v1495
        %1985 = vmatprep.subr.bf16.mxu0 %v1488
        %1986 = vmatpush2.bf16.msra.mxu0 %v1487
        %1987 = vmatprep.subr.bf16.mxu0 %v1480
        %1988 = vmatpush2.bf16.msra.mxu0 %v1479
        %1989 = vmatprep.subr.bf16.mxu0 %v1472
        %1990 = vmatpush2.bf16.msra.mxu0 %v1471
        %1991 = vmatprep.subr.bf16.mxu0 %v1464
        %1992 = vmatpush2.bf16.msra.mxu0 %v1463
        %1993 = vmatprep.subr.bf16.mxu0 %v1456
        %1994 = vmatpush2.bf16.msra.mxu0 %v1455
        %1995 = vmatprep.subr.bf16.mxu0 %v1448
        %1996 = vmatpush2.bf16.msra.mxu0 %v1447
        %1997 = vmatprep.subr.bf16.mxu0 %v1440
        %1998 = vmatpush2.bf16.msra.mxu0 %v1439
        %1999 = vmatprep.mubr.bf16.mxu0 %v598
        %2000 = vmatmul.mubr.bf16.gmra.mxu0 %v597
        %v2001 = vpop.f32.mrf.mxu0
        %v2002 = vadd.f32 %v501, %v2001
        %v2003 = vpop.f32.mrf.mxu0
        %v2004 = vadd.f32 %v505, %v2003
        %v2005 = vpop.f32.mrf.mxu0
        %v2006 = vpop.f32.mrf.mxu0
        %2007 = vdwg.mxu0
        %2008 = vmatprep.subr.bf16.mxu0 %v1560
        %2009 = vmatpush1.bf16.msra.mxu0 %v1559
        %2010 = vmatprep.subr.bf16.mxu0 %v1552
        %2011 = vmatpush1.bf16.msra.mxu0 %v1551
        %2012 = vmatprep.subr.bf16.mxu0 %v1544
        %2013 = vmatpush1.bf16.msra.mxu0 %v1543
        %2014 = vmatprep.subr.bf16.mxu0 %v1536
        %2015 = vmatpush1.bf16.msra.mxu0 %v1535
        %2016 = vmatprep.subr.bf16.mxu0 %v1528
        %2017 = vmatpush1.bf16.msra.mxu0 %v1527
        %2018 = vmatprep.subr.bf16.mxu0 %v1520
        %2019 = vmatpush1.bf16.msra.mxu0 %v1519
        %2020 = vmatprep.subr.bf16.mxu0 %v1512
        %2021 = vmatpush1.bf16.msra.mxu0 %v1511
        %2022 = vmatprep.subr.bf16.mxu0 %v1504
        %2023 = vmatpush1.bf16.msra.mxu0 %v1503
        %2024 = vmatprep.subr.bf16.mxu0 %v1624
        %2025 = vmatpush2.bf16.msra.mxu0 %v1623
        %2026 = vmatprep.subr.bf16.mxu0 %v1616
        %2027 = vmatpush2.bf16.msra.mxu0 %v1615
        %2028 = vmatprep.subr.bf16.mxu0 %v1608
        %2029 = vmatpush2.bf16.msra.mxu0 %v1607
        %2030 = vmatprep.subr.bf16.mxu0 %v1600
        %2031 = vmatpush2.bf16.msra.mxu0 %v1599
        %2032 = vmatprep.subr.bf16.mxu0 %v1592
        %2033 = vmatpush2.bf16.msra.mxu0 %v1591
        %2034 = vmatprep.subr.bf16.mxu0 %v1584
        %2035 = vmatpush2.bf16.msra.mxu0 %v1583
        %2036 = vmatprep.subr.bf16.mxu0 %v1576
        %2037 = vmatpush2.bf16.msra.mxu0 %v1575
        %2038 = vmatprep.subr.bf16.mxu0 %v1568
        %2039 = vmatpush2.bf16.msra.mxu0 %v1567
        %2040 = vmatprep.mubr.bf16.mxu0 %v600
        %2041 = vmatmul.mubr.bf16.gmra.mxu0 %v599
        %v2042 = vpop.f32.mrf.mxu0
        %v2043 = vadd.f32 %v2002, %v2042
        %v2044 = vpop.f32.mrf.mxu0
        %v2045 = vadd.f32 %v2004, %v2044
        %v2046 = vpop.f32.mrf.mxu0
        %v2047 = vpop.f32.mrf.mxu0
        %2048 = vdwg.mxu0
        %2049 = vmatprep.subr.bf16.mxu0 %v1434
        %2050 = vmatpush1.bf16.msra.mxu0 %v1433
        %2051 = vmatprep.subr.bf16.mxu0 %v1426
        %2052 = vmatpush1.bf16.msra.mxu0 %v1425
        %2053 = vmatprep.subr.bf16.mxu0 %v1418
        %2054 = vmatpush1.bf16.msra.mxu0 %v1417
        %2055 = vmatprep.subr.bf16.mxu0 %v1410
        %2056 = vmatpush1.bf16.msra.mxu0 %v1409
        %2057 = vmatprep.subr.bf16.mxu0 %v1402
        %2058 = vmatpush1.bf16.msra.mxu0 %v1401
        %2059 = vmatprep.subr.bf16.mxu0 %v1394
        %2060 = vmatpush1.bf16.msra.mxu0 %v1393
        %2061 = vmatprep.subr.bf16.mxu0 %v1386
        %2062 = vmatpush1.bf16.msra.mxu0 %v1385
        %2063 = vmatprep.subr.bf16.mxu0 %v1378
        %2064 = vmatpush1.bf16.msra.mxu0 %v1377
        %2065 = vmatprep.subr.bf16.mxu0 %v1498
        %2066 = vmatpush2.bf16.msra.mxu0 %v1497
        %2067 = vmatprep.subr.bf16.mxu0 %v1490
        %2068 = vmatpush2.bf16.msra.mxu0 %v1489
        %2069 = vmatprep.subr.bf16.mxu0 %v1482
        %2070 = vmatpush2.bf16.msra.mxu0 %v1481
        %2071 = vmatprep.subr.bf16.mxu0 %v1474
        %2072 = vmatpush2.bf16.msra.mxu0 %v1473
        %2073 = vmatprep.subr.bf16.mxu0 %v1466
        %2074 = vmatpush2.bf16.msra.mxu0 %v1465
        %2075 = vmatprep.subr.bf16.mxu0 %v1458
        %2076 = vmatpush2.bf16.msra.mxu0 %v1457
        %2077 = vmatprep.subr.bf16.mxu0 %v1450
        %2078 = vmatpush2.bf16.msra.mxu0 %v1449
        %2079 = vmatprep.subr.bf16.mxu0 %v1442
        %2080 = vmatpush2.bf16.msra.mxu0 %v1441
        %2081 = vmatprep.mubr.bf16.mxu0 %v598
        %2082 = vmatmul.mubr.bf16.gmra.mxu0 %v597
        %v2083 = vpop.f32.mrf.mxu0
        %v2084 = vadd.f32 %v509, %v2083
        %v2085 = vpop.f32.mrf.mxu0
        %v2086 = vadd.f32 %v513, %v2085
        %v2087 = vpop.f32.mrf.mxu0
        %v2088 = vpop.f32.mrf.mxu0
        %2089 = vdwg.mxu0
        %2090 = vmatprep.subr.bf16.mxu0 %v1562
        %2091 = vmatpush1.bf16.msra.mxu0 %v1561
        %2092 = vmatprep.subr.bf16.mxu0 %v1554
        %2093 = vmatpush1.bf16.msra.mxu0 %v1553
        %2094 = vmatprep.subr.bf16.mxu0 %v1546
        %2095 = vmatpush1.bf16.msra.mxu0 %v1545
        %2096 = vmatprep.subr.bf16.mxu0 %v1538
        %2097 = vmatpush1.bf16.msra.mxu0 %v1537
        %2098 = vmatprep.subr.bf16.mxu0 %v1530
        %2099 = vmatpush1.bf16.msra.mxu0 %v1529
        %2100 = vmatprep.subr.bf16.mxu0 %v1522
        %2101 = vmatpush1.bf16.msra.mxu0 %v1521
        %2102 = vmatprep.subr.bf16.mxu0 %v1514
        %2103 = vmatpush1.bf16.msra.mxu0 %v1513
        %2104 = vmatprep.subr.bf16.mxu0 %v1506
        %2105 = vmatpush1.bf16.msra.mxu0 %v1505
        %2106 = vmatprep.subr.bf16.mxu0 %v1626
        %2107 = vmatpush2.bf16.msra.mxu0 %v1625
        %2108 = vmatprep.subr.bf16.mxu0 %v1618
        %2109 = vmatpush2.bf16.msra.mxu0 %v1617
        %2110 = vmatprep.subr.bf16.mxu0 %v1610
        %2111 = vmatpush2.bf16.msra.mxu0 %v1609
        %2112 = vmatprep.subr.bf16.mxu0 %v1602
        %2113 = vmatpush2.bf16.msra.mxu0 %v1601
        %2114 = vmatprep.subr.bf16.mxu0 %v1594
        %2115 = vmatpush2.bf16.msra.mxu0 %v1593
        %2116 = vmatprep.subr.bf16.mxu0 %v1586
        %2117 = vmatpush2.bf16.msra.mxu0 %v1585
        %2118 = vmatprep.subr.bf16.mxu0 %v1578
        %2119 = vmatpush2.bf16.msra.mxu0 %v1577
        %2120 = vmatprep.subr.bf16.mxu0 %v1570
        %2121 = vmatpush2.bf16.msra.mxu0 %v1569
        %2122 = vmatprep.mubr.bf16.mxu0 %v600
        %2123 = vmatmul.mubr.bf16.gmra.mxu0 %v599
        %v2124 = vpop.f32.mrf.mxu0
        %v2125 = vadd.f32 %v2084, %v2124
        %v2126 = vpop.f32.mrf.mxu0
        %v2127 = vadd.f32 %v2086, %v2126
        %v2128 = vpop.f32.mrf.mxu0
        %v2129 = vpop.f32.mrf.mxu0
        %2130 = vdwg.mxu0
        %2131 = vmatprep.subr.bf16.mxu0 %v1436
        %2132 = vmatpush1.bf16.msra.mxu0 %v1435
        %2133 = vmatprep.subr.bf16.mxu0 %v1428
        %2134 = vmatpush1.bf16.msra.mxu0 %v1427
        %2135 = vmatprep.subr.bf16.mxu0 %v1420
        %2136 = vmatpush1.bf16.msra.mxu0 %v1419
        %2137 = vmatprep.subr.bf16.mxu0 %v1412
        %2138 = vmatpush1.bf16.msra.mxu0 %v1411
        %2139 = vmatprep.subr.bf16.mxu0 %v1404
        %2140 = vmatpush1.bf16.msra.mxu0 %v1403
        %2141 = vmatprep.subr.bf16.mxu0 %v1396
        %2142 = vmatpush1.bf16.msra.mxu0 %v1395
        %2143 = vmatprep.subr.bf16.mxu0 %v1388
        %2144 = vmatpush1.bf16.msra.mxu0 %v1387
        %2145 = vmatprep.subr.bf16.mxu0 %v1380
        %2146 = vmatpush1.bf16.msra.mxu0 %v1379
        %2147 = vmatprep.subr.bf16.mxu0 %v1500
        %2148 = vmatpush2.bf16.msra.mxu0 %v1499
        %2149 = vmatprep.subr.bf16.mxu0 %v1492
        %2150 = vmatpush2.bf16.msra.mxu0 %v1491
        %2151 = vmatprep.subr.bf16.mxu0 %v1484
        %2152 = vmatpush2.bf16.msra.mxu0 %v1483
        %2153 = vmatprep.subr.bf16.mxu0 %v1476
        %2154 = vmatpush2.bf16.msra.mxu0 %v1475
        %2155 = vmatprep.subr.bf16.mxu0 %v1468
        %2156 = vmatpush2.bf16.msra.mxu0 %v1467
        %2157 = vmatprep.subr.bf16.mxu0 %v1460
        %2158 = vmatpush2.bf16.msra.mxu0 %v1459
        %2159 = vmatprep.subr.bf16.mxu0 %v1452
        %2160 = vmatpush2.bf16.msra.mxu0 %v1451
        %2161 = vmatprep.subr.bf16.mxu0 %v1444
        %2162 = vmatpush2.bf16.msra.mxu0 %v1443
        %2163 = vmatprep.mubr.bf16.mxu0 %v598
        %2164 = vmatmul.mubr.bf16.gmra.mxu0 %v597
        %v2165 = vpop.f32.mrf.mxu0
        %v2166 = vadd.f32 %v517, %v2165
        %v2167 = vpop.f32.mrf.mxu0
        %v2168 = vadd.f32 %v521, %v2167
        %v2169 = vpop.f32.mrf.mxu0
        %v2170 = vpop.f32.mrf.mxu0
        %2171 = vdwg.mxu0
        %2172 = vmatprep.subr.bf16.mxu0 %v1564
        %2173 = vmatpush1.bf16.msra.mxu0 %v1563
        %2174 = vmatprep.subr.bf16.mxu0 %v1556
        %2175 = vmatpush1.bf16.msra.mxu0 %v1555
        %2176 = vmatprep.subr.bf16.mxu0 %v1548
        %2177 = vmatpush1.bf16.msra.mxu0 %v1547
        %2178 = vmatprep.subr.bf16.mxu0 %v1540
        %2179 = vmatpush1.bf16.msra.mxu0 %v1539
        %2180 = vmatprep.subr.bf16.mxu0 %v1532
        %2181 = vmatpush1.bf16.msra.mxu0 %v1531
        %2182 = vmatprep.subr.bf16.mxu0 %v1524
        %2183 = vmatpush1.bf16.msra.mxu0 %v1523
        %2184 = vmatprep.subr.bf16.mxu0 %v1516
        %2185 = vmatpush1.bf16.msra.mxu0 %v1515
        %2186 = vmatprep.subr.bf16.mxu0 %v1508
        %2187 = vmatpush1.bf16.msra.mxu0 %v1507
        %2188 = vmatprep.subr.bf16.mxu0 %v1628
        %2189 = vmatpush2.bf16.msra.mxu0 %v1627
        %2190 = vmatprep.subr.bf16.mxu0 %v1620
        %2191 = vmatpush2.bf16.msra.mxu0 %v1619
        %2192 = vmatprep.subr.bf16.mxu0 %v1612
        %2193 = vmatpush2.bf16.msra.mxu0 %v1611
        %2194 = vmatprep.subr.bf16.mxu0 %v1604
        %2195 = vmatpush2.bf16.msra.mxu0 %v1603
        %2196 = vmatprep.subr.bf16.mxu0 %v1596
        %2197 = vmatpush2.bf16.msra.mxu0 %v1595
        %2198 = vmatprep.subr.bf16.mxu0 %v1588
        %2199 = vmatpush2.bf16.msra.mxu0 %v1587
        %2200 = vmatprep.subr.bf16.mxu0 %v1580
        %2201 = vmatpush2.bf16.msra.mxu0 %v1579
        %2202 = vmatprep.subr.bf16.mxu0 %v1572
        %2203 = vmatpush2.bf16.msra.mxu0 %v1571
        %2204 = vmatprep.mubr.bf16.mxu0 %v600
        %2205 = vmatmul.mubr.bf16.gmra.mxu0 %v599
        %v2206 = vpop.f32.mrf.mxu0
        %v2207 = vadd.f32 %v2166, %v2206
        %v2208 = vpop.f32.mrf.mxu0
        %v2209 = vadd.f32 %v2168, %v2208
        %v2210 = vpop.f32.mrf.mxu0
        %v2211 = vpop.f32.mrf.mxu0
        %2212 = vdwg.mxu0
        %v2213 = vmul.f32 %v1961, 0.5
        %v2214 = vmul.f32 %v1963, 0.5
        %v2215 = vmul.f32 %v2043, 0.5
        %v2216 = vmul.f32 %v2045, 0.5
        %v2217 = vmul.f32 %v2125, 0.5
        %v2218 = vmul.f32 %v2127, 0.5
        %v2219 = vmul.f32 %v2207, 0.5
        %v2220 = vmul.f32 %v2209, 0.5
        %v2221 = vmul.f32 %v1961, 0.044715
        %v2222 = vmul.f32 %v1963, 0.044715
        %v2223 = vmul.f32 %v2043, 0.044715
        %v2224 = vmul.f32 %v2045, 0.044715
        %v2225 = vmul.f32 %v2125, 0.044715
        %v2226 = vmul.f32 %v2127, 0.044715
        %v2227 = vmul.f32 %v2207, 0.044715
        %v2228 = vmul.f32 %v2209, 0.044715
        %v2229 = vmul.f32 %v2221, %v1961
        %v2230 = vmul.f32 %v2222, %v1963
        %v2231 = vmul.f32 %v2223, %v2043
        %v2232 = vmul.f32 %v2224, %v2045
        %v2233 = vmul.f32 %v2225, %v2125
        %v2234 = vmul.f32 %v2226, %v2127
        %v2235 = vmul.f32 %v2227, %v2207
        %v2236 = vmul.f32 %v2228, %v2209
        %v2237 = vmul.f32 %v2229, %v1961
        %v2238 = vmul.f32 %v2230, %v1963
        %v2239 = vmul.f32 %v2231, %v2043
        %v2240 = vmul.f32 %v2232, %v2045
        %v2241 = vmul.f32 %v2233, %v2125
        %v2242 = vmul.f32 %v2234, %v2127
        %v2243 = vmul.f32 %v2235, %v2207
        %v2244 = vmul.f32 %v2236, %v2209
        %v2245 = vadd.f32 %v1961, %v2237
        %v2246 = vadd.f32 %v1963, %v2238
        %v2247 = vadd.f32 %v2043, %v2239
        %v2248 = vadd.f32 %v2045, %v2240
        %v2249 = vadd.f32 %v2125, %v2241
        %v2250 = vadd.f32 %v2127, %v2242
        %v2251 = vadd.f32 %v2207, %v2243
        %v2252 = vadd.f32 %v2209, %v2244
        %v2253 = vmul.f32 %v2245, 0.7978846
        %v2254 = vmul.f32 %v2246, 0.7978846
        %v2255 = vmul.f32 %v2247, 0.7978846
        %v2256 = vmul.f32 %v2248, 0.7978846
        %v2257 = vmul.f32 %v2249, 0.7978846
        %v2258 = vmul.f32 %v2250, 0.7978846
        %v2259 = vmul.f32 %v2251, 0.7978846
        %v2260 = vmul.f32 %v2252, 0.7978846
        %v2261 = vtanh.pop %v2253
        %v2262 = vtanh.pop %v2254
        %v2263 = vtanh.pop %v2255
        %v2264 = vtanh.pop %v2256
        %v2265 = vtanh.pop %v2257
        %v2266 = vtanh.pop %v2258
        %v2267 = vtanh.pop %v2259
        %v2268 = vtanh.pop %v2260
        %v2269 = vadd.f32 %v2261, 1.0
        %v2270 = vadd.f32 %v2262, 1.0
        %v2271 = vadd.f32 %v2263, 1.0
        %v2272 = vadd.f32 %v2264, 1.0
        %v2273 = vadd.f32 %v2265, 1.0
        %v2274 = vadd.f32 %v2266, 1.0
        %v2275 = vadd.f32 %v2267, 1.0
        %v2276 = vadd.f32 %v2268, 1.0
        %v2277 = vmul.f32 %v2213, %v2269
        %v2278 = vmul.f32 %v2214, %v2270
        %v2279 = vmul.f32 %v2215, %v2271
        %v2280 = vmul.f32 %v2216, %v2272
        %v2281 = vmul.f32 %v2217, %v2273
        %v2282 = vmul.f32 %v2218, %v2274
        %v2283 = vmul.f32 %v2219, %v2275
        %v2284 = vmul.f32 %v2220, %v2276
        %v2285 = vpack.c.bf16 %v2277, %v2277
        %v2286 = vpack.c.bf16 %v2278, %v2278
        %v2287 = vpack.c.bf16 %v2279, %v2279
        %v2288 = vpack.c.bf16 %v2280, %v2280
        %v2289 = vpack.c.bf16 %v2281, %v2281
        %v2290 = vpack.c.bf16 %v2282, %v2282
        %v2291 = vpack.c.bf16 %v2283, %v2283
        %v2292 = vpack.c.bf16 %v2284, %v2284
        %v2301 = vcombine.low %v2285, %v2286
        %v2302 = vcombine.low %v2287, %v2288
        %v2303 = vcombine.low %v2289, %v2290
        %v2304 = vcombine.low %v2291, %v2292
        %v2306 = vunpack.c.l.s4 1966171168
        %v2307 = vunpack.c.0.s8 %v2306
        %v2308 = vlaneseq
        %v2309 = vshrl.u32 %v2308, 7
        %v2310 = vsub.s32 %v2307, %v2309
        %v2311 = vrot.slane %v2301, %v2310
        %v2313 = vunpack.c.l.s4 1966171168
        %v2314 = vunpack.c.0.s8 %v2313
        %v2315 = vlaneseq
        %v2316 = vshrl.u32 %v2315, 7
        %v2317 = vsub.s32 %v2314, %v2316
        %v2318 = vrot.slane %v2302, %v2317
        %v2320 = vunpack.c.l.s4 1966171168
        %v2321 = vunpack.c.0.s8 %v2320
        %v2322 = vlaneseq
        %v2323 = vshrl.u32 %v2322, 7
        %v2324 = vsub.s32 %v2321, %v2323
        %v2325 = vrot.slane %v2303, %v2324
        %v2327 = vunpack.c.l.s4 1966171168
        %v2328 = vunpack.c.0.s8 %v2327
        %v2329 = vlaneseq
        %v2330 = vshrl.u32 %v2329, 7
        %v2331 = vsub.s32 %v2328, %v2330
        %v2332 = vrot.slane %v2304, %v2331
        %v2333 = vcombine.low %v2311, %v2318
        %v2334 = vcombine.low %v2325, %v2332
        %v2336 = vunpack.c.l.s4 1966171168
        %v2337 = vunpack.c.0.s8 %v2336
        %v2338 = vlaneseq
        %v2339 = vshrl.u32 %v2338, 7
        %v2340 = vsub.s32 %v2337, %v2339
        %v2341 = vrot.slane %v2333, %v2340
        %v2343 = vunpack.c.l.s4 1966171168
        %v2344 = vunpack.c.0.s8 %v2343
        %v2345 = vlaneseq
        %v2346 = vshrl.u32 %v2345, 7
        %v2347 = vsub.s32 %v2344, %v2346
        %v2348 = vrot.slane %v2334, %v2347
        %v2349 = vcombine.low %v2341, %v2348
        %2351 = vst [vmem:[%s228] sm:$0xff] %v2349
        %s2352 = smul.u32 8, %s20
        %p2353 = scmp.lt.s32.totalorder %s2352, 31
        %s2354 = scalar_select %p2353, %s2352, 31
        %s2355 = scalar_lea.vmem %s3, %s2354
        // Predicated region
        $region41: #{complete_dt_forward.11} parent=31 // pred_check
          %p2356 = pneg %p111
        $region42: #{complete_dt_forward.11} parent=31 // pred_check_branch
          %2358 = sbr.rel (%p2356) target = $region44
        $region43: #{complete_dt_forward.11} parent=31 // pred_region
          %s2359 = smul.u32 8, %s20
        $region44: #{complete_dt_forward.11} parent=31 // pred_fallthru
          _
      $region32: #{complete_dt_forward.11} parent=5 // pred_fallthru
        _
      %p2360 = scmp.le.s32.totalorder 2, %s15
      // Predicated region
      $region45: #{complete_dt_forward.11} parent=5 // pred_check
        %p2361 = pneg %p2360
      $region46: #{complete_dt_forward.11} parent=5 // pred_check_branch
        %2363 = sbr.rel (%p2361) target = $region48
      $region47: #{complete_dt_forward.11} parent=5 // pred_region
        %s2364 = ssub.s32 %s15, 2
        // Predicated region
        $region49: #{complete_dt_forward.11} parent=47 // pred_check
          %p2365 = pneg %p117
        $region50: #{complete_dt_forward.11} parent=47 // pred_check_branch
          %2367 = sbr.rel (%p2365) target = $region52
        $region51: #{complete_dt_forward.11} parent=47 // pred_region
          %s2368 = smul.u32 8, %s21
          %p2369 = scmp.lt.s32.totalorder %s2368, 31
          %s2370 = scalar_select %p2369, %s2368, 31
          %s2371 = scalar_lea.vmem %s3, %s2370
        $region52: #{complete_dt_forward.11} parent=47 // pred_fallthru
          _
      $region48: #{complete_dt_forward.11} parent=5 // pred_fallthru
        _
    $region6: #{complete_dt_forward.11} parent=1 // loop_footer
      %s19 = sadd.s32 1, %s15
    $region7: #{complete_dt_forward.11} parent=1 // loop_footer_branch
      %14 = sbr.rel target = $region3
    $region8: #{complete_dt_forward.11} parent=1 // loop_exit
      _
    %2372 = vsyncpa [#allocation3], 1
    %s2373 = scalar_lea.sflag [#allocation3], 1
    %2374 = vsyncpa %s2373, 1
    %2375 = vsyncpa [#allocation5], 1
    %s2376 = scalar_lea.sflag [#allocation5], 1
    %2377 = vsyncpa %s2376, 1

</llo_original>
